<compile_context>
chip_gen: v5e
topology: v5e:2x2
jax: 0.10.0
libtpu: 0.0.40
codegen_flags: <defaults>
</compile_context>

<pallas_src>
import functools

import jax
import jax.numpy as jnp
from jax.experimental import pallas as pl
from jax.experimental.pallas import tpu as pltpu


def _spatial_attention_kernel(w1_ref, w2_ref, bias_ref, x_ref, o_ref,
                              pad1_ref, pad2_ref, attf_ref, *, H, W):
    """Processes Bt images per grid step in a lane-dense (Bt, C, H*W) layout.

    w1_ref:   SMEM f32[98]   conv1 weights (out=1, in=2, 7x7), flattened
    w2_ref:   SMEM f32[9]    conv2 weights (out=1, in=1, 3x3, dilation=2), flattened
    bias_ref: SMEM f32[2]    [conv1 bias, conv2 bias]
    x_ref:    VMEM [Bt, C, H*W]          input block (native dtype)
    o_ref:    VMEM [Bt, C, H*W]          output block
    pad1_ref: VMEM f32[2, H+6, Bt, W+6]  zero-padded avg/max maps (pad=3)
    pad2_ref: VMEM f32[H+4, Bt, W+4]     zero-padded hidden map (pad=2)
    attf_ref: VMEM f32[Bt, H*W]          flattened attention map
    """
    Bt = x_ref.shape[0]

    # Zero the padded scratch borders once; interiors are fully overwritten each step,
    # so the zero borders persist across the whole grid.
    @pl.when(pl.program_id(0) == 0)
    def _init():
        pad1_ref[...] = jnp.zeros_like(pad1_ref)
        pad2_ref[...] = jnp.zeros_like(pad2_ref)

    x = x_ref[...]                                   # (Bt, C, HW) native dtype
    xf = x.astype(jnp.float32)

    # Channel-wise mean / max in the lane-dense layout.
    avg = jnp.mean(xf, axis=1)                       # (Bt, HW) f32
    mx = jnp.max(xf, axis=1)                         # (Bt, HW) f32

    # Scatter the flat maps row-by-row into the padded 2D scratch interiors.
    for h in range(H):
        row = slice(h * W, (h + 1) * W)
        pad1_ref[0, 3 + h, :, 3:3 + W] = avg[:, row]
        pad1_ref[1, 3 + h, :, 3:3 + W] = mx[:, row]

    # ---- Conv2d(2 -> 1, kernel=7, padding=3) + ReLU ----
    acc1 = jnp.full((H, Bt, W), bias_ref[0], dtype=jnp.float32)
    for c in range(2):
        pmap = pad1_ref[c]                                       # (H+6, Bt, W+6)
        cols = [pmap[:, :, kj:kj + W] for kj in range(7)]        # hoisted lane shifts
        for ki in range(7):
            for kj in range(7):
                w = w1_ref[c * 49 + ki * 7 + kj]
                acc1 = acc1 + w * cols[kj][ki:ki + H]
    h1 = jnp.maximum(acc1, 0.0)                                  # (H, Bt, W)

    # ---- Conv2d(1 -> 1, kernel=3, padding=2, dilation=2) ----
    pad2_ref[2:2 + H, :, 2:2 + W] = h1
    pmap2 = pad2_ref[...]                                        # (H+4, Bt, W+4)
    cols2 = [pmap2[:, :, 2 * kj:2 * kj + W] for kj in range(3)]  # hoisted lane shifts
    acc2 = jnp.full((H, Bt, W), bias_ref[1], dtype=jnp.float32)
    for ki in range(3):
        for kj in range(3):
            w = w2_ref[ki * 3 + kj]
            acc2 = acc2 + w * cols2[kj][2 * ki:2 * ki + H]

    att = jax.nn.sigmoid(acc2)                                   # (H, Bt, W)

    # Back to the lane-dense flat layout for the gating multiply.
    for h in range(H):
        attf_ref[:, h * W:(h + 1) * W] = att[h]                  # (Bt, W)
    attf = attf_ref[...].astype(x.dtype)                         # (Bt, HW)

    o_ref[...] = (x * jnp.expand_dims(attf, 1)).astype(o_ref.dtype)


def spatial_attention(x, w1, b1, w2, b2, *, block_batch=None):
    """x: [B, C, H, W]; w1: [1, 2, 7, 7]; b1: [1]; w2: [1, 1, 3, 3]; b2: [1]."""
    B, C, H, W = x.shape
    HW = H * W
    itemsize = x.dtype.itemsize

    # ---- choose how many images per grid step (fits VMEM, keeps >=2 grid steps) ----
    per_image = C * HW * itemsize
    if block_batch is None:
        budget = 4 << 20                          # ~4 MiB input block target
        cap = max(1, budget // per_image)
        if B >= 2:
            cap = min(cap, max(1, B // 2))        # keep >= 2 steps for v7x megacore
        block_batch = 1
        for d in range(1, B + 1):
            if B % d == 0 and d <= cap:
                block_batch = d
    assert B % block_batch == 0, "block_batch must divide the batch size"
    Bt = block_batch
    grid = (B // Bt,)

    x_flat = x.reshape(B, C, HW)                                   # lane-dense layout
    w1_flat = w1.reshape(-1).astype(jnp.float32)                   # (98,)
    w2_flat = w2.reshape(-1).astype(jnp.float32)                   # (9,)
    bias = jnp.stack([b1.reshape(()), b2.reshape(())]).astype(jnp.float32)  # (2,)

    kernel = functools.partial(_spatial_attention_kernel, H=H, W=W)

    block_bytes = Bt * C * HW * itemsize
    scratch_bytes = 4 * (2 * Bt * (H + 6) * (W + 6) + Bt * (H + 4) * (W + 4) + Bt * HW)
    vmem_limit = int(min(48 << 20,
                         max(32 << 20, 6 * block_bytes + 4 * scratch_bytes + (2 << 20))))

    out_flat = pl.pallas_call(
        kernel,
        out_shape=jax.ShapeDtypeStruct((B, C, HW), x.dtype),
        grid=grid,
        in_specs=[
            pl.BlockSpec(memory_space=pltpu.MemorySpace.SMEM),     # w1 (scalars)
            pl.BlockSpec(memory_space=pltpu.MemorySpace.SMEM),     # w2 (scalars)
            pl.BlockSpec(memory_space=pltpu.MemorySpace.SMEM),     # biases (scalars)
            pl.BlockSpec((Bt, C, HW), lambda b: (b, 0, 0)),        # x, lane-dense
        ],
        out_specs=pl.BlockSpec((Bt, C, HW), lambda b: (b, 0, 0)),
        scratch_shapes=[
            pltpu.VMEM((2, H + 6, Bt, W + 6), jnp.float32),        # pad=3 maps (avg, max)
            pltpu.VMEM((H + 4, Bt, W + 4), jnp.float32),           # pad=2 hidden map
            pltpu.VMEM((Bt, HW), jnp.float32),                     # flat attention map
        ],
        compiler_params=pltpu.CompilerParams(
            dimension_semantics=("parallel",),
            vmem_limit_bytes=vmem_limit,
        ),
    )(w1_flat, w2_flat, bias, x_flat)

    return out_flat.reshape(B, C, H, W)


def _reference(x, w1, b1, w2, b2):
    """Pure-JAX reference matching the PyTorch module exactly."""
    avg = jnp.mean(x, axis=1, keepdims=True)
    mx = jnp.max(x, axis=1, keepdims=True)
    cat = jnp.concatenate([avg, mx], axis=1)
    dn = ("NCHW", "OIHW", "NCHW")
    h = jax.lax.conv_general_dilated(cat, w1, (1, 1), [(3, 3), (3, 3)],
                                     dimension_numbers=dn) + b1.reshape(1, -1, 1, 1)
    h = jnp.maximum(h, 0.0)
    h = jax.lax.conv_general_dilated(h, w2, (1, 1), [(2, 2), (2, 2)],
                                     rhs_dilation=(2, 2),
                                     dimension_numbers=dn) + b2.reshape(1, -1, 1, 1)
    return x * jax.nn.sigmoid(h)


if __name__ == "__main__":
    key = jax.random.PRNGKey(0)
    k1, k2, k3, k4, k5 = jax.random.split(key, 5)

    # Deterministic synthetic parameters (shapes from nn.Conv2d(2,1,7) / nn.Conv2d(1,1,3)).
    w1 = jax.random.normal(k1, (1, 2, 7, 7), jnp.float32) * 0.1
    b1 = jax.random.normal(k2, (1,), jnp.float32) * 0.1
    w2 = jax.random.normal(k3, (1, 1, 3, 3), jnp.float32) * 0.1
    b2 = jax.random.normal(k4, (1,), jnp.float32) * 0.1

    x = jax.random.normal(k5, (2, 4, 16, 16), jnp.float32)

    out = spatial_attention(x, w1, b1, w2, b2)
    out = jax.block_until_ready(out)

    ref = jax.block_until_ready(_reference(x, w1, b1, w2, b2))
    assert out.shape == ref.shape
    assert jnp.allclose(out, ref, rtol=1e-4, atol=1e-5), (
        f"max abs err = {jnp.max(jnp.abs(out - ref))}")

    print("KERNEL_OK")
</pallas_src>

<mosaic_0001>
module attributes {stable_mosaic.version = 11 : i64} {
  func.func @_spatial_attention_kernel(%arg0: i32, %arg1: memref<98xf32, #tpu.memory_space<smem>>, %arg2: memref<9xf32, #tpu.memory_space<smem>>, %arg3: memref<2xf32, #tpu.memory_space<smem>>, %arg4: memref<1x4x256xf32, #tpu.memory_space<vmem>>, %arg5: memref<1x4x256xf32, #tpu.memory_space<vmem>>, %arg6: memref<2x22x1x22xf32, #tpu.memory_space<vmem>>, %arg7: memref<20x1x20xf32, #tpu.memory_space<vmem>>, %arg8: memref<1x256xf32, #tpu.memory_space<vmem>>) attributes {dimension_semantics = [#tpu.dimension_semantics<parallel>], iteration_bounds = array<i64: 2>, scalar_prefetch = 0 : i64, scratch_operands = 3 : i64, tpu.core_type = #tpu.core_type<tc>, window_params = [{transform_indices = @transform_0, window_bounds = array<i64: 98>}, {transform_indices = @transform_1, window_bounds = array<i64: 9>}, {transform_indices = @transform_2, window_bounds = array<i64: 2>}, {transform_indices = @transform_3, window_bounds = array<i64: 1, 4, 256>}, {transform_indices = @transform_4, window_bounds = array<i64: 1, 4, 256>}]} {
    %c0_i32 = arith.constant 0 : i32
    %0 = arith.cmpi eq, %arg0, %c0_i32 : i32
    %1 = arith.extui %0 : i1 to i32
    %c0_i32_0 = arith.constant 0 : i32
    %2 = arith.cmpi ne, %1, %c0_i32_0 : i32
    scf.if %2 {
      %cst_189 = arith.constant 0.000000e+00 : f32
      %758 = vector.broadcast %cst_189 : f32 to vector<2x22x1x22xf32>
      %c0_190 = arith.constant 0 : index
      %c0_191 = arith.constant 0 : index
      %c0_192 = arith.constant 0 : index
      %c0_193 = arith.constant 0 : index
      %759 = vector.load %arg6[%c0_190, %c0_191, %c0_192, %c0_193] : memref<2x22x1x22xf32, #tpu.memory_space<vmem>>, vector<2x22x1x22xf32>
      tpu.vector_store %arg6[%c0_190, %c0_191, %c0_192, %c0_193], %758 {strides = array<i32>} : memref<2x22x1x22xf32, #tpu.memory_space<vmem>>, vector<2x22x1x22xf32>,
      %cst_194 = arith.constant 0.000000e+00 : f32
      %760 = vector.broadcast %cst_194 : f32 to vector<20x1x20xf32>
      %c0_195 = arith.constant 0 : index
      %c0_196 = arith.constant 0 : index
      %c0_197 = arith.constant 0 : index
      %761 = vector.load %arg7[%c0_195, %c0_196, %c0_197] : memref<20x1x20xf32, #tpu.memory_space<vmem>>, vector<20x1x20xf32>
      tpu.vector_store %arg7[%c0_195, %c0_196, %c0_197], %760 {strides = array<i32>} : memref<20x1x20xf32, #tpu.memory_space<vmem>>, vector<20x1x20xf32>,
    } else {
    }
    %c0 = arith.constant 0 : index
    %c0_1 = arith.constant 0 : index
    %c0_2 = arith.constant 0 : index
    %3 = vector.load %arg4[%c0, %c0_1, %c0_2] : memref<1x4x256xf32, #tpu.memory_space<vmem>>, vector<1x4x256xf32>
    %cst = arith.constant dense<0.000000e+00> : vector<1x256xf32>
    %4 = vector.multi_reduction <add>, %3, %cst [1] : vector<1x4x256xf32> to vector<1x256xf32>
    %cst_3 = arith.constant 4.000000e+00 : f32
    %5 = vector.broadcast %cst_3 : f32 to vector<1x256xf32>
    %6 = arith.divf %4, %5 : vector<1x256xf32>
    %cst_4 = arith.constant dense<0xFF800000> : vector<1x256xf32>
    %7 = vector.multi_reduction <maximumf>, %3, %cst_4 [1] : vector<1x4x256xf32> to vector<1x256xf32>
    %8 = vector.extract_strided_slice %6 {offsets = [0, 0], sizes = [1, 16], strides = [1, 1]} : vector<1x256xf32> to vector<1x16xf32>
    %c0_5 = arith.constant 0 : index
    %c3 = arith.constant 3 : index
    %c0_6 = arith.constant 0 : index
    %c3_7 = arith.constant 3 : index
    %9 = vector.load %arg6[%c0_5, %c3, %c0_6, %c3_7] : memref<2x22x1x22xf32, #tpu.memory_space<vmem>>, vector<1x1x1x16xf32>
    %10 = vector.shape_cast %9 : vector<1x1x1x16xf32> to vector<1x16xf32>
    %11 = vector.shape_cast %8 : vector<1x16xf32> to vector<1x1x1x16xf32>
    tpu.vector_store %arg6[%c0_5, %c3, %c0_6, %c3_7], %11 {strides = array<i32>} : memref<2x22x1x22xf32, #tpu.memory_space<vmem>>, vector<1x1x1x16xf32>,
    %12 = vector.extract_strided_slice %7 {offsets = [0, 0], sizes = [1, 16], strides = [1, 1]} : vector<1x256xf32> to vector<1x16xf32>
    %c1 = arith.constant 1 : index
    %c3_8 = arith.constant 3 : index
    %c0_9 = arith.constant 0 : index
    %c3_10 = arith.constant 3 : index
    %13 = vector.load %arg6[%c1, %c3_8, %c0_9, %c3_10] : memref<2x22x1x22xf32, #tpu.memory_space<vmem>>, vector<1x1x1x16xf32>
    %14 = vector.shape_cast %13 : vector<1x1x1x16xf32> to vector<1x16xf32>
    %15 = vector.shape_cast %12 : vector<1x16xf32> to vector<1x1x1x16xf32>
    tpu.vector_store %arg6[%c1, %c3_8, %c0_9, %c3_10], %15 {strides = array<i32>} : memref<2x22x1x22xf32, #tpu.memory_space<vmem>>, vector<1x1x1x16xf32>,
    %16 = vector.extract_strided_slice %6 {offsets = [0, 16], sizes = [1, 16], strides = [1, 1]} : vector<1x256xf32> to vector<1x16xf32>
    %c0_11 = arith.constant 0 : index
    %c4 = arith.constant 4 : index
    %c0_12 = arith.constant 0 : index
    %c3_13 = arith.constant 3 : index
    %17 = vector.load %arg6[%c0_11, %c4, %c0_12, %c3_13] : memref<2x22x1x22xf32, #tpu.memory_space<vmem>>, vector<1x1x1x16xf32>
    %18 = vector.shape_cast %17 : vector<1x1x1x16xf32> to vector<1x16xf32>
    %19 = vector.shape_cast %16 : vector<1x16xf32> to vector<1x1x1x16xf32>
    tpu.vector_store %arg6[%c0_11, %c4, %c0_12, %c3_13], %19 {strides = array<i32>} : memref<2x22x1x22xf32, #tpu.memory_space<vmem>>, vector<1x1x1x16xf32>,
    %20 = vector.extract_strided_slice %7 {offsets = [0, 16], sizes = [1, 16], strides = [1, 1]} : vector<1x256xf32> to vector<1x16xf32>
    %c1_14 = arith.constant 1 : index
    %c4_15 = arith.constant 4 : index
    %c0_16 = arith.constant 0 : index
    %c3_17 = arith.constant 3 : index
    %21 = vector.load %arg6[%c1_14, %c4_15, %c0_16, %c3_17] : memref<2x22x1x22xf32, #tpu.memory_space<vmem>>, vector<1x1x1x16xf32>
    %22 = vector.shape_cast %21 : vector<1x1x1x16xf32> to vector<1x16xf32>
    %23 = vector.shape_cast %20 : vector<1x16xf32> to vector<1x1x1x16xf32>
    tpu.vector_store %arg6[%c1_14, %c4_15, %c0_16, %c3_17], %23 {strides = array<i32>} : memref<2x22x1x22xf32, #tpu.memory_space<vmem>>, vector<1x1x1x16xf32>,
    %24 = vector.extract_strided_slice %6 {offsets = [0, 32], sizes = [1, 16], strides = [1, 1]} : vector<1x256xf32> to vector<1x16xf32>
    %c0_18 = arith.constant 0 : index
    %c5 = arith.constant 5 : index
    %c0_19 = arith.constant 0 : index
    %c3_20 = arith.constant 3 : index
    %25 = vector.load %arg6[%c0_18, %c5, %c0_19, %c3_20] : memref<2x22x1x22xf32, #tpu.memory_space<vmem>>, vector<1x1x1x16xf32>
    %26 = vector.shape_cast %25 : vector<1x1x1x16xf32> to vector<1x16xf32>
    %27 = vector.shape_cast %24 : vector<1x16xf32> to vector<1x1x1x16xf32>
    tpu.vector_store %arg6[%c0_18, %c5, %c0_19, %c3_20], %27 {strides = array<i32>} : memref<2x22x1x22xf32, #tpu.memory_space<vmem>>, vector<1x1x1x16xf32>,
    %28 = vector.extract_strided_slice %7 {offsets = [0, 32], sizes = [1, 16], strides = [1, 1]} : vector<1x256xf32> to vector<1x16xf32>
    %c1_21 = arith.constant 1 : index
    %c5_22 = arith.constant 5 : index
    %c0_23 = arith.constant 0 : index
    %c3_24 = arith.constant 3 : index
    %29 = vector.load %arg6[%c1_21, %c5_22, %c0_23, %c3_24] : memref<2x22x1x22xf32, #tpu.memory_space<vmem>>, vector<1x1x1x16xf32>
    %30 = vector.shape_cast %29 : vector<1x1x1x16xf32> to vector<1x16xf32>
    %31 = vector.shape_cast %28 : vector<1x16xf32> to vector<1x1x1x16xf32>
    tpu.vector_store %arg6[%c1_21, %c5_22, %c0_23, %c3_24], %31 {strides = array<i32>} : memref<2x22x1x22xf32, #tpu.memory_space<vmem>>, vector<1x1x1x16xf32>,
    %32 = vector.extract_strided_slice %6 {offsets = [0, 48], sizes = [1, 16], strides = [1, 1]} : vector<1x256xf32> to vector<1x16xf32>
    %c0_25 = arith.constant 0 : index
    %c6 = arith.constant 6 : index
    %c0_26 = arith.constant 0 : index
    %c3_27 = arith.constant 3 : index
    %33 = vector.load %arg6[%c0_25, %c6, %c0_26, %c3_27] : memref<2x22x1x22xf32, #tpu.memory_space<vmem>>, vector<1x1x1x16xf32>
    %34 = vector.shape_cast %33 : vector<1x1x1x16xf32> to vector<1x16xf32>
    %35 = vector.shape_cast %32 : vector<1x16xf32> to vector<1x1x1x16xf32>
    tpu.vector_store %arg6[%c0_25, %c6, %c0_26, %c3_27], %35 {strides = array<i32>} : memref<2x22x1x22xf32, #tpu.memory_space<vmem>>, vector<1x1x1x16xf32>,
    %36 = vector.extract_strided_slice %7 {offsets = [0, 48], sizes = [1, 16], strides = [1, 1]} : vector<1x256xf32> to vector<1x16xf32>
    %c1_28 = arith.constant 1 : index
    %c6_29 = arith.constant 6 : index
    %c0_30 = arith.constant 0 : index
    %c3_31 = arith.constant 3 : index
    %37 = vector.load %arg6[%c1_28, %c6_29, %c0_30, %c3_31] : memref<2x22x1x22xf32, #tpu.memory_space<vmem>>, vector<1x1x1x16xf32>
    %38 = vector.shape_cast %37 : vector<1x1x1x16xf32> to vector<1x16xf32>
    %39 = vector.shape_cast %36 : vector<1x16xf32> to vector<1x1x1x16xf32>
    tpu.vector_store %arg6[%c1_28, %c6_29, %c0_30, %c3_31], %39 {strides = array<i32>} : memref<2x22x1x22xf32, #tpu.memory_space<vmem>>, vector<1x1x1x16xf32>,
    %40 = vector.extract_strided_slice %6 {offsets = [0, 64], sizes = [1, 16], strides = [1, 1]} : vector<1x256xf32> to vector<1x16xf32>
    %c0_32 = arith.constant 0 : index
    %c7 = arith.constant 7 : index
    %c0_33 = arith.constant 0 : index
    %c3_34 = arith.constant 3 : index
    %41 = vector.load %arg6[%c0_32, %c7, %c0_33, %c3_34] : memref<2x22x1x22xf32, #tpu.memory_space<vmem>>, vector<1x1x1x16xf32>
    %42 = vector.shape_cast %41 : vector<1x1x1x16xf32> to vector<1x16xf32>
    %43 = vector.shape_cast %40 : vector<1x16xf32> to vector<1x1x1x16xf32>
    tpu.vector_store %arg6[%c0_32, %c7, %c0_33, %c3_34], %43 {strides = array<i32>} : memref<2x22x1x22xf32, #tpu.memory_space<vmem>>, vector<1x1x1x16xf32>,
    %44 = vector.extract_strided_slice %7 {offsets = [0, 64], sizes = [1, 16], strides = [1, 1]} : vector<1x256xf32> to vector<1x16xf32>
    %c1_35 = arith.constant 1 : index
    %c7_36 = arith.constant 7 : index
    %c0_37 = arith.constant 0 : index
    %c3_38 = arith.constant 3 : index
    %45 = vector.load %arg6[%c1_35, %c7_36, %c0_37, %c3_38] : memref<2x22x1x22xf32, #tpu.memory_space<vmem>>, vector<1x1x1x16xf32>
    %46 = vector.shape_cast %45 : vector<1x1x1x16xf32> to vector<1x16xf32>
    %47 = vector.shape_cast %44 : vector<1x16xf32> to vector<1x1x1x16xf32>
    tpu.vector_store %arg6[%c1_35, %c7_36, %c0_37, %c3_38], %47 {strides = array<i32>} : memref<2x22x1x22xf32, #tpu.memory_space<vmem>>, vector<1x1x1x16xf32>,
    %48 = vector.extract_strided_slice %6 {offsets = [0, 80], sizes = [1, 16], strides = [1, 1]} : vector<1x256xf32> to vector<1x16xf32>
    %c0_39 = arith.constant 0 : index
    %c8 = arith.constant 8 : index
    %c0_40 = arith.constant 0 : index
    %c3_41 = arith.constant 3 : index
    %49 = vector.load %arg6[%c0_39, %c8, %c0_40, %c3_41] : memref<2x22x1x22xf32, #tpu.memory_space<vmem>>, vector<1x1x1x16xf32>
    %50 = vector.shape_cast %49 : vector<1x1x1x16xf32> to vector<1x16xf32>
    %51 = vector.shape_cast %48 : vector<1x16xf32> to vector<1x1x1x16xf32>
    tpu.vector_store %arg6[%c0_39, %c8, %c0_40, %c3_41], %51 {strides = array<i32>} : memref<2x22x1x22xf32, #tpu.memory_space<vmem>>, vector<1x1x1x16xf32>,
    %52 = vector.extract_strided_slice %7 {offsets = [0, 80], sizes = [1, 16], strides = [1, 1]} : vector<1x256xf32> to vector<1x16xf32>
    %c1_42 = arith.constant 1 : index
    %c8_43 = arith.constant 8 : index
    %c0_44 = arith.constant 0 : index
    %c3_45 = arith.constant 3 : index
    %53 = vector.load %arg6[%c1_42, %c8_43, %c0_44, %c3_45] : memref<2x22x1x22xf32, #tpu.memory_space<vmem>>, vector<1x1x1x16xf32>
    %54 = vector.shape_cast %53 : vector<1x1x1x16xf32> to vector<1x16xf32>
    %55 = vector.shape_cast %52 : vector<1x16xf32> to vector<1x1x1x16xf32>
    tpu.vector_store %arg6[%c1_42, %c8_43, %c0_44, %c3_45], %55 {strides = array<i32>} : memref<2x22x1x22xf32, #tpu.memory_space<vmem>>, vector<1x1x1x16xf32>,
    %56 = vector.extract_strided_slice %6 {offsets = [0, 96], sizes = [1, 16], strides = [1, 1]} : vector<1x256xf32> to vector<1x16xf32>
    %c0_46 = arith.constant 0 : index
    %c9 = arith.constant 9 : index
    %c0_47 = arith.constant 0 : index
    %c3_48 = arith.constant 3 : index
    %57 = vector.load %arg6[%c0_46, %c9, %c0_47, %c3_48] : memref<2x22x1x22xf32, #tpu.memory_space<vmem>>, vector<1x1x1x16xf32>
    %58 = vector.shape_cast %57 : vector<1x1x1x16xf32> to vector<1x16xf32>
    %59 = vector.shape_cast %56 : vector<1x16xf32> to vector<1x1x1x16xf32>
    tpu.vector_store %arg6[%c0_46, %c9, %c0_47, %c3_48], %59 {strides = array<i32>} : memref<2x22x1x22xf32, #tpu.memory_space<vmem>>, vector<1x1x1x16xf32>,
    %60 = vector.extract_strided_slice %7 {offsets = [0, 96], sizes = [1, 16], strides = [1, 1]} : vector<1x256xf32> to vector<1x16xf32>
    %c1_49 = arith.constant 1 : index
    %c9_50 = arith.constant 9 : index
    %c0_51 = arith.constant 0 : index
    %c3_52 = arith.constant 3 : index
    %61 = vector.load %arg6[%c1_49, %c9_50, %c0_51, %c3_52] : memref<2x22x1x22xf32, #tpu.memory_space<vmem>>, vector<1x1x1x16xf32>
    %62 = vector.shape_cast %61 : vector<1x1x1x16xf32> to vector<1x16xf32>
    %63 = vector.shape_cast %60 : vector<1x16xf32> to vector<1x1x1x16xf32>
    tpu.vector_store %arg6[%c1_49, %c9_50, %c0_51, %c3_52], %63 {strides = array<i32>} : memref<2x22x1x22xf32, #tpu.memory_space<vmem>>, vector<1x1x1x16xf32>,
    %64 = vector.extract_strided_slice %6 {offsets = [0, 112], sizes = [1, 16], strides = [1, 1]} : vector<1x256xf32> to vector<1x16xf32>
    %c0_53 = arith.constant 0 : index
    %c10 = arith.constant 10 : index
    %c0_54 = arith.constant 0 : index
    %c3_55 = arith.constant 3 : index
    %65 = vector.load %arg6[%c0_53, %c10, %c0_54, %c3_55] : memref<2x22x1x22xf32, #tpu.memory_space<vmem>>, vector<1x1x1x16xf32>
    %66 = vector.shape_cast %65 : vector<1x1x1x16xf32> to vector<1x16xf32>
    %67 = vector.shape_cast %64 : vector<1x16xf32> to vector<1x1x1x16xf32>
    tpu.vector_store %arg6[%c0_53, %c10, %c0_54, %c3_55], %67 {strides = array<i32>} : memref<2x22x1x22xf32, #tpu.memory_space<vmem>>, vector<1x1x1x16xf32>,
    %68 = vector.extract_strided_slice %7 {offsets = [0, 112], sizes = [1, 16], strides = [1, 1]} : vector<1x256xf32> to vector<1x16xf32>
    %c1_56 = arith.constant 1 : index
    %c10_57 = arith.constant 10 : index
    %c0_58 = arith.constant 0 : index
    %c3_59 = arith.constant 3 : index
    %69 = vector.load %arg6[%c1_56, %c10_57, %c0_58, %c3_59] : memref<2x22x1x22xf32, #tpu.memory_space<vmem>>, vector<1x1x1x16xf32>
    %70 = vector.shape_cast %69 : vector<1x1x1x16xf32> to vector<1x16xf32>
    %71 = vector.shape_cast %68 : vector<1x16xf32> to vector<1x1x1x16xf32>
    tpu.vector_store %arg6[%c1_56, %c10_57, %c0_58, %c3_59], %71 {strides = array<i32>} : memref<2x22x1x22xf32, #tpu.memory_space<vmem>>, vector<1x1x1x16xf32>,
    %72 = vector.extract_strided_slice %6 {offsets = [0, 128], sizes = [1, 16], strides = [1, 1]} : vector<1x256xf32> to vector<1x16xf32>
    %c0_60 = arith.constant 0 : index
    %c11 = arith.constant 11 : index
    %c0_61 = arith.constant 0 : index
    %c3_62 = arith.constant 3 : index
    %73 = vector.load %arg6[%c0_60, %c11, %c0_61, %c3_62] : memref<2x22x1x22xf32, #tpu.memory_space<vmem>>, vector<1x1x1x16xf32>
    %74 = vector.shape_cast %73 : vector<1x1x1x16xf32> to vector<1x16xf32>
    %75 = vector.shape_cast %72 : vector<1x16xf32> to vector<1x1x1x16xf32>
    tpu.vector_store %arg6[%c0_60, %c11, %c0_61, %c3_62], %75 {strides = array<i32>} : memref<2x22x1x22xf32, #tpu.memory_space<vmem>>, vector<1x1x1x16xf32>,
    %76 = vector.extract_strided_slice %7 {offsets = [0, 128], sizes = [1, 16], strides = [1, 1]} : vector<1x256xf32> to vector<1x16xf32>
    %c1_63 = arith.constant 1 : index
    %c11_64 = arith.constant 11 : index
    %c0_65 = arith.constant 0 : index
    %c3_66 = arith.constant 3 : index
    %77 = vector.load %arg6[%c1_63, %c11_64, %c0_65, %c3_66] : memref<2x22x1x22xf32, #tpu.memory_space<vmem>>, vector<1x1x1x16xf32>
    %78 = vector.shape_cast %77 : vector<1x1x1x16xf32> to vector<1x16xf32>
    %79 = vector.shape_cast %76 : vector<1x16xf32> to vector<1x1x1x16xf32>
    tpu.vector_store %arg6[%c1_63, %c11_64, %c0_65, %c3_66], %79 {strides = array<i32>} : memref<2x22x1x22xf32, #tpu.memory_space<vmem>>, vector<1x1x1x16xf32>,
    %80 = vector.extract_strided_slice %6 {offsets = [0, 144], sizes = [1, 16], strides = [1, 1]} : vector<1x256xf32> to vector<1x16xf32>
    %c0_67 = arith.constant 0 : index
    %c12 = arith.constant 12 : index
    %c0_68 = arith.constant 0 : index
    %c3_69 = arith.constant 3 : index
    %81 = vector.load %arg6[%c0_67, %c12, %c0_68, %c3_69] : memref<2x22x1x22xf32, #tpu.memory_space<vmem>>, vector<1x1x1x16xf32>
    %82 = vector.shape_cast %81 : vector<1x1x1x16xf32> to vector<1x16xf32>
    %83 = vector.shape_cast %80 : vector<1x16xf32> to vector<1x1x1x16xf32>
    tpu.vector_store %arg6[%c0_67, %c12, %c0_68, %c3_69], %83 {strides = array<i32>} : memref<2x22x1x22xf32, #tpu.memory_space<vmem>>, vector<1x1x1x16xf32>,
    %84 = vector.extract_strided_slice %7 {offsets = [0, 144], sizes = [1, 16], strides = [1, 1]} : vector<1x256xf32> to vector<1x16xf32>
    %c1_70 = arith.constant 1 : index
    %c12_71 = arith.constant 12 : index
    %c0_72 = arith.constant 0 : index
    %c3_73 = arith.constant 3 : index
    %85 = vector.load %arg6[%c1_70, %c12_71, %c0_72, %c3_73] : memref<2x22x1x22xf32, #tpu.memory_space<vmem>>, vector<1x1x1x16xf32>
    %86 = vector.shape_cast %85 : vector<1x1x1x16xf32> to vector<1x16xf32>
    %87 = vector.shape_cast %84 : vector<1x16xf32> to vector<1x1x1x16xf32>
    tpu.vector_store %arg6[%c1_70, %c12_71, %c0_72, %c3_73], %87 {strides = array<i32>} : memref<2x22x1x22xf32, #tpu.memory_space<vmem>>, vector<1x1x1x16xf32>,
    %88 = vector.extract_strided_slice %6 {offsets = [0, 160], sizes = [1, 16], strides = [1, 1]} : vector<1x256xf32> to vector<1x16xf32>
    %c0_74 = arith.constant 0 : index
    %c13 = arith.constant 13 : index
    %c0_75 = arith.constant 0 : index
    %c3_76 = arith.constant 3 : index
    %89 = vector.load %arg6[%c0_74, %c13, %c0_75, %c3_76] : memref<2x22x1x22xf32, #tpu.memory_space<vmem>>, vector<1x1x1x16xf32>
    %90 = vector.shape_cast %89 : vector<1x1x1x16xf32> to vector<1x16xf32>
    %91 = vector.shape_cast %88 : vector<1x16xf32> to vector<1x1x1x16xf32>
    tpu.vector_store %arg6[%c0_74, %c13, %c0_75, %c3_76], %91 {strides = array<i32>} : memref<2x22x1x22xf32, #tpu.memory_space<vmem>>, vector<1x1x1x16xf32>,
    %92 = vector.extract_strided_slice %7 {offsets = [0, 160], sizes = [1, 16], strides = [1, 1]} : vector<1x256xf32> to vector<1x16xf32>
    %c1_77 = arith.constant 1 : index
    %c13_78 = arith.constant 13 : index
    %c0_79 = arith.constant 0 : index
    %c3_80 = arith.constant 3 : index
    %93 = vector.load %arg6[%c1_77, %c13_78, %c0_79, %c3_80] : memref<2x22x1x22xf32, #tpu.memory_space<vmem>>, vector<1x1x1x16xf32>
    %94 = vector.shape_cast %93 : vector<1x1x1x16xf32> to vector<1x16xf32>
    %95 = vector.shape_cast %92 : vector<1x16xf32> to vector<1x1x1x16xf32>
    tpu.vector_store %arg6[%c1_77, %c13_78, %c0_79, %c3_80], %95 {strides = array<i32>} : memref<2x22x1x22xf32, #tpu.memory_space<vmem>>, vector<1x1x1x16xf32>,
    %96 = vector.extract_strided_slice %6 {offsets = [0, 176], sizes = [1, 16], strides = [1, 1]} : vector<1x256xf32> to vector<1x16xf32>
    %c0_81 = arith.constant 0 : index
    %c14 = arith.constant 14 : index
    %c0_82 = arith.constant 0 : index
    %c3_83 = arith.constant 3 : index
    %97 = vector.load %arg6[%c0_81, %c14, %c0_82, %c3_83] : memref<2x22x1x22xf32, #tpu.memory_space<vmem>>, vector<1x1x1x16xf32>
    %98 = vector.shape_cast %97 : vector<1x1x1x16xf32> to vector<1x16xf32>
    %99 = vector.shape_cast %96 : vector<1x16xf32> to vector<1x1x1x16xf32>
    tpu.vector_store %arg6[%c0_81, %c14, %c0_82, %c3_83], %99 {strides = array<i32>} : memref<2x22x1x22xf32, #tpu.memory_space<vmem>>, vector<1x1x1x16xf32>,
    %100 = vector.extract_strided_slice %7 {offsets = [0, 176], sizes = [1, 16], strides = [1, 1]} : vector<1x256xf32> to vector<1x16xf32>
    %c1_84 = arith.constant 1 : index
    %c14_85 = arith.constant 14 : index
    %c0_86 = arith.constant 0 : index
    %c3_87 = arith.constant 3 : index
    %101 = vector.load %arg6[%c1_84, %c14_85, %c0_86, %c3_87] : memref<2x22x1x22xf32, #tpu.memory_space<vmem>>, vector<1x1x1x16xf32>
    %102 = vector.shape_cast %101 : vector<1x1x1x16xf32> to vector<1x16xf32>
    %103 = vector.shape_cast %100 : vector<1x16xf32> to vector<1x1x1x16xf32>
    tpu.vector_store %arg6[%c1_84, %c14_85, %c0_86, %c3_87], %103 {strides = array<i32>} : memref<2x22x1x22xf32, #tpu.memory_space<vmem>>, vector<1x1x1x16xf32>,
    %104 = vector.extract_strided_slice %6 {offsets = [0, 192], sizes = [1, 16], strides = [1, 1]} : vector<1x256xf32> to vector<1x16xf32>
    %c0_88 = arith.constant 0 : index
    %c15 = arith.constant 15 : index
    %c0_89 = arith.constant 0 : index
    %c3_90 = arith.constant 3 : index
    %105 = vector.load %arg6[%c0_88, %c15, %c0_89, %c3_90] : memref<2x22x1x22xf32, #tpu.memory_space<vmem>>, vector<1x1x1x16xf32>
    %106 = vector.shape_cast %105 : vector<1x1x1x16xf32> to vector<1x16xf32>
    %107 = vector.shape_cast %104 : vector<1x16xf32> to vector<1x1x1x16xf32>
    tpu.vector_store %arg6[%c0_88, %c15, %c0_89, %c3_90], %107 {strides = array<i32>} : memref<2x22x1x22xf32, #tpu.memory_space<vmem>>, vector<1x1x1x16xf32>,
    %108 = vector.extract_strided_slice %7 {offsets = [0, 192], sizes = [1, 16], strides = [1, 1]} : vector<1x256xf32> to vector<1x16xf32>
    %c1_91 = arith.constant 1 : index
    %c15_92 = arith.constant 15 : index
    %c0_93 = arith.constant 0 : index
    %c3_94 = arith.constant 3 : index
    %109 = vector.load %arg6[%c1_91, %c15_92, %c0_93, %c3_94] : memref<2x22x1x22xf32, #tpu.memory_space<vmem>>, vector<1x1x1x16xf32>
    %110 = vector.shape_cast %109 : vector<1x1x1x16xf32> to vector<1x16xf32>
    %111 = vector.shape_cast %108 : vector<1x16xf32> to vector<1x1x1x16xf32>
    tpu.vector_store %arg6[%c1_91, %c15_92, %c0_93, %c3_94], %111 {strides = array<i32>} : memref<2x22x1x22xf32, #tpu.memory_space<vmem>>, vector<1x1x1x16xf32>,
    %112 = vector.extract_strided_slice %6 {offsets = [0, 208], sizes = [1, 16], strides = [1, 1]} : vector<1x256xf32> to vector<1x16xf32>
    %c0_95 = arith.constant 0 : index
    %c16 = arith.constant 16 : index
    %c0_96 = arith.constant 0 : index
    %c3_97 = arith.constant 3 : index
    %113 = vector.load %arg6[%c0_95, %c16, %c0_96, %c3_97] : memref<2x22x1x22xf32, #tpu.memory_space<vmem>>, vector<1x1x1x16xf32>
    %114 = vector.shape_cast %113 : vector<1x1x1x16xf32> to vector<1x16xf32>
    %115 = vector.shape_cast %112 : vector<1x16xf32> to vector<1x1x1x16xf32>
    tpu.vector_store %arg6[%c0_95, %c16, %c0_96, %c3_97], %115 {strides = array<i32>} : memref<2x22x1x22xf32, #tpu.memory_space<vmem>>, vector<1x1x1x16xf32>,
    %116 = vector.extract_strided_slice %7 {offsets = [0, 208], sizes = [1, 16], strides = [1, 1]} : vector<1x256xf32> to vector<1x16xf32>
    %c1_98 = arith.constant 1 : index
    %c16_99 = arith.constant 16 : index
    %c0_100 = arith.constant 0 : index
    %c3_101 = arith.constant 3 : index
    %117 = vector.load %arg6[%c1_98, %c16_99, %c0_100, %c3_101] : memref<2x22x1x22xf32, #tpu.memory_space<vmem>>, vector<1x1x1x16xf32>
    %118 = vector.shape_cast %117 : vector<1x1x1x16xf32> to vector<1x16xf32>
    %119 = vector.shape_cast %116 : vector<1x16xf32> to vector<1x1x1x16xf32>
    tpu.vector_store %arg6[%c1_98, %c16_99, %c0_100, %c3_101], %119 {strides = array<i32>} : memref<2x22x1x22xf32, #tpu.memory_space<vmem>>, vector<1x1x1x16xf32>,
    %120 = vector.extract_strided_slice %6 {offsets = [0, 224], sizes = [1, 16], strides = [1, 1]} : vector<1x256xf32> to vector<1x16xf32>
    %c0_102 = arith.constant 0 : index
    %c17 = arith.constant 17 : index
    %c0_103 = arith.constant 0 : index
    %c3_104 = arith.constant 3 : index
    %121 = vector.load %arg6[%c0_102, %c17, %c0_103, %c3_104] : memref<2x22x1x22xf32, #tpu.memory_space<vmem>>, vector<1x1x1x16xf32>
    %122 = vector.shape_cast %121 : vector<1x1x1x16xf32> to vector<1x16xf32>
    %123 = vector.shape_cast %120 : vector<1x16xf32> to vector<1x1x1x16xf32>
    tpu.vector_store %arg6[%c0_102, %c17, %c0_103, %c3_104], %123 {strides = array<i32>} : memref<2x22x1x22xf32, #tpu.memory_space<vmem>>, vector<1x1x1x16xf32>,
    %124 = vector.extract_strided_slice %7 {offsets = [0, 224], sizes = [1, 16], strides = [1, 1]} : vector<1x256xf32> to vector<1x16xf32>
    %c1_105 = arith.constant 1 : index
    %c17_106 = arith.constant 17 : index
    %c0_107 = arith.constant 0 : index
    %c3_108 = arith.constant 3 : index
    %125 = vector.load %arg6[%c1_105, %c17_106, %c0_107, %c3_108] : memref<2x22x1x22xf32, #tpu.memory_space<vmem>>, vector<1x1x1x16xf32>
    %126 = vector.shape_cast %125 : vector<1x1x1x16xf32> to vector<1x16xf32>
    %127 = vector.shape_cast %124 : vector<1x16xf32> to vector<1x1x1x16xf32>
    tpu.vector_store %arg6[%c1_105, %c17_106, %c0_107, %c3_108], %127 {strides = array<i32>} : memref<2x22x1x22xf32, #tpu.memory_space<vmem>>, vector<1x1x1x16xf32>,
    %128 = vector.extract_strided_slice %6 {offsets = [0, 240], sizes = [1, 16], strides = [1, 1]} : vector<1x256xf32> to vector<1x16xf32>
    %c0_109 = arith.constant 0 : index
    %c18 = arith.constant 18 : index
    %c0_110 = arith.constant 0 : index
    %c3_111 = arith.constant 3 : index
    %129 = vector.load %arg6[%c0_109, %c18, %c0_110, %c3_111] : memref<2x22x1x22xf32, #tpu.memory_space<vmem>>, vector<1x1x1x16xf32>
    %130 = vector.shape_cast %129 : vector<1x1x1x16xf32> to vector<1x16xf32>
    %131 = vector.shape_cast %128 : vector<1x16xf32> to vector<1x1x1x16xf32>
    tpu.vector_store %arg6[%c0_109, %c18, %c0_110, %c3_111], %131 {strides = array<i32>} : memref<2x22x1x22xf32, #tpu.memory_space<vmem>>, vector<1x1x1x16xf32>,
    %132 = vector.extract_strided_slice %7 {offsets = [0, 240], sizes = [1, 16], strides = [1, 1]} : vector<1x256xf32> to vector<1x16xf32>
    %c1_112 = arith.constant 1 : index
    %c18_113 = arith.constant 18 : index
    %c0_114 = arith.constant 0 : index
    %c3_115 = arith.constant 3 : index
    %133 = vector.load %arg6[%c1_112, %c18_113, %c0_114, %c3_115] : memref<2x22x1x22xf32, #tpu.memory_space<vmem>>, vector<1x1x1x16xf32>
    %134 = vector.shape_cast %133 : vector<1x1x1x16xf32> to vector<1x16xf32>
    %135 = vector.shape_cast %132 : vector<1x16xf32> to vector<1x1x1x16xf32>
    tpu.vector_store %arg6[%c1_112, %c18_113, %c0_114, %c3_115], %135 {strides = array<i32>} : memref<2x22x1x22xf32, #tpu.memory_space<vmem>>, vector<1x1x1x16xf32>,
    %c0_116 = arith.constant 0 : index
    %136 = memref.load %arg3[%c0_116] : memref<2xf32, #tpu.memory_space<smem>>
    %137 = vector.broadcast %136 : f32 to vector<16x1x16xf32>
    %c0_117 = arith.constant 0 : index
    %c0_118 = arith.constant 0 : index
    %c0_119 = arith.constant 0 : index
    %c0_120 = arith.constant 0 : index
    %138 = vector.load %arg6[%c0_117, %c0_118, %c0_119, %c0_120] : memref<2x22x1x22xf32, #tpu.memory_space<vmem>>, vector<1x22x1x22xf32>
    %139 = vector.shape_cast %138 : vector<1x22x1x22xf32> to vector<22x1x22xf32>
    %140 = vector.extract_strided_slice %139 {offsets = [0, 0, 0], sizes = [22, 1, 16], strides = [1, 1, 1]} : vector<22x1x22xf32> to vector<22x1x16xf32>
    %141 = vector.extract_strided_slice %139 {offsets = [0, 0, 1], sizes = [22, 1, 16], strides = [1, 1, 1]} : vector<22x1x22xf32> to vector<22x1x16xf32>
    %142 = vector.extract_strided_slice %139 {offsets = [0, 0, 2], sizes = [22, 1, 16], strides = [1, 1, 1]} : vector<22x1x22xf32> to vector<22x1x16xf32>
    %143 = vector.extract_strided_slice %139 {offsets = [0, 0, 3], sizes = [22, 1, 16], strides = [1, 1, 1]} : vector<22x1x22xf32> to vector<22x1x16xf32>
    %144 = vector.extract_strided_slice %139 {offsets = [0, 0, 4], sizes = [22, 1, 16], strides = [1, 1, 1]} : vector<22x1x22xf32> to vector<22x1x16xf32>
    %145 = vector.extract_strided_slice %139 {offsets = [0, 0, 5], sizes = [22, 1, 16], strides = [1, 1, 1]} : vector<22x1x22xf32> to vector<22x1x16xf32>
    %146 = vector.extract_strided_slice %139 {offsets = [0, 0, 6], sizes = [22, 1, 16], strides = [1, 1, 1]} : vector<22x1x22xf32> to vector<22x1x16xf32>
    %c0_121 = arith.constant 0 : index
    %147 = memref.load %arg1[%c0_121] : memref<98xf32, #tpu.memory_space<smem>>
    %148 = vector.extract_strided_slice %140 {offsets = [0, 0, 0], sizes = [16, 1, 16], strides = [1, 1, 1]} : vector<22x1x16xf32> to vector<16x1x16xf32>
    %149 = vector.broadcast %147 : f32 to vector<16x1x16xf32>
    %150 = arith.mulf %149, %148 : vector<16x1x16xf32>
    %151 = arith.addf %137, %150 : vector<16x1x16xf32>
    %c1_122 = arith.constant 1 : index
    %152 = memref.load %arg1[%c1_122] : memref<98xf32, #tpu.memory_space<smem>>
    %153 = vector.extract_strided_slice %141 {offsets = [0, 0, 0], sizes = [16, 1, 16], strides = [1, 1, 1]} : vector<22x1x16xf32> to vector<16x1x16xf32>
    %154 = vector.broadcast %152 : f32 to vector<16x1x16xf32>
    %155 = arith.mulf %154, %153 : vector<16x1x16xf32>
    %156 = arith.addf %151, %155 : vector<16x1x16xf32>
    %c2 = arith.constant 2 : index
    %157 = memref.load %arg1[%c2] : memref<98xf32, #tpu.memory_space<smem>>
    %158 = vector.extract_strided_slice %142 {offsets = [0, 0, 0], sizes = [16, 1, 16], strides = [1, 1, 1]} : vector<22x1x16xf32> to vector<16x1x16xf32>
    %159 = vector.broadcast %157 : f32 to vector<16x1x16xf32>
    %160 = arith.mulf %159, %158 : vector<16x1x16xf32>
    %161 = arith.addf %156, %160 : vector<16x1x16xf32>
    %c3_123 = arith.constant 3 : index
    %162 = memref.load %arg1[%c3_123] : memref<98xf32, #tpu.memory_space<smem>>
    %163 = vector.extract_strided_slice %143 {offsets = [0, 0, 0], sizes = [16, 1, 16], strides = [1, 1, 1]} : vector<22x1x16xf32> to vector<16x1x16xf32>
    %164 = vector.broadcast %162 : f32 to vector<16x1x16xf32>
    %165 = arith.mulf %164, %163 : vector<16x1x16xf32>
    %166 = arith.addf %161, %165 : vector<16x1x16xf32>
    %c4_124 = arith.constant 4 : index
    %167 = memref.load %arg1[%c4_124] : memref<98xf32, #tpu.memory_space<smem>>
    %168 = vector.extract_strided_slice %144 {offsets = [0, 0, 0], sizes = [16, 1, 16], strides = [1, 1, 1]} : vector<22x1x16xf32> to vector<16x1x16xf32>
    %169 = vector.broadcast %167 : f32 to vector<16x1x16xf32>
    %170 = arith.mulf %169, %168 : vector<16x1x16xf32>
    %171 = arith.addf %166, %170 : vector<16x1x16xf32>
    %c5_125 = arith.constant 5 : index
    %172 = memref.load %arg1[%c5_125] : memref<98xf32, #tpu.memory_space<smem>>
    %173 = vector.extract_strided_slice %145 {offsets = [0, 0, 0], sizes = [16, 1, 16], strides = [1, 1, 1]} : vector<22x1x16xf32> to vector<16x1x16xf32>
    %174 = vector.broadcast %172 : f32 to vector<16x1x16xf32>
    %175 = arith.mulf %174, %173 : vector<16x1x16xf32>
    %176 = arith.addf %171, %175 : vector<16x1x16xf32>
    %c6_126 = arith.constant 6 : index
    %177 = memref.load %arg1[%c6_126] : memref<98xf32, #tpu.memory_space<smem>>
    %178 = vector.extract_strided_slice %146 {offsets = [0, 0, 0], sizes = [16, 1, 16], strides = [1, 1, 1]} : vector<22x1x16xf32> to vector<16x1x16xf32>
    %179 = vector.broadcast %177 : f32 to vector<16x1x16xf32>
    %180 = arith.mulf %179, %178 : vector<16x1x16xf32>
    %181 = arith.addf %176, %180 : vector<16x1x16xf32>
    %c7_127 = arith.constant 7 : index
    %182 = memref.load %arg1[%c7_127] : memref<98xf32, #tpu.memory_space<smem>>
    %183 = vector.extract_strided_slice %140 {offsets = [1, 0, 0], sizes = [16, 1, 16], strides = [1, 1, 1]} : vector<22x1x16xf32> to vector<16x1x16xf32>
    %184 = vector.broadcast %182 : f32 to vector<16x1x16xf32>
    %185 = arith.mulf %184, %183 : vector<16x1x16xf32>
    %186 = arith.addf %181, %185 : vector<16x1x16xf32>
    %c8_128 = arith.constant 8 : index
    %187 = memref.load %arg1[%c8_128] : memref<98xf32, #tpu.memory_space<smem>>
    %188 = vector.extract_strided_slice %141 {offsets = [1, 0, 0], sizes = [16, 1, 16], strides = [1, 1, 1]} : vector<22x1x16xf32> to vector<16x1x16xf32>
    %189 = vector.broadcast %187 : f32 to vector<16x1x16xf32>
    %190 = arith.mulf %189, %188 : vector<16x1x16xf32>
    %191 = arith.addf %186, %190 : vector<16x1x16xf32>
    %c9_129 = arith.constant 9 : index
    %192 = memref.load %arg1[%c9_129] : memref<98xf32, #tpu.memory_space<smem>>
    %193 = vector.extract_strided_slice %142 {offsets = [1, 0, 0], sizes = [16, 1, 16], strides = [1, 1, 1]} : vector<22x1x16xf32> to vector<16x1x16xf32>
    %194 = vector.broadcast %192 : f32 to vector<16x1x16xf32>
    %195 = arith.mulf %194, %193 : vector<16x1x16xf32>
    %196 = arith.addf %191, %195 : vector<16x1x16xf32>
    %c10_130 = arith.constant 10 : index
    %197 = memref.load %arg1[%c10_130] : memref<98xf32, #tpu.memory_space<smem>>
    %198 = vector.extract_strided_slice %143 {offsets = [1, 0, 0], sizes = [16, 1, 16], strides = [1, 1, 1]} : vector<22x1x16xf32> to vector<16x1x16xf32>
    %199 = vector.broadcast %197 : f32 to vector<16x1x16xf32>
    %200 = arith.mulf %199, %198 : vector<16x1x16xf32>
    %201 = arith.addf %196, %200 : vector<16x1x16xf32>
    %c11_131 = arith.constant 11 : index
    %202 = memref.load %arg1[%c11_131] : memref<98xf32, #tpu.memory_space<smem>>
    %203 = vector.extract_strided_slice %144 {offsets = [1, 0, 0], sizes = [16, 1, 16], strides = [1, 1, 1]} : vector<22x1x16xf32> to vector<16x1x16xf32>
    %204 = vector.broadcast %202 : f32 to vector<16x1x16xf32>
    %205 = arith.mulf %204, %203 : vector<16x1x16xf32>
    %206 = arith.addf %201, %205 : vector<16x1x16xf32>
    %c12_132 = arith.constant 12 : index
    %207 = memref.load %arg1[%c12_132] : memref<98xf32, #tpu.memory_space<smem>>
    %208 = vector.extract_strided_slice %145 {offsets = [1, 0, 0], sizes = [16, 1, 16], strides = [1, 1, 1]} : vector<22x1x16xf32> to vector<16x1x16xf32>
    %209 = vector.broadcast %207 : f32 to vector<16x1x16xf32>
    %210 = arith.mulf %209, %208 : vector<16x1x16xf32>
    %211 = arith.addf %206, %210 : vector<16x1x16xf32>
    %c13_133 = arith.constant 13 : index
    %212 = memref.load %arg1[%c13_133] : memref<98xf32, #tpu.memory_space<smem>>
    %213 = vector.extract_strided_slice %146 {offsets = [1, 0, 0], sizes = [16, 1, 16], strides = [1, 1, 1]} : vector<22x1x16xf32> to vector<16x1x16xf32>
    %214 = vector.broadcast %212 : f32 to vector<16x1x16xf32>
    %215 = arith.mulf %214, %213 : vector<16x1x16xf32>
    %216 = arith.addf %211, %215 : vector<16x1x16xf32>
    %c14_134 = arith.constant 14 : index
    %217 = memref.load %arg1[%c14_134] : memref<98xf32, #tpu.memory_space<smem>>
    %218 = vector.extract_strided_slice %140 {offsets = [2, 0, 0], sizes = [16, 1, 16], strides = [1, 1, 1]} : vector<22x1x16xf32> to vector<16x1x16xf32>
    %219 = vector.broadcast %217 : f32 to vector<16x1x16xf32>
    %220 = arith.mulf %219, %218 : vector<16x1x16xf32>
    %221 = arith.addf %216, %220 : vector<16x1x16xf32>
    %c15_135 = arith.constant 15 : index
    %222 = memref.load %arg1[%c15_135] : memref<98xf32, #tpu.memory_space<smem>>
    %223 = vector.extract_strided_slice %141 {offsets = [2, 0, 0], sizes = [16, 1, 16], strides = [1, 1, 1]} : vector<22x1x16xf32> to vector<16x1x16xf32>
    %224 = vector.broadcast %222 : f32 to vector<16x1x16xf32>
    %225 = arith.mulf %224, %223 : vector<16x1x16xf32>
    %226 = arith.addf %221, %225 : vector<16x1x16xf32>
    %c16_136 = arith.constant 16 : index
    %227 = memref.load %arg1[%c16_136] : memref<98xf32, #tpu.memory_space<smem>>
    %228 = vector.extract_strided_slice %142 {offsets = [2, 0, 0], sizes = [16, 1, 16], strides = [1, 1, 1]} : vector<22x1x16xf32> to vector<16x1x16xf32>
    %229 = vector.broadcast %227 : f32 to vector<16x1x16xf32>
    %230 = arith.mulf %229, %228 : vector<16x1x16xf32>
    %231 = arith.addf %226, %230 : vector<16x1x16xf32>
    %c17_137 = arith.constant 17 : index
    %232 = memref.load %arg1[%c17_137] : memref<98xf32, #tpu.memory_space<smem>>
    %233 = vector.extract_strided_slice %143 {offsets = [2, 0, 0], sizes = [16, 1, 16], strides = [1, 1, 1]} : vector<22x1x16xf32> to vector<16x1x16xf32>
    %234 = vector.broadcast %232 : f32 to vector<16x1x16xf32>
    %235 = arith.mulf %234, %233 : vector<16x1x16xf32>
    %236 = arith.addf %231, %235 : vector<16x1x16xf32>
    %c18_138 = arith.constant 18 : index
    %237 = memref.load %arg1[%c18_138] : memref<98xf32, #tpu.memory_space<smem>>
    %238 = vector.extract_strided_slice %144 {offsets = [2, 0, 0], sizes = [16, 1, 16], strides = [1, 1, 1]} : vector<22x1x16xf32> to vector<16x1x16xf32>
    %239 = vector.broadcast %237 : f32 to vector<16x1x16xf32>
    %240 = arith.mulf %239, %238 : vector<16x1x16xf32>
    %241 = arith.addf %236, %240 : vector<16x1x16xf32>
    %c19 = arith.constant 19 : index
    %242 = memref.load %arg1[%c19] : memref<98xf32, #tpu.memory_space<smem>>
    %243 = vector.extract_strided_slice %145 {offsets = [2, 0, 0], sizes = [16, 1, 16], strides = [1, 1, 1]} : vector<22x1x16xf32> to vector<16x1x16xf32>
    %244 = vector.broadcast %242 : f32 to vector<16x1x16xf32>
    %245 = arith.mulf %244, %243 : vector<16x1x16xf32>
    %246 = arith.addf %241, %245 : vector<16x1x16xf32>
    %c20 = arith.constant 20 : index
    %247 = memref.load %arg1[%c20] : memref<98xf32, #tpu.memory_space<smem>>
    %248 = vector.extract_strided_slice %146 {offsets = [2, 0, 0], sizes = [16, 1, 16], strides = [1, 1, 1]} : vector<22x1x16xf32> to vector<16x1x16xf32>
    %249 = vector.broadcast %247 : f32 to vector<16x1x16xf32>
    %250 = arith.mulf %249, %248 : vector<16x1x16xf32>
    %251 = arith.addf %246, %250 : vector<16x1x16xf32>
    %c21 = arith.constant 21 : index
    %252 = memref.load %arg1[%c21] : memref<98xf32, #tpu.memory_space<smem>>
    %253 = vector.extract_strided_slice %140 {offsets = [3, 0, 0], sizes = [16, 1, 16], strides = [1, 1, 1]} : vector<22x1x16xf32> to vector<16x1x16xf32>
    %254 = vector.broadcast %252 : f32 to vector<16x1x16xf32>
    %255 = arith.mulf %254, %253 : vector<16x1x16xf32>
    %256 = arith.addf %251, %255 : vector<16x1x16xf32>
    %c22 = arith.constant 22 : index
    %257 = memref.load %arg1[%c22] : memref<98xf32, #tpu.memory_space<smem>>
    %258 = vector.extract_strided_slice %141 {offsets = [3, 0, 0], sizes = [16, 1, 16], strides = [1, 1, 1]} : vector<22x1x16xf32> to vector<16x1x16xf32>
    %259 = vector.broadcast %257 : f32 to vector<16x1x16xf32>
    %260 = arith.mulf %259, %258 : vector<16x1x16xf32>
    %261 = arith.addf %256, %260 : vector<16x1x16xf32>
    %c23 = arith.constant 23 : index
    %262 = memref.load %arg1[%c23] : memref<98xf32, #tpu.memory_space<smem>>
    %263 = vector.extract_strided_slice %142 {offsets = [3, 0, 0], sizes = [16, 1, 16], strides = [1, 1, 1]} : vector<22x1x16xf32> to vector<16x1x16xf32>
    %264 = vector.broadcast %262 : f32 to vector<16x1x16xf32>
    %265 = arith.mulf %264, %263 : vector<16x1x16xf32>
    %266 = arith.addf %261, %265 : vector<16x1x16xf32>
    %c24 = arith.constant 24 : index
    %267 = memref.load %arg1[%c24] : memref<98xf32, #tpu.memory_space<smem>>
    %268 = vector.extract_strided_slice %143 {offsets = [3, 0, 0], sizes = [16, 1, 16], strides = [1, 1, 1]} : vector<22x1x16xf32> to vector<16x1x16xf32>
    %269 = vector.broadcast %267 : f32 to vector<16x1x16xf32>
    %270 = arith.mulf %269, %268 : vector<16x1x16xf32>
    %271 = arith.addf %266, %270 : vector<16x1x16xf32>
    %c25 = arith.constant 25 : index
    %272 = memref.load %arg1[%c25] : memref<98xf32, #tpu.memory_space<smem>>
    %273 = vector.extract_strided_slice %144 {offsets = [3, 0, 0], sizes = [16, 1, 16], strides = [1, 1, 1]} : vector<22x1x16xf32> to vector<16x1x16xf32>
    %274 = vector.broadcast %272 : f32 to vector<16x1x16xf32>
    %275 = arith.mulf %274, %273 : vector<16x1x16xf32>
    %276 = arith.addf %271, %275 : vector<16x1x16xf32>
    %c26 = arith.constant 26 : index
    %277 = memref.load %arg1[%c26] : memref<98xf32, #tpu.memory_space<smem>>
    %278 = vector.extract_strided_slice %145 {offsets = [3, 0, 0], sizes = [16, 1, 16], strides = [1, 1, 1]} : vector<22x1x16xf32> to vector<16x1x16xf32>
    %279 = vector.broadcast %277 : f32 to vector<16x1x16xf32>
    %280 = arith.mulf %279, %278 : vector<16x1x16xf32>
    %281 = arith.addf %276, %280 : vector<16x1x16xf32>
    %c27 = arith.constant 27 : index
    %282 = memref.load %arg1[%c27] : memref<98xf32, #tpu.memory_space<smem>>
    %283 = vector.extract_strided_slice %146 {offsets = [3, 0, 0], sizes = [16, 1, 16], strides = [1, 1, 1]} : vector<22x1x16xf32> to vector<16x1x16xf32>
    %284 = vector.broadcast %282 : f32 to vector<16x1x16xf32>
    %285 = arith.mulf %284, %283 : vector<16x1x16xf32>
    %286 = arith.addf %281, %285 : vector<16x1x16xf32>
    %c28 = arith.constant 28 : index
    %287 = memref.load %arg1[%c28] : memref<98xf32, #tpu.memory_space<smem>>
    %288 = vector.extract_strided_slice %140 {offsets = [4, 0, 0], sizes = [16, 1, 16], strides = [1, 1, 1]} : vector<22x1x16xf32> to vector<16x1x16xf32>
    %289 = vector.broadcast %287 : f32 to vector<16x1x16xf32>
    %290 = arith.mulf %289, %288 : vector<16x1x16xf32>
    %291 = arith.addf %286, %290 : vector<16x1x16xf32>
    %c29 = arith.constant 29 : index
    %292 = memref.load %arg1[%c29] : memref<98xf32, #tpu.memory_space<smem>>
    %293 = vector.extract_strided_slice %141 {offsets = [4, 0, 0], sizes = [16, 1, 16], strides = [1, 1, 1]} : vector<22x1x16xf32> to vector<16x1x16xf32>
    %294 = vector.broadcast %292 : f32 to vector<16x1x16xf32>
    %295 = arith.mulf %294, %293 : vector<16x1x16xf32>
    %296 = arith.addf %291, %295 : vector<16x1x16xf32>
    %c30 = arith.constant 30 : index
    %297 = memref.load %arg1[%c30] : memref<98xf32, #tpu.memory_space<smem>>
    %298 = vector.extract_strided_slice %142 {offsets = [4, 0, 0], sizes = [16, 1, 16], strides = [1, 1, 1]} : vector<22x1x16xf32> to vector<16x1x16xf32>
    %299 = vector.broadcast %297 : f32 to vector<16x1x16xf32>
    %300 = arith.mulf %299, %298 : vector<16x1x16xf32>
    %301 = arith.addf %296, %300 : vector<16x1x16xf32>
    %c31 = arith.constant 31 : index
    %302 = memref.load %arg1[%c31] : memref<98xf32, #tpu.memory_space<smem>>
    %303 = vector.extract_strided_slice %143 {offsets = [4, 0, 0], sizes = [16, 1, 16], strides = [1, 1, 1]} : vector<22x1x16xf32> to vector<16x1x16xf32>
    %304 = vector.broadcast %302 : f32 to vector<16x1x16xf32>
    %305 = arith.mulf %304, %303 : vector<16x1x16xf32>
    %306 = arith.addf %301, %305 : vector<16x1x16xf32>
    %c32 = arith.constant 32 : index
    %307 = memref.load %arg1[%c32] : memref<98xf32, #tpu.memory_space<smem>>
    %308 = vector.extract_strided_slice %144 {offsets = [4, 0, 0], sizes = [16, 1, 16], strides = [1, 1, 1]} : vector<22x1x16xf32> to vector<16x1x16xf32>
    %309 = vector.broadcast %307 : f32 to vector<16x1x16xf32>
    %310 = arith.mulf %309, %308 : vector<16x1x16xf32>
    %311 = arith.addf %306, %310 : vector<16x1x16xf32>
    %c33 = arith.constant 33 : index
    %312 = memref.load %arg1[%c33] : memref<98xf32, #tpu.memory_space<smem>>
    %313 = vector.extract_strided_slice %145 {offsets = [4, 0, 0], sizes = [16, 1, 16], strides = [1, 1, 1]} : vector<22x1x16xf32> to vector<16x1x16xf32>
    %314 = vector.broadcast %312 : f32 to vector<16x1x16xf32>
    %315 = arith.mulf %314, %313 : vector<16x1x16xf32>
    %316 = arith.addf %311, %315 : vector<16x1x16xf32>
    %c34 = arith.constant 34 : index
    %317 = memref.load %arg1[%c34] : memref<98xf32, #tpu.memory_space<smem>>
    %318 = vector.extract_strided_slice %146 {offsets = [4, 0, 0], sizes = [16, 1, 16], strides = [1, 1, 1]} : vector<22x1x16xf32> to vector<16x1x16xf32>
    %319 = vector.broadcast %317 : f32 to vector<16x1x16xf32>
    %320 = arith.mulf %319, %318 : vector<16x1x16xf32>
    %321 = arith.addf %316, %320 : vector<16x1x16xf32>
    %c35 = arith.constant 35 : index
    %322 = memref.load %arg1[%c35] : memref<98xf32, #tpu.memory_space<smem>>
    %323 = vector.extract_strided_slice %140 {offsets = [5, 0, 0], sizes = [16, 1, 16], strides = [1, 1, 1]} : vector<22x1x16xf32> to vector<16x1x16xf32>
    %324 = vector.broadcast %322 : f32 to vector<16x1x16xf32>
    %325 = arith.mulf %324, %323 : vector<16x1x16xf32>
    %326 = arith.addf %321, %325 : vector<16x1x16xf32>
    %c36 = arith.constant 36 : index
    %327 = memref.load %arg1[%c36] : memref<98xf32, #tpu.memory_space<smem>>
    %328 = vector.extract_strided_slice %141 {offsets = [5, 0, 0], sizes = [16, 1, 16], strides = [1, 1, 1]} : vector<22x1x16xf32> to vector<16x1x16xf32>
    %329 = vector.broadcast %327 : f32 to vector<16x1x16xf32>
    %330 = arith.mulf %329, %328 : vector<16x1x16xf32>
    %331 = arith.addf %326, %330 : vector<16x1x16xf32>
    %c37 = arith.constant 37 : index
    %332 = memref.load %arg1[%c37] : memref<98xf32, #tpu.memory_space<smem>>
    %333 = vector.extract_strided_slice %142 {offsets = [5, 0, 0], sizes = [16, 1, 16], strides = [1, 1, 1]} : vector<22x1x16xf32> to vector<16x1x16xf32>
    %334 = vector.broadcast %332 : f32 to vector<16x1x16xf32>
    %335 = arith.mulf %334, %333 : vector<16x1x16xf32>
    %336 = arith.addf %331, %335 : vector<16x1x16xf32>
    %c38 = arith.constant 38 : index
    %337 = memref.load %arg1[%c38] : memref<98xf32, #tpu.memory_space<smem>>
    %338 = vector.extract_strided_slice %143 {offsets = [5, 0, 0], sizes = [16, 1, 16], strides = [1, 1, 1]} : vector<22x1x16xf32> to vector<16x1x16xf32>
    %339 = vector.broadcast %337 : f32 to vector<16x1x16xf32>
    %340 = arith.mulf %339, %338 : vector<16x1x16xf32>
    %341 = arith.addf %336, %340 : vector<16x1x16xf32>
    %c39 = arith.constant 39 : index
    %342 = memref.load %arg1[%c39] : memref<98xf32, #tpu.memory_space<smem>>
    %343 = vector.extract_strided_slice %144 {offsets = [5, 0, 0], sizes = [16, 1, 16], strides = [1, 1, 1]} : vector<22x1x16xf32> to vector<16x1x16xf32>
    %344 = vector.broadcast %342 : f32 to vector<16x1x16xf32>
    %345 = arith.mulf %344, %343 : vector<16x1x16xf32>
    %346 = arith.addf %341, %345 : vector<16x1x16xf32>
    %c40 = arith.constant 40 : index
    %347 = memref.load %arg1[%c40] : memref<98xf32, #tpu.memory_space<smem>>
    %348 = vector.extract_strided_slice %145 {offsets = [5, 0, 0], sizes = [16, 1, 16], strides = [1, 1, 1]} : vector<22x1x16xf32> to vector<16x1x16xf32>
    %349 = vector.broadcast %347 : f32 to vector<16x1x16xf32>
    %350 = arith.mulf %349, %348 : vector<16x1x16xf32>
    %351 = arith.addf %346, %350 : vector<16x1x16xf32>
    %c41 = arith.constant 41 : index
    %352 = memref.load %arg1[%c41] : memref<98xf32, #tpu.memory_space<smem>>
    %353 = vector.extract_strided_slice %146 {offsets = [5, 0, 0], sizes = [16, 1, 16], strides = [1, 1, 1]} : vector<22x1x16xf32> to vector<16x1x16xf32>
    %354 = vector.broadcast %352 : f32 to vector<16x1x16xf32>
    %355 = arith.mulf %354, %353 : vector<16x1x16xf32>
    %356 = arith.addf %351, %355 : vector<16x1x16xf32>
    %c42 = arith.constant 42 : index
    %357 = memref.load %arg1[%c42] : memref<98xf32, #tpu.memory_space<smem>>
    %358 = vector.extract_strided_slice %140 {offsets = [6, 0, 0], sizes = [16, 1, 16], strides = [1, 1, 1]} : vector<22x1x16xf32> to vector<16x1x16xf32>
    %359 = vector.broadcast %357 : f32 to vector<16x1x16xf32>
    %360 = arith.mulf %359, %358 : vector<16x1x16xf32>
    %361 = arith.addf %356, %360 : vector<16x1x16xf32>
    %c43 = arith.constant 43 : index
    %362 = memref.load %arg1[%c43] : memref<98xf32, #tpu.memory_space<smem>>
    %363 = vector.extract_strided_slice %141 {offsets = [6, 0, 0], sizes = [16, 1, 16], strides = [1, 1, 1]} : vector<22x1x16xf32> to vector<16x1x16xf32>
    %364 = vector.broadcast %362 : f32 to vector<16x1x16xf32>
    %365 = arith.mulf %364, %363 : vector<16x1x16xf32>
    %366 = arith.addf %361, %365 : vector<16x1x16xf32>
    %c44 = arith.constant 44 : index
    %367 = memref.load %arg1[%c44] : memref<98xf32, #tpu.memory_space<smem>>
    %368 = vector.extract_strided_slice %142 {offsets = [6, 0, 0], sizes = [16, 1, 16], strides = [1, 1, 1]} : vector<22x1x16xf32> to vector<16x1x16xf32>
    %369 = vector.broadcast %367 : f32 to vector<16x1x16xf32>
    %370 = arith.mulf %369, %368 : vector<16x1x16xf32>
    %371 = arith.addf %366, %370 : vector<16x1x16xf32>
    %c45 = arith.constant 45 : index
    %372 = memref.load %arg1[%c45] : memref<98xf32, #tpu.memory_space<smem>>
    %373 = vector.extract_strided_slice %143 {offsets = [6, 0, 0], sizes = [16, 1, 16], strides = [1, 1, 1]} : vector<22x1x16xf32> to vector<16x1x16xf32>
    %374 = vector.broadcast %372 : f32 to vector<16x1x16xf32>
    %375 = arith.mulf %374, %373 : vector<16x1x16xf32>
    %376 = arith.addf %371, %375 : vector<16x1x16xf32>
    %c46 = arith.constant 46 : index
    %377 = memref.load %arg1[%c46] : memref<98xf32, #tpu.memory_space<smem>>
    %378 = vector.extract_strided_slice %144 {offsets = [6, 0, 0], sizes = [16, 1, 16], strides = [1, 1, 1]} : vector<22x1x16xf32> to vector<16x1x16xf32>
    %379 = vector.broadcast %377 : f32 to vector<16x1x16xf32>
    %380 = arith.mulf %379, %378 : vector<16x1x16xf32>
    %381 = arith.addf %376, %380 : vector<16x1x16xf32>
    %c47 = arith.constant 47 : index
    %382 = memref.load %arg1[%c47] : memref<98xf32, #tpu.memory_space<smem>>
    %383 = vector.extract_strided_slice %145 {offsets = [6, 0, 0], sizes = [16, 1, 16], strides = [1, 1, 1]} : vector<22x1x16xf32> to vector<16x1x16xf32>
    %384 = vector.broadcast %382 : f32 to vector<16x1x16xf32>
    %385 = arith.mulf %384, %383 : vector<16x1x16xf32>
    %386 = arith.addf %381, %385 : vector<16x1x16xf32>
    %c48 = arith.constant 48 : index
    %387 = memref.load %arg1[%c48] : memref<98xf32, #tpu.memory_space<smem>>
    %388 = vector.extract_strided_slice %146 {offsets = [6, 0, 0], sizes = [16, 1, 16], strides = [1, 1, 1]} : vector<22x1x16xf32> to vector<16x1x16xf32>
    %389 = vector.broadcast %387 : f32 to vector<16x1x16xf32>
    %390 = arith.mulf %389, %388 : vector<16x1x16xf32>
    %391 = arith.addf %386, %390 : vector<16x1x16xf32>
    %c1_139 = arith.constant 1 : index
    %c0_140 = arith.constant 0 : index
    %c0_141 = arith.constant 0 : index
    %c0_142 = arith.constant 0 : index
    %392 = vector.load %arg6[%c1_139, %c0_140, %c0_141, %c0_142] : memref<2x22x1x22xf32, #tpu.memory_space<vmem>>, vector<1x22x1x22xf32>
    %393 = vector.shape_cast %392 : vector<1x22x1x22xf32> to vector<22x1x22xf32>
    %394 = vector.extract_strided_slice %393 {offsets = [0, 0, 0], sizes = [22, 1, 16], strides = [1, 1, 1]} : vector<22x1x22xf32> to vector<22x1x16xf32>
    %395 = vector.extract_strided_slice %393 {offsets = [0, 0, 1], sizes = [22, 1, 16], strides = [1, 1, 1]} : vector<22x1x22xf32> to vector<22x1x16xf32>
    %396 = vector.extract_strided_slice %393 {offsets = [0, 0, 2], sizes = [22, 1, 16], strides = [1, 1, 1]} : vector<22x1x22xf32> to vector<22x1x16xf32>
    %397 = vector.extract_strided_slice %393 {offsets = [0, 0, 3], sizes = [22, 1, 16], strides = [1, 1, 1]} : vector<22x1x22xf32> to vector<22x1x16xf32>
    %398 = vector.extract_strided_slice %393 {offsets = [0, 0, 4], sizes = [22, 1, 16], strides = [1, 1, 1]} : vector<22x1x22xf32> to vector<22x1x16xf32>
    %399 = vector.extract_strided_slice %393 {offsets = [0, 0, 5], sizes = [22, 1, 16], strides = [1, 1, 1]} : vector<22x1x22xf32> to vector<22x1x16xf32>
    %400 = vector.extract_strided_slice %393 {offsets = [0, 0, 6], sizes = [22, 1, 16], strides = [1, 1, 1]} : vector<22x1x22xf32> to vector<22x1x16xf32>
    %c49 = arith.constant 49 : index
    %401 = memref.load %arg1[%c49] : memref<98xf32, #tpu.memory_space<smem>>
    %402 = vector.extract_strided_slice %394 {offsets = [0, 0, 0], sizes = [16, 1, 16], strides = [1, 1, 1]} : vector<22x1x16xf32> to vector<16x1x16xf32>
    %403 = vector.broadcast %401 : f32 to vector<16x1x16xf32>
    %404 = arith.mulf %403, %402 : vector<16x1x16xf32>
    %405 = arith.addf %391, %404 : vector<16x1x16xf32>
    %c50 = arith.constant 50 : index
    %406 = memref.load %arg1[%c50] : memref<98xf32, #tpu.memory_space<smem>>
    %407 = vector.extract_strided_slice %395 {offsets = [0, 0, 0], sizes = [16, 1, 16], strides = [1, 1, 1]} : vector<22x1x16xf32> to vector<16x1x16xf32>
    %408 = vector.broadcast %406 : f32 to vector<16x1x16xf32>
    %409 = arith.mulf %408, %407 : vector<16x1x16xf32>
    %410 = arith.addf %405, %409 : vector<16x1x16xf32>
    %c51 = arith.constant 51 : index
    %411 = memref.load %arg1[%c51] : memref<98xf32, #tpu.memory_space<smem>>
    %412 = vector.extract_strided_slice %396 {offsets = [0, 0, 0], sizes = [16, 1, 16], strides = [1, 1, 1]} : vector<22x1x16xf32> to vector<16x1x16xf32>
    %413 = vector.broadcast %411 : f32 to vector<16x1x16xf32>
    %414 = arith.mulf %413, %412 : vector<16x1x16xf32>
    %415 = arith.addf %410, %414 : vector<16x1x16xf32>
    %c52 = arith.constant 52 : index
    %416 = memref.load %arg1[%c52] : memref<98xf32, #tpu.memory_space<smem>>
    %417 = vector.extract_strided_slice %397 {offsets = [0, 0, 0], sizes = [16, 1, 16], strides = [1, 1, 1]} : vector<22x1x16xf32> to vector<16x1x16xf32>
    %418 = vector.broadcast %416 : f32 to vector<16x1x16xf32>
    %419 = arith.mulf %418, %417 : vector<16x1x16xf32>
    %420 = arith.addf %415, %419 : vector<16x1x16xf32>
    %c53 = arith.constant 53 : index
    %421 = memref.load %arg1[%c53] : memref<98xf32, #tpu.memory_space<smem>>
    %422 = vector.extract_strided_slice %398 {offsets = [0, 0, 0], sizes = [16, 1, 16], strides = [1, 1, 1]} : vector<22x1x16xf32> to vector<16x1x16xf32>
    %423 = vector.broadcast %421 : f32 to vector<16x1x16xf32>
    %424 = arith.mulf %423, %422 : vector<16x1x16xf32>
    %425 = arith.addf %420, %424 : vector<16x1x16xf32>
    %c54 = arith.constant 54 : index
    %426 = memref.load %arg1[%c54] : memref<98xf32, #tpu.memory_space<smem>>
    %427 = vector.extract_strided_slice %399 {offsets = [0, 0, 0], sizes = [16, 1, 16], strides = [1, 1, 1]} : vector<22x1x16xf32> to vector<16x1x16xf32>
    %428 = vector.broadcast %426 : f32 to vector<16x1x16xf32>
    %429 = arith.mulf %428, %427 : vector<16x1x16xf32>
    %430 = arith.addf %425, %429 : vector<16x1x16xf32>
    %c55 = arith.constant 55 : index
    %431 = memref.load %arg1[%c55] : memref<98xf32, #tpu.memory_space<smem>>
    %432 = vector.extract_strided_slice %400 {offsets = [0, 0, 0], sizes = [16, 1, 16], strides = [1, 1, 1]} : vector<22x1x16xf32> to vector<16x1x16xf32>
    %433 = vector.broadcast %431 : f32 to vector<16x1x16xf32>
    %434 = arith.mulf %433, %432 : vector<16x1x16xf32>
    %435 = arith.addf %430, %434 : vector<16x1x16xf32>
    %c56 = arith.constant 56 : index
    %436 = memref.load %arg1[%c56] : memref<98xf32, #tpu.memory_space<smem>>
    %437 = vector.extract_strided_slice %394 {offsets = [1, 0, 0], sizes = [16, 1, 16], strides = [1, 1, 1]} : vector<22x1x16xf32> to vector<16x1x16xf32>
    %438 = vector.broadcast %436 : f32 to vector<16x1x16xf32>
    %439 = arith.mulf %438, %437 : vector<16x1x16xf32>
    %440 = arith.addf %435, %439 : vector<16x1x16xf32>
    %c57 = arith.constant 57 : index
    %441 = memref.load %arg1[%c57] : memref<98xf32, #tpu.memory_space<smem>>
    %442 = vector.extract_strided_slice %395 {offsets = [1, 0, 0], sizes = [16, 1, 16], strides = [1, 1, 1]} : vector<22x1x16xf32> to vector<16x1x16xf32>
    %443 = vector.broadcast %441 : f32 to vector<16x1x16xf32>
    %444 = arith.mulf %443, %442 : vector<16x1x16xf32>
    %445 = arith.addf %440, %444 : vector<16x1x16xf32>
    %c58 = arith.constant 58 : index
    %446 = memref.load %arg1[%c58] : memref<98xf32, #tpu.memory_space<smem>>
    %447 = vector.extract_strided_slice %396 {offsets = [1, 0, 0], sizes = [16, 1, 16], strides = [1, 1, 1]} : vector<22x1x16xf32> to vector<16x1x16xf32>
    %448 = vector.broadcast %446 : f32 to vector<16x1x16xf32>
    %449 = arith.mulf %448, %447 : vector<16x1x16xf32>
    %450 = arith.addf %445, %449 : vector<16x1x16xf32>
    %c59 = arith.constant 59 : index
    %451 = memref.load %arg1[%c59] : memref<98xf32, #tpu.memory_space<smem>>
    %452 = vector.extract_strided_slice %397 {offsets = [1, 0, 0], sizes = [16, 1, 16], strides = [1, 1, 1]} : vector<22x1x16xf32> to vector<16x1x16xf32>
    %453 = vector.broadcast %451 : f32 to vector<16x1x16xf32>
    %454 = arith.mulf %453, %452 : vector<16x1x16xf32>
    %455 = arith.addf %450, %454 : vector<16x1x16xf32>
    %c60 = arith.constant 60 : index
    %456 = memref.load %arg1[%c60] : memref<98xf32, #tpu.memory_space<smem>>
    %457 = vector.extract_strided_slice %398 {offsets = [1, 0, 0], sizes = [16, 1, 16], strides = [1, 1, 1]} : vector<22x1x16xf32> to vector<16x1x16xf32>
    %458 = vector.broadcast %456 : f32 to vector<16x1x16xf32>
    %459 = arith.mulf %458, %457 : vector<16x1x16xf32>
    %460 = arith.addf %455, %459 : vector<16x1x16xf32>
    %c61 = arith.constant 61 : index
    %461 = memref.load %arg1[%c61] : memref<98xf32, #tpu.memory_space<smem>>
    %462 = vector.extract_strided_slice %399 {offsets = [1, 0, 0], sizes = [16, 1, 16], strides = [1, 1, 1]} : vector<22x1x16xf32> to vector<16x1x16xf32>
    %463 = vector.broadcast %461 : f32 to vector<16x1x16xf32>
    %464 = arith.mulf %463, %462 : vector<16x1x16xf32>
    %465 = arith.addf %460, %464 : vector<16x1x16xf32>
    %c62 = arith.constant 62 : index
    %466 = memref.load %arg1[%c62] : memref<98xf32, #tpu.memory_space<smem>>
    %467 = vector.extract_strided_slice %400 {offsets = [1, 0, 0], sizes = [16, 1, 16], strides = [1, 1, 1]} : vector<22x1x16xf32> to vector<16x1x16xf32>
    %468 = vector.broadcast %466 : f32 to vector<16x1x16xf32>
    %469 = arith.mulf %468, %467 : vector<16x1x16xf32>
    %470 = arith.addf %465, %469 : vector<16x1x16xf32>
    %c63 = arith.constant 63 : index
    %471 = memref.load %arg1[%c63] : memref<98xf32, #tpu.memory_space<smem>>
    %472 = vector.extract_strided_slice %394 {offsets = [2, 0, 0], sizes = [16, 1, 16], strides = [1, 1, 1]} : vector<22x1x16xf32> to vector<16x1x16xf32>
    %473 = vector.broadcast %471 : f32 to vector<16x1x16xf32>
    %474 = arith.mulf %473, %472 : vector<16x1x16xf32>
    %475 = arith.addf %470, %474 : vector<16x1x16xf32>
    %c64 = arith.constant 64 : index
    %476 = memref.load %arg1[%c64] : memref<98xf32, #tpu.memory_space<smem>>
    %477 = vector.extract_strided_slice %395 {offsets = [2, 0, 0], sizes = [16, 1, 16], strides = [1, 1, 1]} : vector<22x1x16xf32> to vector<16x1x16xf32>
    %478 = vector.broadcast %476 : f32 to vector<16x1x16xf32>
    %479 = arith.mulf %478, %477 : vector<16x1x16xf32>
    %480 = arith.addf %475, %479 : vector<16x1x16xf32>
    %c65 = arith.constant 65 : index
    %481 = memref.load %arg1[%c65] : memref<98xf32, #tpu.memory_space<smem>>
    %482 = vector.extract_strided_slice %396 {offsets = [2, 0, 0], sizes = [16, 1, 16], strides = [1, 1, 1]} : vector<22x1x16xf32> to vector<16x1x16xf32>
    %483 = vector.broadcast %481 : f32 to vector<16x1x16xf32>
    %484 = arith.mulf %483, %482 : vector<16x1x16xf32>
    %485 = arith.addf %480, %484 : vector<16x1x16xf32>
    %c66 = arith.constant 66 : index
    %486 = memref.load %arg1[%c66] : memref<98xf32, #tpu.memory_space<smem>>
    %487 = vector.extract_strided_slice %397 {offsets = [2, 0, 0], sizes = [16, 1, 16], strides = [1, 1, 1]} : vector<22x1x16xf32> to vector<16x1x16xf32>
    %488 = vector.broadcast %486 : f32 to vector<16x1x16xf32>
    %489 = arith.mulf %488, %487 : vector<16x1x16xf32>
    %490 = arith.addf %485, %489 : vector<16x1x16xf32>
    %c67 = arith.constant 67 : index
    %491 = memref.load %arg1[%c67] : memref<98xf32, #tpu.memory_space<smem>>
    %492 = vector.extract_strided_slice %398 {offsets = [2, 0, 0], sizes = [16, 1, 16], strides = [1, 1, 1]} : vector<22x1x16xf32> to vector<16x1x16xf32>
    %493 = vector.broadcast %491 : f32 to vector<16x1x16xf32>
    %494 = arith.mulf %493, %492 : vector<16x1x16xf32>
    %495 = arith.addf %490, %494 : vector<16x1x16xf32>
    %c68 = arith.constant 68 : index
    %496 = memref.load %arg1[%c68] : memref<98xf32, #tpu.memory_space<smem>>
    %497 = vector.extract_strided_slice %399 {offsets = [2, 0, 0], sizes = [16, 1, 16], strides = [1, 1, 1]} : vector<22x1x16xf32> to vector<16x1x16xf32>
    %498 = vector.broadcast %496 : f32 to vector<16x1x16xf32>
    %499 = arith.mulf %498, %497 : vector<16x1x16xf32>
    %500 = arith.addf %495, %499 : vector<16x1x16xf32>
    %c69 = arith.constant 69 : index
    %501 = memref.load %arg1[%c69] : memref<98xf32, #tpu.memory_space<smem>>
    %502 = vector.extract_strided_slice %400 {offsets = [2, 0, 0], sizes = [16, 1, 16], strides = [1, 1, 1]} : vector<22x1x16xf32> to vector<16x1x16xf32>
    %503 = vector.broadcast %501 : f32 to vector<16x1x16xf32>
    %504 = arith.mulf %503, %502 : vector<16x1x16xf32>
    %505 = arith.addf %500, %504 : vector<16x1x16xf32>
    %c70 = arith.constant 70 : index
    %506 = memref.load %arg1[%c70] : memref<98xf32, #tpu.memory_space<smem>>
    %507 = vector.extract_strided_slice %394 {offsets = [3, 0, 0], sizes = [16, 1, 16], strides = [1, 1, 1]} : vector<22x1x16xf32> to vector<16x1x16xf32>
    %508 = vector.broadcast %506 : f32 to vector<16x1x16xf32>
    %509 = arith.mulf %508, %507 : vector<16x1x16xf32>
    %510 = arith.addf %505, %509 : vector<16x1x16xf32>
    %c71 = arith.constant 71 : index
    %511 = memref.load %arg1[%c71] : memref<98xf32, #tpu.memory_space<smem>>
    %512 = vector.extract_strided_slice %395 {offsets = [3, 0, 0], sizes = [16, 1, 16], strides = [1, 1, 1]} : vector<22x1x16xf32> to vector<16x1x16xf32>
    %513 = vector.broadcast %511 : f32 to vector<16x1x16xf32>
    %514 = arith.mulf %513, %512 : vector<16x1x16xf32>
    %515 = arith.addf %510, %514 : vector<16x1x16xf32>
    %c72 = arith.constant 72 : index
    %516 = memref.load %arg1[%c72] : memref<98xf32, #tpu.memory_space<smem>>
    %517 = vector.extract_strided_slice %396 {offsets = [3, 0, 0], sizes = [16, 1, 16], strides = [1, 1, 1]} : vector<22x1x16xf32> to vector<16x1x16xf32>
    %518 = vector.broadcast %516 : f32 to vector<16x1x16xf32>
    %519 = arith.mulf %518, %517 : vector<16x1x16xf32>
    %520 = arith.addf %515, %519 : vector<16x1x16xf32>
    %c73 = arith.constant 73 : index
    %521 = memref.load %arg1[%c73] : memref<98xf32, #tpu.memory_space<smem>>
    %522 = vector.extract_strided_slice %397 {offsets = [3, 0, 0], sizes = [16, 1, 16], strides = [1, 1, 1]} : vector<22x1x16xf32> to vector<16x1x16xf32>
    %523 = vector.broadcast %521 : f32 to vector<16x1x16xf32>
    %524 = arith.mulf %523, %522 : vector<16x1x16xf32>
    %525 = arith.addf %520, %524 : vector<16x1x16xf32>
    %c74 = arith.constant 74 : index
    %526 = memref.load %arg1[%c74] : memref<98xf32, #tpu.memory_space<smem>>
    %527 = vector.extract_strided_slice %398 {offsets = [3, 0, 0], sizes = [16, 1, 16], strides = [1, 1, 1]} : vector<22x1x16xf32> to vector<16x1x16xf32>
    %528 = vector.broadcast %526 : f32 to vector<16x1x16xf32>
    %529 = arith.mulf %528, %527 : vector<16x1x16xf32>
    %530 = arith.addf %525, %529 : vector<16x1x16xf32>
    %c75 = arith.constant 75 : index
    %531 = memref.load %arg1[%c75] : memref<98xf32, #tpu.memory_space<smem>>
    %532 = vector.extract_strided_slice %399 {offsets = [3, 0, 0], sizes = [16, 1, 16], strides = [1, 1, 1]} : vector<22x1x16xf32> to vector<16x1x16xf32>
    %533 = vector.broadcast %531 : f32 to vector<16x1x16xf32>
    %534 = arith.mulf %533, %532 : vector<16x1x16xf32>
    %535 = arith.addf %530, %534 : vector<16x1x16xf32>
    %c76 = arith.constant 76 : index
    %536 = memref.load %arg1[%c76] : memref<98xf32, #tpu.memory_space<smem>>
    %537 = vector.extract_strided_slice %400 {offsets = [3, 0, 0], sizes = [16, 1, 16], strides = [1, 1, 1]} : vector<22x1x16xf32> to vector<16x1x16xf32>
    %538 = vector.broadcast %536 : f32 to vector<16x1x16xf32>
    %539 = arith.mulf %538, %537 : vector<16x1x16xf32>
    %540 = arith.addf %535, %539 : vector<16x1x16xf32>
    %c77 = arith.constant 77 : index
    %541 = memref.load %arg1[%c77] : memref<98xf32, #tpu.memory_space<smem>>
    %542 = vector.extract_strided_slice %394 {offsets = [4, 0, 0], sizes = [16, 1, 16], strides = [1, 1, 1]} : vector<22x1x16xf32> to vector<16x1x16xf32>
    %543 = vector.broadcast %541 : f32 to vector<16x1x16xf32>
    %544 = arith.mulf %543, %542 : vector<16x1x16xf32>
    %545 = arith.addf %540, %544 : vector<16x1x16xf32>
    %c78 = arith.constant 78 : index
    %546 = memref.load %arg1[%c78] : memref<98xf32, #tpu.memory_space<smem>>
    %547 = vector.extract_strided_slice %395 {offsets = [4, 0, 0], sizes = [16, 1, 16], strides = [1, 1, 1]} : vector<22x1x16xf32> to vector<16x1x16xf32>
    %548 = vector.broadcast %546 : f32 to vector<16x1x16xf32>
    %549 = arith.mulf %548, %547 : vector<16x1x16xf32>
    %550 = arith.addf %545, %549 : vector<16x1x16xf32>
    %c79 = arith.constant 79 : index
    %551 = memref.load %arg1[%c79] : memref<98xf32, #tpu.memory_space<smem>>
    %552 = vector.extract_strided_slice %396 {offsets = [4, 0, 0], sizes = [16, 1, 16], strides = [1, 1, 1]} : vector<22x1x16xf32> to vector<16x1x16xf32>
    %553 = vector.broadcast %551 : f32 to vector<16x1x16xf32>
    %554 = arith.mulf %553, %552 : vector<16x1x16xf32>
    %555 = arith.addf %550, %554 : vector<16x1x16xf32>
    %c80 = arith.constant 80 : index
    %556 = memref.load %arg1[%c80] : memref<98xf32, #tpu.memory_space<smem>>
    %557 = vector.extract_strided_slice %397 {offsets = [4, 0, 0], sizes = [16, 1, 16], strides = [1, 1, 1]} : vector<22x1x16xf32> to vector<16x1x16xf32>
    %558 = vector.broadcast %556 : f32 to vector<16x1x16xf32>
    %559 = arith.mulf %558, %557 : vector<16x1x16xf32>
    %560 = arith.addf %555, %559 : vector<16x1x16xf32>
    %c81 = arith.constant 81 : index
    %561 = memref.load %arg1[%c81] : memref<98xf32, #tpu.memory_space<smem>>
    %562 = vector.extract_strided_slice %398 {offsets = [4, 0, 0], sizes = [16, 1, 16], strides = [1, 1, 1]} : vector<22x1x16xf32> to vector<16x1x16xf32>
    %563 = vector.broadcast %561 : f32 to vector<16x1x16xf32>
    %564 = arith.mulf %563, %562 : vector<16x1x16xf32>
    %565 = arith.addf %560, %564 : vector<16x1x16xf32>
    %c82 = arith.constant 82 : index
    %566 = memref.load %arg1[%c82] : memref<98xf32, #tpu.memory_space<smem>>
    %567 = vector.extract_strided_slice %399 {offsets = [4, 0, 0], sizes = [16, 1, 16], strides = [1, 1, 1]} : vector<22x1x16xf32> to vector<16x1x16xf32>
    %568 = vector.broadcast %566 : f32 to vector<16x1x16xf32>
    %569 = arith.mulf %568, %567 : vector<16x1x16xf32>
    %570 = arith.addf %565, %569 : vector<16x1x16xf32>
    %c83 = arith.constant 83 : index
    %571 = memref.load %arg1[%c83] : memref<98xf32, #tpu.memory_space<smem>>
    %572 = vector.extract_strided_slice %400 {offsets = [4, 0, 0], sizes = [16, 1, 16], strides = [1, 1, 1]} : vector<22x1x16xf32> to vector<16x1x16xf32>
    %573 = vector.broadcast %571 : f32 to vector<16x1x16xf32>
    %574 = arith.mulf %573, %572 : vector<16x1x16xf32>
    %575 = arith.addf %570, %574 : vector<16x1x16xf32>
    %c84 = arith.constant 84 : index
    %576 = memref.load %arg1[%c84] : memref<98xf32, #tpu.memory_space<smem>>
    %577 = vector.extract_strided_slice %394 {offsets = [5, 0, 0], sizes = [16, 1, 16], strides = [1, 1, 1]} : vector<22x1x16xf32> to vector<16x1x16xf32>
    %578 = vector.broadcast %576 : f32 to vector<16x1x16xf32>
    %579 = arith.mulf %578, %577 : vector<16x1x16xf32>
    %580 = arith.addf %575, %579 : vector<16x1x16xf32>
    %c85 = arith.constant 85 : index
    %581 = memref.load %arg1[%c85] : memref<98xf32, #tpu.memory_space<smem>>
    %582 = vector.extract_strided_slice %395 {offsets = [5, 0, 0], sizes = [16, 1, 16], strides = [1, 1, 1]} : vector<22x1x16xf32> to vector<16x1x16xf32>
    %583 = vector.broadcast %581 : f32 to vector<16x1x16xf32>
    %584 = arith.mulf %583, %582 : vector<16x1x16xf32>
    %585 = arith.addf %580, %584 : vector<16x1x16xf32>
    %c86 = arith.constant 86 : index
    %586 = memref.load %arg1[%c86] : memref<98xf32, #tpu.memory_space<smem>>
    %587 = vector.extract_strided_slice %396 {offsets = [5, 0, 0], sizes = [16, 1, 16], strides = [1, 1, 1]} : vector<22x1x16xf32> to vector<16x1x16xf32>
    %588 = vector.broadcast %586 : f32 to vector<16x1x16xf32>
    %589 = arith.mulf %588, %587 : vector<16x1x16xf32>
    %590 = arith.addf %585, %589 : vector<16x1x16xf32>
    %c87 = arith.constant 87 : index
    %591 = memref.load %arg1[%c87] : memref<98xf32, #tpu.memory_space<smem>>
    %592 = vector.extract_strided_slice %397 {offsets = [5, 0, 0], sizes = [16, 1, 16], strides = [1, 1, 1]} : vector<22x1x16xf32> to vector<16x1x16xf32>
    %593 = vector.broadcast %591 : f32 to vector<16x1x16xf32>
    %594 = arith.mulf %593, %592 : vector<16x1x16xf32>
    %595 = arith.addf %590, %594 : vector<16x1x16xf32>
    %c88 = arith.constant 88 : index
    %596 = memref.load %arg1[%c88] : memref<98xf32, #tpu.memory_space<smem>>
    %597 = vector.extract_strided_slice %398 {offsets = [5, 0, 0], sizes = [16, 1, 16], strides = [1, 1, 1]} : vector<22x1x16xf32> to vector<16x1x16xf32>
    %598 = vector.broadcast %596 : f32 to vector<16x1x16xf32>
    %599 = arith.mulf %598, %597 : vector<16x1x16xf32>
    %600 = arith.addf %595, %599 : vector<16x1x16xf32>
    %c89 = arith.constant 89 : index
    %601 = memref.load %arg1[%c89] : memref<98xf32, #tpu.memory_space<smem>>
    %602 = vector.extract_strided_slice %399 {offsets = [5, 0, 0], sizes = [16, 1, 16], strides = [1, 1, 1]} : vector<22x1x16xf32> to vector<16x1x16xf32>
    %603 = vector.broadcast %601 : f32 to vector<16x1x16xf32>
    %604 = arith.mulf %603, %602 : vector<16x1x16xf32>
    %605 = arith.addf %600, %604 : vector<16x1x16xf32>
    %c90 = arith.constant 90 : index
    %606 = memref.load %arg1[%c90] : memref<98xf32, #tpu.memory_space<smem>>
    %607 = vector.extract_strided_slice %400 {offsets = [5, 0, 0], sizes = [16, 1, 16], strides = [1, 1, 1]} : vector<22x1x16xf32> to vector<16x1x16xf32>
    %608 = vector.broadcast %606 : f32 to vector<16x1x16xf32>
    %609 = arith.mulf %608, %607 : vector<16x1x16xf32>
    %610 = arith.addf %605, %609 : vector<16x1x16xf32>
    %c91 = arith.constant 91 : index
    %611 = memref.load %arg1[%c91] : memref<98xf32, #tpu.memory_space<smem>>
    %612 = vector.extract_strided_slice %394 {offsets = [6, 0, 0], sizes = [16, 1, 16], strides = [1, 1, 1]} : vector<22x1x16xf32> to vector<16x1x16xf32>
    %613 = vector.broadcast %611 : f32 to vector<16x1x16xf32>
    %614 = arith.mulf %613, %612 : vector<16x1x16xf32>
    %615 = arith.addf %610, %614 : vector<16x1x16xf32>
    %c92 = arith.constant 92 : index
    %616 = memref.load %arg1[%c92] : memref<98xf32, #tpu.memory_space<smem>>
    %617 = vector.extract_strided_slice %395 {offsets = [6, 0, 0], sizes = [16, 1, 16], strides = [1, 1, 1]} : vector<22x1x16xf32> to vector<16x1x16xf32>
    %618 = vector.broadcast %616 : f32 to vector<16x1x16xf32>
    %619 = arith.mulf %618, %617 : vector<16x1x16xf32>
    %620 = arith.addf %615, %619 : vector<16x1x16xf32>
    %c93 = arith.constant 93 : index
    %621 = memref.load %arg1[%c93] : memref<98xf32, #tpu.memory_space<smem>>
    %622 = vector.extract_strided_slice %396 {offsets = [6, 0, 0], sizes = [16, 1, 16], strides = [1, 1, 1]} : vector<22x1x16xf32> to vector<16x1x16xf32>
    %623 = vector.broadcast %621 : f32 to vector<16x1x16xf32>
    %624 = arith.mulf %623, %622 : vector<16x1x16xf32>
    %625 = arith.addf %620, %624 : vector<16x1x16xf32>
    %c94 = arith.constant 94 : index
    %626 = memref.load %arg1[%c94] : memref<98xf32, #tpu.memory_space<smem>>
    %627 = vector.extract_strided_slice %397 {offsets = [6, 0, 0], sizes = [16, 1, 16], strides = [1, 1, 1]} : vector<22x1x16xf32> to vector<16x1x16xf32>
    %628 = vector.broadcast %626 : f32 to vector<16x1x16xf32>
    %629 = arith.mulf %628, %627 : vector<16x1x16xf32>
    %630 = arith.addf %625, %629 : vector<16x1x16xf32>
    %c95 = arith.constant 95 : index
    %631 = memref.load %arg1[%c95] : memref<98xf32, #tpu.memory_space<smem>>
    %632 = vector.extract_strided_slice %398 {offsets = [6, 0, 0], sizes = [16, 1, 16], strides = [1, 1, 1]} : vector<22x1x16xf32> to vector<16x1x16xf32>
    %633 = vector.broadcast %631 : f32 to vector<16x1x16xf32>
    %634 = arith.mulf %633, %632 : vector<16x1x16xf32>
    %635 = arith.addf %630, %634 : vector<16x1x16xf32>
    %c96 = arith.constant 96 : index
    %636 = memref.load %arg1[%c96] : memref<98xf32, #tpu.memory_space<smem>>
    %637 = vector.extract_strided_slice %399 {offsets = [6, 0, 0], sizes = [16, 1, 16], strides = [1, 1, 1]} : vector<22x1x16xf32> to vector<16x1x16xf32>
    %638 = vector.broadcast %636 : f32 to vector<16x1x16xf32>
    %639 = arith.mulf %638, %637 : vector<16x1x16xf32>
    %640 = arith.addf %635, %639 : vector<16x1x16xf32>
    %c97 = arith.constant 97 : index
    %641 = memref.load %arg1[%c97] : memref<98xf32, #tpu.memory_space<smem>>
    %642 = vector.extract_strided_slice %400 {offsets = [6, 0, 0], sizes = [16, 1, 16], strides = [1, 1, 1]} : vector<22x1x16xf32> to vector<16x1x16xf32>
    %643 = vector.broadcast %641 : f32 to vector<16x1x16xf32>
    %644 = arith.mulf %643, %642 : vector<16x1x16xf32>
    %645 = arith.addf %640, %644 : vector<16x1x16xf32>
    %cst_143 = arith.constant 0.000000e+00 : f32
    %646 = vector.broadcast %cst_143 : f32 to vector<16x1x16xf32>
    %647 = arith.maximumf %645, %646 : vector<16x1x16xf32>
    %c2_144 = arith.constant 2 : index
    %c0_145 = arith.constant 0 : index
    %c2_146 = arith.constant 2 : index
    %648 = vector.load %arg7[%c2_144, %c0_145, %c2_146] : memref<20x1x20xf32, #tpu.memory_space<vmem>>, vector<16x1x16xf32>
    tpu.vector_store %arg7[%c2_144, %c0_145, %c2_146], %647 {strides = array<i32>} : memref<20x1x20xf32, #tpu.memory_space<vmem>>, vector<16x1x16xf32>,
    %c0_147 = arith.constant 0 : index
    %c0_148 = arith.constant 0 : index
    %c0_149 = arith.constant 0 : index
    %649 = vector.load %arg7[%c0_147, %c0_148, %c0_149] : memref<20x1x20xf32, #tpu.memory_space<vmem>>, vector<20x1x20xf32>
    %650 = vector.extract_strided_slice %649 {offsets = [0, 0, 0], sizes = [20, 1, 16], strides = [1, 1, 1]} : vector<20x1x20xf32> to vector<20x1x16xf32>
    %651 = vector.extract_strided_slice %649 {offsets = [0, 0, 2], sizes = [20, 1, 16], strides = [1, 1, 1]} : vector<20x1x20xf32> to vector<20x1x16xf32>
    %652 = vector.extract_strided_slice %649 {offsets = [0, 0, 4], sizes = [20, 1, 16], strides = [1, 1, 1]} : vector<20x1x20xf32> to vector<20x1x16xf32>
    %c1_150 = arith.constant 1 : index
    %653 = memref.load %arg3[%c1_150] : memref<2xf32, #tpu.memory_space<smem>>
    %654 = vector.broadcast %653 : f32 to vector<16x1x16xf32>
    %c0_151 = arith.constant 0 : index
    %655 = memref.load %arg2[%c0_151] : memref<9xf32, #tpu.memory_space<smem>>
    %656 = vector.extract_strided_slice %650 {offsets = [0, 0, 0], sizes = [16, 1, 16], strides = [1, 1, 1]} : vector<20x1x16xf32> to vector<16x1x16xf32>
    %657 = vector.broadcast %655 : f32 to vector<16x1x16xf32>
    %658 = arith.mulf %657, %656 : vector<16x1x16xf32>
    %659 = arith.addf %654, %658 : vector<16x1x16xf32>
    %c1_152 = arith.constant 1 : index
    %660 = memref.load %arg2[%c1_152] : memref<9xf32, #tpu.memory_space<smem>>
    %661 = vector.extract_strided_slice %651 {offsets = [0, 0, 0], sizes = [16, 1, 16], strides = [1, 1, 1]} : vector<20x1x16xf32> to vector<16x1x16xf32>
    %662 = vector.broadcast %660 : f32 to vector<16x1x16xf32>
    %663 = arith.mulf %662, %661 : vector<16x1x16xf32>
    %664 = arith.addf %659, %663 : vector<16x1x16xf32>
    %c2_153 = arith.constant 2 : index
    %665 = memref.load %arg2[%c2_153] : memref<9xf32, #tpu.memory_space<smem>>
    %666 = vector.extract_strided_slice %652 {offsets = [0, 0, 0], sizes = [16, 1, 16], strides = [1, 1, 1]} : vector<20x1x16xf32> to vector<16x1x16xf32>
    %667 = vector.broadcast %665 : f32 to vector<16x1x16xf32>
    %668 = arith.mulf %667, %666 : vector<16x1x16xf32>
    %669 = arith.addf %664, %668 : vector<16x1x16xf32>
    %c3_154 = arith.constant 3 : index
    %670 = memref.load %arg2[%c3_154] : memref<9xf32, #tpu.memory_space<smem>>
    %671 = vector.extract_strided_slice %650 {offsets = [2, 0, 0], sizes = [16, 1, 16], strides = [1, 1, 1]} : vector<20x1x16xf32> to vector<16x1x16xf32>
    %672 = vector.broadcast %670 : f32 to vector<16x1x16xf32>
    %673 = arith.mulf %672, %671 : vector<16x1x16xf32>
    %674 = arith.addf %669, %673 : vector<16x1x16xf32>
    %c4_155 = arith.constant 4 : index
    %675 = memref.load %arg2[%c4_155] : memref<9xf32, #tpu.memory_space<smem>>
    %676 = vector.extract_strided_slice %651 {offsets = [2, 0, 0], sizes = [16, 1, 16], strides = [1, 1, 1]} : vector<20x1x16xf32> to vector<16x1x16xf32>
    %677 = vector.broadcast %675 : f32 to vector<16x1x16xf32>
    %678 = arith.mulf %677, %676 : vector<16x1x16xf32>
    %679 = arith.addf %674, %678 : vector<16x1x16xf32>
    %c5_156 = arith.constant 5 : index
    %680 = memref.load %arg2[%c5_156] : memref<9xf32, #tpu.memory_space<smem>>
    %681 = vector.extract_strided_slice %652 {offsets = [2, 0, 0], sizes = [16, 1, 16], strides = [1, 1, 1]} : vector<20x1x16xf32> to vector<16x1x16xf32>
    %682 = vector.broadcast %680 : f32 to vector<16x1x16xf32>
    %683 = arith.mulf %682, %681 : vector<16x1x16xf32>
    %684 = arith.addf %679, %683 : vector<16x1x16xf32>
    %c6_157 = arith.constant 6 : index
    %685 = memref.load %arg2[%c6_157] : memref<9xf32, #tpu.memory_space<smem>>
    %686 = vector.extract_strided_slice %650 {offsets = [4, 0, 0], sizes = [16, 1, 16], strides = [1, 1, 1]} : vector<20x1x16xf32> to vector<16x1x16xf32>
    %687 = vector.broadcast %685 : f32 to vector<16x1x16xf32>
    %688 = arith.mulf %687, %686 : vector<16x1x16xf32>
    %689 = arith.addf %684, %688 : vector<16x1x16xf32>
    %c7_158 = arith.constant 7 : index
    %690 = memref.load %arg2[%c7_158] : memref<9xf32, #tpu.memory_space<smem>>
    %691 = vector.extract_strided_slice %651 {offsets = [4, 0, 0], sizes = [16, 1, 16], strides = [1, 1, 1]} : vector<20x1x16xf32> to vector<16x1x16xf32>
    %692 = vector.broadcast %690 : f32 to vector<16x1x16xf32>
    %693 = arith.mulf %692, %691 : vector<16x1x16xf32>
    %694 = arith.addf %689, %693 : vector<16x1x16xf32>
    %c8_159 = arith.constant 8 : index
    %695 = memref.load %arg2[%c8_159] : memref<9xf32, #tpu.memory_space<smem>>
    %696 = vector.extract_strided_slice %652 {offsets = [4, 0, 0], sizes = [16, 1, 16], strides = [1, 1, 1]} : vector<20x1x16xf32> to vector<16x1x16xf32>
    %697 = vector.broadcast %695 : f32 to vector<16x1x16xf32>
    %698 = arith.mulf %697, %696 : vector<16x1x16xf32>
    %699 = arith.addf %694, %698 : vector<16x1x16xf32>
    %700 = arith.negf %699 : vector<16x1x16xf32>
    %701 = math.exp %700 : vector<16x1x16xf32>
    %cst_160 = arith.constant 1.000000e+00 : f32
    %702 = vector.broadcast %cst_160 : f32 to vector<16x1x16xf32>
    %703 = arith.addf %702, %701 : vector<16x1x16xf32>
    %704 = arith.divf %702, %703 : vector<16x1x16xf32>
    %705 = vector.extract_strided_slice %704 {offsets = [0, 0, 0], sizes = [1, 1, 16], strides = [1, 1, 1]} : vector<16x1x16xf32> to vector<1x1x16xf32>
    %706 = vector.shape_cast %705 : vector<1x1x16xf32> to vector<1x16xf32>
    %c0_161 = arith.constant 0 : index
    %c0_162 = arith.constant 0 : index
    %707 = vector.load %arg8[%c0_161, %c0_162] : memref<1x256xf32, #tpu.memory_space<vmem>>, vector<1x16xf32>
    tpu.vector_store %arg8[%c0_161, %c0_162], %706 {strides = array<i32>} : memref<1x256xf32, #tpu.memory_space<vmem>>, vector<1x16xf32>,
    %708 = vector.extract_strided_slice %704 {offsets = [1, 0, 0], sizes = [1, 1, 16], strides = [1, 1, 1]} : vector<16x1x16xf32> to vector<1x1x16xf32>
    %709 = vector.shape_cast %708 : vector<1x1x16xf32> to vector<1x16xf32>
    %c0_163 = arith.constant 0 : index
    %c16_164 = arith.constant 16 : index
    %710 = vector.load %arg8[%c0_163, %c16_164] : memref<1x256xf32, #tpu.memory_space<vmem>>, vector<1x16xf32>
    tpu.vector_store %arg8[%c0_163, %c16_164], %709 {strides = array<i32>} : memref<1x256xf32, #tpu.memory_space<vmem>>, vector<1x16xf32>,
    %711 = vector.extract_strided_slice %704 {offsets = [2, 0, 0], sizes = [1, 1, 16], strides = [1, 1, 1]} : vector<16x1x16xf32> to vector<1x1x16xf32>
    %712 = vector.shape_cast %711 : vector<1x1x16xf32> to vector<1x16xf32>
    %c0_165 = arith.constant 0 : index
    %c32_166 = arith.constant 32 : index
    %713 = vector.load %arg8[%c0_165, %c32_166] : memref<1x256xf32, #tpu.memory_space<vmem>>, vector<1x16xf32>
    tpu.vector_store %arg8[%c0_165, %c32_166], %712 {strides = array<i32>} : memref<1x256xf32, #tpu.memory_space<vmem>>, vector<1x16xf32>,
    %714 = vector.extract_strided_slice %704 {offsets = [3, 0, 0], sizes = [1, 1, 16], strides = [1, 1, 1]} : vector<16x1x16xf32> to vector<1x1x16xf32>
    %715 = vector.shape_cast %714 : vector<1x1x16xf32> to vector<1x16xf32>
    %c0_167 = arith.constant 0 : index
    %c48_168 = arith.constant 48 : index
    %716 = vector.load %arg8[%c0_167, %c48_168] : memref<1x256xf32, #tpu.memory_space<vmem>>, vector<1x16xf32>
    tpu.vector_store %arg8[%c0_167, %c48_168], %715 {strides = array<i32>} : memref<1x256xf32, #tpu.memory_space<vmem>>, vector<1x16xf32>,
    %717 = vector.extract_strided_slice %704 {offsets = [4, 0, 0], sizes = [1, 1, 16], strides = [1, 1, 1]} : vector<16x1x16xf32> to vector<1x1x16xf32>
    %718 = vector.shape_cast %717 : vector<1x1x16xf32> to vector<1x16xf32>
    %c0_169 = arith.constant 0 : index
    %c64_170 = arith.constant 64 : index
    %719 = vector.load %arg8[%c0_169, %c64_170] : memref<1x256xf32, #tpu.memory_space<vmem>>, vector<1x16xf32>
    tpu.vector_store %arg8[%c0_169, %c64_170], %718 {strides = array<i32>} : memref<1x256xf32, #tpu.memory_space<vmem>>, vector<1x16xf32>,
    %720 = vector.extract_strided_slice %704 {offsets = [5, 0, 0], sizes = [1, 1, 16], strides = [1, 1, 1]} : vector<16x1x16xf32> to vector<1x1x16xf32>
    %721 = vector.shape_cast %720 : vector<1x1x16xf32> to vector<1x16xf32>
    %c0_171 = arith.constant 0 : index
    %c80_172 = arith.constant 80 : index
    %722 = vector.load %arg8[%c0_171, %c80_172] : memref<1x256xf32, #tpu.memory_space<vmem>>, vector<1x16xf32>
    tpu.vector_store %arg8[%c0_171, %c80_172], %721 {strides = array<i32>} : memref<1x256xf32, #tpu.memory_space<vmem>>, vector<1x16xf32>,
    %723 = vector.extract_strided_slice %704 {offsets = [6, 0, 0], sizes = [1, 1, 16], strides = [1, 1, 1]} : vector<16x1x16xf32> to vector<1x1x16xf32>
    %724 = vector.shape_cast %723 : vector<1x1x16xf32> to vector<1x16xf32>
    %c0_173 = arith.constant 0 : index
    %c96_174 = arith.constant 96 : index
    %725 = vector.load %arg8[%c0_173, %c96_174] : memref<1x256xf32, #tpu.memory_space<vmem>>, vector<1x16xf32>
    tpu.vector_store %arg8[%c0_173, %c96_174], %724 {strides = array<i32>} : memref<1x256xf32, #tpu.memory_space<vmem>>, vector<1x16xf32>,
    %726 = vector.extract_strided_slice %704 {offsets = [7, 0, 0], sizes = [1, 1, 16], strides = [1, 1, 1]} : vector<16x1x16xf32> to vector<1x1x16xf32>
    %727 = vector.shape_cast %726 : vector<1x1x16xf32> to vector<1x16xf32>
    %c0_175 = arith.constant 0 : index
    %c112 = arith.constant 112 : index
    %728 = vector.load %arg8[%c0_175, %c112] : memref<1x256xf32, #tpu.memory_space<vmem>>, vector<1x16xf32>
    tpu.vector_store %arg8[%c0_175, %c112], %727 {strides = array<i32>} : memref<1x256xf32, #tpu.memory_space<vmem>>, vector<1x16xf32>,
    %729 = vector.extract_strided_slice %704 {offsets = [8, 0, 0], sizes = [1, 1, 16], strides = [1, 1, 1]} : vector<16x1x16xf32> to vector<1x1x16xf32>
    %730 = vector.shape_cast %729 : vector<1x1x16xf32> to vector<1x16xf32>
    %c0_176 = arith.constant 0 : index
    %c128 = arith.constant 128 : index
    %731 = vector.load %arg8[%c0_176, %c128] : memref<1x256xf32, #tpu.memory_space<vmem>>, vector<1x16xf32>
    tpu.vector_store %arg8[%c0_176, %c128], %730 {strides = array<i32>} : memref<1x256xf32, #tpu.memory_space<vmem>>, vector<1x16xf32>,
    %732 = vector.extract_strided_slice %704 {offsets = [9, 0, 0], sizes = [1, 1, 16], strides = [1, 1, 1]} : vector<16x1x16xf32> to vector<1x1x16xf32>
    %733 = vector.shape_cast %732 : vector<1x1x16xf32> to vector<1x16xf32>
    %c0_177 = arith.constant 0 : index
    %c144 = arith.constant 144 : index
    %734 = vector.load %arg8[%c0_177, %c144] : memref<1x256xf32, #tpu.memory_space<vmem>>, vector<1x16xf32>
    tpu.vector_store %arg8[%c0_177, %c144], %733 {strides = array<i32>} : memref<1x256xf32, #tpu.memory_space<vmem>>, vector<1x16xf32>,
    %735 = vector.extract_strided_slice %704 {offsets = [10, 0, 0], sizes = [1, 1, 16], strides = [1, 1, 1]} : vector<16x1x16xf32> to vector<1x1x16xf32>
    %736 = vector.shape_cast %735 : vector<1x1x16xf32> to vector<1x16xf32>
    %c0_178 = arith.constant 0 : index
    %c160 = arith.constant 160 : index
    %737 = vector.load %arg8[%c0_178, %c160] : memref<1x256xf32, #tpu.memory_space<vmem>>, vector<1x16xf32>
    tpu.vector_store %arg8[%c0_178, %c160], %736 {strides = array<i32>} : memref<1x256xf32, #tpu.memory_space<vmem>>, vector<1x16xf32>,
    %738 = vector.extract_strided_slice %704 {offsets = [11, 0, 0], sizes = [1, 1, 16], strides = [1, 1, 1]} : vector<16x1x16xf32> to vector<1x1x16xf32>
    %739 = vector.shape_cast %738 : vector<1x1x16xf32> to vector<1x16xf32>
    %c0_179 = arith.constant 0 : index
    %c176 = arith.constant 176 : index
    %740 = vector.load %arg8[%c0_179, %c176] : memref<1x256xf32, #tpu.memory_space<vmem>>, vector<1x16xf32>
    tpu.vector_store %arg8[%c0_179, %c176], %739 {strides = array<i32>} : memref<1x256xf32, #tpu.memory_space<vmem>>, vector<1x16xf32>,
    %741 = vector.extract_strided_slice %704 {offsets = [12, 0, 0], sizes = [1, 1, 16], strides = [1, 1, 1]} : vector<16x1x16xf32> to vector<1x1x16xf32>
    %742 = vector.shape_cast %741 : vector<1x1x16xf32> to vector<1x16xf32>
    %c0_180 = arith.constant 0 : index
    %c192 = arith.constant 192 : index
    %743 = vector.load %arg8[%c0_180, %c192] : memref<1x256xf32, #tpu.memory_space<vmem>>, vector<1x16xf32>
    tpu.vector_store %arg8[%c0_180, %c192], %742 {strides = array<i32>} : memref<1x256xf32, #tpu.memory_space<vmem>>, vector<1x16xf32>,
    %744 = vector.extract_strided_slice %704 {offsets = [13, 0, 0], sizes = [1, 1, 16], strides = [1, 1, 1]} : vector<16x1x16xf32> to vector<1x1x16xf32>
    %745 = vector.shape_cast %744 : vector<1x1x16xf32> to vector<1x16xf32>
    %c0_181 = arith.constant 0 : index
    %c208 = arith.constant 208 : index
    %746 = vector.load %arg8[%c0_181, %c208] : memref<1x256xf32, #tpu.memory_space<vmem>>, vector<1x16xf32>
    tpu.vector_store %arg8[%c0_181, %c208], %745 {strides = array<i32>} : memref<1x256xf32, #tpu.memory_space<vmem>>, vector<1x16xf32>,
    %747 = vector.extract_strided_slice %704 {offsets = [14, 0, 0], sizes = [1, 1, 16], strides = [1, 1, 1]} : vector<16x1x16xf32> to vector<1x1x16xf32>
    %748 = vector.shape_cast %747 : vector<1x1x16xf32> to vector<1x16xf32>
    %c0_182 = arith.constant 0 : index
    %c224 = arith.constant 224 : index
    %749 = vector.load %arg8[%c0_182, %c224] : memref<1x256xf32, #tpu.memory_space<vmem>>, vector<1x16xf32>
    tpu.vector_store %arg8[%c0_182, %c224], %748 {strides = array<i32>} : memref<1x256xf32, #tpu.memory_space<vmem>>, vector<1x16xf32>,
    %750 = vector.extract_strided_slice %704 {offsets = [15, 0, 0], sizes = [1, 1, 16], strides = [1, 1, 1]} : vector<16x1x16xf32> to vector<1x1x16xf32>
    %751 = vector.shape_cast %750 : vector<1x1x16xf32> to vector<1x16xf32>
    %c0_183 = arith.constant 0 : index
    %c240 = arith.constant 240 : index
    %752 = vector.load %arg8[%c0_183, %c240] : memref<1x256xf32, #tpu.memory_space<vmem>>, vector<1x16xf32>
    tpu.vector_store %arg8[%c0_183, %c240], %751 {strides = array<i32>} : memref<1x256xf32, #tpu.memory_space<vmem>>, vector<1x16xf32>,
    %c0_184 = arith.constant 0 : index
    %c0_185 = arith.constant 0 : index
    %753 = vector.load %arg8[%c0_184, %c0_185] : memref<1x256xf32, #tpu.memory_space<vmem>>, vector<1x256xf32>
    %754 = vector.shape_cast %753 : vector<1x256xf32> to vector<1x1x256xf32>
    %755 = vector.broadcast %754 : vector<1x1x256xf32> to vector<1x4x256xf32>
    %756 = arith.mulf %3, %755 : vector<1x4x256xf32>
    %c0_186 = arith.constant 0 : index
    %c0_187 = arith.constant 0 : index
    %c0_188 = arith.constant 0 : index
    %757 = vector.load %arg5[%c0_186, %c0_187, %c0_188] : memref<1x4x256xf32, #tpu.memory_space<vmem>>, vector<1x4x256xf32>
    tpu.vector_store %arg5[%c0_186, %c0_187, %c0_188], %756 {strides = array<i32>} : memref<1x4x256xf32, #tpu.memory_space<vmem>>, vector<1x4x256xf32>,
    return
  }
  func.func @transform_0(%arg0: i32) -> i32 {
    %c0_i32 = arith.constant 0 : i32
    %c0_i32_0 = arith.constant 0 : i32
    return %c0_i32 : i32
  }
  func.func @transform_1(%arg0: i32) -> i32 {
    %c0_i32 = arith.constant 0 : i32
    %c0_i32_0 = arith.constant 0 : i32
    return %c0_i32 : i32
  }
  func.func @transform_2(%arg0: i32) -> i32 {
    %c0_i32 = arith.constant 0 : i32
    %c0_i32_0 = arith.constant 0 : i32
    return %c0_i32 : i32
  }
  func.func @transform_3(%arg0: i32) -> (i32, i32, i32) {
    %c0_i32 = arith.constant 0 : i32
    %c0_i32_0 = arith.constant 0 : i32
    %c0_i32_1 = arith.constant 0 : i32
    return %arg0, %c0_i32, %c0_i32_0 : i32, i32, i32
  }
  func.func @transform_4(%arg0: i32) -> (i32, i32, i32) {
    %c0_i32 = arith.constant 0 : i32
    %c0_i32_0 = arith.constant 0 : i32
    %c0_i32_1 = arith.constant 0 : i32
    return %arg0, %c0_i32, %c0_i32_0 : i32, i32, i32
  }
}

</mosaic_0001>

<llo_original>
// kernel: tpu_custom_call.1
$region0: #{tpu_custom_call.1}
  #allocation0 [shape = 'u32[]', space=smem, size = 0x4, offset = 0x4, fixed_abs, tag = 'smem constant byte address 0x4 - core index']
  #allocation1 [shape = 'u32[72,128]{1,0:T(1,128)}', space=vmem, size = 0x9000, scoped, tag = 'internal scratch']
  #allocation2 [shape = 'f32[2,22,1,22]{3,2,1,0:T(1,128)}', space=vmem, size = 0x5800, scoped, tag = 'scratch operand']
  #allocation3 [shape = 'f32[20,1,20]{2,1,0:T(1,128)}', space=vmem, size = 0x2800, scoped, tag = 'scratch operand']
  #allocation4 [shape = 'f32[1,256]{1,0:T(1,128)}', space=vmem, size = 0x400, scoped, tag = 'scratch operand']
  %s0 = inlined_call_operand.hbm [shape: f32[98], index: 0, kind: input, shape index: {}]
  %s1 = inlined_call_operand.hbm [shape: f32[9], index: 1, kind: input, shape index: {}]
  %s2 = inlined_call_operand.vmem [shape: f32[2], index: 2, kind: input, shape index: {}]
  %s3 = inlined_call_operand.hbm [shape: f32[2,4,256], index: 3, kind: input, shape index: {}]
  %s4 = inlined_call_operand.hbm [shape: f32[2,4,256], index: 4, kind: output, shape index: {}]
  %s5 = sld [smem:[#allocation0]]
  $region69: #{tpu_custom_call.1} parent=0
    _
  %s7 = ssub.s32 1, %s5
  %s8 = scalar_select 0, %s7, %s5
  $region1: #{tpu_custom_call.1} parent=0
    #allocation5 [shape = 'u8[512]{0}', space=smem, size = 0x200, scoped, tag = 'input window, operand 0, single buffered']
    #allocation6 [shape = 's32[2]{0}', space=sflag, size = 0x8, scoped, tag = 'scoped memory for tpu_custom_call.1']
    #allocation7 [shape = 's32[2]{0}', space=sflag, size = 0x8, scoped, tag = 'scoped memory for tpu_custom_call.1']
    #allocation8 [shape = 's32[2]{0}', space=sflag, size = 0x8, scoped, tag = 'scoped memory for tpu_custom_call.1']
    #allocation9 [shape = 's32[2]{0}', space=sflag, size = 0x8, scoped, tag = 'scoped memory for tpu_custom_call.1']
    #allocation10 [shape = 'u8[512]{0}', space=smem, size = 0x200, scoped, tag = 'input window, operand 1, single buffered']
    #allocation11 [shape = 's32[1]{0}', space=sflag, size = 0x4, scoped, tag = 'scoped memory for tpu_custom_call.1']
    #allocation12 [shape = 'u8[512]{0}', space=smem, size = 0x200, scoped, tag = 'input window, operand 2, single buffered']
    #allocation13 [shape = 'u8[8192]{0}', space=vmem, size = 0x2000, scoped, tag = 'input window, operand 3']
    #allocation14 [shape = 'u8[8192]{0}', space=vmem, size = 0x2000, scoped, tag = 'output window, operand 0']
    %9 = vsyncpa [#allocation8], 0
    %10 = vsyncpa [#allocation11], 0
    %11 = vsyncpa [#allocation9], 0
    %12 = vsyncpa [#allocation6], 0
    %s13 = scalar_lea.sflag [#allocation6], 1
    %14 = vsyncpa %s13, 0
    %15 = vsyncpa [#allocation7], 0
    %s16 = scalar_lea.sflag [#allocation7], 1
    %17 = vsyncpa %s16, 0
    loop: start=0, step=1, limit=4
    $region2: #{tpu_custom_call.1} parent=1 // loop_pre_header
      _
    $region3: #{tpu_custom_call.1} parent=1 // loop_header
      %s19 = sphi 0, %s23
      %p20 = scmp.ge.s32.totalorder %s19, 4
      %s27 = sphi 0, %s27
      %s29 = sphi 0, %s27
      %s30 = sphi 0, %s29
      %s44 = sphi 0, %s30
      %s48 = sphi 0, %s48
      %s50 = sphi 0, %s48
      %s51 = sphi 0, %s50
      %s65 = sphi 0, %s51
      %s69 = sphi 0, %s69
      %s71 = sphi 0, %s69
      %s72 = sphi 0, %s71
      %s86 = sphi 0, %s72
      %s92 = sphi 0, %s94
      %s95 = sphi 0, %s92
      %s96 = sphi 0, %s95
      %s112 = sphi 0, %s96
      %s118 = sphi 0, %s120
      %s121 = sphi 0, %s118
      %s122 = sphi 0, %s121
      %s138 = sphi 0, %s122
    $region4: #{tpu_custom_call.1} parent=1 // loop_header_branch
      %22 = sbr.rel (%p20) target = $region8
    $region5: #{tpu_custom_call.1} parent=1 // loop_body
      %s24 = ssub.s32 %s19, 1
      %s25 = ssub.s32 %s19, 2
      %s26 = sadd.s32 %s19, 1
      %s28 = sadd.s32 %s27, 1
      %p31 = scmp.eq.s32.totalorder %s19, 1
      %p32 = scmp.ne.s32.totalorder %s27, %s29
      %p33 = scmp.eq.s32.totalorder %s19, 0
      %p34 = por %p32, %p33
      %p35 = scmp.ne.s32.totalorder %s27, %s29
      %p36 = scmp.eq.s32.totalorder %s24, 1
      %p37 = por %p35, %p36
      %p38 = scmp.ne.s32.totalorder %s29, %s30
      %p39 = scmp.eq.s32.totalorder %s24, 0
      %p40 = por %p38, %p39
      %p41 = scmp.ne.s32.totalorder %s29, %s30
      %p42 = scmp.eq.s32.totalorder %s25, 1
      %p43 = por %p41, %p42
      %p45 = scmp.ne.s32.totalorder %s30, %s44
      %p46 = scmp.eq.s32.totalorder %s25, 0
      %p47 = por %p45, %p46
      %s49 = sadd.s32 %s48, 1
      %p52 = scmp.eq.s32.totalorder %s19, 1
      %p53 = scmp.ne.s32.totalorder %s48, %s50
      %p54 = scmp.eq.s32.totalorder %s19, 0
      %p55 = por %p53, %p54
      %p56 = scmp.ne.s32.totalorder %s48, %s50
      %p57 = scmp.eq.s32.totalorder %s24, 1
      %p58 = por %p56, %p57
      %p59 = scmp.ne.s32.totalorder %s50, %s51
      %p60 = scmp.eq.s32.totalorder %s24, 0
      %p61 = por %p59, %p60
      %p62 = scmp.ne.s32.totalorder %s50, %s51
      %p63 = scmp.eq.s32.totalorder %s25, 1
      %p64 = por %p62, %p63
      %p66 = scmp.ne.s32.totalorder %s51, %s65
      %p67 = scmp.eq.s32.totalorder %s25, 0
      %p68 = por %p66, %p67
      %s70 = sadd.s32 %s69, 1
      %p73 = scmp.eq.s32.totalorder %s19, 1
      %p74 = scmp.ne.s32.totalorder %s69, %s71
      %p75 = scmp.eq.s32.totalorder %s19, 0
      %p76 = por %p74, %p75
      %p77 = scmp.ne.s32.totalorder %s69, %s71
      %p78 = scmp.eq.s32.totalorder %s24, 1
      %p79 = por %p77, %p78
      %p80 = scmp.ne.s32.totalorder %s71, %s72
      %p81 = scmp.eq.s32.totalorder %s24, 0
      %p82 = por %p80, %p81
      %p83 = scmp.ne.s32.totalorder %s71, %s72
      %p84 = scmp.eq.s32.totalorder %s25, 1
      %p85 = por %p83, %p84
      %p87 = scmp.ne.s32.totalorder %s72, %s86
      %p88 = scmp.eq.s32.totalorder %s25, 0
      %p89 = por %p87, %p88
      %s90 = ssub.s32 %s19, %s26
      %p91 = scmp.eq.s32.totalorder %s90, 0
      %s93 = sadd.s32 %s92, 1
      %s94 = scalar_select %p91, %s92, %s93
      %p97 = pneg %p91
      %p98 = scmp.eq.s32.totalorder %s19, 1
      %p99 = por %p97, %p98
      %p100 = scmp.ne.s32.totalorder %s92, %s95
      %p101 = scmp.eq.s32.totalorder %s19, 0
      %p102 = por %p100, %p101
      %p103 = scmp.ne.s32.totalorder %s92, %s95
      %p104 = scmp.eq.s32.totalorder %s24, 1
      %p105 = por %p103, %p104
      %p106 = scmp.ne.s32.totalorder %s95, %s96
      %p107 = scmp.eq.s32.totalorder %s24, 0
      %p108 = por %p106, %p107
      %p109 = scmp.ne.s32.totalorder %s95, %s96
      %p110 = scmp.eq.s32.totalorder %s25, 1
      %p111 = por %p109, %p110
      %p113 = scmp.ne.s32.totalorder %s96, %s112
      %p114 = scmp.eq.s32.totalorder %s25, 0
      %p115 = por %p113, %p114
      %s116 = ssub.s32 %s19, %s26
      %p117 = scmp.eq.s32.totalorder %s116, 0
      %s119 = sadd.s32 %s118, 1
      %s120 = scalar_select %p117, %s118, %s119
      %p123 = pneg %p117
      %p124 = scmp.eq.s32.totalorder %s19, 1
      %p125 = por %p123, %p124
      %p126 = scmp.ne.s32.totalorder %s118, %s121
      %p127 = scmp.eq.s32.totalorder %s19, 0
      %p128 = por %p126, %p127
      %p129 = scmp.ne.s32.totalorder %s118, %s121
      %p130 = scmp.eq.s32.totalorder %s24, 1
      %p131 = por %p129, %p130
      %p132 = scmp.ne.s32.totalorder %s121, %s122
      %p133 = scmp.eq.s32.totalorder %s24, 0
      %p134 = por %p132, %p133
      %p135 = scmp.ne.s32.totalorder %s121, %s122
      %p136 = scmp.eq.s32.totalorder %s25, 1
      %p137 = por %p135, %p136
      %p139 = scmp.ne.s32.totalorder %s122, %s138
      %p140 = scmp.eq.s32.totalorder %s25, 0
      %p141 = por %p139, %p140
      %p142 = scmp.le.s32.totalorder 1, %s19
      %p143 = scmp.lt.s32.totalorder %s19, 3
      %p144 = pnand %p142, %p143
      %p145 = pneg %p144
      // Predicated region
      $region9: #{tpu_custom_call.1} parent=5 // pred_check
        _
      $region10: #{tpu_custom_call.1} parent=5 // pred_check_branch
        %147 = sbr.rel (%p144) target = $region12
      $region11: #{tpu_custom_call.1} parent=5 // pred_region
        %s148 = ssub.s32 %s19, 1
        // Predicated region
        $region13: #{tpu_custom_call.1} parent=11 // pred_check
          %p149 = pneg %p40
        $region14: #{tpu_custom_call.1} parent=11 // pred_check_branch
          %151 = sbr.rel (%p149) target = $region16
        $region15: #{tpu_custom_call.1} parent=11 // pred_region
          %153 = vsyncadd [#allocation8], 0
          %s155 = sshll.u32 %s0, 4
          %s156 = int_to_ptr.hbm [resolvable:$true] %s155
          %158 = dma.hbm_to_smem %s156, 16, [#allocation5], [#allocation8]
        $region16: #{tpu_custom_call.1} parent=11 // pred_fallthru
          _
        // Predicated region
        $region17: #{tpu_custom_call.1} parent=11 // pred_check
          %p159 = pneg %p61
        $region18: #{tpu_custom_call.1} parent=11 // pred_check_branch
          %161 = sbr.rel (%p159) target = $region20
        $region19: #{tpu_custom_call.1} parent=11 // pred_region
          %163 = vsyncadd [#allocation11], 0
          %s165 = sshll.u32 %s1, 4
          %s166 = int_to_ptr.hbm [resolvable:$true] %s165
          %168 = dma.hbm_to_smem %s166, 16, [#allocation10], [#allocation11]
        $region20: #{tpu_custom_call.1} parent=11 // pred_fallthru
          _
        // Predicated region
        $region21: #{tpu_custom_call.1} parent=11 // pred_check
          %p169 = pneg %p82
        $region22: #{tpu_custom_call.1} parent=11 // pred_check_branch
          %171 = sbr.rel (%p169) target = $region24
        $region23: #{tpu_custom_call.1} parent=11 // pred_region
          %173 = vsyncadd [#allocation9], 0
          %s175 = sshll.u32 %s2, 4
          %s176 = int_to_ptr.vmem [resolvable:$true] %s175
          %178 = dma.vmem_to_smem %s176, 16, [#allocation12], [#allocation9]
        $region24: #{tpu_custom_call.1} parent=11 // pred_fallthru
          _
      $region12: #{tpu_custom_call.1} parent=5 // pred_fallthru
        _
      %p179 = scmp.lt.s32.totalorder %s19, 2
      // Predicated region
      $region25: #{tpu_custom_call.1} parent=5 // pred_check
        %p180 = pneg %p179
      $region26: #{tpu_custom_call.1} parent=5 // pred_check_branch
        %182 = sbr.rel (%p180) target = $region28
      $region27: #{tpu_custom_call.1} parent=5 // pred_region
        // Predicated region
        $region29: #{tpu_custom_call.1} parent=27 // pred_check
          %p183 = pneg %p102
        $region30: #{tpu_custom_call.1} parent=27 // pred_check_branch
          %185 = sbr.rel (%p183) target = $region32
        $region31: #{tpu_custom_call.1} parent=27 // pred_region
          %s186 = sand.u32 %s92, 1
          %s187 = scalar_lea.sflag [#allocation6], %s186
          %s188 = sand.u32 %s92, 1
          %s189 = smul.addr %s188, 8
          %s190 = scalar_lea.vmem [#allocation13], %s189
          %192 = vsyncadd %s187, 0
          %s193 = smul.addr %s19, 2
          %s194 = smul.addr %s193, 4
          %s195 = scalar_lea.hbm %s3, %s194
          %s197 = sshll.u32 %s195, 4
          %s198 = int_to_ptr.hbm [resolvable:$true] %s197
          %s199 = sshll.u32 %s190, 4
          %s200 = int_to_ptr.vmem [resolvable:$true] %s199
          %202 = dma.hbm_to_vmem [thread:$0]  %s198, 128, %s200, %s187
        $region32: #{tpu_custom_call.1} parent=27 // pred_fallthru
          _
      $region28: #{tpu_custom_call.1} parent=5 // pred_fallthru
        _
      %p203 = scmp.le.s32.totalorder 1, %s19
      %p204 = scmp.lt.s32.totalorder %s19, 3
      %p205 = pnand %p203, %p204
      %p206 = pneg %p205
      // Predicated region
      $region33: #{tpu_custom_call.1} parent=5 // pred_check
        _
      $region34: #{tpu_custom_call.1} parent=5 // pred_check_branch
        %208 = sbr.rel (%p205) target = $region36
      $region35: #{tpu_custom_call.1} parent=5 // pred_region
        %s209 = ssub.s32 %s19, 1
        // Predicated region
        $region37: #{tpu_custom_call.1} parent=35 // pred_check
          %p210 = pneg %p40
        $region38: #{tpu_custom_call.1} parent=35 // pred_check_branch
          %212 = sbr.rel (%p210) target = $region40
        $region39: #{tpu_custom_call.1} parent=35 // pred_region
          %214 = dma.done [#allocation8], 16
        $region40: #{tpu_custom_call.1} parent=35 // pred_fallthru
          _
        // Predicated region
        $region41: #{tpu_custom_call.1} parent=35 // pred_check
          %p215 = pneg %p61
        $region42: #{tpu_custom_call.1} parent=35 // pred_check_branch
          %217 = sbr.rel (%p215) target = $region44
        $region43: #{tpu_custom_call.1} parent=35 // pred_region
          %219 = dma.done [#allocation11], 16
        $region44: #{tpu_custom_call.1} parent=35 // pred_fallthru
          _
        // Predicated region
        $region45: #{tpu_custom_call.1} parent=35 // pred_check
          %p220 = pneg %p82
        $region46: #{tpu_custom_call.1} parent=35 // pred_check_branch
          %222 = sbr.rel (%p220) target = $region48
        $region47: #{tpu_custom_call.1} parent=35 // pred_region
          %224 = dma.done [#allocation9], 16
        $region48: #{tpu_custom_call.1} parent=35 // pred_fallthru
          _
        %s225 = sand.u32 %s95, 1
        %s226 = scalar_lea.sflag [#allocation6], %s225
        %s227 = sand.u32 %s95, 1
        %s228 = smul.addr %s227, 8
        %s229 = scalar_lea.vmem [#allocation13], %s228
        // Predicated region
        $region49: #{tpu_custom_call.1} parent=35 // pred_check
          %p230 = pneg %p108
        $region50: #{tpu_custom_call.1} parent=35 // pred_check_branch
          %232 = sbr.rel (%p230) target = $region52
        $region51: #{tpu_custom_call.1} parent=35 // pred_region
          %234 = dma.done %s226, 128
        $region52: #{tpu_custom_call.1} parent=35 // pred_fallthru
          _
        %235 = sfence
        %p236 = pneg %p40
        %p237 = pneg %p37
        %p238 = pneg %p61
        %p239 = pneg %p58
        %p240 = pneg %p82
        %p241 = pneg %p79
        %s242 = sand.u32 %s95, 1
        %s243 = scalar_lea.sflag [#allocation6], %s242
        %s244 = sand.u32 %s95, 1
        %s245 = smul.addr %s244, 8
        %s246 = scalar_lea.vmem [#allocation13], %s245
        %p247 = pneg %p108
        %p248 = pneg %p105
        %p249 = pneg %p134
        %p250 = pneg %p131
        %s251 = sand.u32 %s121, 1
        %s252 = scalar_lea.sflag [#allocation7], %s251
        %s253 = sand.u32 %s121, 1
        %s254 = smul.addr %s253, 8
        %s255 = scalar_lea.vmem [#allocation14], %s254
        %p256 = scmp.eq.s32.totalorder %s24, 0
        // Predicated region
        $region53: #{tpu_custom_call.1} parent=35 // pred_check
          %p257 = pneg %p256
        $region54: #{tpu_custom_call.1} parent=35 // pred_check_branch
          %259 = sbr.rel (%p257) target = $region56
        $region55: #{tpu_custom_call.1} parent=35 // pred_region
          %vm260 = vcmask 172032
          %261 = vst.msk [vmem:[#allocation2] sm:$0x1] %vm260, 0.0
          %262 = vst.msk [vmem:[#allocation2 + $0x1] sm:$0x1] %vm260, 0.0
          %263 = vst.msk [vmem:[#allocation2 + $0x2] sm:$0x1] %vm260, 0.0
          %264 = vst.msk [vmem:[#allocation2 + $0x3] sm:$0x1] %vm260, 0.0
          %265 = vst.msk [vmem:[#allocation2 + $0x4] sm:$0x1] %vm260, 0.0
          %266 = vst.msk [vmem:[#allocation2 + $0x5] sm:$0x1] %vm260, 0.0
          %267 = vst.msk [vmem:[#allocation2 + $0x6] sm:$0x1] %vm260, 0.0
          %268 = vst.msk [vmem:[#allocation2 + $0x7] sm:$0x1] %vm260, 0.0
          %269 = vst.msk [vmem:[#allocation2 + $0x8] sm:$0x1] %vm260, 0.0
          %270 = vst.msk [vmem:[#allocation2 + $0x9] sm:$0x1] %vm260, 0.0
          %271 = vst.msk [vmem:[#allocation2 + $0xa] sm:$0x1] %vm260, 0.0
          %272 = vst.msk [vmem:[#allocation2 + $0xb] sm:$0x1] %vm260, 0.0
          %273 = vst.msk [vmem:[#allocation2 + $0xc] sm:$0x1] %vm260, 0.0
          %274 = vst.msk [vmem:[#allocation2 + $0xd] sm:$0x1] %vm260, 0.0
          %275 = vst.msk [vmem:[#allocation2 + $0xe] sm:$0x1] %vm260, 0.0
          %276 = vst.msk [vmem:[#allocation2 + $0xf] sm:$0x1] %vm260, 0.0
          %277 = vst.msk [vmem:[#allocation2 + $0x10] sm:$0x1] %vm260, 0.0
          %278 = vst.msk [vmem:[#allocation2 + $0x11] sm:$0x1] %vm260, 0.0
          %279 = vst.msk [vmem:[#allocation2 + $0x12] sm:$0x1] %vm260, 0.0
          %280 = vst.msk [vmem:[#allocation2 + $0x13] sm:$0x1] %vm260, 0.0
          %281 = vst.msk [vmem:[#allocation2 + $0x14] sm:$0x1] %vm260, 0.0
          %282 = vst.msk [vmem:[#allocation2 + $0x15] sm:$0x1] %vm260, 0.0
          %283 = vst.msk [vmem:[#allocation2 + $0x16] sm:$0x1] %vm260, 0.0
          %284 = vst.msk [vmem:[#allocation2 + $0x17] sm:$0x1] %vm260, 0.0
          %285 = vst.msk [vmem:[#allocation2 + $0x18] sm:$0x1] %vm260, 0.0
          %286 = vst.msk [vmem:[#allocation2 + $0x19] sm:$0x1] %vm260, 0.0
          %287 = vst.msk [vmem:[#allocation2 + $0x1a] sm:$0x1] %vm260, 0.0
          %288 = vst.msk [vmem:[#allocation2 + $0x1b] sm:$0x1] %vm260, 0.0
          %289 = vst.msk [vmem:[#allocation2 + $0x1c] sm:$0x1] %vm260, 0.0
          %290 = vst.msk [vmem:[#allocation2 + $0x1d] sm:$0x1] %vm260, 0.0
          %291 = vst.msk [vmem:[#allocation2 + $0x1e] sm:$0x1] %vm260, 0.0
          %292 = vst.msk [vmem:[#allocation2 + $0x1f] sm:$0x1] %vm260, 0.0
          %293 = vst.msk [vmem:[#allocation2 + $0x20] sm:$0x1] %vm260, 0.0
          %294 = vst.msk [vmem:[#allocation2 + $0x21] sm:$0x1] %vm260, 0.0
          %295 = vst.msk [vmem:[#allocation2 + $0x22] sm:$0x1] %vm260, 0.0
          %296 = vst.msk [vmem:[#allocation2 + $0x23] sm:$0x1] %vm260, 0.0
          %297 = vst.msk [vmem:[#allocation2 + $0x24] sm:$0x1] %vm260, 0.0
          %298 = vst.msk [vmem:[#allocation2 + $0x25] sm:$0x1] %vm260, 0.0
          %299 = vst.msk [vmem:[#allocation2 + $0x26] sm:$0x1] %vm260, 0.0
          %300 = vst.msk [vmem:[#allocation2 + $0x27] sm:$0x1] %vm260, 0.0
          %301 = vst.msk [vmem:[#allocation2 + $0x28] sm:$0x1] %vm260, 0.0
          %302 = vst.msk [vmem:[#allocation2 + $0x29] sm:$0x1] %vm260, 0.0
          %303 = vst.msk [vmem:[#allocation2 + $0x2a] sm:$0x1] %vm260, 0.0
          %304 = vst.msk [vmem:[#allocation2 + $0x2b] sm:$0x1] %vm260, 0.0
          %vm305 = vcmask 155648
          %306 = vst.msk [vmem:[#allocation3] sm:$0x1] %vm305, 0.0
          %307 = vst.msk [vmem:[#allocation3 + $0x1] sm:$0x1] %vm305, 0.0
          %308 = vst.msk [vmem:[#allocation3 + $0x2] sm:$0x1] %vm305, 0.0
          %309 = vst.msk [vmem:[#allocation3 + $0x3] sm:$0x1] %vm305, 0.0
          %310 = vst.msk [vmem:[#allocation3 + $0x4] sm:$0x1] %vm305, 0.0
          %311 = vst.msk [vmem:[#allocation3 + $0x5] sm:$0x1] %vm305, 0.0
          %312 = vst.msk [vmem:[#allocation3 + $0x6] sm:$0x1] %vm305, 0.0
          %313 = vst.msk [vmem:[#allocation3 + $0x7] sm:$0x1] %vm305, 0.0
          %314 = vst.msk [vmem:[#allocation3 + $0x8] sm:$0x1] %vm305, 0.0
          %315 = vst.msk [vmem:[#allocation3 + $0x9] sm:$0x1] %vm305, 0.0
          %316 = vst.msk [vmem:[#allocation3 + $0xa] sm:$0x1] %vm305, 0.0
          %317 = vst.msk [vmem:[#allocation3 + $0xb] sm:$0x1] %vm305, 0.0
          %318 = vst.msk [vmem:[#allocation3 + $0xc] sm:$0x1] %vm305, 0.0
          %319 = vst.msk [vmem:[#allocation3 + $0xd] sm:$0x1] %vm305, 0.0
          %320 = vst.msk [vmem:[#allocation3 + $0xe] sm:$0x1] %vm305, 0.0
          %321 = vst.msk [vmem:[#allocation3 + $0xf] sm:$0x1] %vm305, 0.0
          %322 = vst.msk [vmem:[#allocation3 + $0x10] sm:$0x1] %vm305, 0.0
          %323 = vst.msk [vmem:[#allocation3 + $0x11] sm:$0x1] %vm305, 0.0
          %324 = vst.msk [vmem:[#allocation3 + $0x12] sm:$0x1] %vm305, 0.0
          %325 = vst.msk [vmem:[#allocation3 + $0x13] sm:$0x1] %vm305, 0.0
        $region56: #{tpu_custom_call.1} parent=35 // pred_fallthru
          _
        %v326 = vld [vmem:[%s229] sm:$0xff]
        %328 = vst [vmem:[#allocation1] ss:$2 sm:$0xff] %v326
        %v329 = vld.sshfl [vmem:[#allocation1] sm:$0xff pattern:$0x75316420]
        %v330 = vld.sshfl [vmem:[#allocation1 + $0x8] sm:$0xff pattern:$0x75316420]
        %vm333 = vcmask 1043456
        %v334 = vsel %vm333, %v329, 0.0
        %v335 = vrot.slane %v334, 4
        %v336 = vadd.f32 %v334, %v335
        %v337 = vrot.slane %v336, 2
        %v338 = vadd.f32 %v336, %v337
        %v339 = vrot.slane %v338, 1
        %v340 = vadd.f32 %v338, %v339
        %v341 = vsel %vm333, %v330, 0.0
        %v342 = vrot.slane %v341, 4
        %v343 = vadd.f32 %v341, %v342
        %v344 = vrot.slane %v343, 2
        %v345 = vadd.f32 %v343, %v344
        %v346 = vrot.slane %v345, 1
        %v347 = vadd.f32 %v345, %v346
        %v348 = vrcp.pop 4.0
        %v349 = vmul.f32 4.0, %v348
        %v350 = vsub.f32 1.0, %v349
        %v351 = vmul.f32 %v348, %v350
        %v352 = vadd.f32 %v348, %v351
        %vm353 = vweird.f32 %v348
        %v354 = vsel %vm353, %v348, %v352
        %v355 = vmul.f32 %v340, %v354
        %v356 = vmul.f32 %v347, %v354
        %357 = vst [vmem:[#allocation1] ss:$2 sm:$0xff] %v326
        %v358 = vld.sshfl [vmem:[#allocation1] sm:$0xff pattern:$0x75316420]
        %v359 = vld.sshfl [vmem:[#allocation1 + $0x8] sm:$0xff pattern:$0x75316420]
        %v362 = vsel %vm333, %v358, -inf
        %v363 = vrot.slane %v362, 4
        %v364 = vmax.f32 %v362, %v363
        %v365 = vrot.slane %v364, 2
        %v366 = vmax.f32 %v364, %v365
        %v367 = vrot.slane %v366, 1
        %v368 = vmax.f32 %v366, %v367
        %v369 = vsel %vm333, %v359, -inf
        %v370 = vrot.slane %v369, 4
        %v371 = vmax.f32 %v369, %v370
        %v372 = vrot.slane %v371, 2
        %v373 = vmax.f32 %v371, %v372
        %v374 = vrot.slane %v373, 1
        %v375 = vmax.f32 %v373, %v374
        %377 = vrot.lane.b32.xlu0 %v355, 3
        %v378 = vpop.permute.xlu0 %377
        %s380 = scalar_lea.vmem [#allocation2], 3
        %vm381 = vcmask 147480
        %382 = vst.msk [vmem:[%s380] sm:$0x1] %vm381, %v378
        %384 = vrot.lane.b32.xlu0 %v368, 3
        %v385 = vpop.permute.xlu0 %384
        %s387 = scalar_lea.vmem [#allocation2], 25
        %388 = vst.msk [vmem:[%s387] sm:$0x1] %vm381, %v385
        %389 = vrot.lane.b32.xlu0 %v355, 115
        %v390 = vpop.permute.xlu0 %389
        %s392 = scalar_lea.vmem [#allocation2], 4
        %393 = vst.msk [vmem:[%s392] sm:$0x1] %vm381, %v390
        %394 = vrot.lane.b32.xlu0 %v368, 115
        %v395 = vpop.permute.xlu0 %394
        %s397 = scalar_lea.vmem [#allocation2], 26
        %398 = vst.msk [vmem:[%s397] sm:$0x1] %vm381, %v395
        %399 = vrot.lane.b32.xlu0 %v355, 99
        %v400 = vpop.permute.xlu0 %399
        %s402 = scalar_lea.vmem [#allocation2], 5
        %403 = vst.msk [vmem:[%s402] sm:$0x1] %vm381, %v400
        %404 = vrot.lane.b32.xlu0 %v368, 99
        %v405 = vpop.permute.xlu0 %404
        %s407 = scalar_lea.vmem [#allocation2], 27
        %408 = vst.msk [vmem:[%s407] sm:$0x1] %vm381, %v405
        %409 = vrot.lane.b32.xlu0 %v355, 83
        %v410 = vpop.permute.xlu0 %409
        %s412 = scalar_lea.vmem [#allocation2], 6
        %413 = vst.msk [vmem:[%s412] sm:$0x1] %vm381, %v410
        %414 = vrot.lane.b32.xlu0 %v368, 83
        %v415 = vpop.permute.xlu0 %414
        %s417 = scalar_lea.vmem [#allocation2], 28
        %418 = vst.msk [vmem:[%s417] sm:$0x1] %vm381, %v415
        %419 = vrot.lane.b32.xlu0 %v355, 67
        %v420 = vpop.permute.xlu0 %419
        %s422 = scalar_lea.vmem [#allocation2], 7
        %423 = vst.msk [vmem:[%s422] sm:$0x1] %vm381, %v420
        %424 = vrot.lane.b32.xlu0 %v368, 67
        %v425 = vpop.permute.xlu0 %424
        %s427 = scalar_lea.vmem [#allocation2], 29
        %428 = vst.msk [vmem:[%s427] sm:$0x1] %vm381, %v425
        %429 = vrot.lane.b32.xlu0 %v355, 51
        %v430 = vpop.permute.xlu0 %429
        %s432 = scalar_lea.vmem [#allocation2], 8
        %433 = vst.msk [vmem:[%s432] sm:$0x1] %vm381, %v430
        %434 = vrot.lane.b32.xlu0 %v368, 51
        %v435 = vpop.permute.xlu0 %434
        %s437 = scalar_lea.vmem [#allocation2], 30
        %438 = vst.msk [vmem:[%s437] sm:$0x1] %vm381, %v435
        %439 = vrot.lane.b32.xlu0 %v355, 35
        %v440 = vpop.permute.xlu0 %439
        %s442 = scalar_lea.vmem [#allocation2], 9
        %443 = vst.msk [vmem:[%s442] sm:$0x1] %vm381, %v440
        %444 = vrot.lane.b32.xlu0 %v368, 35
        %v445 = vpop.permute.xlu0 %444
        %s447 = scalar_lea.vmem [#allocation2], 31
        %448 = vst.msk [vmem:[%s447] sm:$0x1] %vm381, %v445
        %449 = vrot.lane.b32.xlu0 %v355, 19
        %v450 = vpop.permute.xlu0 %449
        %s452 = scalar_lea.vmem [#allocation2], 10
        %453 = vst.msk [vmem:[%s452] sm:$0x1] %vm381, %v450
        %454 = vrot.lane.b32.xlu0 %v368, 19
        %v455 = vpop.permute.xlu0 %454
        %s457 = scalar_lea.vmem [#allocation2], 32
        %458 = vst.msk [vmem:[%s457] sm:$0x1] %vm381, %v455
        %460 = vrot.lane.b32.xlu0 %v356, 3
        %v461 = vpop.permute.xlu0 %460
        %s463 = scalar_lea.vmem [#allocation2], 11
        %464 = vst.msk [vmem:[%s463] sm:$0x1] %vm381, %v461
        %466 = vrot.lane.b32.xlu0 %v375, 3
        %v467 = vpop.permute.xlu0 %466
        %s469 = scalar_lea.vmem [#allocation2], 33
        %470 = vst.msk [vmem:[%s469] sm:$0x1] %vm381, %v467
        %471 = vrot.lane.b32.xlu0 %v356, 115
        %v472 = vpop.permute.xlu0 %471
        %s474 = scalar_lea.vmem [#allocation2], 12
        %475 = vst.msk [vmem:[%s474] sm:$0x1] %vm381, %v472
        %476 = vrot.lane.b32.xlu0 %v375, 115
        %v477 = vpop.permute.xlu0 %476
        %s479 = scalar_lea.vmem [#allocation2], 34
        %480 = vst.msk [vmem:[%s479] sm:$0x1] %vm381, %v477
        %481 = vrot.lane.b32.xlu0 %v356, 99
        %v482 = vpop.permute.xlu0 %481
        %s484 = scalar_lea.vmem [#allocation2], 13
        %485 = vst.msk [vmem:[%s484] sm:$0x1] %vm381, %v482
        %486 = vrot.lane.b32.xlu0 %v375, 99
        %v487 = vpop.permute.xlu0 %486
        %s489 = scalar_lea.vmem [#allocation2], 35
        %490 = vst.msk [vmem:[%s489] sm:$0x1] %vm381, %v487
        %491 = vrot.lane.b32.xlu0 %v356, 83
        %v492 = vpop.permute.xlu0 %491
        %s494 = scalar_lea.vmem [#allocation2], 14
        %495 = vst.msk [vmem:[%s494] sm:$0x1] %vm381, %v492
        %496 = vrot.lane.b32.xlu0 %v375, 83
        %v497 = vpop.permute.xlu0 %496
        %s499 = scalar_lea.vmem [#allocation2], 36
        %500 = vst.msk [vmem:[%s499] sm:$0x1] %vm381, %v497
        %501 = vrot.lane.b32.xlu0 %v356, 67
        %v502 = vpop.permute.xlu0 %501
        %s504 = scalar_lea.vmem [#allocation2], 15
        %505 = vst.msk [vmem:[%s504] sm:$0x1] %vm381, %v502
        %506 = vrot.lane.b32.xlu0 %v375, 67
        %v507 = vpop.permute.xlu0 %506
        %s509 = scalar_lea.vmem [#allocation2], 37
        %510 = vst.msk [vmem:[%s509] sm:$0x1] %vm381, %v507
        %511 = vrot.lane.b32.xlu0 %v356, 51
        %v512 = vpop.permute.xlu0 %511
        %s514 = scalar_lea.vmem [#allocation2], 16
        %515 = vst.msk [vmem:[%s514] sm:$0x1] %vm381, %v512
        %516 = vrot.lane.b32.xlu0 %v375, 51
        %v517 = vpop.permute.xlu0 %516
        %s519 = scalar_lea.vmem [#allocation2], 38
        %520 = vst.msk [vmem:[%s519] sm:$0x1] %vm381, %v517
        %521 = vrot.lane.b32.xlu0 %v356, 35
        %v522 = vpop.permute.xlu0 %521
        %s524 = scalar_lea.vmem [#allocation2], 17
        %525 = vst.msk [vmem:[%s524] sm:$0x1] %vm381, %v522
        %526 = vrot.lane.b32.xlu0 %v375, 35
        %v527 = vpop.permute.xlu0 %526
        %s529 = scalar_lea.vmem [#allocation2], 39
        %530 = vst.msk [vmem:[%s529] sm:$0x1] %vm381, %v527
        %531 = vrot.lane.b32.xlu0 %v356, 19
        %v532 = vpop.permute.xlu0 %531
        %s534 = scalar_lea.vmem [#allocation2], 18
        %535 = vst.msk [vmem:[%s534] sm:$0x1] %vm381, %v532
        %536 = vrot.lane.b32.xlu0 %v375, 19
        %v537 = vpop.permute.xlu0 %536
        %s539 = scalar_lea.vmem [#allocation2], 40
        %540 = vst.msk [vmem:[%s539] sm:$0x1] %vm381, %v537
        %s541 = sld [smem:[#allocation12]]
        %v542 = vstv %s541
        %v543 = vld [vmem:[#allocation2] sm:$0x1]
        %v544 = vld [vmem:[#allocation2 + $0x1] sm:$0x1]
        %v545 = vld [vmem:[#allocation2 + $0x2] sm:$0x1]
        %v546 = vld [vmem:[#allocation2 + $0x3] sm:$0x1]
        %v547 = vld [vmem:[#allocation2 + $0x4] sm:$0x1]
        %v548 = vld [vmem:[#allocation2 + $0x5] sm:$0x1]
        %v549 = vld [vmem:[#allocation2 + $0x6] sm:$0x1]
        %v550 = vld [vmem:[#allocation2 + $0x7] sm:$0x1]
        %v551 = vld [vmem:[#allocation2 + $0x8] sm:$0x1]
        %v552 = vld [vmem:[#allocation2 + $0x9] sm:$0x1]
        %v553 = vld [vmem:[#allocation2 + $0xa] sm:$0x1]
        %v554 = vld [vmem:[#allocation2 + $0xb] sm:$0x1]
        %v555 = vld [vmem:[#allocation2 + $0xc] sm:$0x1]
        %v556 = vld [vmem:[#allocation2 + $0xd] sm:$0x1]
        %v557 = vld [vmem:[#allocation2 + $0xe] sm:$0x1]
        %v558 = vld [vmem:[#allocation2 + $0xf] sm:$0x1]
        %v559 = vld [vmem:[#allocation2 + $0x10] sm:$0x1]
        %v560 = vld [vmem:[#allocation2 + $0x11] sm:$0x1]
        %v561 = vld [vmem:[#allocation2 + $0x12] sm:$0x1]
        %v562 = vld [vmem:[#allocation2 + $0x13] sm:$0x1]
        %v563 = vld [vmem:[#allocation2 + $0x14] sm:$0x1]
        %v564 = vld [vmem:[#allocation2 + $0x15] sm:$0x1]
        %s565 = sld [smem:[#allocation5]]
        %v566 = vstv %s565
        %v567 = vmul.f32 %v566, %v543
        %v568 = vmul.f32 %v566, %v544
        %v569 = vmul.f32 %v566, %v545
        %v570 = vmul.f32 %v566, %v546
        %v571 = vmul.f32 %v566, %v547
        %v572 = vmul.f32 %v566, %v548
        %v573 = vmul.f32 %v566, %v549
        %v574 = vmul.f32 %v566, %v550
        %v575 = vmul.f32 %v566, %v551
        %v576 = vmul.f32 %v566, %v552
        %v577 = vmul.f32 %v566, %v553
        %v578 = vmul.f32 %v566, %v554
        %v579 = vmul.f32 %v566, %v555
        %v580 = vmul.f32 %v566, %v556
        %v581 = vmul.f32 %v566, %v557
        %v582 = vmul.f32 %v566, %v558
        %v583 = vadd.f32 %v542, %v567
        %v584 = vadd.f32 %v542, %v568
        %v585 = vadd.f32 %v542, %v569
        %v586 = vadd.f32 %v542, %v570
        %v587 = vadd.f32 %v542, %v571
        %v588 = vadd.f32 %v542, %v572
        %v589 = vadd.f32 %v542, %v573
        %v590 = vadd.f32 %v542, %v574
        %v591 = vadd.f32 %v542, %v575
        %v592 = vadd.f32 %v542, %v576
        %v593 = vadd.f32 %v542, %v577
        %v594 = vadd.f32 %v542, %v578
        %v595 = vadd.f32 %v542, %v579
        %v596 = vadd.f32 %v542, %v580
        %v597 = vadd.f32 %v542, %v581
        %v598 = vadd.f32 %v542, %v582
        %s599 = sld [smem:[#allocation5 + $0x1]]
        %v600 = vstv %s599
        %v601 = vmul.f32 %v600, %v543
        %v602 = vmul.f32 %v600, %v544
        %v603 = vmul.f32 %v600, %v545
        %v604 = vmul.f32 %v600, %v546
        %v605 = vmul.f32 %v600, %v547
        %v606 = vmul.f32 %v600, %v548
        %v607 = vmul.f32 %v600, %v549
        %v608 = vmul.f32 %v600, %v550
        %v609 = vmul.f32 %v600, %v551
        %v610 = vmul.f32 %v600, %v552
        %v611 = vmul.f32 %v600, %v553
        %v612 = vmul.f32 %v600, %v554
        %v613 = vmul.f32 %v600, %v555
        %v614 = vmul.f32 %v600, %v556
        %v615 = vmul.f32 %v600, %v557
        %v616 = vmul.f32 %v600, %v558
        %633 = vrot.lane.b32.xlu0 %v601, 127
        %v634 = vpop.permute.xlu0 %633
        %635 = vrot.lane.b32.xlu0 %v602, 127
        %v636 = vpop.permute.xlu0 %635
        %637 = vrot.lane.b32.xlu0 %v603, 127
        %v638 = vpop.permute.xlu0 %637
        %639 = vrot.lane.b32.xlu0 %v604, 127
        %v640 = vpop.permute.xlu0 %639
        %641 = vrot.lane.b32.xlu0 %v605, 127
        %v642 = vpop.permute.xlu0 %641
        %643 = vrot.lane.b32.xlu0 %v606, 127
        %v644 = vpop.permute.xlu0 %643
        %645 = vrot.lane.b32.xlu0 %v607, 127
        %v646 = vpop.permute.xlu0 %645
        %647 = vrot.lane.b32.xlu0 %v608, 127
        %v648 = vpop.permute.xlu0 %647
        %649 = vrot.lane.b32.xlu0 %v609, 127
        %v650 = vpop.permute.xlu0 %649
        %651 = vrot.lane.b32.xlu0 %v610, 127
        %v652 = vpop.permute.xlu0 %651
        %653 = vrot.lane.b32.xlu0 %v611, 127
        %v654 = vpop.permute.xlu0 %653
        %655 = vrot.lane.b32.xlu0 %v612, 127
        %v656 = vpop.permute.xlu0 %655
        %657 = vrot.lane.b32.xlu0 %v613, 127
        %v658 = vpop.permute.xlu0 %657
        %659 = vrot.lane.b32.xlu0 %v614, 127
        %v660 = vpop.permute.xlu0 %659
        %661 = vrot.lane.b32.xlu0 %v615, 127
        %v662 = vpop.permute.xlu0 %661
        %663 = vrot.lane.b32.xlu0 %v616, 127
        %v664 = vpop.permute.xlu0 %663
        %v681 = vadd.f32 %v583, %v634
        %v682 = vadd.f32 %v584, %v636
        %v683 = vadd.f32 %v585, %v638
        %v684 = vadd.f32 %v586, %v640
        %v685 = vadd.f32 %v587, %v642
        %v686 = vadd.f32 %v588, %v644
        %v687 = vadd.f32 %v589, %v646
        %v688 = vadd.f32 %v590, %v648
        %v689 = vadd.f32 %v591, %v650
        %v690 = vadd.f32 %v592, %v652
        %v691 = vadd.f32 %v593, %v654
        %v692 = vadd.f32 %v594, %v656
        %v693 = vadd.f32 %v595, %v658
        %v694 = vadd.f32 %v596, %v660
        %v695 = vadd.f32 %v597, %v662
        %v696 = vadd.f32 %v598, %v664
        %s697 = sld [smem:[#allocation5 + $0x2]]
        %v698 = vstv %s697
        %v699 = vmul.f32 %v698, %v543
        %v700 = vmul.f32 %v698, %v544
        %v701 = vmul.f32 %v698, %v545
        %v702 = vmul.f32 %v698, %v546
        %v703 = vmul.f32 %v698, %v547
        %v704 = vmul.f32 %v698, %v548
        %v705 = vmul.f32 %v698, %v549
        %v706 = vmul.f32 %v698, %v550
        %v707 = vmul.f32 %v698, %v551
        %v708 = vmul.f32 %v698, %v552
        %v709 = vmul.f32 %v698, %v553
        %v710 = vmul.f32 %v698, %v554
        %v711 = vmul.f32 %v698, %v555
        %v712 = vmul.f32 %v698, %v556
        %v713 = vmul.f32 %v698, %v557
        %v714 = vmul.f32 %v698, %v558
        %731 = vrot.lane.b32.xlu0 %v699, 126
        %v732 = vpop.permute.xlu0 %731
        %733 = vrot.lane.b32.xlu0 %v700, 126
        %v734 = vpop.permute.xlu0 %733
        %735 = vrot.lane.b32.xlu0 %v701, 126
        %v736 = vpop.permute.xlu0 %735
        %737 = vrot.lane.b32.xlu0 %v702, 126
        %v738 = vpop.permute.xlu0 %737
        %739 = vrot.lane.b32.xlu0 %v703, 126
        %v740 = vpop.permute.xlu0 %739
        %741 = vrot.lane.b32.xlu0 %v704, 126
        %v742 = vpop.permute.xlu0 %741
        %743 = vrot.lane.b32.xlu0 %v705, 126
        %v744 = vpop.permute.xlu0 %743
        %745 = vrot.lane.b32.xlu0 %v706, 126
        %v746 = vpop.permute.xlu0 %745
        %747 = vrot.lane.b32.xlu0 %v707, 126
        %v748 = vpop.permute.xlu0 %747
        %749 = vrot.lane.b32.xlu0 %v708, 126
        %v750 = vpop.permute.xlu0 %749
        %751 = vrot.lane.b32.xlu0 %v709, 126
        %v752 = vpop.permute.xlu0 %751
        %753 = vrot.lane.b32.xlu0 %v710, 126
        %v754 = vpop.permute.xlu0 %753
        %755 = vrot.lane.b32.xlu0 %v711, 126
        %v756 = vpop.permute.xlu0 %755
        %757 = vrot.lane.b32.xlu0 %v712, 126
        %v758 = vpop.permute.xlu0 %757
        %759 = vrot.lane.b32.xlu0 %v713, 126
        %v760 = vpop.permute.xlu0 %759
        %761 = vrot.lane.b32.xlu0 %v714, 126
        %v762 = vpop.permute.xlu0 %761
        %v779 = vadd.f32 %v681, %v732
        %v780 = vadd.f32 %v682, %v734
        %v781 = vadd.f32 %v683, %v736
        %v782 = vadd.f32 %v684, %v738
        %v783 = vadd.f32 %v685, %v740
        %v784 = vadd.f32 %v686, %v742
        %v785 = vadd.f32 %v687, %v744
        %v786 = vadd.f32 %v688, %v746
        %v787 = vadd.f32 %v689, %v748
        %v788 = vadd.f32 %v690, %v750
        %v789 = vadd.f32 %v691, %v752
        %v790 = vadd.f32 %v692, %v754
        %v791 = vadd.f32 %v693, %v756
        %v792 = vadd.f32 %v694, %v758
        %v793 = vadd.f32 %v695, %v760
        %v794 = vadd.f32 %v696, %v762
        %s795 = sld [smem:[#allocation5 + $0x3]]
        %v796 = vstv %s795
        %v797 = vmul.f32 %v796, %v543
        %v798 = vmul.f32 %v796, %v544
        %v799 = vmul.f32 %v796, %v545
        %v800 = vmul.f32 %v796, %v546
        %v801 = vmul.f32 %v796, %v547
        %v802 = vmul.f32 %v796, %v548
        %v803 = vmul.f32 %v796, %v549
        %v804 = vmul.f32 %v796, %v550
        %v805 = vmul.f32 %v796, %v551
        %v806 = vmul.f32 %v796, %v552
        %v807 = vmul.f32 %v796, %v553
        %v808 = vmul.f32 %v796, %v554
        %v809 = vmul.f32 %v796, %v555
        %v810 = vmul.f32 %v796, %v556
        %v811 = vmul.f32 %v796, %v557
        %v812 = vmul.f32 %v796, %v558
        %829 = vrot.lane.b32.xlu0 %v797, 125
        %v830 = vpop.permute.xlu0 %829
        %831 = vrot.lane.b32.xlu0 %v798, 125
        %v832 = vpop.permute.xlu0 %831
        %833 = vrot.lane.b32.xlu0 %v799, 125
        %v834 = vpop.permute.xlu0 %833
        %835 = vrot.lane.b32.xlu0 %v800, 125
        %v836 = vpop.permute.xlu0 %835
        %837 = vrot.lane.b32.xlu0 %v801, 125
        %v838 = vpop.permute.xlu0 %837
        %839 = vrot.lane.b32.xlu0 %v802, 125
        %v840 = vpop.permute.xlu0 %839
        %841 = vrot.lane.b32.xlu0 %v803, 125
        %v842 = vpop.permute.xlu0 %841
        %843 = vrot.lane.b32.xlu0 %v804, 125
        %v844 = vpop.permute.xlu0 %843
        %845 = vrot.lane.b32.xlu0 %v805, 125
        %v846 = vpop.permute.xlu0 %845
        %847 = vrot.lane.b32.xlu0 %v806, 125
        %v848 = vpop.permute.xlu0 %847
        %849 = vrot.lane.b32.xlu0 %v807, 125
        %v850 = vpop.permute.xlu0 %849
        %851 = vrot.lane.b32.xlu0 %v808, 125
        %v852 = vpop.permute.xlu0 %851
        %853 = vrot.lane.b32.xlu0 %v809, 125
        %v854 = vpop.permute.xlu0 %853
        %855 = vrot.lane.b32.xlu0 %v810, 125
        %v856 = vpop.permute.xlu0 %855
        %857 = vrot.lane.b32.xlu0 %v811, 125
        %v858 = vpop.permute.xlu0 %857
        %859 = vrot.lane.b32.xlu0 %v812, 125
        %v860 = vpop.permute.xlu0 %859
        %v877 = vadd.f32 %v779, %v830
        %v878 = vadd.f32 %v780, %v832
        %v879 = vadd.f32 %v781, %v834
        %v880 = vadd.f32 %v782, %v836
        %v881 = vadd.f32 %v783, %v838
        %v882 = vadd.f32 %v784, %v840
        %v883 = vadd.f32 %v785, %v842
        %v884 = vadd.f32 %v786, %v844
        %v885 = vadd.f32 %v787, %v846
        %v886 = vadd.f32 %v788, %v848
        %v887 = vadd.f32 %v789, %v850
        %v888 = vadd.f32 %v790, %v852
        %v889 = vadd.f32 %v791, %v854
        %v890 = vadd.f32 %v792, %v856
        %v891 = vadd.f32 %v793, %v858
        %v892 = vadd.f32 %v794, %v860
        %s893 = sld [smem:[#allocation5 + $0x4]]
        %v894 = vstv %s893
        %v895 = vmul.f32 %v894, %v543
        %v896 = vmul.f32 %v894, %v544
        %v897 = vmul.f32 %v894, %v545
        %v898 = vmul.f32 %v894, %v546
        %v899 = vmul.f32 %v894, %v547
        %v900 = vmul.f32 %v894, %v548
        %v901 = vmul.f32 %v894, %v549
        %v902 = vmul.f32 %v894, %v550
        %v903 = vmul.f32 %v894, %v551
        %v904 = vmul.f32 %v894, %v552
        %v905 = vmul.f32 %v894, %v553
        %v906 = vmul.f32 %v894, %v554
        %v907 = vmul.f32 %v894, %v555
        %v908 = vmul.f32 %v894, %v556
        %v909 = vmul.f32 %v894, %v557
        %v910 = vmul.f32 %v894, %v558
        %927 = vrot.lane.b32.xlu0 %v895, 124
        %v928 = vpop.permute.xlu0 %927
        %929 = vrot.lane.b32.xlu0 %v896, 124
        %v930 = vpop.permute.xlu0 %929
        %931 = vrot.lane.b32.xlu0 %v897, 124
        %v932 = vpop.permute.xlu0 %931
        %933 = vrot.lane.b32.xlu0 %v898, 124
        %v934 = vpop.permute.xlu0 %933
        %935 = vrot.lane.b32.xlu0 %v899, 124
        %v936 = vpop.permute.xlu0 %935
        %937 = vrot.lane.b32.xlu0 %v900, 124
        %v938 = vpop.permute.xlu0 %937
        %939 = vrot.lane.b32.xlu0 %v901, 124
        %v940 = vpop.permute.xlu0 %939
        %941 = vrot.lane.b32.xlu0 %v902, 124
        %v942 = vpop.permute.xlu0 %941
        %943 = vrot.lane.b32.xlu0 %v903, 124
        %v944 = vpop.permute.xlu0 %943
        %945 = vrot.lane.b32.xlu0 %v904, 124
        %v946 = vpop.permute.xlu0 %945
        %947 = vrot.lane.b32.xlu0 %v905, 124
        %v948 = vpop.permute.xlu0 %947
        %949 = vrot.lane.b32.xlu0 %v906, 124
        %v950 = vpop.permute.xlu0 %949
        %951 = vrot.lane.b32.xlu0 %v907, 124
        %v952 = vpop.permute.xlu0 %951
        %953 = vrot.lane.b32.xlu0 %v908, 124
        %v954 = vpop.permute.xlu0 %953
        %955 = vrot.lane.b32.xlu0 %v909, 124
        %v956 = vpop.permute.xlu0 %955
        %957 = vrot.lane.b32.xlu0 %v910, 124
        %v958 = vpop.permute.xlu0 %957
        %v975 = vadd.f32 %v877, %v928
        %v976 = vadd.f32 %v878, %v930
        %v977 = vadd.f32 %v879, %v932
        %v978 = vadd.f32 %v880, %v934
        %v979 = vadd.f32 %v881, %v936
        %v980 = vadd.f32 %v882, %v938
        %v981 = vadd.f32 %v883, %v940
        %v982 = vadd.f32 %v884, %v942
        %v983 = vadd.f32 %v885, %v944
        %v984 = vadd.f32 %v886, %v946
        %v985 = vadd.f32 %v887, %v948
        %v986 = vadd.f32 %v888, %v950
        %v987 = vadd.f32 %v889, %v952
        %v988 = vadd.f32 %v890, %v954
        %v989 = vadd.f32 %v891, %v956
        %v990 = vadd.f32 %v892, %v958
        %s991 = sld [smem:[#allocation5 + $0x5]]
        %v992 = vstv %s991
        %v993 = vmul.f32 %v992, %v543
        %v994 = vmul.f32 %v992, %v544
        %v995 = vmul.f32 %v992, %v545
        %v996 = vmul.f32 %v992, %v546
        %v997 = vmul.f32 %v992, %v547
        %v998 = vmul.f32 %v992, %v548
        %v999 = vmul.f32 %v992, %v549
        %v1000 = vmul.f32 %v992, %v550
        %v1001 = vmul.f32 %v992, %v551
        %v1002 = vmul.f32 %v992, %v552
        %v1003 = vmul.f32 %v992, %v553
        %v1004 = vmul.f32 %v992, %v554
        %v1005 = vmul.f32 %v992, %v555
        %v1006 = vmul.f32 %v992, %v556
        %v1007 = vmul.f32 %v992, %v557
        %v1008 = vmul.f32 %v992, %v558
        %1025 = vrot.lane.b32.xlu0 %v993, 123
        %v1026 = vpop.permute.xlu0 %1025
        %1027 = vrot.lane.b32.xlu0 %v994, 123
        %v1028 = vpop.permute.xlu0 %1027
        %1029 = vrot.lane.b32.xlu0 %v995, 123
        %v1030 = vpop.permute.xlu0 %1029
        %1031 = vrot.lane.b32.xlu0 %v996, 123
        %v1032 = vpop.permute.xlu0 %1031
        %1033 = vrot.lane.b32.xlu0 %v997, 123
        %v1034 = vpop.permute.xlu0 %1033
        %1035 = vrot.lane.b32.xlu0 %v998, 123
        %v1036 = vpop.permute.xlu0 %1035
        %1037 = vrot.lane.b32.xlu0 %v999, 123
        %v1038 = vpop.permute.xlu0 %1037
        %1039 = vrot.lane.b32.xlu0 %v1000, 123
        %v1040 = vpop.permute.xlu0 %1039
        %1041 = vrot.lane.b32.xlu0 %v1001, 123
        %v1042 = vpop.permute.xlu0 %1041
        %1043 = vrot.lane.b32.xlu0 %v1002, 123
        %v1044 = vpop.permute.xlu0 %1043
        %1045 = vrot.lane.b32.xlu0 %v1003, 123
        %v1046 = vpop.permute.xlu0 %1045
        %1047 = vrot.lane.b32.xlu0 %v1004, 123
        %v1048 = vpop.permute.xlu0 %1047
        %1049 = vrot.lane.b32.xlu0 %v1005, 123
        %v1050 = vpop.permute.xlu0 %1049
        %1051 = vrot.lane.b32.xlu0 %v1006, 123
        %v1052 = vpop.permute.xlu0 %1051
        %1053 = vrot.lane.b32.xlu0 %v1007, 123
        %v1054 = vpop.permute.xlu0 %1053
        %1055 = vrot.lane.b32.xlu0 %v1008, 123
        %v1056 = vpop.permute.xlu0 %1055
        %v1073 = vadd.f32 %v975, %v1026
        %v1074 = vadd.f32 %v976, %v1028
        %v1075 = vadd.f32 %v977, %v1030
        %v1076 = vadd.f32 %v978, %v1032
        %v1077 = vadd.f32 %v979, %v1034
        %v1078 = vadd.f32 %v980, %v1036
        %v1079 = vadd.f32 %v981, %v1038
        %v1080 = vadd.f32 %v982, %v1040
        %v1081 = vadd.f32 %v983, %v1042
        %v1082 = vadd.f32 %v984, %v1044
        %v1083 = vadd.f32 %v985, %v1046
        %v1084 = vadd.f32 %v986, %v1048
        %v1085 = vadd.f32 %v987, %v1050
        %v1086 = vadd.f32 %v988, %v1052
        %v1087 = vadd.f32 %v989, %v1054
        %v1088 = vadd.f32 %v990, %v1056
        %s1089 = sld [smem:[#allocation5 + $0x6]]
        %v1090 = vstv %s1089
        %v1091 = vmul.f32 %v1090, %v543
        %v1092 = vmul.f32 %v1090, %v544
        %v1093 = vmul.f32 %v1090, %v545
        %v1094 = vmul.f32 %v1090, %v546
        %v1095 = vmul.f32 %v1090, %v547
        %v1096 = vmul.f32 %v1090, %v548
        %v1097 = vmul.f32 %v1090, %v549
        %v1098 = vmul.f32 %v1090, %v550
        %v1099 = vmul.f32 %v1090, %v551
        %v1100 = vmul.f32 %v1090, %v552
        %v1101 = vmul.f32 %v1090, %v553
        %v1102 = vmul.f32 %v1090, %v554
        %v1103 = vmul.f32 %v1090, %v555
        %v1104 = vmul.f32 %v1090, %v556
        %v1105 = vmul.f32 %v1090, %v557
        %v1106 = vmul.f32 %v1090, %v558
        %1123 = vrot.lane.b32.xlu0 %v1091, 122
        %v1124 = vpop.permute.xlu0 %1123
        %1125 = vrot.lane.b32.xlu0 %v1092, 122
        %v1126 = vpop.permute.xlu0 %1125
        %1127 = vrot.lane.b32.xlu0 %v1093, 122
        %v1128 = vpop.permute.xlu0 %1127
        %1129 = vrot.lane.b32.xlu0 %v1094, 122
        %v1130 = vpop.permute.xlu0 %1129
        %1131 = vrot.lane.b32.xlu0 %v1095, 122
        %v1132 = vpop.permute.xlu0 %1131
        %1133 = vrot.lane.b32.xlu0 %v1096, 122
        %v1134 = vpop.permute.xlu0 %1133
        %1135 = vrot.lane.b32.xlu0 %v1097, 122
        %v1136 = vpop.permute.xlu0 %1135
        %1137 = vrot.lane.b32.xlu0 %v1098, 122
        %v1138 = vpop.permute.xlu0 %1137
        %1139 = vrot.lane.b32.xlu0 %v1099, 122
        %v1140 = vpop.permute.xlu0 %1139
        %1141 = vrot.lane.b32.xlu0 %v1100, 122
        %v1142 = vpop.permute.xlu0 %1141
        %1143 = vrot.lane.b32.xlu0 %v1101, 122
        %v1144 = vpop.permute.xlu0 %1143
        %1145 = vrot.lane.b32.xlu0 %v1102, 122
        %v1146 = vpop.permute.xlu0 %1145
        %1147 = vrot.lane.b32.xlu0 %v1103, 122
        %v1148 = vpop.permute.xlu0 %1147
        %1149 = vrot.lane.b32.xlu0 %v1104, 122
        %v1150 = vpop.permute.xlu0 %1149
        %1151 = vrot.lane.b32.xlu0 %v1105, 122
        %v1152 = vpop.permute.xlu0 %1151
        %1153 = vrot.lane.b32.xlu0 %v1106, 122
        %v1154 = vpop.permute.xlu0 %1153
        %v1171 = vadd.f32 %v1073, %v1124
        %v1172 = vadd.f32 %v1074, %v1126
        %v1173 = vadd.f32 %v1075, %v1128
        %v1174 = vadd.f32 %v1076, %v1130
        %v1175 = vadd.f32 %v1077, %v1132
        %v1176 = vadd.f32 %v1078, %v1134
        %v1177 = vadd.f32 %v1079, %v1136
        %v1178 = vadd.f32 %v1080, %v1138
        %v1179 = vadd.f32 %v1081, %v1140
        %v1180 = vadd.f32 %v1082, %v1142
        %v1181 = vadd.f32 %v1083, %v1144
        %v1182 = vadd.f32 %v1084, %v1146
        %v1183 = vadd.f32 %v1085, %v1148
        %v1184 = vadd.f32 %v1086, %v1150
        %v1185 = vadd.f32 %v1087, %v1152
        %v1186 = vadd.f32 %v1088, %v1154
        %s1187 = sld [smem:[#allocation5 + $0x7]]
        %v1188 = vstv %s1187
        %v1189 = vmul.f32 %v1188, %v544
        %v1190 = vmul.f32 %v1188, %v545
        %v1191 = vmul.f32 %v1188, %v546
        %v1192 = vmul.f32 %v1188, %v547
        %v1193 = vmul.f32 %v1188, %v548
        %v1194 = vmul.f32 %v1188, %v549
        %v1195 = vmul.f32 %v1188, %v550
        %v1196 = vmul.f32 %v1188, %v551
        %v1197 = vmul.f32 %v1188, %v552
        %v1198 = vmul.f32 %v1188, %v553
        %v1199 = vmul.f32 %v1188, %v554
        %v1200 = vmul.f32 %v1188, %v555
        %v1201 = vmul.f32 %v1188, %v556
        %v1202 = vmul.f32 %v1188, %v557
        %v1203 = vmul.f32 %v1188, %v558
        %v1204 = vmul.f32 %v1188, %v559
        %v1205 = vadd.f32 %v1171, %v1189
        %v1206 = vadd.f32 %v1172, %v1190
        %v1207 = vadd.f32 %v1173, %v1191
        %v1208 = vadd.f32 %v1174, %v1192
        %v1209 = vadd.f32 %v1175, %v1193
        %v1210 = vadd.f32 %v1176, %v1194
        %v1211 = vadd.f32 %v1177, %v1195
        %v1212 = vadd.f32 %v1178, %v1196
        %v1213 = vadd.f32 %v1179, %v1197
        %v1214 = vadd.f32 %v1180, %v1198
        %v1215 = vadd.f32 %v1181, %v1199
        %v1216 = vadd.f32 %v1182, %v1200
        %v1217 = vadd.f32 %v1183, %v1201
        %v1218 = vadd.f32 %v1184, %v1202
        %v1219 = vadd.f32 %v1185, %v1203
        %v1220 = vadd.f32 %v1186, %v1204
        %s1221 = sld [smem:[#allocation5 + $0x8]]
        %v1222 = vstv %s1221
        %v1223 = vmul.f32 %v1222, %v544
        %v1224 = vmul.f32 %v1222, %v545
        %v1225 = vmul.f32 %v1222, %v546
        %v1226 = vmul.f32 %v1222, %v547
        %v1227 = vmul.f32 %v1222, %v548
        %v1228 = vmul.f32 %v1222, %v549
        %v1229 = vmul.f32 %v1222, %v550
        %v1230 = vmul.f32 %v1222, %v551
        %v1231 = vmul.f32 %v1222, %v552
        %v1232 = vmul.f32 %v1222, %v553
        %v1233 = vmul.f32 %v1222, %v554
        %v1234 = vmul.f32 %v1222, %v555
        %v1235 = vmul.f32 %v1222, %v556
        %v1236 = vmul.f32 %v1222, %v557
        %v1237 = vmul.f32 %v1222, %v558
        %v1238 = vmul.f32 %v1222, %v559
        %1255 = vrot.lane.b32.xlu0 %v1223, 127
        %v1256 = vpop.permute.xlu0 %1255
        %1257 = vrot.lane.b32.xlu0 %v1224, 127
        %v1258 = vpop.permute.xlu0 %1257
        %1259 = vrot.lane.b32.xlu0 %v1225, 127
        %v1260 = vpop.permute.xlu0 %1259
        %1261 = vrot.lane.b32.xlu0 %v1226, 127
        %v1262 = vpop.permute.xlu0 %1261
        %1263 = vrot.lane.b32.xlu0 %v1227, 127
        %v1264 = vpop.permute.xlu0 %1263
        %1265 = vrot.lane.b32.xlu0 %v1228, 127
        %v1266 = vpop.permute.xlu0 %1265
        %1267 = vrot.lane.b32.xlu0 %v1229, 127
        %v1268 = vpop.permute.xlu0 %1267
        %1269 = vrot.lane.b32.xlu0 %v1230, 127
        %v1270 = vpop.permute.xlu0 %1269
        %1271 = vrot.lane.b32.xlu0 %v1231, 127
        %v1272 = vpop.permute.xlu0 %1271
        %1273 = vrot.lane.b32.xlu0 %v1232, 127
        %v1274 = vpop.permute.xlu0 %1273
        %1275 = vrot.lane.b32.xlu0 %v1233, 127
        %v1276 = vpop.permute.xlu0 %1275
        %1277 = vrot.lane.b32.xlu0 %v1234, 127
        %v1278 = vpop.permute.xlu0 %1277
        %1279 = vrot.lane.b32.xlu0 %v1235, 127
        %v1280 = vpop.permute.xlu0 %1279
        %1281 = vrot.lane.b32.xlu0 %v1236, 127
        %v1282 = vpop.permute.xlu0 %1281
        %1283 = vrot.lane.b32.xlu0 %v1237, 127
        %v1284 = vpop.permute.xlu0 %1283
        %1285 = vrot.lane.b32.xlu0 %v1238, 127
        %v1286 = vpop.permute.xlu0 %1285
        %v1303 = vadd.f32 %v1205, %v1256
        %v1304 = vadd.f32 %v1206, %v1258
        %v1305 = vadd.f32 %v1207, %v1260
        %v1306 = vadd.f32 %v1208, %v1262
        %v1307 = vadd.f32 %v1209, %v1264
        %v1308 = vadd.f32 %v1210, %v1266
        %v1309 = vadd.f32 %v1211, %v1268
        %v1310 = vadd.f32 %v1212, %v1270
        %v1311 = vadd.f32 %v1213, %v1272
        %v1312 = vadd.f32 %v1214, %v1274
        %v1313 = vadd.f32 %v1215, %v1276
        %v1314 = vadd.f32 %v1216, %v1278
        %v1315 = vadd.f32 %v1217, %v1280
        %v1316 = vadd.f32 %v1218, %v1282
        %v1317 = vadd.f32 %v1219, %v1284
        %v1318 = vadd.f32 %v1220, %v1286
        %s1319 = sld [smem:[#allocation5 + $0x9]]
        %v1320 = vstv %s1319
        %v1321 = vmul.f32 %v1320, %v544
        %v1322 = vmul.f32 %v1320, %v545
        %v1323 = vmul.f32 %v1320, %v546
        %v1324 = vmul.f32 %v1320, %v547
        %v1325 = vmul.f32 %v1320, %v548
        %v1326 = vmul.f32 %v1320, %v549
        %v1327 = vmul.f32 %v1320, %v550
        %v1328 = vmul.f32 %v1320, %v551
        %v1329 = vmul.f32 %v1320, %v552
        %v1330 = vmul.f32 %v1320, %v553
        %v1331 = vmul.f32 %v1320, %v554
        %v1332 = vmul.f32 %v1320, %v555
        %v1333 = vmul.f32 %v1320, %v556
        %v1334 = vmul.f32 %v1320, %v557
        %v1335 = vmul.f32 %v1320, %v558
        %v1336 = vmul.f32 %v1320, %v559
        %1353 = vrot.lane.b32.xlu0 %v1321, 126
        %v1354 = vpop.permute.xlu0 %1353
        %1355 = vrot.lane.b32.xlu0 %v1322, 126
        %v1356 = vpop.permute.xlu0 %1355
        %1357 = vrot.lane.b32.xlu0 %v1323, 126
        %v1358 = vpop.permute.xlu0 %1357
        %1359 = vrot.lane.b32.xlu0 %v1324, 126
        %v1360 = vpop.permute.xlu0 %1359
        %1361 = vrot.lane.b32.xlu0 %v1325, 126
        %v1362 = vpop.permute.xlu0 %1361
        %1363 = vrot.lane.b32.xlu0 %v1326, 126
        %v1364 = vpop.permute.xlu0 %1363
        %1365 = vrot.lane.b32.xlu0 %v1327, 126
        %v1366 = vpop.permute.xlu0 %1365
        %1367 = vrot.lane.b32.xlu0 %v1328, 126
        %v1368 = vpop.permute.xlu0 %1367
        %1369 = vrot.lane.b32.xlu0 %v1329, 126
        %v1370 = vpop.permute.xlu0 %1369
        %1371 = vrot.lane.b32.xlu0 %v1330, 126
        %v1372 = vpop.permute.xlu0 %1371
        %1373 = vrot.lane.b32.xlu0 %v1331, 126
        %v1374 = vpop.permute.xlu0 %1373
        %1375 = vrot.lane.b32.xlu0 %v1332, 126
        %v1376 = vpop.permute.xlu0 %1375
        %1377 = vrot.lane.b32.xlu0 %v1333, 126
        %v1378 = vpop.permute.xlu0 %1377
        %1379 = vrot.lane.b32.xlu0 %v1334, 126
        %v1380 = vpop.permute.xlu0 %1379
        %1381 = vrot.lane.b32.xlu0 %v1335, 126
        %v1382 = vpop.permute.xlu0 %1381
        %1383 = vrot.lane.b32.xlu0 %v1336, 126
        %v1384 = vpop.permute.xlu0 %1383
        %v1401 = vadd.f32 %v1303, %v1354
        %v1402 = vadd.f32 %v1304, %v1356
        %v1403 = vadd.f32 %v1305, %v1358
        %v1404 = vadd.f32 %v1306, %v1360
        %v1405 = vadd.f32 %v1307, %v1362
        %v1406 = vadd.f32 %v1308, %v1364
        %v1407 = vadd.f32 %v1309, %v1366
        %v1408 = vadd.f32 %v1310, %v1368
        %v1409 = vadd.f32 %v1311, %v1370
        %v1410 = vadd.f32 %v1312, %v1372
        %v1411 = vadd.f32 %v1313, %v1374
        %v1412 = vadd.f32 %v1314, %v1376
        %v1413 = vadd.f32 %v1315, %v1378
        %v1414 = vadd.f32 %v1316, %v1380
        %v1415 = vadd.f32 %v1317, %v1382
        %v1416 = vadd.f32 %v1318, %v1384
        %s1417 = sld [smem:[#allocation5 + $0xa]]
        %v1418 = vstv %s1417
        %v1419 = vmul.f32 %v1418, %v544
        %v1420 = vmul.f32 %v1418, %v545
        %v1421 = vmul.f32 %v1418, %v546
        %v1422 = vmul.f32 %v1418, %v547
        %v1423 = vmul.f32 %v1418, %v548
        %v1424 = vmul.f32 %v1418, %v549
        %v1425 = vmul.f32 %v1418, %v550
        %v1426 = vmul.f32 %v1418, %v551
        %v1427 = vmul.f32 %v1418, %v552
        %v1428 = vmul.f32 %v1418, %v553
        %v1429 = vmul.f32 %v1418, %v554
        %v1430 = vmul.f32 %v1418, %v555
        %v1431 = vmul.f32 %v1418, %v556
        %v1432 = vmul.f32 %v1418, %v557
        %v1433 = vmul.f32 %v1418, %v558
        %v1434 = vmul.f32 %v1418, %v559
        %1451 = vrot.lane.b32.xlu0 %v1419, 125
        %v1452 = vpop.permute.xlu0 %1451
        %1453 = vrot.lane.b32.xlu0 %v1420, 125
        %v1454 = vpop.permute.xlu0 %1453
        %1455 = vrot.lane.b32.xlu0 %v1421, 125
        %v1456 = vpop.permute.xlu0 %1455
        %1457 = vrot.lane.b32.xlu0 %v1422, 125
        %v1458 = vpop.permute.xlu0 %1457
        %1459 = vrot.lane.b32.xlu0 %v1423, 125
        %v1460 = vpop.permute.xlu0 %1459
        %1461 = vrot.lane.b32.xlu0 %v1424, 125
        %v1462 = vpop.permute.xlu0 %1461
        %1463 = vrot.lane.b32.xlu0 %v1425, 125
        %v1464 = vpop.permute.xlu0 %1463
        %1465 = vrot.lane.b32.xlu0 %v1426, 125
        %v1466 = vpop.permute.xlu0 %1465
        %1467 = vrot.lane.b32.xlu0 %v1427, 125
        %v1468 = vpop.permute.xlu0 %1467
        %1469 = vrot.lane.b32.xlu0 %v1428, 125
        %v1470 = vpop.permute.xlu0 %1469
        %1471 = vrot.lane.b32.xlu0 %v1429, 125
        %v1472 = vpop.permute.xlu0 %1471
        %1473 = vrot.lane.b32.xlu0 %v1430, 125
        %v1474 = vpop.permute.xlu0 %1473
        %1475 = vrot.lane.b32.xlu0 %v1431, 125
        %v1476 = vpop.permute.xlu0 %1475
        %1477 = vrot.lane.b32.xlu0 %v1432, 125
        %v1478 = vpop.permute.xlu0 %1477
        %1479 = vrot.lane.b32.xlu0 %v1433, 125
        %v1480 = vpop.permute.xlu0 %1479
        %1481 = vrot.lane.b32.xlu0 %v1434, 125
        %v1482 = vpop.permute.xlu0 %1481
        %v1499 = vadd.f32 %v1401, %v1452
        %v1500 = vadd.f32 %v1402, %v1454
        %v1501 = vadd.f32 %v1403, %v1456
        %v1502 = vadd.f32 %v1404, %v1458
        %v1503 = vadd.f32 %v1405, %v1460
        %v1504 = vadd.f32 %v1406, %v1462
        %v1505 = vadd.f32 %v1407, %v1464
        %v1506 = vadd.f32 %v1408, %v1466
        %v1507 = vadd.f32 %v1409, %v1468
        %v1508 = vadd.f32 %v1410, %v1470
        %v1509 = vadd.f32 %v1411, %v1472
        %v1510 = vadd.f32 %v1412, %v1474
        %v1511 = vadd.f32 %v1413, %v1476
        %v1512 = vadd.f32 %v1414, %v1478
        %v1513 = vadd.f32 %v1415, %v1480
        %v1514 = vadd.f32 %v1416, %v1482
        %s1515 = sld [smem:[#allocation5 + $0xb]]
        %v1516 = vstv %s1515
        %v1517 = vmul.f32 %v1516, %v544
        %v1518 = vmul.f32 %v1516, %v545
        %v1519 = vmul.f32 %v1516, %v546
        %v1520 = vmul.f32 %v1516, %v547
        %v1521 = vmul.f32 %v1516, %v548
        %v1522 = vmul.f32 %v1516, %v549
        %v1523 = vmul.f32 %v1516, %v550
        %v1524 = vmul.f32 %v1516, %v551
        %v1525 = vmul.f32 %v1516, %v552
        %v1526 = vmul.f32 %v1516, %v553
        %v1527 = vmul.f32 %v1516, %v554
        %v1528 = vmul.f32 %v1516, %v555
        %v1529 = vmul.f32 %v1516, %v556
        %v1530 = vmul.f32 %v1516, %v557
        %v1531 = vmul.f32 %v1516, %v558
        %v1532 = vmul.f32 %v1516, %v559
        %1549 = vrot.lane.b32.xlu0 %v1517, 124
        %v1550 = vpop.permute.xlu0 %1549
        %1551 = vrot.lane.b32.xlu0 %v1518, 124
        %v1552 = vpop.permute.xlu0 %1551
        %1553 = vrot.lane.b32.xlu0 %v1519, 124
        %v1554 = vpop.permute.xlu0 %1553
        %1555 = vrot.lane.b32.xlu0 %v1520, 124
        %v1556 = vpop.permute.xlu0 %1555
        %1557 = vrot.lane.b32.xlu0 %v1521, 124
        %v1558 = vpop.permute.xlu0 %1557
        %1559 = vrot.lane.b32.xlu0 %v1522, 124
        %v1560 = vpop.permute.xlu0 %1559
        %1561 = vrot.lane.b32.xlu0 %v1523, 124
        %v1562 = vpop.permute.xlu0 %1561
        %1563 = vrot.lane.b32.xlu0 %v1524, 124
        %v1564 = vpop.permute.xlu0 %1563
        %1565 = vrot.lane.b32.xlu0 %v1525, 124
        %v1566 = vpop.permute.xlu0 %1565
        %1567 = vrot.lane.b32.xlu0 %v1526, 124
        %v1568 = vpop.permute.xlu0 %1567
        %1569 = vrot.lane.b32.xlu0 %v1527, 124
        %v1570 = vpop.permute.xlu0 %1569
        %1571 = vrot.lane.b32.xlu0 %v1528, 124
        %v1572 = vpop.permute.xlu0 %1571
        %1573 = vrot.lane.b32.xlu0 %v1529, 124
        %v1574 = vpop.permute.xlu0 %1573
        %1575 = vrot.lane.b32.xlu0 %v1530, 124
        %v1576 = vpop.permute.xlu0 %1575
        %1577 = vrot.lane.b32.xlu0 %v1531, 124
        %v1578 = vpop.permute.xlu0 %1577
        %1579 = vrot.lane.b32.xlu0 %v1532, 124
        %v1580 = vpop.permute.xlu0 %1579
        %v1597 = vadd.f32 %v1499, %v1550
        %v1598 = vadd.f32 %v1500, %v1552
        %v1599 = vadd.f32 %v1501, %v1554
        %v1600 = vadd.f32 %v1502, %v1556
        %v1601 = vadd.f32 %v1503, %v1558
        %v1602 = vadd.f32 %v1504, %v1560
        %v1603 = vadd.f32 %v1505, %v1562
        %v1604 = vadd.f32 %v1506, %v1564
        %v1605 = vadd.f32 %v1507, %v1566
        %v1606 = vadd.f32 %v1508, %v1568
        %v1607 = vadd.f32 %v1509, %v1570
        %v1608 = vadd.f32 %v1510, %v1572
        %v1609 = vadd.f32 %v1511, %v1574
        %v1610 = vadd.f32 %v1512, %v1576
        %v1611 = vadd.f32 %v1513, %v1578
        %v1612 = vadd.f32 %v1514, %v1580
        %s1613 = sld [smem:[#allocation5 + $0xc]]
        %v1614 = vstv %s1613
        %v1615 = vmul.f32 %v1614, %v544
        %v1616 = vmul.f32 %v1614, %v545
        %v1617 = vmul.f32 %v1614, %v546
        %v1618 = vmul.f32 %v1614, %v547
        %v1619 = vmul.f32 %v1614, %v548
        %v1620 = vmul.f32 %v1614, %v549
        %v1621 = vmul.f32 %v1614, %v550
        %v1622 = vmul.f32 %v1614, %v551
        %v1623 = vmul.f32 %v1614, %v552
        %v1624 = vmul.f32 %v1614, %v553
        %v1625 = vmul.f32 %v1614, %v554
        %v1626 = vmul.f32 %v1614, %v555
        %v1627 = vmul.f32 %v1614, %v556
        %v1628 = vmul.f32 %v1614, %v557
        %v1629 = vmul.f32 %v1614, %v558
        %v1630 = vmul.f32 %v1614, %v559
        %1647 = vrot.lane.b32.xlu0 %v1615, 123
        %v1648 = vpop.permute.xlu0 %1647
        %1649 = vrot.lane.b32.xlu0 %v1616, 123
        %v1650 = vpop.permute.xlu0 %1649
        %1651 = vrot.lane.b32.xlu0 %v1617, 123
        %v1652 = vpop.permute.xlu0 %1651
        %1653 = vrot.lane.b32.xlu0 %v1618, 123
        %v1654 = vpop.permute.xlu0 %1653
        %1655 = vrot.lane.b32.xlu0 %v1619, 123
        %v1656 = vpop.permute.xlu0 %1655
        %1657 = vrot.lane.b32.xlu0 %v1620, 123
        %v1658 = vpop.permute.xlu0 %1657
        %1659 = vrot.lane.b32.xlu0 %v1621, 123
        %v1660 = vpop.permute.xlu0 %1659
        %1661 = vrot.lane.b32.xlu0 %v1622, 123
        %v1662 = vpop.permute.xlu0 %1661
        %1663 = vrot.lane.b32.xlu0 %v1623, 123
        %v1664 = vpop.permute.xlu0 %1663
        %1665 = vrot.lane.b32.xlu0 %v1624, 123
        %v1666 = vpop.permute.xlu0 %1665
        %1667 = vrot.lane.b32.xlu0 %v1625, 123
        %v1668 = vpop.permute.xlu0 %1667
        %1669 = vrot.lane.b32.xlu0 %v1626, 123
        %v1670 = vpop.permute.xlu0 %1669
        %1671 = vrot.lane.b32.xlu0 %v1627, 123
        %v1672 = vpop.permute.xlu0 %1671
        %1673 = vrot.lane.b32.xlu0 %v1628, 123
        %v1674 = vpop.permute.xlu0 %1673
        %1675 = vrot.lane.b32.xlu0 %v1629, 123
        %v1676 = vpop.permute.xlu0 %1675
        %1677 = vrot.lane.b32.xlu0 %v1630, 123
        %v1678 = vpop.permute.xlu0 %1677
        %v1695 = vadd.f32 %v1597, %v1648
        %v1696 = vadd.f32 %v1598, %v1650
        %v1697 = vadd.f32 %v1599, %v1652
        %v1698 = vadd.f32 %v1600, %v1654
        %v1699 = vadd.f32 %v1601, %v1656
        %v1700 = vadd.f32 %v1602, %v1658
        %v1701 = vadd.f32 %v1603, %v1660
        %v1702 = vadd.f32 %v1604, %v1662
        %v1703 = vadd.f32 %v1605, %v1664
        %v1704 = vadd.f32 %v1606, %v1666
        %v1705 = vadd.f32 %v1607, %v1668
        %v1706 = vadd.f32 %v1608, %v1670
        %v1707 = vadd.f32 %v1609, %v1672
        %v1708 = vadd.f32 %v1610, %v1674
        %v1709 = vadd.f32 %v1611, %v1676
        %v1710 = vadd.f32 %v1612, %v1678
        %s1711 = sld [smem:[#allocation5 + $0xd]]
        %v1712 = vstv %s1711
        %v1713 = vmul.f32 %v1712, %v544
        %v1714 = vmul.f32 %v1712, %v545
        %v1715 = vmul.f32 %v1712, %v546
        %v1716 = vmul.f32 %v1712, %v547
        %v1717 = vmul.f32 %v1712, %v548
        %v1718 = vmul.f32 %v1712, %v549
        %v1719 = vmul.f32 %v1712, %v550
        %v1720 = vmul.f32 %v1712, %v551
        %v1721 = vmul.f32 %v1712, %v552
        %v1722 = vmul.f32 %v1712, %v553
        %v1723 = vmul.f32 %v1712, %v554
        %v1724 = vmul.f32 %v1712, %v555
        %v1725 = vmul.f32 %v1712, %v556
        %v1726 = vmul.f32 %v1712, %v557
        %v1727 = vmul.f32 %v1712, %v558
        %v1728 = vmul.f32 %v1712, %v559
        %1745 = vrot.lane.b32.xlu0 %v1713, 122
        %v1746 = vpop.permute.xlu0 %1745
        %1747 = vrot.lane.b32.xlu0 %v1714, 122
        %v1748 = vpop.permute.xlu0 %1747
        %1749 = vrot.lane.b32.xlu0 %v1715, 122
        %v1750 = vpop.permute.xlu0 %1749
        %1751 = vrot.lane.b32.xlu0 %v1716, 122
        %v1752 = vpop.permute.xlu0 %1751
        %1753 = vrot.lane.b32.xlu0 %v1717, 122
        %v1754 = vpop.permute.xlu0 %1753
        %1755 = vrot.lane.b32.xlu0 %v1718, 122
        %v1756 = vpop.permute.xlu0 %1755
        %1757 = vrot.lane.b32.xlu0 %v1719, 122
        %v1758 = vpop.permute.xlu0 %1757
        %1759 = vrot.lane.b32.xlu0 %v1720, 122
        %v1760 = vpop.permute.xlu0 %1759
        %1761 = vrot.lane.b32.xlu0 %v1721, 122
        %v1762 = vpop.permute.xlu0 %1761
        %1763 = vrot.lane.b32.xlu0 %v1722, 122
        %v1764 = vpop.permute.xlu0 %1763
        %1765 = vrot.lane.b32.xlu0 %v1723, 122
        %v1766 = vpop.permute.xlu0 %1765
        %1767 = vrot.lane.b32.xlu0 %v1724, 122
        %v1768 = vpop.permute.xlu0 %1767
        %1769 = vrot.lane.b32.xlu0 %v1725, 122
        %v1770 = vpop.permute.xlu0 %1769
        %1771 = vrot.lane.b32.xlu0 %v1726, 122
        %v1772 = vpop.permute.xlu0 %1771
        %1773 = vrot.lane.b32.xlu0 %v1727, 122
        %v1774 = vpop.permute.xlu0 %1773
        %1775 = vrot.lane.b32.xlu0 %v1728, 122
        %v1776 = vpop.permute.xlu0 %1775
        %v1793 = vadd.f32 %v1695, %v1746
        %v1794 = vadd.f32 %v1696, %v1748
        %v1795 = vadd.f32 %v1697, %v1750
        %v1796 = vadd.f32 %v1698, %v1752
        %v1797 = vadd.f32 %v1699, %v1754
        %v1798 = vadd.f32 %v1700, %v1756
        %v1799 = vadd.f32 %v1701, %v1758
        %v1800 = vadd.f32 %v1702, %v1760
        %v1801 = vadd.f32 %v1703, %v1762
        %v1802 = vadd.f32 %v1704, %v1764
        %v1803 = vadd.f32 %v1705, %v1766
        %v1804 = vadd.f32 %v1706, %v1768
        %v1805 = vadd.f32 %v1707, %v1770
        %v1806 = vadd.f32 %v1708, %v1772
        %v1807 = vadd.f32 %v1709, %v1774
        %v1808 = vadd.f32 %v1710, %v1776
        %s1809 = sld [smem:[#allocation5 + $0xe]]
        %v1810 = vstv %s1809
        %v1811 = vmul.f32 %v1810, %v545
        %v1812 = vmul.f32 %v1810, %v546
        %v1813 = vmul.f32 %v1810, %v547
        %v1814 = vmul.f32 %v1810, %v548
        %v1815 = vmul.f32 %v1810, %v549
        %v1816 = vmul.f32 %v1810, %v550
        %v1817 = vmul.f32 %v1810, %v551
        %v1818 = vmul.f32 %v1810, %v552
        %v1819 = vmul.f32 %v1810, %v553
        %v1820 = vmul.f32 %v1810, %v554
        %v1821 = vmul.f32 %v1810, %v555
        %v1822 = vmul.f32 %v1810, %v556
        %v1823 = vmul.f32 %v1810, %v557
        %v1824 = vmul.f32 %v1810, %v558
        %v1825 = vmul.f32 %v1810, %v559
        %v1826 = vmul.f32 %v1810, %v560
        %v1827 = vadd.f32 %v1793, %v1811
        %v1828 = vadd.f32 %v1794, %v1812
        %v1829 = vadd.f32 %v1795, %v1813
        %v1830 = vadd.f32 %v1796, %v1814
        %v1831 = vadd.f32 %v1797, %v1815
        %v1832 = vadd.f32 %v1798, %v1816
        %v1833 = vadd.f32 %v1799, %v1817
        %v1834 = vadd.f32 %v1800, %v1818
        %v1835 = vadd.f32 %v1801, %v1819
        %v1836 = vadd.f32 %v1802, %v1820
        %v1837 = vadd.f32 %v1803, %v1821
        %v1838 = vadd.f32 %v1804, %v1822
        %v1839 = vadd.f32 %v1805, %v1823
        %v1840 = vadd.f32 %v1806, %v1824
        %v1841 = vadd.f32 %v1807, %v1825
        %v1842 = vadd.f32 %v1808, %v1826
        %s1843 = sld [smem:[#allocation5 + $0xf]]
        %v1844 = vstv %s1843
        %v1845 = vmul.f32 %v1844, %v545
        %v1846 = vmul.f32 %v1844, %v546
        %v1847 = vmul.f32 %v1844, %v547
        %v1848 = vmul.f32 %v1844, %v548
        %v1849 = vmul.f32 %v1844, %v549
        %v1850 = vmul.f32 %v1844, %v550
        %v1851 = vmul.f32 %v1844, %v551
        %v1852 = vmul.f32 %v1844, %v552
        %v1853 = vmul.f32 %v1844, %v553
        %v1854 = vmul.f32 %v1844, %v554
        %v1855 = vmul.f32 %v1844, %v555
        %v1856 = vmul.f32 %v1844, %v556
        %v1857 = vmul.f32 %v1844, %v557
        %v1858 = vmul.f32 %v1844, %v558
        %v1859 = vmul.f32 %v1844, %v559
        %v1860 = vmul.f32 %v1844, %v560
        %1877 = vrot.lane.b32.xlu0 %v1845, 127
        %v1878 = vpop.permute.xlu0 %1877
        %1879 = vrot.lane.b32.xlu0 %v1846, 127
        %v1880 = vpop.permute.xlu0 %1879
        %1881 = vrot.lane.b32.xlu0 %v1847, 127
        %v1882 = vpop.permute.xlu0 %1881
        %1883 = vrot.lane.b32.xlu0 %v1848, 127
        %v1884 = vpop.permute.xlu0 %1883
        %1885 = vrot.lane.b32.xlu0 %v1849, 127
        %v1886 = vpop.permute.xlu0 %1885
        %1887 = vrot.lane.b32.xlu0 %v1850, 127
        %v1888 = vpop.permute.xlu0 %1887
        %1889 = vrot.lane.b32.xlu0 %v1851, 127
        %v1890 = vpop.permute.xlu0 %1889
        %1891 = vrot.lane.b32.xlu0 %v1852, 127
        %v1892 = vpop.permute.xlu0 %1891
        %1893 = vrot.lane.b32.xlu0 %v1853, 127
        %v1894 = vpop.permute.xlu0 %1893
        %1895 = vrot.lane.b32.xlu0 %v1854, 127
        %v1896 = vpop.permute.xlu0 %1895
        %1897 = vrot.lane.b32.xlu0 %v1855, 127
        %v1898 = vpop.permute.xlu0 %1897
        %1899 = vrot.lane.b32.xlu0 %v1856, 127
        %v1900 = vpop.permute.xlu0 %1899
        %1901 = vrot.lane.b32.xlu0 %v1857, 127
        %v1902 = vpop.permute.xlu0 %1901
        %1903 = vrot.lane.b32.xlu0 %v1858, 127
        %v1904 = vpop.permute.xlu0 %1903
        %1905 = vrot.lane.b32.xlu0 %v1859, 127
        %v1906 = vpop.permute.xlu0 %1905
        %1907 = vrot.lane.b32.xlu0 %v1860, 127
        %v1908 = vpop.permute.xlu0 %1907
        %v1925 = vadd.f32 %v1827, %v1878
        %v1926 = vadd.f32 %v1828, %v1880
        %v1927 = vadd.f32 %v1829, %v1882
        %v1928 = vadd.f32 %v1830, %v1884
        %v1929 = vadd.f32 %v1831, %v1886
        %v1930 = vadd.f32 %v1832, %v1888
        %v1931 = vadd.f32 %v1833, %v1890
        %v1932 = vadd.f32 %v1834, %v1892
        %v1933 = vadd.f32 %v1835, %v1894
        %v1934 = vadd.f32 %v1836, %v1896
        %v1935 = vadd.f32 %v1837, %v1898
        %v1936 = vadd.f32 %v1838, %v1900
        %v1937 = vadd.f32 %v1839, %v1902
        %v1938 = vadd.f32 %v1840, %v1904
        %v1939 = vadd.f32 %v1841, %v1906
        %v1940 = vadd.f32 %v1842, %v1908
        %s1941 = sld [smem:[#allocation5 + $0x10]]
        %v1942 = vstv %s1941
        %v1943 = vmul.f32 %v1942, %v545
        %v1944 = vmul.f32 %v1942, %v546
        %v1945 = vmul.f32 %v1942, %v547
        %v1946 = vmul.f32 %v1942, %v548
        %v1947 = vmul.f32 %v1942, %v549
        %v1948 = vmul.f32 %v1942, %v550
        %v1949 = vmul.f32 %v1942, %v551
        %v1950 = vmul.f32 %v1942, %v552
        %v1951 = vmul.f32 %v1942, %v553
        %v1952 = vmul.f32 %v1942, %v554
        %v1953 = vmul.f32 %v1942, %v555
        %v1954 = vmul.f32 %v1942, %v556
        %v1955 = vmul.f32 %v1942, %v557
        %v1956 = vmul.f32 %v1942, %v558
        %v1957 = vmul.f32 %v1942, %v559
        %v1958 = vmul.f32 %v1942, %v560
        %1975 = vrot.lane.b32.xlu0 %v1943, 126
        %v1976 = vpop.permute.xlu0 %1975
        %1977 = vrot.lane.b32.xlu0 %v1944, 126
        %v1978 = vpop.permute.xlu0 %1977
        %1979 = vrot.lane.b32.xlu0 %v1945, 126
        %v1980 = vpop.permute.xlu0 %1979
        %1981 = vrot.lane.b32.xlu0 %v1946, 126
        %v1982 = vpop.permute.xlu0 %1981
        %1983 = vrot.lane.b32.xlu0 %v1947, 126
        %v1984 = vpop.permute.xlu0 %1983
        %1985 = vrot.lane.b32.xlu0 %v1948, 126
        %v1986 = vpop.permute.xlu0 %1985
        %1987 = vrot.lane.b32.xlu0 %v1949, 126
        %v1988 = vpop.permute.xlu0 %1987
        %1989 = vrot.lane.b32.xlu0 %v1950, 126
        %v1990 = vpop.permute.xlu0 %1989
        %1991 = vrot.lane.b32.xlu0 %v1951, 126
        %v1992 = vpop.permute.xlu0 %1991
        %1993 = vrot.lane.b32.xlu0 %v1952, 126
        %v1994 = vpop.permute.xlu0 %1993
        %1995 = vrot.lane.b32.xlu0 %v1953, 126
        %v1996 = vpop.permute.xlu0 %1995
        %1997 = vrot.lane.b32.xlu0 %v1954, 126
        %v1998 = vpop.permute.xlu0 %1997
        %1999 = vrot.lane.b32.xlu0 %v1955, 126
        %v2000 = vpop.permute.xlu0 %1999
        %2001 = vrot.lane.b32.xlu0 %v1956, 126
        %v2002 = vpop.permute.xlu0 %2001
        %2003 = vrot.lane.b32.xlu0 %v1957, 126
        %v2004 = vpop.permute.xlu0 %2003
        %2005 = vrot.lane.b32.xlu0 %v1958, 126
        %v2006 = vpop.permute.xlu0 %2005
        %v2023 = vadd.f32 %v1925, %v1976
        %v2024 = vadd.f32 %v1926, %v1978
        %v2025 = vadd.f32 %v1927, %v1980
        %v2026 = vadd.f32 %v1928, %v1982
        %v2027 = vadd.f32 %v1929, %v1984
        %v2028 = vadd.f32 %v1930, %v1986
        %v2029 = vadd.f32 %v1931, %v1988
        %v2030 = vadd.f32 %v1932, %v1990
        %v2031 = vadd.f32 %v1933, %v1992
        %v2032 = vadd.f32 %v1934, %v1994
        %v2033 = vadd.f32 %v1935, %v1996
        %v2034 = vadd.f32 %v1936, %v1998
        %v2035 = vadd.f32 %v1937, %v2000
        %v2036 = vadd.f32 %v1938, %v2002
        %v2037 = vadd.f32 %v1939, %v2004
        %v2038 = vadd.f32 %v1940, %v2006
        %s2039 = sld [smem:[#allocation5 + $0x11]]
        %v2040 = vstv %s2039
        %v2041 = vmul.f32 %v2040, %v545
        %v2042 = vmul.f32 %v2040, %v546
        %v2043 = vmul.f32 %v2040, %v547
        %v2044 = vmul.f32 %v2040, %v548
        %v2045 = vmul.f32 %v2040, %v549
        %v2046 = vmul.f32 %v2040, %v550
        %v2047 = vmul.f32 %v2040, %v551
        %v2048 = vmul.f32 %v2040, %v552
        %v2049 = vmul.f32 %v2040, %v553
        %v2050 = vmul.f32 %v2040, %v554
        %v2051 = vmul.f32 %v2040, %v555
        %v2052 = vmul.f32 %v2040, %v556
        %v2053 = vmul.f32 %v2040, %v557
        %v2054 = vmul.f32 %v2040, %v558
        %v2055 = vmul.f32 %v2040, %v559
        %v2056 = vmul.f32 %v2040, %v560
        %2073 = vrot.lane.b32.xlu0 %v2041, 125
        %v2074 = vpop.permute.xlu0 %2073
        %2075 = vrot.lane.b32.xlu0 %v2042, 125
        %v2076 = vpop.permute.xlu0 %2075
        %2077 = vrot.lane.b32.xlu0 %v2043, 125
        %v2078 = vpop.permute.xlu0 %2077
        %2079 = vrot.lane.b32.xlu0 %v2044, 125
        %v2080 = vpop.permute.xlu0 %2079
        %2081 = vrot.lane.b32.xlu0 %v2045, 125
        %v2082 = vpop.permute.xlu0 %2081
        %2083 = vrot.lane.b32.xlu0 %v2046, 125
        %v2084 = vpop.permute.xlu0 %2083
        %2085 = vrot.lane.b32.xlu0 %v2047, 125
        %v2086 = vpop.permute.xlu0 %2085
        %2087 = vrot.lane.b32.xlu0 %v2048, 125
        %v2088 = vpop.permute.xlu0 %2087
        %2089 = vrot.lane.b32.xlu0 %v2049, 125
        %v2090 = vpop.permute.xlu0 %2089
        %2091 = vrot.lane.b32.xlu0 %v2050, 125
        %v2092 = vpop.permute.xlu0 %2091
        %2093 = vrot.lane.b32.xlu0 %v2051, 125
        %v2094 = vpop.permute.xlu0 %2093
        %2095 = vrot.lane.b32.xlu0 %v2052, 125
        %v2096 = vpop.permute.xlu0 %2095
        %2097 = vrot.lane.b32.xlu0 %v2053, 125
        %v2098 = vpop.permute.xlu0 %2097
        %2099 = vrot.lane.b32.xlu0 %v2054, 125
        %v2100 = vpop.permute.xlu0 %2099
        %2101 = vrot.lane.b32.xlu0 %v2055, 125
        %v2102 = vpop.permute.xlu0 %2101
        %2103 = vrot.lane.b32.xlu0 %v2056, 125
        %v2104 = vpop.permute.xlu0 %2103
        %v2121 = vadd.f32 %v2023, %v2074
        %v2122 = vadd.f32 %v2024, %v2076
        %v2123 = vadd.f32 %v2025, %v2078
        %v2124 = vadd.f32 %v2026, %v2080
        %v2125 = vadd.f32 %v2027, %v2082
        %v2126 = vadd.f32 %v2028, %v2084
        %v2127 = vadd.f32 %v2029, %v2086
        %v2128 = vadd.f32 %v2030, %v2088
        %v2129 = vadd.f32 %v2031, %v2090
        %v2130 = vadd.f32 %v2032, %v2092
        %v2131 = vadd.f32 %v2033, %v2094
        %v2132 = vadd.f32 %v2034, %v2096
        %v2133 = vadd.f32 %v2035, %v2098
        %v2134 = vadd.f32 %v2036, %v2100
        %v2135 = vadd.f32 %v2037, %v2102
        %v2136 = vadd.f32 %v2038, %v2104
        %s2137 = sld [smem:[#allocation5 + $0x12]]
        %v2138 = vstv %s2137
        %v2139 = vmul.f32 %v2138, %v545
        %v2140 = vmul.f32 %v2138, %v546
        %v2141 = vmul.f32 %v2138, %v547
        %v2142 = vmul.f32 %v2138, %v548
        %v2143 = vmul.f32 %v2138, %v549
        %v2144 = vmul.f32 %v2138, %v550
        %v2145 = vmul.f32 %v2138, %v551
        %v2146 = vmul.f32 %v2138, %v552
        %v2147 = vmul.f32 %v2138, %v553
        %v2148 = vmul.f32 %v2138, %v554
        %v2149 = vmul.f32 %v2138, %v555
        %v2150 = vmul.f32 %v2138, %v556
        %v2151 = vmul.f32 %v2138, %v557
        %v2152 = vmul.f32 %v2138, %v558
        %v2153 = vmul.f32 %v2138, %v559
        %v2154 = vmul.f32 %v2138, %v560
        %2171 = vrot.lane.b32.xlu0 %v2139, 124
        %v2172 = vpop.permute.xlu0 %2171
        %2173 = vrot.lane.b32.xlu0 %v2140, 124
        %v2174 = vpop.permute.xlu0 %2173
        %2175 = vrot.lane.b32.xlu0 %v2141, 124
        %v2176 = vpop.permute.xlu0 %2175
        %2177 = vrot.lane.b32.xlu0 %v2142, 124
        %v2178 = vpop.permute.xlu0 %2177
        %2179 = vrot.lane.b32.xlu0 %v2143, 124
        %v2180 = vpop.permute.xlu0 %2179
        %2181 = vrot.lane.b32.xlu0 %v2144, 124
        %v2182 = vpop.permute.xlu0 %2181
        %2183 = vrot.lane.b32.xlu0 %v2145, 124
        %v2184 = vpop.permute.xlu0 %2183
        %2185 = vrot.lane.b32.xlu0 %v2146, 124
        %v2186 = vpop.permute.xlu0 %2185
        %2187 = vrot.lane.b32.xlu0 %v2147, 124
        %v2188 = vpop.permute.xlu0 %2187
        %2189 = vrot.lane.b32.xlu0 %v2148, 124
        %v2190 = vpop.permute.xlu0 %2189
        %2191 = vrot.lane.b32.xlu0 %v2149, 124
        %v2192 = vpop.permute.xlu0 %2191
        %2193 = vrot.lane.b32.xlu0 %v2150, 124
        %v2194 = vpop.permute.xlu0 %2193
        %2195 = vrot.lane.b32.xlu0 %v2151, 124
        %v2196 = vpop.permute.xlu0 %2195
        %2197 = vrot.lane.b32.xlu0 %v2152, 124
        %v2198 = vpop.permute.xlu0 %2197
        %2199 = vrot.lane.b32.xlu0 %v2153, 124
        %v2200 = vpop.permute.xlu0 %2199
        %2201 = vrot.lane.b32.xlu0 %v2154, 124
        %v2202 = vpop.permute.xlu0 %2201
        %v2219 = vadd.f32 %v2121, %v2172
        %v2220 = vadd.f32 %v2122, %v2174
        %v2221 = vadd.f32 %v2123, %v2176
        %v2222 = vadd.f32 %v2124, %v2178
        %v2223 = vadd.f32 %v2125, %v2180
        %v2224 = vadd.f32 %v2126, %v2182
        %v2225 = vadd.f32 %v2127, %v2184
        %v2226 = vadd.f32 %v2128, %v2186
        %v2227 = vadd.f32 %v2129, %v2188
        %v2228 = vadd.f32 %v2130, %v2190
        %v2229 = vadd.f32 %v2131, %v2192
        %v2230 = vadd.f32 %v2132, %v2194
        %v2231 = vadd.f32 %v2133, %v2196
        %v2232 = vadd.f32 %v2134, %v2198
        %v2233 = vadd.f32 %v2135, %v2200
        %v2234 = vadd.f32 %v2136, %v2202
        %s2235 = sld [smem:[#allocation5 + $0x13]]
        %v2236 = vstv %s2235
        %v2237 = vmul.f32 %v2236, %v545
        %v2238 = vmul.f32 %v2236, %v546
        %v2239 = vmul.f32 %v2236, %v547
        %v2240 = vmul.f32 %v2236, %v548
        %v2241 = vmul.f32 %v2236, %v549
        %v2242 = vmul.f32 %v2236, %v550
        %v2243 = vmul.f32 %v2236, %v551
        %v2244 = vmul.f32 %v2236, %v552
        %v2245 = vmul.f32 %v2236, %v553
        %v2246 = vmul.f32 %v2236, %v554
        %v2247 = vmul.f32 %v2236, %v555
        %v2248 = vmul.f32 %v2236, %v556
        %v2249 = vmul.f32 %v2236, %v557
        %v2250 = vmul.f32 %v2236, %v558
        %v2251 = vmul.f32 %v2236, %v559
        %v2252 = vmul.f32 %v2236, %v560
        %2269 = vrot.lane.b32.xlu0 %v2237, 123
        %v2270 = vpop.permute.xlu0 %2269
        %2271 = vrot.lane.b32.xlu0 %v2238, 123
        %v2272 = vpop.permute.xlu0 %2271
        %2273 = vrot.lane.b32.xlu0 %v2239, 123
        %v2274 = vpop.permute.xlu0 %2273
        %2275 = vrot.lane.b32.xlu0 %v2240, 123
        %v2276 = vpop.permute.xlu0 %2275
        %2277 = vrot.lane.b32.xlu0 %v2241, 123
        %v2278 = vpop.permute.xlu0 %2277
        %2279 = vrot.lane.b32.xlu0 %v2242, 123
        %v2280 = vpop.permute.xlu0 %2279
        %2281 = vrot.lane.b32.xlu0 %v2243, 123
        %v2282 = vpop.permute.xlu0 %2281
        %2283 = vrot.lane.b32.xlu0 %v2244, 123
        %v2284 = vpop.permute.xlu0 %2283
        %2285 = vrot.lane.b32.xlu0 %v2245, 123
        %v2286 = vpop.permute.xlu0 %2285
        %2287 = vrot.lane.b32.xlu0 %v2246, 123
        %v2288 = vpop.permute.xlu0 %2287
        %2289 = vrot.lane.b32.xlu0 %v2247, 123
        %v2290 = vpop.permute.xlu0 %2289
        %2291 = vrot.lane.b32.xlu0 %v2248, 123
        %v2292 = vpop.permute.xlu0 %2291
        %2293 = vrot.lane.b32.xlu0 %v2249, 123
        %v2294 = vpop.permute.xlu0 %2293
        %2295 = vrot.lane.b32.xlu0 %v2250, 123
        %v2296 = vpop.permute.xlu0 %2295
        %2297 = vrot.lane.b32.xlu0 %v2251, 123
        %v2298 = vpop.permute.xlu0 %2297
        %2299 = vrot.lane.b32.xlu0 %v2252, 123
        %v2300 = vpop.permute.xlu0 %2299
        %v2317 = vadd.f32 %v2219, %v2270
        %v2318 = vadd.f32 %v2220, %v2272
        %v2319 = vadd.f32 %v2221, %v2274
        %v2320 = vadd.f32 %v2222, %v2276
        %v2321 = vadd.f32 %v2223, %v2278
        %v2322 = vadd.f32 %v2224, %v2280
        %v2323 = vadd.f32 %v2225, %v2282
        %v2324 = vadd.f32 %v2226, %v2284
        %v2325 = vadd.f32 %v2227, %v2286
        %v2326 = vadd.f32 %v2228, %v2288
        %v2327 = vadd.f32 %v2229, %v2290
        %v2328 = vadd.f32 %v2230, %v2292
        %v2329 = vadd.f32 %v2231, %v2294
        %v2330 = vadd.f32 %v2232, %v2296
        %v2331 = vadd.f32 %v2233, %v2298
        %v2332 = vadd.f32 %v2234, %v2300
        %s2333 = sld [smem:[#allocation5 + $0x14]]
        %v2334 = vstv %s2333
        %v2335 = vmul.f32 %v2334, %v545
        %v2336 = vmul.f32 %v2334, %v546
        %v2337 = vmul.f32 %v2334, %v547
        %v2338 = vmul.f32 %v2334, %v548
        %v2339 = vmul.f32 %v2334, %v549
        %v2340 = vmul.f32 %v2334, %v550
        %v2341 = vmul.f32 %v2334, %v551
        %v2342 = vmul.f32 %v2334, %v552
        %v2343 = vmul.f32 %v2334, %v553
        %v2344 = vmul.f32 %v2334, %v554
        %v2345 = vmul.f32 %v2334, %v555
        %v2346 = vmul.f32 %v2334, %v556
        %v2347 = vmul.f32 %v2334, %v557
        %v2348 = vmul.f32 %v2334, %v558
        %v2349 = vmul.f32 %v2334, %v559
        %v2350 = vmul.f32 %v2334, %v560
        %2367 = vrot.lane.b32.xlu0 %v2335, 122
        %v2368 = vpop.permute.xlu0 %2367
        %2369 = vrot.lane.b32.xlu0 %v2336, 122
        %v2370 = vpop.permute.xlu0 %2369
        %2371 = vrot.lane.b32.xlu0 %v2337, 122
        %v2372 = vpop.permute.xlu0 %2371
        %2373 = vrot.lane.b32.xlu0 %v2338, 122
        %v2374 = vpop.permute.xlu0 %2373
        %2375 = vrot.lane.b32.xlu0 %v2339, 122
        %v2376 = vpop.permute.xlu0 %2375
        %2377 = vrot.lane.b32.xlu0 %v2340, 122
        %v2378 = vpop.permute.xlu0 %2377
        %2379 = vrot.lane.b32.xlu0 %v2341, 122
        %v2380 = vpop.permute.xlu0 %2379
        %2381 = vrot.lane.b32.xlu0 %v2342, 122
        %v2382 = vpop.permute.xlu0 %2381
        %2383 = vrot.lane.b32.xlu0 %v2343, 122
        %v2384 = vpop.permute.xlu0 %2383
        %2385 = vrot.lane.b32.xlu0 %v2344, 122
        %v2386 = vpop.permute.xlu0 %2385
        %2387 = vrot.lane.b32.xlu0 %v2345, 122
        %v2388 = vpop.permute.xlu0 %2387
        %2389 = vrot.lane.b32.xlu0 %v2346, 122
        %v2390 = vpop.permute.xlu0 %2389
        %2391 = vrot.lane.b32.xlu0 %v2347, 122
        %v2392 = vpop.permute.xlu0 %2391
        %2393 = vrot.lane.b32.xlu0 %v2348, 122
        %v2394 = vpop.permute.xlu0 %2393
        %2395 = vrot.lane.b32.xlu0 %v2349, 122
        %v2396 = vpop.permute.xlu0 %2395
        %2397 = vrot.lane.b32.xlu0 %v2350, 122
        %v2398 = vpop.permute.xlu0 %2397
        %v2415 = vadd.f32 %v2317, %v2368
        %v2416 = vadd.f32 %v2318, %v2370
        %v2417 = vadd.f32 %v2319, %v2372
        %v2418 = vadd.f32 %v2320, %v2374
        %v2419 = vadd.f32 %v2321, %v2376
        %v2420 = vadd.f32 %v2322, %v2378
        %v2421 = vadd.f32 %v2323, %v2380
        %v2422 = vadd.f32 %v2324, %v2382
        %v2423 = vadd.f32 %v2325, %v2384
        %v2424 = vadd.f32 %v2326, %v2386
        %v2425 = vadd.f32 %v2327, %v2388
        %v2426 = vadd.f32 %v2328, %v2390
        %v2427 = vadd.f32 %v2329, %v2392
        %v2428 = vadd.f32 %v2330, %v2394
        %v2429 = vadd.f32 %v2331, %v2396
        %v2430 = vadd.f32 %v2332, %v2398
        %s2431 = sld [smem:[#allocation5 + $0x15]]
        %v2432 = vstv %s2431
        %v2433 = vmul.f32 %v2432, %v546
        %v2434 = vmul.f32 %v2432, %v547
        %v2435 = vmul.f32 %v2432, %v548
        %v2436 = vmul.f32 %v2432, %v549
        %v2437 = vmul.f32 %v2432, %v550
        %v2438 = vmul.f32 %v2432, %v551
        %v2439 = vmul.f32 %v2432, %v552
        %v2440 = vmul.f32 %v2432, %v553
        %v2441 = vmul.f32 %v2432, %v554
        %v2442 = vmul.f32 %v2432, %v555
        %v2443 = vmul.f32 %v2432, %v556
        %v2444 = vmul.f32 %v2432, %v557
        %v2445 = vmul.f32 %v2432, %v558
        %v2446 = vmul.f32 %v2432, %v559
        %v2447 = vmul.f32 %v2432, %v560
        %v2448 = vmul.f32 %v2432, %v561
        %v2449 = vadd.f32 %v2415, %v2433
        %v2450 = vadd.f32 %v2416, %v2434
        %v2451 = vadd.f32 %v2417, %v2435
        %v2452 = vadd.f32 %v2418, %v2436
        %v2453 = vadd.f32 %v2419, %v2437
        %v2454 = vadd.f32 %v2420, %v2438
        %v2455 = vadd.f32 %v2421, %v2439
        %v2456 = vadd.f32 %v2422, %v2440
        %v2457 = vadd.f32 %v2423, %v2441
        %v2458 = vadd.f32 %v2424, %v2442
        %v2459 = vadd.f32 %v2425, %v2443
        %v2460 = vadd.f32 %v2426, %v2444
        %v2461 = vadd.f32 %v2427, %v2445
        %v2462 = vadd.f32 %v2428, %v2446
        %v2463 = vadd.f32 %v2429, %v2447
        %v2464 = vadd.f32 %v2430, %v2448
        %s2465 = sld [smem:[#allocation5 + $0x16]]
        %v2466 = vstv %s2465
        %v2467 = vmul.f32 %v2466, %v546
        %v2468 = vmul.f32 %v2466, %v547
        %v2469 = vmul.f32 %v2466, %v548
        %v2470 = vmul.f32 %v2466, %v549
        %v2471 = vmul.f32 %v2466, %v550
        %v2472 = vmul.f32 %v2466, %v551
        %v2473 = vmul.f32 %v2466, %v552
        %v2474 = vmul.f32 %v2466, %v553
        %v2475 = vmul.f32 %v2466, %v554
        %v2476 = vmul.f32 %v2466, %v555
        %v2477 = vmul.f32 %v2466, %v556
        %v2478 = vmul.f32 %v2466, %v557
        %v2479 = vmul.f32 %v2466, %v558
        %v2480 = vmul.f32 %v2466, %v559
        %v2481 = vmul.f32 %v2466, %v560
        %v2482 = vmul.f32 %v2466, %v561
        %2499 = vrot.lane.b32.xlu0 %v2467, 127
        %v2500 = vpop.permute.xlu0 %2499
        %2501 = vrot.lane.b32.xlu0 %v2468, 127
        %v2502 = vpop.permute.xlu0 %2501
        %2503 = vrot.lane.b32.xlu0 %v2469, 127
        %v2504 = vpop.permute.xlu0 %2503
        %2505 = vrot.lane.b32.xlu0 %v2470, 127
        %v2506 = vpop.permute.xlu0 %2505
        %2507 = vrot.lane.b32.xlu0 %v2471, 127
        %v2508 = vpop.permute.xlu0 %2507
        %2509 = vrot.lane.b32.xlu0 %v2472, 127
        %v2510 = vpop.permute.xlu0 %2509
        %2511 = vrot.lane.b32.xlu0 %v2473, 127
        %v2512 = vpop.permute.xlu0 %2511
        %2513 = vrot.lane.b32.xlu0 %v2474, 127
        %v2514 = vpop.permute.xlu0 %2513
        %2515 = vrot.lane.b32.xlu0 %v2475, 127
        %v2516 = vpop.permute.xlu0 %2515
        %2517 = vrot.lane.b32.xlu0 %v2476, 127
        %v2518 = vpop.permute.xlu0 %2517
        %2519 = vrot.lane.b32.xlu0 %v2477, 127
        %v2520 = vpop.permute.xlu0 %2519
        %2521 = vrot.lane.b32.xlu0 %v2478, 127
        %v2522 = vpop.permute.xlu0 %2521
        %2523 = vrot.lane.b32.xlu0 %v2479, 127
        %v2524 = vpop.permute.xlu0 %2523
        %2525 = vrot.lane.b32.xlu0 %v2480, 127
        %v2526 = vpop.permute.xlu0 %2525
        %2527 = vrot.lane.b32.xlu0 %v2481, 127
        %v2528 = vpop.permute.xlu0 %2527
        %2529 = vrot.lane.b32.xlu0 %v2482, 127
        %v2530 = vpop.permute.xlu0 %2529
        %v2547 = vadd.f32 %v2449, %v2500
        %v2548 = vadd.f32 %v2450, %v2502
        %v2549 = vadd.f32 %v2451, %v2504
        %v2550 = vadd.f32 %v2452, %v2506
        %v2551 = vadd.f32 %v2453, %v2508
        %v2552 = vadd.f32 %v2454, %v2510
        %v2553 = vadd.f32 %v2455, %v2512
        %v2554 = vadd.f32 %v2456, %v2514
        %v2555 = vadd.f32 %v2457, %v2516
        %v2556 = vadd.f32 %v2458, %v2518
        %v2557 = vadd.f32 %v2459, %v2520
        %v2558 = vadd.f32 %v2460, %v2522
        %v2559 = vadd.f32 %v2461, %v2524
        %v2560 = vadd.f32 %v2462, %v2526
        %v2561 = vadd.f32 %v2463, %v2528
        %v2562 = vadd.f32 %v2464, %v2530
        %s2563 = sld [smem:[#allocation5 + $0x17]]
        %v2564 = vstv %s2563
        %v2565 = vmul.f32 %v2564, %v546
        %v2566 = vmul.f32 %v2564, %v547
        %v2567 = vmul.f32 %v2564, %v548
        %v2568 = vmul.f32 %v2564, %v549
        %v2569 = vmul.f32 %v2564, %v550
        %v2570 = vmul.f32 %v2564, %v551
        %v2571 = vmul.f32 %v2564, %v552
        %v2572 = vmul.f32 %v2564, %v553
        %v2573 = vmul.f32 %v2564, %v554
        %v2574 = vmul.f32 %v2564, %v555
        %v2575 = vmul.f32 %v2564, %v556
        %v2576 = vmul.f32 %v2564, %v557
        %v2577 = vmul.f32 %v2564, %v558
        %v2578 = vmul.f32 %v2564, %v559
        %v2579 = vmul.f32 %v2564, %v560
        %v2580 = vmul.f32 %v2564, %v561
        %2597 = vrot.lane.b32.xlu0 %v2565, 126
        %v2598 = vpop.permute.xlu0 %2597
        %2599 = vrot.lane.b32.xlu0 %v2566, 126
        %v2600 = vpop.permute.xlu0 %2599
        %2601 = vrot.lane.b32.xlu0 %v2567, 126
        %v2602 = vpop.permute.xlu0 %2601
        %2603 = vrot.lane.b32.xlu0 %v2568, 126
        %v2604 = vpop.permute.xlu0 %2603
        %2605 = vrot.lane.b32.xlu0 %v2569, 126
        %v2606 = vpop.permute.xlu0 %2605
        %2607 = vrot.lane.b32.xlu0 %v2570, 126
        %v2608 = vpop.permute.xlu0 %2607
        %2609 = vrot.lane.b32.xlu0 %v2571, 126
        %v2610 = vpop.permute.xlu0 %2609
        %2611 = vrot.lane.b32.xlu0 %v2572, 126
        %v2612 = vpop.permute.xlu0 %2611
        %2613 = vrot.lane.b32.xlu0 %v2573, 126
        %v2614 = vpop.permute.xlu0 %2613
        %2615 = vrot.lane.b32.xlu0 %v2574, 126
        %v2616 = vpop.permute.xlu0 %2615
        %2617 = vrot.lane.b32.xlu0 %v2575, 126
        %v2618 = vpop.permute.xlu0 %2617
        %2619 = vrot.lane.b32.xlu0 %v2576, 126
        %v2620 = vpop.permute.xlu0 %2619
        %2621 = vrot.lane.b32.xlu0 %v2577, 126
        %v2622 = vpop.permute.xlu0 %2621
        %2623 = vrot.lane.b32.xlu0 %v2578, 126
        %v2624 = vpop.permute.xlu0 %2623
        %2625 = vrot.lane.b32.xlu0 %v2579, 126
        %v2626 = vpop.permute.xlu0 %2625
        %2627 = vrot.lane.b32.xlu0 %v2580, 126
        %v2628 = vpop.permute.xlu0 %2627
        %v2645 = vadd.f32 %v2547, %v2598
        %v2646 = vadd.f32 %v2548, %v2600
        %v2647 = vadd.f32 %v2549, %v2602
        %v2648 = vadd.f32 %v2550, %v2604
        %v2649 = vadd.f32 %v2551, %v2606
        %v2650 = vadd.f32 %v2552, %v2608
        %v2651 = vadd.f32 %v2553, %v2610
        %v2652 = vadd.f32 %v2554, %v2612
        %v2653 = vadd.f32 %v2555, %v2614
        %v2654 = vadd.f32 %v2556, %v2616
        %v2655 = vadd.f32 %v2557, %v2618
        %v2656 = vadd.f32 %v2558, %v2620
        %v2657 = vadd.f32 %v2559, %v2622
        %v2658 = vadd.f32 %v2560, %v2624
        %v2659 = vadd.f32 %v2561, %v2626
        %v2660 = vadd.f32 %v2562, %v2628
        %s2661 = sld [smem:[#allocation5 + $0x18]]
        %v2662 = vstv %s2661
        %v2663 = vmul.f32 %v2662, %v546
        %v2664 = vmul.f32 %v2662, %v547
        %v2665 = vmul.f32 %v2662, %v548
        %v2666 = vmul.f32 %v2662, %v549
        %v2667 = vmul.f32 %v2662, %v550
        %v2668 = vmul.f32 %v2662, %v551
        %v2669 = vmul.f32 %v2662, %v552
        %v2670 = vmul.f32 %v2662, %v553
        %v2671 = vmul.f32 %v2662, %v554
        %v2672 = vmul.f32 %v2662, %v555
        %v2673 = vmul.f32 %v2662, %v556
        %v2674 = vmul.f32 %v2662, %v557
        %v2675 = vmul.f32 %v2662, %v558
        %v2676 = vmul.f32 %v2662, %v559
        %v2677 = vmul.f32 %v2662, %v560
        %v2678 = vmul.f32 %v2662, %v561
        %2695 = vrot.lane.b32.xlu0 %v2663, 125
        %v2696 = vpop.permute.xlu0 %2695
        %2697 = vrot.lane.b32.xlu0 %v2664, 125
        %v2698 = vpop.permute.xlu0 %2697
        %2699 = vrot.lane.b32.xlu0 %v2665, 125
        %v2700 = vpop.permute.xlu0 %2699
        %2701 = vrot.lane.b32.xlu0 %v2666, 125
        %v2702 = vpop.permute.xlu0 %2701
        %2703 = vrot.lane.b32.xlu0 %v2667, 125
        %v2704 = vpop.permute.xlu0 %2703
        %2705 = vrot.lane.b32.xlu0 %v2668, 125
        %v2706 = vpop.permute.xlu0 %2705
        %2707 = vrot.lane.b32.xlu0 %v2669, 125
        %v2708 = vpop.permute.xlu0 %2707
        %2709 = vrot.lane.b32.xlu0 %v2670, 125
        %v2710 = vpop.permute.xlu0 %2709
        %2711 = vrot.lane.b32.xlu0 %v2671, 125
        %v2712 = vpop.permute.xlu0 %2711
        %2713 = vrot.lane.b32.xlu0 %v2672, 125
        %v2714 = vpop.permute.xlu0 %2713
        %2715 = vrot.lane.b32.xlu0 %v2673, 125
        %v2716 = vpop.permute.xlu0 %2715
        %2717 = vrot.lane.b32.xlu0 %v2674, 125
        %v2718 = vpop.permute.xlu0 %2717
        %2719 = vrot.lane.b32.xlu0 %v2675, 125
        %v2720 = vpop.permute.xlu0 %2719
        %2721 = vrot.lane.b32.xlu0 %v2676, 125
        %v2722 = vpop.permute.xlu0 %2721
        %2723 = vrot.lane.b32.xlu0 %v2677, 125
        %v2724 = vpop.permute.xlu0 %2723
        %2725 = vrot.lane.b32.xlu0 %v2678, 125
        %v2726 = vpop.permute.xlu0 %2725
        %v2743 = vadd.f32 %v2645, %v2696
        %v2744 = vadd.f32 %v2646, %v2698
        %v2745 = vadd.f32 %v2647, %v2700
        %v2746 = vadd.f32 %v2648, %v2702
        %v2747 = vadd.f32 %v2649, %v2704
        %v2748 = vadd.f32 %v2650, %v2706
        %v2749 = vadd.f32 %v2651, %v2708
        %v2750 = vadd.f32 %v2652, %v2710
        %v2751 = vadd.f32 %v2653, %v2712
        %v2752 = vadd.f32 %v2654, %v2714
        %v2753 = vadd.f32 %v2655, %v2716
        %v2754 = vadd.f32 %v2656, %v2718
        %v2755 = vadd.f32 %v2657, %v2720
        %v2756 = vadd.f32 %v2658, %v2722
        %v2757 = vadd.f32 %v2659, %v2724
        %v2758 = vadd.f32 %v2660, %v2726
        %s2759 = sld [smem:[#allocation5 + $0x19]]
        %v2760 = vstv %s2759
        %v2761 = vmul.f32 %v2760, %v546
        %v2762 = vmul.f32 %v2760, %v547
        %v2763 = vmul.f32 %v2760, %v548
        %v2764 = vmul.f32 %v2760, %v549
        %v2765 = vmul.f32 %v2760, %v550
        %v2766 = vmul.f32 %v2760, %v551
        %v2767 = vmul.f32 %v2760, %v552
        %v2768 = vmul.f32 %v2760, %v553
        %v2769 = vmul.f32 %v2760, %v554
        %v2770 = vmul.f32 %v2760, %v555
        %v2771 = vmul.f32 %v2760, %v556
        %v2772 = vmul.f32 %v2760, %v557
        %v2773 = vmul.f32 %v2760, %v558
        %v2774 = vmul.f32 %v2760, %v559
        %v2775 = vmul.f32 %v2760, %v560
        %v2776 = vmul.f32 %v2760, %v561
        %2793 = vrot.lane.b32.xlu0 %v2761, 124
        %v2794 = vpop.permute.xlu0 %2793
        %2795 = vrot.lane.b32.xlu0 %v2762, 124
        %v2796 = vpop.permute.xlu0 %2795
        %2797 = vrot.lane.b32.xlu0 %v2763, 124
        %v2798 = vpop.permute.xlu0 %2797
        %2799 = vrot.lane.b32.xlu0 %v2764, 124
        %v2800 = vpop.permute.xlu0 %2799
        %2801 = vrot.lane.b32.xlu0 %v2765, 124
        %v2802 = vpop.permute.xlu0 %2801
        %2803 = vrot.lane.b32.xlu0 %v2766, 124
        %v2804 = vpop.permute.xlu0 %2803
        %2805 = vrot.lane.b32.xlu0 %v2767, 124
        %v2806 = vpop.permute.xlu0 %2805
        %2807 = vrot.lane.b32.xlu0 %v2768, 124
        %v2808 = vpop.permute.xlu0 %2807
        %2809 = vrot.lane.b32.xlu0 %v2769, 124
        %v2810 = vpop.permute.xlu0 %2809
        %2811 = vrot.lane.b32.xlu0 %v2770, 124
        %v2812 = vpop.permute.xlu0 %2811
        %2813 = vrot.lane.b32.xlu0 %v2771, 124
        %v2814 = vpop.permute.xlu0 %2813
        %2815 = vrot.lane.b32.xlu0 %v2772, 124
        %v2816 = vpop.permute.xlu0 %2815
        %2817 = vrot.lane.b32.xlu0 %v2773, 124
        %v2818 = vpop.permute.xlu0 %2817
        %2819 = vrot.lane.b32.xlu0 %v2774, 124
        %v2820 = vpop.permute.xlu0 %2819
        %2821 = vrot.lane.b32.xlu0 %v2775, 124
        %v2822 = vpop.permute.xlu0 %2821
        %2823 = vrot.lane.b32.xlu0 %v2776, 124
        %v2824 = vpop.permute.xlu0 %2823
        %v2841 = vadd.f32 %v2743, %v2794
        %v2842 = vadd.f32 %v2744, %v2796
        %v2843 = vadd.f32 %v2745, %v2798
        %v2844 = vadd.f32 %v2746, %v2800
        %v2845 = vadd.f32 %v2747, %v2802
        %v2846 = vadd.f32 %v2748, %v2804
        %v2847 = vadd.f32 %v2749, %v2806
        %v2848 = vadd.f32 %v2750, %v2808
        %v2849 = vadd.f32 %v2751, %v2810
        %v2850 = vadd.f32 %v2752, %v2812
        %v2851 = vadd.f32 %v2753, %v2814
        %v2852 = vadd.f32 %v2754, %v2816
        %v2853 = vadd.f32 %v2755, %v2818
        %v2854 = vadd.f32 %v2756, %v2820
        %v2855 = vadd.f32 %v2757, %v2822
        %v2856 = vadd.f32 %v2758, %v2824
        %s2857 = sld [smem:[#allocation5 + $0x1a]]
        %v2858 = vstv %s2857
        %v2859 = vmul.f32 %v2858, %v546
        %v2860 = vmul.f32 %v2858, %v547
        %v2861 = vmul.f32 %v2858, %v548
        %v2862 = vmul.f32 %v2858, %v549
        %v2863 = vmul.f32 %v2858, %v550
        %v2864 = vmul.f32 %v2858, %v551
        %v2865 = vmul.f32 %v2858, %v552
        %v2866 = vmul.f32 %v2858, %v553
        %v2867 = vmul.f32 %v2858, %v554
        %v2868 = vmul.f32 %v2858, %v555
        %v2869 = vmul.f32 %v2858, %v556
        %v2870 = vmul.f32 %v2858, %v557
        %v2871 = vmul.f32 %v2858, %v558
        %v2872 = vmul.f32 %v2858, %v559
        %v2873 = vmul.f32 %v2858, %v560
        %v2874 = vmul.f32 %v2858, %v561
        %2891 = vrot.lane.b32.xlu0 %v2859, 123
        %v2892 = vpop.permute.xlu0 %2891
        %2893 = vrot.lane.b32.xlu0 %v2860, 123
        %v2894 = vpop.permute.xlu0 %2893
        %2895 = vrot.lane.b32.xlu0 %v2861, 123
        %v2896 = vpop.permute.xlu0 %2895
        %2897 = vrot.lane.b32.xlu0 %v2862, 123
        %v2898 = vpop.permute.xlu0 %2897
        %2899 = vrot.lane.b32.xlu0 %v2863, 123
        %v2900 = vpop.permute.xlu0 %2899
        %2901 = vrot.lane.b32.xlu0 %v2864, 123
        %v2902 = vpop.permute.xlu0 %2901
        %2903 = vrot.lane.b32.xlu0 %v2865, 123
        %v2904 = vpop.permute.xlu0 %2903
        %2905 = vrot.lane.b32.xlu0 %v2866, 123
        %v2906 = vpop.permute.xlu0 %2905
        %2907 = vrot.lane.b32.xlu0 %v2867, 123
        %v2908 = vpop.permute.xlu0 %2907
        %2909 = vrot.lane.b32.xlu0 %v2868, 123
        %v2910 = vpop.permute.xlu0 %2909
        %2911 = vrot.lane.b32.xlu0 %v2869, 123
        %v2912 = vpop.permute.xlu0 %2911
        %2913 = vrot.lane.b32.xlu0 %v2870, 123
        %v2914 = vpop.permute.xlu0 %2913
        %2915 = vrot.lane.b32.xlu0 %v2871, 123
        %v2916 = vpop.permute.xlu0 %2915
        %2917 = vrot.lane.b32.xlu0 %v2872, 123
        %v2918 = vpop.permute.xlu0 %2917
        %2919 = vrot.lane.b32.xlu0 %v2873, 123
        %v2920 = vpop.permute.xlu0 %2919
        %2921 = vrot.lane.b32.xlu0 %v2874, 123
        %v2922 = vpop.permute.xlu0 %2921
        %v2939 = vadd.f32 %v2841, %v2892
        %v2940 = vadd.f32 %v2842, %v2894
        %v2941 = vadd.f32 %v2843, %v2896
        %v2942 = vadd.f32 %v2844, %v2898
        %v2943 = vadd.f32 %v2845, %v2900
        %v2944 = vadd.f32 %v2846, %v2902
        %v2945 = vadd.f32 %v2847, %v2904
        %v2946 = vadd.f32 %v2848, %v2906
        %v2947 = vadd.f32 %v2849, %v2908
        %v2948 = vadd.f32 %v2850, %v2910
        %v2949 = vadd.f32 %v2851, %v2912
        %v2950 = vadd.f32 %v2852, %v2914
        %v2951 = vadd.f32 %v2853, %v2916
        %v2952 = vadd.f32 %v2854, %v2918
        %v2953 = vadd.f32 %v2855, %v2920
        %v2954 = vadd.f32 %v2856, %v2922
        %s2955 = sld [smem:[#allocation5 + $0x1b]]
        %v2956 = vstv %s2955
        %v2957 = vmul.f32 %v2956, %v546
        %v2958 = vmul.f32 %v2956, %v547
        %v2959 = vmul.f32 %v2956, %v548
        %v2960 = vmul.f32 %v2956, %v549
        %v2961 = vmul.f32 %v2956, %v550
        %v2962 = vmul.f32 %v2956, %v551
        %v2963 = vmul.f32 %v2956, %v552
        %v2964 = vmul.f32 %v2956, %v553
        %v2965 = vmul.f32 %v2956, %v554
        %v2966 = vmul.f32 %v2956, %v555
        %v2967 = vmul.f32 %v2956, %v556
        %v2968 = vmul.f32 %v2956, %v557
        %v2969 = vmul.f32 %v2956, %v558
        %v2970 = vmul.f32 %v2956, %v559
        %v2971 = vmul.f32 %v2956, %v560
        %v2972 = vmul.f32 %v2956, %v561
        %2989 = vrot.lane.b32.xlu0 %v2957, 122
        %v2990 = vpop.permute.xlu0 %2989
        %2991 = vrot.lane.b32.xlu0 %v2958, 122
        %v2992 = vpop.permute.xlu0 %2991
        %2993 = vrot.lane.b32.xlu0 %v2959, 122
        %v2994 = vpop.permute.xlu0 %2993
        %2995 = vrot.lane.b32.xlu0 %v2960, 122
        %v2996 = vpop.permute.xlu0 %2995
        %2997 = vrot.lane.b32.xlu0 %v2961, 122
        %v2998 = vpop.permute.xlu0 %2997
        %2999 = vrot.lane.b32.xlu0 %v2962, 122
        %v3000 = vpop.permute.xlu0 %2999
        %3001 = vrot.lane.b32.xlu0 %v2963, 122
        %v3002 = vpop.permute.xlu0 %3001
        %3003 = vrot.lane.b32.xlu0 %v2964, 122
        %v3004 = vpop.permute.xlu0 %3003
        %3005 = vrot.lane.b32.xlu0 %v2965, 122
        %v3006 = vpop.permute.xlu0 %3005
        %3007 = vrot.lane.b32.xlu0 %v2966, 122
        %v3008 = vpop.permute.xlu0 %3007
        %3009 = vrot.lane.b32.xlu0 %v2967, 122
        %v3010 = vpop.permute.xlu0 %3009
        %3011 = vrot.lane.b32.xlu0 %v2968, 122
        %v3012 = vpop.permute.xlu0 %3011
        %3013 = vrot.lane.b32.xlu0 %v2969, 122
        %v3014 = vpop.permute.xlu0 %3013
        %3015 = vrot.lane.b32.xlu0 %v2970, 122
        %v3016 = vpop.permute.xlu0 %3015
        %3017 = vrot.lane.b32.xlu0 %v2971, 122
        %v3018 = vpop.permute.xlu0 %3017
        %3019 = vrot.lane.b32.xlu0 %v2972, 122
        %v3020 = vpop.permute.xlu0 %3019
        %v3037 = vadd.f32 %v2939, %v2990
        %v3038 = vadd.f32 %v2940, %v2992
        %v3039 = vadd.f32 %v2941, %v2994
        %v3040 = vadd.f32 %v2942, %v2996
        %v3041 = vadd.f32 %v2943, %v2998
        %v3042 = vadd.f32 %v2944, %v3000
        %v3043 = vadd.f32 %v2945, %v3002
        %v3044 = vadd.f32 %v2946, %v3004
        %v3045 = vadd.f32 %v2947, %v3006
        %v3046 = vadd.f32 %v2948, %v3008
        %v3047 = vadd.f32 %v2949, %v3010
        %v3048 = vadd.f32 %v2950, %v3012
        %v3049 = vadd.f32 %v2951, %v3014
        %v3050 = vadd.f32 %v2952, %v3016
        %v3051 = vadd.f32 %v2953, %v3018
        %v3052 = vadd.f32 %v2954, %v3020
        %s3053 = sld [smem:[#allocation5 + $0x1c]]
        %v3054 = vstv %s3053
        %v3055 = vmul.f32 %v3054, %v547
        %v3056 = vmul.f32 %v3054, %v548
        %v3057 = vmul.f32 %v3054, %v549
        %v3058 = vmul.f32 %v3054, %v550
        %v3059 = vmul.f32 %v3054, %v551
        %v3060 = vmul.f32 %v3054, %v552
        %v3061 = vmul.f32 %v3054, %v553
        %v3062 = vmul.f32 %v3054, %v554
        %v3063 = vmul.f32 %v3054, %v555
        %v3064 = vmul.f32 %v3054, %v556
        %v3065 = vmul.f32 %v3054, %v557
        %v3066 = vmul.f32 %v3054, %v558
        %v3067 = vmul.f32 %v3054, %v559
        %v3068 = vmul.f32 %v3054, %v560
        %v3069 = vmul.f32 %v3054, %v561
        %v3070 = vmul.f32 %v3054, %v562
        %v3071 = vadd.f32 %v3037, %v3055
        %v3072 = vadd.f32 %v3038, %v3056
        %v3073 = vadd.f32 %v3039, %v3057
        %v3074 = vadd.f32 %v3040, %v3058
        %v3075 = vadd.f32 %v3041, %v3059
        %v3076 = vadd.f32 %v3042, %v3060
        %v3077 = vadd.f32 %v3043, %v3061
        %v3078 = vadd.f32 %v3044, %v3062
        %v3079 = vadd.f32 %v3045, %v3063
        %v3080 = vadd.f32 %v3046, %v3064
        %v3081 = vadd.f32 %v3047, %v3065
        %v3082 = vadd.f32 %v3048, %v3066
        %v3083 = vadd.f32 %v3049, %v3067
        %v3084 = vadd.f32 %v3050, %v3068
        %v3085 = vadd.f32 %v3051, %v3069
        %v3086 = vadd.f32 %v3052, %v3070
        %s3087 = sld [smem:[#allocation5 + $0x1d]]
        %v3088 = vstv %s3087
        %v3089 = vmul.f32 %v3088, %v547
        %v3090 = vmul.f32 %v3088, %v548
        %v3091 = vmul.f32 %v3088, %v549
        %v3092 = vmul.f32 %v3088, %v550
        %v3093 = vmul.f32 %v3088, %v551
        %v3094 = vmul.f32 %v3088, %v552
        %v3095 = vmul.f32 %v3088, %v553
        %v3096 = vmul.f32 %v3088, %v554
        %v3097 = vmul.f32 %v3088, %v555
        %v3098 = vmul.f32 %v3088, %v556
        %v3099 = vmul.f32 %v3088, %v557
        %v3100 = vmul.f32 %v3088, %v558
        %v3101 = vmul.f32 %v3088, %v559
        %v3102 = vmul.f32 %v3088, %v560
        %v3103 = vmul.f32 %v3088, %v561
        %v3104 = vmul.f32 %v3088, %v562
        %3121 = vrot.lane.b32.xlu0 %v3089, 127
        %v3122 = vpop.permute.xlu0 %3121
        %3123 = vrot.lane.b32.xlu0 %v3090, 127
        %v3124 = vpop.permute.xlu0 %3123
        %3125 = vrot.lane.b32.xlu0 %v3091, 127
        %v3126 = vpop.permute.xlu0 %3125
        %3127 = vrot.lane.b32.xlu0 %v3092, 127
        %v3128 = vpop.permute.xlu0 %3127
        %3129 = vrot.lane.b32.xlu0 %v3093, 127
        %v3130 = vpop.permute.xlu0 %3129
        %3131 = vrot.lane.b32.xlu0 %v3094, 127
        %v3132 = vpop.permute.xlu0 %3131
        %3133 = vrot.lane.b32.xlu0 %v3095, 127
        %v3134 = vpop.permute.xlu0 %3133
        %3135 = vrot.lane.b32.xlu0 %v3096, 127
        %v3136 = vpop.permute.xlu0 %3135
        %3137 = vrot.lane.b32.xlu0 %v3097, 127
        %v3138 = vpop.permute.xlu0 %3137
        %3139 = vrot.lane.b32.xlu0 %v3098, 127
        %v3140 = vpop.permute.xlu0 %3139
        %3141 = vrot.lane.b32.xlu0 %v3099, 127
        %v3142 = vpop.permute.xlu0 %3141
        %3143 = vrot.lane.b32.xlu0 %v3100, 127
        %v3144 = vpop.permute.xlu0 %3143
        %3145 = vrot.lane.b32.xlu0 %v3101, 127
        %v3146 = vpop.permute.xlu0 %3145
        %3147 = vrot.lane.b32.xlu0 %v3102, 127
        %v3148 = vpop.permute.xlu0 %3147
        %3149 = vrot.lane.b32.xlu0 %v3103, 127
        %v3150 = vpop.permute.xlu0 %3149
        %3151 = vrot.lane.b32.xlu0 %v3104, 127
        %v3152 = vpop.permute.xlu0 %3151
        %v3169 = vadd.f32 %v3071, %v3122
        %v3170 = vadd.f32 %v3072, %v3124
        %v3171 = vadd.f32 %v3073, %v3126
        %v3172 = vadd.f32 %v3074, %v3128
        %v3173 = vadd.f32 %v3075, %v3130
        %v3174 = vadd.f32 %v3076, %v3132
        %v3175 = vadd.f32 %v3077, %v3134
        %v3176 = vadd.f32 %v3078, %v3136
        %v3177 = vadd.f32 %v3079, %v3138
        %v3178 = vadd.f32 %v3080, %v3140
        %v3179 = vadd.f32 %v3081, %v3142
        %v3180 = vadd.f32 %v3082, %v3144
        %v3181 = vadd.f32 %v3083, %v3146
        %v3182 = vadd.f32 %v3084, %v3148
        %v3183 = vadd.f32 %v3085, %v3150
        %v3184 = vadd.f32 %v3086, %v3152
        %s3185 = sld [smem:[#allocation5 + $0x1e]]
        %v3186 = vstv %s3185
        %v3187 = vmul.f32 %v3186, %v547
        %v3188 = vmul.f32 %v3186, %v548
        %v3189 = vmul.f32 %v3186, %v549
        %v3190 = vmul.f32 %v3186, %v550
        %v3191 = vmul.f32 %v3186, %v551
        %v3192 = vmul.f32 %v3186, %v552
        %v3193 = vmul.f32 %v3186, %v553
        %v3194 = vmul.f32 %v3186, %v554
        %v3195 = vmul.f32 %v3186, %v555
        %v3196 = vmul.f32 %v3186, %v556
        %v3197 = vmul.f32 %v3186, %v557
        %v3198 = vmul.f32 %v3186, %v558
        %v3199 = vmul.f32 %v3186, %v559
        %v3200 = vmul.f32 %v3186, %v560
        %v3201 = vmul.f32 %v3186, %v561
        %v3202 = vmul.f32 %v3186, %v562
        %3219 = vrot.lane.b32.xlu0 %v3187, 126
        %v3220 = vpop.permute.xlu0 %3219
        %3221 = vrot.lane.b32.xlu0 %v3188, 126
        %v3222 = vpop.permute.xlu0 %3221
        %3223 = vrot.lane.b32.xlu0 %v3189, 126
        %v3224 = vpop.permute.xlu0 %3223
        %3225 = vrot.lane.b32.xlu0 %v3190, 126
        %v3226 = vpop.permute.xlu0 %3225
        %3227 = vrot.lane.b32.xlu0 %v3191, 126
        %v3228 = vpop.permute.xlu0 %3227
        %3229 = vrot.lane.b32.xlu0 %v3192, 126
        %v3230 = vpop.permute.xlu0 %3229
        %3231 = vrot.lane.b32.xlu0 %v3193, 126
        %v3232 = vpop.permute.xlu0 %3231
        %3233 = vrot.lane.b32.xlu0 %v3194, 126
        %v3234 = vpop.permute.xlu0 %3233
        %3235 = vrot.lane.b32.xlu0 %v3195, 126
        %v3236 = vpop.permute.xlu0 %3235
        %3237 = vrot.lane.b32.xlu0 %v3196, 126
        %v3238 = vpop.permute.xlu0 %3237
        %3239 = vrot.lane.b32.xlu0 %v3197, 126
        %v3240 = vpop.permute.xlu0 %3239
        %3241 = vrot.lane.b32.xlu0 %v3198, 126
        %v3242 = vpop.permute.xlu0 %3241
        %3243 = vrot.lane.b32.xlu0 %v3199, 126
        %v3244 = vpop.permute.xlu0 %3243
        %3245 = vrot.lane.b32.xlu0 %v3200, 126
        %v3246 = vpop.permute.xlu0 %3245
        %3247 = vrot.lane.b32.xlu0 %v3201, 126
        %v3248 = vpop.permute.xlu0 %3247
        %3249 = vrot.lane.b32.xlu0 %v3202, 126
        %v3250 = vpop.permute.xlu0 %3249
        %v3267 = vadd.f32 %v3169, %v3220
        %v3268 = vadd.f32 %v3170, %v3222
        %v3269 = vadd.f32 %v3171, %v3224
        %v3270 = vadd.f32 %v3172, %v3226
        %v3271 = vadd.f32 %v3173, %v3228
        %v3272 = vadd.f32 %v3174, %v3230
        %v3273 = vadd.f32 %v3175, %v3232
        %v3274 = vadd.f32 %v3176, %v3234
        %v3275 = vadd.f32 %v3177, %v3236
        %v3276 = vadd.f32 %v3178, %v3238
        %v3277 = vadd.f32 %v3179, %v3240
        %v3278 = vadd.f32 %v3180, %v3242
        %v3279 = vadd.f32 %v3181, %v3244
        %v3280 = vadd.f32 %v3182, %v3246
        %v3281 = vadd.f32 %v3183, %v3248
        %v3282 = vadd.f32 %v3184, %v3250
        %s3283 = sld [smem:[#allocation5 + $0x1f]]
        %v3284 = vstv %s3283
        %v3285 = vmul.f32 %v3284, %v547
        %v3286 = vmul.f32 %v3284, %v548
        %v3287 = vmul.f32 %v3284, %v549
        %v3288 = vmul.f32 %v3284, %v550
        %v3289 = vmul.f32 %v3284, %v551
        %v3290 = vmul.f32 %v3284, %v552
        %v3291 = vmul.f32 %v3284, %v553
        %v3292 = vmul.f32 %v3284, %v554
        %v3293 = vmul.f32 %v3284, %v555
        %v3294 = vmul.f32 %v3284, %v556
        %v3295 = vmul.f32 %v3284, %v557
        %v3296 = vmul.f32 %v3284, %v558
        %v3297 = vmul.f32 %v3284, %v559
        %v3298 = vmul.f32 %v3284, %v560
        %v3299 = vmul.f32 %v3284, %v561
        %v3300 = vmul.f32 %v3284, %v562
        %3317 = vrot.lane.b32.xlu0 %v3285, 125
        %v3318 = vpop.permute.xlu0 %3317
        %3319 = vrot.lane.b32.xlu0 %v3286, 125
        %v3320 = vpop.permute.xlu0 %3319
        %3321 = vrot.lane.b32.xlu0 %v3287, 125
        %v3322 = vpop.permute.xlu0 %3321
        %3323 = vrot.lane.b32.xlu0 %v3288, 125
        %v3324 = vpop.permute.xlu0 %3323
        %3325 = vrot.lane.b32.xlu0 %v3289, 125
        %v3326 = vpop.permute.xlu0 %3325
        %3327 = vrot.lane.b32.xlu0 %v3290, 125
        %v3328 = vpop.permute.xlu0 %3327
        %3329 = vrot.lane.b32.xlu0 %v3291, 125
        %v3330 = vpop.permute.xlu0 %3329
        %3331 = vrot.lane.b32.xlu0 %v3292, 125
        %v3332 = vpop.permute.xlu0 %3331
        %3333 = vrot.lane.b32.xlu0 %v3293, 125
        %v3334 = vpop.permute.xlu0 %3333
        %3335 = vrot.lane.b32.xlu0 %v3294, 125
        %v3336 = vpop.permute.xlu0 %3335
        %3337 = vrot.lane.b32.xlu0 %v3295, 125
        %v3338 = vpop.permute.xlu0 %3337
        %3339 = vrot.lane.b32.xlu0 %v3296, 125
        %v3340 = vpop.permute.xlu0 %3339
        %3341 = vrot.lane.b32.xlu0 %v3297, 125
        %v3342 = vpop.permute.xlu0 %3341
        %3343 = vrot.lane.b32.xlu0 %v3298, 125
        %v3344 = vpop.permute.xlu0 %3343
        %3345 = vrot.lane.b32.xlu0 %v3299, 125
        %v3346 = vpop.permute.xlu0 %3345
        %3347 = vrot.lane.b32.xlu0 %v3300, 125
        %v3348 = vpop.permute.xlu0 %3347
        %v3365 = vadd.f32 %v3267, %v3318
        %v3366 = vadd.f32 %v3268, %v3320
        %v3367 = vadd.f32 %v3269, %v3322
        %v3368 = vadd.f32 %v3270, %v3324
        %v3369 = vadd.f32 %v3271, %v3326
        %v3370 = vadd.f32 %v3272, %v3328
        %v3371 = vadd.f32 %v3273, %v3330
        %v3372 = vadd.f32 %v3274, %v3332
        %v3373 = vadd.f32 %v3275, %v3334
        %v3374 = vadd.f32 %v3276, %v3336
        %v3375 = vadd.f32 %v3277, %v3338
        %v3376 = vadd.f32 %v3278, %v3340
        %v3377 = vadd.f32 %v3279, %v3342
        %v3378 = vadd.f32 %v3280, %v3344
        %v3379 = vadd.f32 %v3281, %v3346
        %v3380 = vadd.f32 %v3282, %v3348
        %s3381 = sld [smem:[#allocation5 + $0x20]]
        %v3382 = vstv %s3381
        %v3383 = vmul.f32 %v3382, %v547
        %v3384 = vmul.f32 %v3382, %v548
        %v3385 = vmul.f32 %v3382, %v549
        %v3386 = vmul.f32 %v3382, %v550
        %v3387 = vmul.f32 %v3382, %v551
        %v3388 = vmul.f32 %v3382, %v552
        %v3389 = vmul.f32 %v3382, %v553
        %v3390 = vmul.f32 %v3382, %v554
        %v3391 = vmul.f32 %v3382, %v555
        %v3392 = vmul.f32 %v3382, %v556
        %v3393 = vmul.f32 %v3382, %v557
        %v3394 = vmul.f32 %v3382, %v558
        %v3395 = vmul.f32 %v3382, %v559
        %v3396 = vmul.f32 %v3382, %v560
        %v3397 = vmul.f32 %v3382, %v561
        %v3398 = vmul.f32 %v3382, %v562
        %3415 = vrot.lane.b32.xlu0 %v3383, 124
        %v3416 = vpop.permute.xlu0 %3415
        %3417 = vrot.lane.b32.xlu0 %v3384, 124
        %v3418 = vpop.permute.xlu0 %3417
        %3419 = vrot.lane.b32.xlu0 %v3385, 124
        %v3420 = vpop.permute.xlu0 %3419
        %3421 = vrot.lane.b32.xlu0 %v3386, 124
        %v3422 = vpop.permute.xlu0 %3421
        %3423 = vrot.lane.b32.xlu0 %v3387, 124
        %v3424 = vpop.permute.xlu0 %3423
        %3425 = vrot.lane.b32.xlu0 %v3388, 124
        %v3426 = vpop.permute.xlu0 %3425
        %3427 = vrot.lane.b32.xlu0 %v3389, 124
        %v3428 = vpop.permute.xlu0 %3427
        %3429 = vrot.lane.b32.xlu0 %v3390, 124
        %v3430 = vpop.permute.xlu0 %3429
        %3431 = vrot.lane.b32.xlu0 %v3391, 124
        %v3432 = vpop.permute.xlu0 %3431
        %3433 = vrot.lane.b32.xlu0 %v3392, 124
        %v3434 = vpop.permute.xlu0 %3433
        %3435 = vrot.lane.b32.xlu0 %v3393, 124
        %v3436 = vpop.permute.xlu0 %3435
        %3437 = vrot.lane.b32.xlu0 %v3394, 124
        %v3438 = vpop.permute.xlu0 %3437
        %3439 = vrot.lane.b32.xlu0 %v3395, 124
        %v3440 = vpop.permute.xlu0 %3439
        %3441 = vrot.lane.b32.xlu0 %v3396, 124
        %v3442 = vpop.permute.xlu0 %3441
        %3443 = vrot.lane.b32.xlu0 %v3397, 124
        %v3444 = vpop.permute.xlu0 %3443
        %3445 = vrot.lane.b32.xlu0 %v3398, 124
        %v3446 = vpop.permute.xlu0 %3445
        %v3463 = vadd.f32 %v3365, %v3416
        %v3464 = vadd.f32 %v3366, %v3418
        %v3465 = vadd.f32 %v3367, %v3420
        %v3466 = vadd.f32 %v3368, %v3422
        %v3467 = vadd.f32 %v3369, %v3424
        %v3468 = vadd.f32 %v3370, %v3426
        %v3469 = vadd.f32 %v3371, %v3428
        %v3470 = vadd.f32 %v3372, %v3430
        %v3471 = vadd.f32 %v3373, %v3432
        %v3472 = vadd.f32 %v3374, %v3434
        %v3473 = vadd.f32 %v3375, %v3436
        %v3474 = vadd.f32 %v3376, %v3438
        %v3475 = vadd.f32 %v3377, %v3440
        %v3476 = vadd.f32 %v3378, %v3442
        %v3477 = vadd.f32 %v3379, %v3444
        %v3478 = vadd.f32 %v3380, %v3446
        %s3479 = sld [smem:[#allocation5 + $0x21]]
        %v3480 = vstv %s3479
        %v3481 = vmul.f32 %v3480, %v547
        %v3482 = vmul.f32 %v3480, %v548
        %v3483 = vmul.f32 %v3480, %v549
        %v3484 = vmul.f32 %v3480, %v550
        %v3485 = vmul.f32 %v3480, %v551
        %v3486 = vmul.f32 %v3480, %v552
        %v3487 = vmul.f32 %v3480, %v553
        %v3488 = vmul.f32 %v3480, %v554
        %v3489 = vmul.f32 %v3480, %v555
        %v3490 = vmul.f32 %v3480, %v556
        %v3491 = vmul.f32 %v3480, %v557
        %v3492 = vmul.f32 %v3480, %v558
        %v3493 = vmul.f32 %v3480, %v559
        %v3494 = vmul.f32 %v3480, %v560
        %v3495 = vmul.f32 %v3480, %v561
        %v3496 = vmul.f32 %v3480, %v562
        %3513 = vrot.lane.b32.xlu0 %v3481, 123
        %v3514 = vpop.permute.xlu0 %3513
        %3515 = vrot.lane.b32.xlu0 %v3482, 123
        %v3516 = vpop.permute.xlu0 %3515
        %3517 = vrot.lane.b32.xlu0 %v3483, 123
        %v3518 = vpop.permute.xlu0 %3517
        %3519 = vrot.lane.b32.xlu0 %v3484, 123
        %v3520 = vpop.permute.xlu0 %3519
        %3521 = vrot.lane.b32.xlu0 %v3485, 123
        %v3522 = vpop.permute.xlu0 %3521
        %3523 = vrot.lane.b32.xlu0 %v3486, 123
        %v3524 = vpop.permute.xlu0 %3523
        %3525 = vrot.lane.b32.xlu0 %v3487, 123
        %v3526 = vpop.permute.xlu0 %3525
        %3527 = vrot.lane.b32.xlu0 %v3488, 123
        %v3528 = vpop.permute.xlu0 %3527
        %3529 = vrot.lane.b32.xlu0 %v3489, 123
        %v3530 = vpop.permute.xlu0 %3529
        %3531 = vrot.lane.b32.xlu0 %v3490, 123
        %v3532 = vpop.permute.xlu0 %3531
        %3533 = vrot.lane.b32.xlu0 %v3491, 123
        %v3534 = vpop.permute.xlu0 %3533
        %3535 = vrot.lane.b32.xlu0 %v3492, 123
        %v3536 = vpop.permute.xlu0 %3535
        %3537 = vrot.lane.b32.xlu0 %v3493, 123
        %v3538 = vpop.permute.xlu0 %3537
        %3539 = vrot.lane.b32.xlu0 %v3494, 123
        %v3540 = vpop.permute.xlu0 %3539
        %3541 = vrot.lane.b32.xlu0 %v3495, 123
        %v3542 = vpop.permute.xlu0 %3541
        %3543 = vrot.lane.b32.xlu0 %v3496, 123
        %v3544 = vpop.permute.xlu0 %3543
        %v3561 = vadd.f32 %v3463, %v3514
        %v3562 = vadd.f32 %v3464, %v3516
        %v3563 = vadd.f32 %v3465, %v3518
        %v3564 = vadd.f32 %v3466, %v3520
        %v3565 = vadd.f32 %v3467, %v3522
        %v3566 = vadd.f32 %v3468, %v3524
        %v3567 = vadd.f32 %v3469, %v3526
        %v3568 = vadd.f32 %v3470, %v3528
        %v3569 = vadd.f32 %v3471, %v3530
        %v3570 = vadd.f32 %v3472, %v3532
        %v3571 = vadd.f32 %v3473, %v3534
        %v3572 = vadd.f32 %v3474, %v3536
        %v3573 = vadd.f32 %v3475, %v3538
        %v3574 = vadd.f32 %v3476, %v3540
        %v3575 = vadd.f32 %v3477, %v3542
        %v3576 = vadd.f32 %v3478, %v3544
        %s3577 = sld [smem:[#allocation5 + $0x22]]
        %v3578 = vstv %s3577
        %v3579 = vmul.f32 %v3578, %v547
        %v3580 = vmul.f32 %v3578, %v548
        %v3581 = vmul.f32 %v3578, %v549
        %v3582 = vmul.f32 %v3578, %v550
        %v3583 = vmul.f32 %v3578, %v551
        %v3584 = vmul.f32 %v3578, %v552
        %v3585 = vmul.f32 %v3578, %v553
        %v3586 = vmul.f32 %v3578, %v554
        %v3587 = vmul.f32 %v3578, %v555
        %v3588 = vmul.f32 %v3578, %v556
        %v3589 = vmul.f32 %v3578, %v557
        %v3590 = vmul.f32 %v3578, %v558
        %v3591 = vmul.f32 %v3578, %v559
        %v3592 = vmul.f32 %v3578, %v560
        %v3593 = vmul.f32 %v3578, %v561
        %v3594 = vmul.f32 %v3578, %v562
        %3611 = vrot.lane.b32.xlu0 %v3579, 122
        %v3612 = vpop.permute.xlu0 %3611
        %3613 = vrot.lane.b32.xlu0 %v3580, 122
        %v3614 = vpop.permute.xlu0 %3613
        %3615 = vrot.lane.b32.xlu0 %v3581, 122
        %v3616 = vpop.permute.xlu0 %3615
        %3617 = vrot.lane.b32.xlu0 %v3582, 122
        %v3618 = vpop.permute.xlu0 %3617
        %3619 = vrot.lane.b32.xlu0 %v3583, 122
        %v3620 = vpop.permute.xlu0 %3619
        %3621 = vrot.lane.b32.xlu0 %v3584, 122
        %v3622 = vpop.permute.xlu0 %3621
        %3623 = vrot.lane.b32.xlu0 %v3585, 122
        %v3624 = vpop.permute.xlu0 %3623
        %3625 = vrot.lane.b32.xlu0 %v3586, 122
        %v3626 = vpop.permute.xlu0 %3625
        %3627 = vrot.lane.b32.xlu0 %v3587, 122
        %v3628 = vpop.permute.xlu0 %3627
        %3629 = vrot.lane.b32.xlu0 %v3588, 122
        %v3630 = vpop.permute.xlu0 %3629
        %3631 = vrot.lane.b32.xlu0 %v3589, 122
        %v3632 = vpop.permute.xlu0 %3631
        %3633 = vrot.lane.b32.xlu0 %v3590, 122
        %v3634 = vpop.permute.xlu0 %3633
        %3635 = vrot.lane.b32.xlu0 %v3591, 122
        %v3636 = vpop.permute.xlu0 %3635
        %3637 = vrot.lane.b32.xlu0 %v3592, 122
        %v3638 = vpop.permute.xlu0 %3637
        %3639 = vrot.lane.b32.xlu0 %v3593, 122
        %v3640 = vpop.permute.xlu0 %3639
        %3641 = vrot.lane.b32.xlu0 %v3594, 122
        %v3642 = vpop.permute.xlu0 %3641
        %v3659 = vadd.f32 %v3561, %v3612
        %v3660 = vadd.f32 %v3562, %v3614
        %v3661 = vadd.f32 %v3563, %v3616
        %v3662 = vadd.f32 %v3564, %v3618
        %v3663 = vadd.f32 %v3565, %v3620
        %v3664 = vadd.f32 %v3566, %v3622
        %v3665 = vadd.f32 %v3567, %v3624
        %v3666 = vadd.f32 %v3568, %v3626
        %v3667 = vadd.f32 %v3569, %v3628
        %v3668 = vadd.f32 %v3570, %v3630
        %v3669 = vadd.f32 %v3571, %v3632
        %v3670 = vadd.f32 %v3572, %v3634
        %v3671 = vadd.f32 %v3573, %v3636
        %v3672 = vadd.f32 %v3574, %v3638
        %v3673 = vadd.f32 %v3575, %v3640
        %v3674 = vadd.f32 %v3576, %v3642
        %s3675 = sld [smem:[#allocation5 + $0x23]]
        %v3676 = vstv %s3675
        %v3677 = vmul.f32 %v3676, %v548
        %v3678 = vmul.f32 %v3676, %v549
        %v3679 = vmul.f32 %v3676, %v550
        %v3680 = vmul.f32 %v3676, %v551
        %v3681 = vmul.f32 %v3676, %v552
        %v3682 = vmul.f32 %v3676, %v553
        %v3683 = vmul.f32 %v3676, %v554
        %v3684 = vmul.f32 %v3676, %v555
        %v3685 = vmul.f32 %v3676, %v556
        %v3686 = vmul.f32 %v3676, %v557
        %v3687 = vmul.f32 %v3676, %v558
        %v3688 = vmul.f32 %v3676, %v559
        %v3689 = vmul.f32 %v3676, %v560
        %v3690 = vmul.f32 %v3676, %v561
        %v3691 = vmul.f32 %v3676, %v562
        %v3692 = vmul.f32 %v3676, %v563
        %v3693 = vadd.f32 %v3659, %v3677
        %v3694 = vadd.f32 %v3660, %v3678
        %v3695 = vadd.f32 %v3661, %v3679
        %v3696 = vadd.f32 %v3662, %v3680
        %v3697 = vadd.f32 %v3663, %v3681
        %v3698 = vadd.f32 %v3664, %v3682
        %v3699 = vadd.f32 %v3665, %v3683
        %v3700 = vadd.f32 %v3666, %v3684
        %v3701 = vadd.f32 %v3667, %v3685
        %v3702 = vadd.f32 %v3668, %v3686
        %v3703 = vadd.f32 %v3669, %v3687
        %v3704 = vadd.f32 %v3670, %v3688
        %v3705 = vadd.f32 %v3671, %v3689
        %v3706 = vadd.f32 %v3672, %v3690
        %v3707 = vadd.f32 %v3673, %v3691
        %v3708 = vadd.f32 %v3674, %v3692
        %s3709 = sld [smem:[#allocation5 + $0x24]]
        %v3710 = vstv %s3709
        %v3711 = vmul.f32 %v3710, %v548
        %v3712 = vmul.f32 %v3710, %v549
        %v3713 = vmul.f32 %v3710, %v550
        %v3714 = vmul.f32 %v3710, %v551
        %v3715 = vmul.f32 %v3710, %v552
        %v3716 = vmul.f32 %v3710, %v553
        %v3717 = vmul.f32 %v3710, %v554
        %v3718 = vmul.f32 %v3710, %v555
        %v3719 = vmul.f32 %v3710, %v556
        %v3720 = vmul.f32 %v3710, %v557
        %v3721 = vmul.f32 %v3710, %v558
        %v3722 = vmul.f32 %v3710, %v559
        %v3723 = vmul.f32 %v3710, %v560
        %v3724 = vmul.f32 %v3710, %v561
        %v3725 = vmul.f32 %v3710, %v562
        %v3726 = vmul.f32 %v3710, %v563
        %3743 = vrot.lane.b32.xlu0 %v3711, 127
        %v3744 = vpop.permute.xlu0 %3743
        %3745 = vrot.lane.b32.xlu0 %v3712, 127
        %v3746 = vpop.permute.xlu0 %3745
        %3747 = vrot.lane.b32.xlu0 %v3713, 127
        %v3748 = vpop.permute.xlu0 %3747
        %3749 = vrot.lane.b32.xlu0 %v3714, 127
        %v3750 = vpop.permute.xlu0 %3749
        %3751 = vrot.lane.b32.xlu0 %v3715, 127
        %v3752 = vpop.permute.xlu0 %3751
        %3753 = vrot.lane.b32.xlu0 %v3716, 127
        %v3754 = vpop.permute.xlu0 %3753
        %3755 = vrot.lane.b32.xlu0 %v3717, 127
        %v3756 = vpop.permute.xlu0 %3755
        %3757 = vrot.lane.b32.xlu0 %v3718, 127
        %v3758 = vpop.permute.xlu0 %3757
        %3759 = vrot.lane.b32.xlu0 %v3719, 127
        %v3760 = vpop.permute.xlu0 %3759
        %3761 = vrot.lane.b32.xlu0 %v3720, 127
        %v3762 = vpop.permute.xlu0 %3761
        %3763 = vrot.lane.b32.xlu0 %v3721, 127
        %v3764 = vpop.permute.xlu0 %3763
        %3765 = vrot.lane.b32.xlu0 %v3722, 127
        %v3766 = vpop.permute.xlu0 %3765
        %3767 = vrot.lane.b32.xlu0 %v3723, 127
        %v3768 = vpop.permute.xlu0 %3767
        %3769 = vrot.lane.b32.xlu0 %v3724, 127
        %v3770 = vpop.permute.xlu0 %3769
        %3771 = vrot.lane.b32.xlu0 %v3725, 127
        %v3772 = vpop.permute.xlu0 %3771
        %3773 = vrot.lane.b32.xlu0 %v3726, 127
        %v3774 = vpop.permute.xlu0 %3773
        %v3791 = vadd.f32 %v3693, %v3744
        %v3792 = vadd.f32 %v3694, %v3746
        %v3793 = vadd.f32 %v3695, %v3748
        %v3794 = vadd.f32 %v3696, %v3750
        %v3795 = vadd.f32 %v3697, %v3752
        %v3796 = vadd.f32 %v3698, %v3754
        %v3797 = vadd.f32 %v3699, %v3756
        %v3798 = vadd.f32 %v3700, %v3758
        %v3799 = vadd.f32 %v3701, %v3760
        %v3800 = vadd.f32 %v3702, %v3762
        %v3801 = vadd.f32 %v3703, %v3764
        %v3802 = vadd.f32 %v3704, %v3766
        %v3803 = vadd.f32 %v3705, %v3768
        %v3804 = vadd.f32 %v3706, %v3770
        %v3805 = vadd.f32 %v3707, %v3772
        %v3806 = vadd.f32 %v3708, %v3774
        %s3807 = sld [smem:[#allocation5 + $0x25]]
        %v3808 = vstv %s3807
        %v3809 = vmul.f32 %v3808, %v548
        %v3810 = vmul.f32 %v3808, %v549
        %v3811 = vmul.f32 %v3808, %v550
        %v3812 = vmul.f32 %v3808, %v551
        %v3813 = vmul.f32 %v3808, %v552
        %v3814 = vmul.f32 %v3808, %v553
        %v3815 = vmul.f32 %v3808, %v554
        %v3816 = vmul.f32 %v3808, %v555
        %v3817 = vmul.f32 %v3808, %v556
        %v3818 = vmul.f32 %v3808, %v557
        %v3819 = vmul.f32 %v3808, %v558
        %v3820 = vmul.f32 %v3808, %v559
        %v3821 = vmul.f32 %v3808, %v560
        %v3822 = vmul.f32 %v3808, %v561
        %v3823 = vmul.f32 %v3808, %v562
        %v3824 = vmul.f32 %v3808, %v563
        %3841 = vrot.lane.b32.xlu0 %v3809, 126
        %v3842 = vpop.permute.xlu0 %3841
        %3843 = vrot.lane.b32.xlu0 %v3810, 126
        %v3844 = vpop.permute.xlu0 %3843
        %3845 = vrot.lane.b32.xlu0 %v3811, 126
        %v3846 = vpop.permute.xlu0 %3845
        %3847 = vrot.lane.b32.xlu0 %v3812, 126
        %v3848 = vpop.permute.xlu0 %3847
        %3849 = vrot.lane.b32.xlu0 %v3813, 126
        %v3850 = vpop.permute.xlu0 %3849
        %3851 = vrot.lane.b32.xlu0 %v3814, 126
        %v3852 = vpop.permute.xlu0 %3851
        %3853 = vrot.lane.b32.xlu0 %v3815, 126
        %v3854 = vpop.permute.xlu0 %3853
        %3855 = vrot.lane.b32.xlu0 %v3816, 126
        %v3856 = vpop.permute.xlu0 %3855
        %3857 = vrot.lane.b32.xlu0 %v3817, 126
        %v3858 = vpop.permute.xlu0 %3857
        %3859 = vrot.lane.b32.xlu0 %v3818, 126
        %v3860 = vpop.permute.xlu0 %3859
        %3861 = vrot.lane.b32.xlu0 %v3819, 126
        %v3862 = vpop.permute.xlu0 %3861
        %3863 = vrot.lane.b32.xlu0 %v3820, 126
        %v3864 = vpop.permute.xlu0 %3863
        %3865 = vrot.lane.b32.xlu0 %v3821, 126
        %v3866 = vpop.permute.xlu0 %3865
        %3867 = vrot.lane.b32.xlu0 %v3822, 126
        %v3868 = vpop.permute.xlu0 %3867
        %3869 = vrot.lane.b32.xlu0 %v3823, 126
        %v3870 = vpop.permute.xlu0 %3869
        %3871 = vrot.lane.b32.xlu0 %v3824, 126
        %v3872 = vpop.permute.xlu0 %3871
        %v3889 = vadd.f32 %v3791, %v3842
        %v3890 = vadd.f32 %v3792, %v3844
        %v3891 = vadd.f32 %v3793, %v3846
        %v3892 = vadd.f32 %v3794, %v3848
        %v3893 = vadd.f32 %v3795, %v3850
        %v3894 = vadd.f32 %v3796, %v3852
        %v3895 = vadd.f32 %v3797, %v3854
        %v3896 = vadd.f32 %v3798, %v3856
        %v3897 = vadd.f32 %v3799, %v3858
        %v3898 = vadd.f32 %v3800, %v3860
        %v3899 = vadd.f32 %v3801, %v3862
        %v3900 = vadd.f32 %v3802, %v3864
        %v3901 = vadd.f32 %v3803, %v3866
        %v3902 = vadd.f32 %v3804, %v3868
        %v3903 = vadd.f32 %v3805, %v3870
        %v3904 = vadd.f32 %v3806, %v3872
        %s3905 = sld [smem:[#allocation5 + $0x26]]
        %v3906 = vstv %s3905
        %v3907 = vmul.f32 %v3906, %v548
        %v3908 = vmul.f32 %v3906, %v549
        %v3909 = vmul.f32 %v3906, %v550
        %v3910 = vmul.f32 %v3906, %v551
        %v3911 = vmul.f32 %v3906, %v552
        %v3912 = vmul.f32 %v3906, %v553
        %v3913 = vmul.f32 %v3906, %v554
        %v3914 = vmul.f32 %v3906, %v555
        %v3915 = vmul.f32 %v3906, %v556
        %v3916 = vmul.f32 %v3906, %v557
        %v3917 = vmul.f32 %v3906, %v558
        %v3918 = vmul.f32 %v3906, %v559
        %v3919 = vmul.f32 %v3906, %v560
        %v3920 = vmul.f32 %v3906, %v561
        %v3921 = vmul.f32 %v3906, %v562
        %v3922 = vmul.f32 %v3906, %v563
        %3939 = vrot.lane.b32.xlu0 %v3907, 125
        %v3940 = vpop.permute.xlu0 %3939
        %3941 = vrot.lane.b32.xlu0 %v3908, 125
        %v3942 = vpop.permute.xlu0 %3941
        %3943 = vrot.lane.b32.xlu0 %v3909, 125
        %v3944 = vpop.permute.xlu0 %3943
        %3945 = vrot.lane.b32.xlu0 %v3910, 125
        %v3946 = vpop.permute.xlu0 %3945
        %3947 = vrot.lane.b32.xlu0 %v3911, 125
        %v3948 = vpop.permute.xlu0 %3947
        %3949 = vrot.lane.b32.xlu0 %v3912, 125
        %v3950 = vpop.permute.xlu0 %3949
        %3951 = vrot.lane.b32.xlu0 %v3913, 125
        %v3952 = vpop.permute.xlu0 %3951
        %3953 = vrot.lane.b32.xlu0 %v3914, 125
        %v3954 = vpop.permute.xlu0 %3953
        %3955 = vrot.lane.b32.xlu0 %v3915, 125
        %v3956 = vpop.permute.xlu0 %3955
        %3957 = vrot.lane.b32.xlu0 %v3916, 125
        %v3958 = vpop.permute.xlu0 %3957
        %3959 = vrot.lane.b32.xlu0 %v3917, 125
        %v3960 = vpop.permute.xlu0 %3959
        %3961 = vrot.lane.b32.xlu0 %v3918, 125
        %v3962 = vpop.permute.xlu0 %3961
        %3963 = vrot.lane.b32.xlu0 %v3919, 125
        %v3964 = vpop.permute.xlu0 %3963
        %3965 = vrot.lane.b32.xlu0 %v3920, 125
        %v3966 = vpop.permute.xlu0 %3965
        %3967 = vrot.lane.b32.xlu0 %v3921, 125
        %v3968 = vpop.permute.xlu0 %3967
        %3969 = vrot.lane.b32.xlu0 %v3922, 125
        %v3970 = vpop.permute.xlu0 %3969
        %v3987 = vadd.f32 %v3889, %v3940
        %v3988 = vadd.f32 %v3890, %v3942
        %v3989 = vadd.f32 %v3891, %v3944
        %v3990 = vadd.f32 %v3892, %v3946
        %v3991 = vadd.f32 %v3893, %v3948
        %v3992 = vadd.f32 %v3894, %v3950
        %v3993 = vadd.f32 %v3895, %v3952
        %v3994 = vadd.f32 %v3896, %v3954
        %v3995 = vadd.f32 %v3897, %v3956
        %v3996 = vadd.f32 %v3898, %v3958
        %v3997 = vadd.f32 %v3899, %v3960
        %v3998 = vadd.f32 %v3900, %v3962
        %v3999 = vadd.f32 %v3901, %v3964
        %v4000 = vadd.f32 %v3902, %v3966
        %v4001 = vadd.f32 %v3903, %v3968
        %v4002 = vadd.f32 %v3904, %v3970
        %s4003 = sld [smem:[#allocation5 + $0x27]]
        %v4004 = vstv %s4003
        %v4005 = vmul.f32 %v4004, %v548
        %v4006 = vmul.f32 %v4004, %v549
        %v4007 = vmul.f32 %v4004, %v550
        %v4008 = vmul.f32 %v4004, %v551
        %v4009 = vmul.f32 %v4004, %v552
        %v4010 = vmul.f32 %v4004, %v553
        %v4011 = vmul.f32 %v4004, %v554
        %v4012 = vmul.f32 %v4004, %v555
        %v4013 = vmul.f32 %v4004, %v556
        %v4014 = vmul.f32 %v4004, %v557
        %v4015 = vmul.f32 %v4004, %v558
        %v4016 = vmul.f32 %v4004, %v559
        %v4017 = vmul.f32 %v4004, %v560
        %v4018 = vmul.f32 %v4004, %v561
        %v4019 = vmul.f32 %v4004, %v562
        %v4020 = vmul.f32 %v4004, %v563
        %4037 = vrot.lane.b32.xlu0 %v4005, 124
        %v4038 = vpop.permute.xlu0 %4037
        %4039 = vrot.lane.b32.xlu0 %v4006, 124
        %v4040 = vpop.permute.xlu0 %4039
        %4041 = vrot.lane.b32.xlu0 %v4007, 124
        %v4042 = vpop.permute.xlu0 %4041
        %4043 = vrot.lane.b32.xlu0 %v4008, 124
        %v4044 = vpop.permute.xlu0 %4043
        %4045 = vrot.lane.b32.xlu0 %v4009, 124
        %v4046 = vpop.permute.xlu0 %4045
        %4047 = vrot.lane.b32.xlu0 %v4010, 124
        %v4048 = vpop.permute.xlu0 %4047
        %4049 = vrot.lane.b32.xlu0 %v4011, 124
        %v4050 = vpop.permute.xlu0 %4049
        %4051 = vrot.lane.b32.xlu0 %v4012, 124
        %v4052 = vpop.permute.xlu0 %4051
        %4053 = vrot.lane.b32.xlu0 %v4013, 124
        %v4054 = vpop.permute.xlu0 %4053
        %4055 = vrot.lane.b32.xlu0 %v4014, 124
        %v4056 = vpop.permute.xlu0 %4055
        %4057 = vrot.lane.b32.xlu0 %v4015, 124
        %v4058 = vpop.permute.xlu0 %4057
        %4059 = vrot.lane.b32.xlu0 %v4016, 124
        %v4060 = vpop.permute.xlu0 %4059
        %4061 = vrot.lane.b32.xlu0 %v4017, 124
        %v4062 = vpop.permute.xlu0 %4061
        %4063 = vrot.lane.b32.xlu0 %v4018, 124
        %v4064 = vpop.permute.xlu0 %4063
        %4065 = vrot.lane.b32.xlu0 %v4019, 124
        %v4066 = vpop.permute.xlu0 %4065
        %4067 = vrot.lane.b32.xlu0 %v4020, 124
        %v4068 = vpop.permute.xlu0 %4067
        %v4085 = vadd.f32 %v3987, %v4038
        %v4086 = vadd.f32 %v3988, %v4040
        %v4087 = vadd.f32 %v3989, %v4042
        %v4088 = vadd.f32 %v3990, %v4044
        %v4089 = vadd.f32 %v3991, %v4046
        %v4090 = vadd.f32 %v3992, %v4048
        %v4091 = vadd.f32 %v3993, %v4050
        %v4092 = vadd.f32 %v3994, %v4052
        %v4093 = vadd.f32 %v3995, %v4054
        %v4094 = vadd.f32 %v3996, %v4056
        %v4095 = vadd.f32 %v3997, %v4058
        %v4096 = vadd.f32 %v3998, %v4060
        %v4097 = vadd.f32 %v3999, %v4062
        %v4098 = vadd.f32 %v4000, %v4064
        %v4099 = vadd.f32 %v4001, %v4066
        %v4100 = vadd.f32 %v4002, %v4068
        %s4101 = sld [smem:[#allocation5 + $0x28]]
        %v4102 = vstv %s4101
        %v4103 = vmul.f32 %v4102, %v548
        %v4104 = vmul.f32 %v4102, %v549
        %v4105 = vmul.f32 %v4102, %v550
        %v4106 = vmul.f32 %v4102, %v551
        %v4107 = vmul.f32 %v4102, %v552
        %v4108 = vmul.f32 %v4102, %v553
        %v4109 = vmul.f32 %v4102, %v554
        %v4110 = vmul.f32 %v4102, %v555
        %v4111 = vmul.f32 %v4102, %v556
        %v4112 = vmul.f32 %v4102, %v557
        %v4113 = vmul.f32 %v4102, %v558
        %v4114 = vmul.f32 %v4102, %v559
        %v4115 = vmul.f32 %v4102, %v560
        %v4116 = vmul.f32 %v4102, %v561
        %v4117 = vmul.f32 %v4102, %v562
        %v4118 = vmul.f32 %v4102, %v563
        %4135 = vrot.lane.b32.xlu0 %v4103, 123
        %v4136 = vpop.permute.xlu0 %4135
        %4137 = vrot.lane.b32.xlu0 %v4104, 123
        %v4138 = vpop.permute.xlu0 %4137
        %4139 = vrot.lane.b32.xlu0 %v4105, 123
        %v4140 = vpop.permute.xlu0 %4139
        %4141 = vrot.lane.b32.xlu0 %v4106, 123
        %v4142 = vpop.permute.xlu0 %4141
        %4143 = vrot.lane.b32.xlu0 %v4107, 123
        %v4144 = vpop.permute.xlu0 %4143
        %4145 = vrot.lane.b32.xlu0 %v4108, 123
        %v4146 = vpop.permute.xlu0 %4145
        %4147 = vrot.lane.b32.xlu0 %v4109, 123
        %v4148 = vpop.permute.xlu0 %4147
        %4149 = vrot.lane.b32.xlu0 %v4110, 123
        %v4150 = vpop.permute.xlu0 %4149
        %4151 = vrot.lane.b32.xlu0 %v4111, 123
        %v4152 = vpop.permute.xlu0 %4151
        %4153 = vrot.lane.b32.xlu0 %v4112, 123
        %v4154 = vpop.permute.xlu0 %4153
        %4155 = vrot.lane.b32.xlu0 %v4113, 123
        %v4156 = vpop.permute.xlu0 %4155
        %4157 = vrot.lane.b32.xlu0 %v4114, 123
        %v4158 = vpop.permute.xlu0 %4157
        %4159 = vrot.lane.b32.xlu0 %v4115, 123
        %v4160 = vpop.permute.xlu0 %4159
        %4161 = vrot.lane.b32.xlu0 %v4116, 123
        %v4162 = vpop.permute.xlu0 %4161
        %4163 = vrot.lane.b32.xlu0 %v4117, 123
        %v4164 = vpop.permute.xlu0 %4163
        %4165 = vrot.lane.b32.xlu0 %v4118, 123
        %v4166 = vpop.permute.xlu0 %4165
        %v4183 = vadd.f32 %v4085, %v4136
        %v4184 = vadd.f32 %v4086, %v4138
        %v4185 = vadd.f32 %v4087, %v4140
        %v4186 = vadd.f32 %v4088, %v4142
        %v4187 = vadd.f32 %v4089, %v4144
        %v4188 = vadd.f32 %v4090, %v4146
        %v4189 = vadd.f32 %v4091, %v4148
        %v4190 = vadd.f32 %v4092, %v4150
        %v4191 = vadd.f32 %v4093, %v4152
        %v4192 = vadd.f32 %v4094, %v4154
        %v4193 = vadd.f32 %v4095, %v4156
        %v4194 = vadd.f32 %v4096, %v4158
        %v4195 = vadd.f32 %v4097, %v4160
        %v4196 = vadd.f32 %v4098, %v4162
        %v4197 = vadd.f32 %v4099, %v4164
        %v4198 = vadd.f32 %v4100, %v4166
        %s4199 = sld [smem:[#allocation5 + $0x29]]
        %v4200 = vstv %s4199
        %v4201 = vmul.f32 %v4200, %v548
        %v4202 = vmul.f32 %v4200, %v549
        %v4203 = vmul.f32 %v4200, %v550
        %v4204 = vmul.f32 %v4200, %v551
        %v4205 = vmul.f32 %v4200, %v552
        %v4206 = vmul.f32 %v4200, %v553
        %v4207 = vmul.f32 %v4200, %v554
        %v4208 = vmul.f32 %v4200, %v555
        %v4209 = vmul.f32 %v4200, %v556
        %v4210 = vmul.f32 %v4200, %v557
        %v4211 = vmul.f32 %v4200, %v558
        %v4212 = vmul.f32 %v4200, %v559
        %v4213 = vmul.f32 %v4200, %v560
        %v4214 = vmul.f32 %v4200, %v561
        %v4215 = vmul.f32 %v4200, %v562
        %v4216 = vmul.f32 %v4200, %v563
        %4233 = vrot.lane.b32.xlu0 %v4201, 122
        %v4234 = vpop.permute.xlu0 %4233
        %4235 = vrot.lane.b32.xlu0 %v4202, 122
        %v4236 = vpop.permute.xlu0 %4235
        %4237 = vrot.lane.b32.xlu0 %v4203, 122
        %v4238 = vpop.permute.xlu0 %4237
        %4239 = vrot.lane.b32.xlu0 %v4204, 122
        %v4240 = vpop.permute.xlu0 %4239
        %4241 = vrot.lane.b32.xlu0 %v4205, 122
        %v4242 = vpop.permute.xlu0 %4241
        %4243 = vrot.lane.b32.xlu0 %v4206, 122
        %v4244 = vpop.permute.xlu0 %4243
        %4245 = vrot.lane.b32.xlu0 %v4207, 122
        %v4246 = vpop.permute.xlu0 %4245
        %4247 = vrot.lane.b32.xlu0 %v4208, 122
        %v4248 = vpop.permute.xlu0 %4247
        %4249 = vrot.lane.b32.xlu0 %v4209, 122
        %v4250 = vpop.permute.xlu0 %4249
        %4251 = vrot.lane.b32.xlu0 %v4210, 122
        %v4252 = vpop.permute.xlu0 %4251
        %4253 = vrot.lane.b32.xlu0 %v4211, 122
        %v4254 = vpop.permute.xlu0 %4253
        %4255 = vrot.lane.b32.xlu0 %v4212, 122
        %v4256 = vpop.permute.xlu0 %4255
        %4257 = vrot.lane.b32.xlu0 %v4213, 122
        %v4258 = vpop.permute.xlu0 %4257
        %4259 = vrot.lane.b32.xlu0 %v4214, 122
        %v4260 = vpop.permute.xlu0 %4259
        %4261 = vrot.lane.b32.xlu0 %v4215, 122
        %v4262 = vpop.permute.xlu0 %4261
        %4263 = vrot.lane.b32.xlu0 %v4216, 122
        %v4264 = vpop.permute.xlu0 %4263
        %v4281 = vadd.f32 %v4183, %v4234
        %v4282 = vadd.f32 %v4184, %v4236
        %v4283 = vadd.f32 %v4185, %v4238
        %v4284 = vadd.f32 %v4186, %v4240
        %v4285 = vadd.f32 %v4187, %v4242
        %v4286 = vadd.f32 %v4188, %v4244
        %v4287 = vadd.f32 %v4189, %v4246
        %v4288 = vadd.f32 %v4190, %v4248
        %v4289 = vadd.f32 %v4191, %v4250
        %v4290 = vadd.f32 %v4192, %v4252
        %v4291 = vadd.f32 %v4193, %v4254
        %v4292 = vadd.f32 %v4194, %v4256
        %v4293 = vadd.f32 %v4195, %v4258
        %v4294 = vadd.f32 %v4196, %v4260
        %v4295 = vadd.f32 %v4197, %v4262
        %v4296 = vadd.f32 %v4198, %v4264
        %s4297 = sld [smem:[#allocation5 + $0x2a]]
        %v4298 = vstv %s4297
        %v4299 = vmul.f32 %v4298, %v549
        %v4300 = vmul.f32 %v4298, %v550
        %v4301 = vmul.f32 %v4298, %v551
        %v4302 = vmul.f32 %v4298, %v552
        %v4303 = vmul.f32 %v4298, %v553
        %v4304 = vmul.f32 %v4298, %v554
        %v4305 = vmul.f32 %v4298, %v555
        %v4306 = vmul.f32 %v4298, %v556
        %v4307 = vmul.f32 %v4298, %v557
        %v4308 = vmul.f32 %v4298, %v558
        %v4309 = vmul.f32 %v4298, %v559
        %v4310 = vmul.f32 %v4298, %v560
        %v4311 = vmul.f32 %v4298, %v561
        %v4312 = vmul.f32 %v4298, %v562
        %v4313 = vmul.f32 %v4298, %v563
        %v4314 = vmul.f32 %v4298, %v564
        %v4315 = vadd.f32 %v4281, %v4299
        %v4316 = vadd.f32 %v4282, %v4300
        %v4317 = vadd.f32 %v4283, %v4301
        %v4318 = vadd.f32 %v4284, %v4302
        %v4319 = vadd.f32 %v4285, %v4303
        %v4320 = vadd.f32 %v4286, %v4304
        %v4321 = vadd.f32 %v4287, %v4305
        %v4322 = vadd.f32 %v4288, %v4306
        %v4323 = vadd.f32 %v4289, %v4307
        %v4324 = vadd.f32 %v4290, %v4308
        %v4325 = vadd.f32 %v4291, %v4309
        %v4326 = vadd.f32 %v4292, %v4310
        %v4327 = vadd.f32 %v4293, %v4311
        %v4328 = vadd.f32 %v4294, %v4312
        %v4329 = vadd.f32 %v4295, %v4313
        %v4330 = vadd.f32 %v4296, %v4314
        %s4331 = sld [smem:[#allocation5 + $0x2b]]
        %v4332 = vstv %s4331
        %v4333 = vmul.f32 %v4332, %v549
        %v4334 = vmul.f32 %v4332, %v550
        %v4335 = vmul.f32 %v4332, %v551
        %v4336 = vmul.f32 %v4332, %v552
        %v4337 = vmul.f32 %v4332, %v553
        %v4338 = vmul.f32 %v4332, %v554
        %v4339 = vmul.f32 %v4332, %v555
        %v4340 = vmul.f32 %v4332, %v556
        %v4341 = vmul.f32 %v4332, %v557
        %v4342 = vmul.f32 %v4332, %v558
        %v4343 = vmul.f32 %v4332, %v559
        %v4344 = vmul.f32 %v4332, %v560
        %v4345 = vmul.f32 %v4332, %v561
        %v4346 = vmul.f32 %v4332, %v562
        %v4347 = vmul.f32 %v4332, %v563
        %v4348 = vmul.f32 %v4332, %v564
        %4365 = vrot.lane.b32.xlu0 %v4333, 127
        %v4366 = vpop.permute.xlu0 %4365
        %4367 = vrot.lane.b32.xlu0 %v4334, 127
        %v4368 = vpop.permute.xlu0 %4367
        %4369 = vrot.lane.b32.xlu0 %v4335, 127
        %v4370 = vpop.permute.xlu0 %4369
        %4371 = vrot.lane.b32.xlu0 %v4336, 127
        %v4372 = vpop.permute.xlu0 %4371
        %4373 = vrot.lane.b32.xlu0 %v4337, 127
        %v4374 = vpop.permute.xlu0 %4373
        %4375 = vrot.lane.b32.xlu0 %v4338, 127
        %v4376 = vpop.permute.xlu0 %4375
        %4377 = vrot.lane.b32.xlu0 %v4339, 127
        %v4378 = vpop.permute.xlu0 %4377
        %4379 = vrot.lane.b32.xlu0 %v4340, 127
        %v4380 = vpop.permute.xlu0 %4379
        %4381 = vrot.lane.b32.xlu0 %v4341, 127
        %v4382 = vpop.permute.xlu0 %4381
        %4383 = vrot.lane.b32.xlu0 %v4342, 127
        %v4384 = vpop.permute.xlu0 %4383
        %4385 = vrot.lane.b32.xlu0 %v4343, 127
        %v4386 = vpop.permute.xlu0 %4385
        %4387 = vrot.lane.b32.xlu0 %v4344, 127
        %v4388 = vpop.permute.xlu0 %4387
        %4389 = vrot.lane.b32.xlu0 %v4345, 127
        %v4390 = vpop.permute.xlu0 %4389
        %4391 = vrot.lane.b32.xlu0 %v4346, 127
        %v4392 = vpop.permute.xlu0 %4391
        %4393 = vrot.lane.b32.xlu0 %v4347, 127
        %v4394 = vpop.permute.xlu0 %4393
        %4395 = vrot.lane.b32.xlu0 %v4348, 127
        %v4396 = vpop.permute.xlu0 %4395
        %v4413 = vadd.f32 %v4315, %v4366
        %v4414 = vadd.f32 %v4316, %v4368
        %v4415 = vadd.f32 %v4317, %v4370
        %v4416 = vadd.f32 %v4318, %v4372
        %v4417 = vadd.f32 %v4319, %v4374
        %v4418 = vadd.f32 %v4320, %v4376
        %v4419 = vadd.f32 %v4321, %v4378
        %v4420 = vadd.f32 %v4322, %v4380
        %v4421 = vadd.f32 %v4323, %v4382
        %v4422 = vadd.f32 %v4324, %v4384
        %v4423 = vadd.f32 %v4325, %v4386
        %v4424 = vadd.f32 %v4326, %v4388
        %v4425 = vadd.f32 %v4327, %v4390
        %v4426 = vadd.f32 %v4328, %v4392
        %v4427 = vadd.f32 %v4329, %v4394
        %v4428 = vadd.f32 %v4330, %v4396
        %s4429 = sld [smem:[#allocation5 + $0x2c]]
        %v4430 = vstv %s4429
        %v4431 = vmul.f32 %v4430, %v549
        %v4432 = vmul.f32 %v4430, %v550
        %v4433 = vmul.f32 %v4430, %v551
        %v4434 = vmul.f32 %v4430, %v552
        %v4435 = vmul.f32 %v4430, %v553
        %v4436 = vmul.f32 %v4430, %v554
        %v4437 = vmul.f32 %v4430, %v555
        %v4438 = vmul.f32 %v4430, %v556
        %v4439 = vmul.f32 %v4430, %v557
        %v4440 = vmul.f32 %v4430, %v558
        %v4441 = vmul.f32 %v4430, %v559
        %v4442 = vmul.f32 %v4430, %v560
        %v4443 = vmul.f32 %v4430, %v561
        %v4444 = vmul.f32 %v4430, %v562
        %v4445 = vmul.f32 %v4430, %v563
        %v4446 = vmul.f32 %v4430, %v564
        %4463 = vrot.lane.b32.xlu0 %v4431, 126
        %v4464 = vpop.permute.xlu0 %4463
        %4465 = vrot.lane.b32.xlu0 %v4432, 126
        %v4466 = vpop.permute.xlu0 %4465
        %4467 = vrot.lane.b32.xlu0 %v4433, 126
        %v4468 = vpop.permute.xlu0 %4467
        %4469 = vrot.lane.b32.xlu0 %v4434, 126
        %v4470 = vpop.permute.xlu0 %4469
        %4471 = vrot.lane.b32.xlu0 %v4435, 126
        %v4472 = vpop.permute.xlu0 %4471
        %4473 = vrot.lane.b32.xlu0 %v4436, 126
        %v4474 = vpop.permute.xlu0 %4473
        %4475 = vrot.lane.b32.xlu0 %v4437, 126
        %v4476 = vpop.permute.xlu0 %4475
        %4477 = vrot.lane.b32.xlu0 %v4438, 126
        %v4478 = vpop.permute.xlu0 %4477
        %4479 = vrot.lane.b32.xlu0 %v4439, 126
        %v4480 = vpop.permute.xlu0 %4479
        %4481 = vrot.lane.b32.xlu0 %v4440, 126
        %v4482 = vpop.permute.xlu0 %4481
        %4483 = vrot.lane.b32.xlu0 %v4441, 126
        %v4484 = vpop.permute.xlu0 %4483
        %4485 = vrot.lane.b32.xlu0 %v4442, 126
        %v4486 = vpop.permute.xlu0 %4485
        %4487 = vrot.lane.b32.xlu0 %v4443, 126
        %v4488 = vpop.permute.xlu0 %4487
        %4489 = vrot.lane.b32.xlu0 %v4444, 126
        %v4490 = vpop.permute.xlu0 %4489
        %4491 = vrot.lane.b32.xlu0 %v4445, 126
        %v4492 = vpop.permute.xlu0 %4491
        %4493 = vrot.lane.b32.xlu0 %v4446, 126
        %v4494 = vpop.permute.xlu0 %4493
        %v4511 = vadd.f32 %v4413, %v4464
        %v4512 = vadd.f32 %v4414, %v4466
        %v4513 = vadd.f32 %v4415, %v4468
        %v4514 = vadd.f32 %v4416, %v4470
        %v4515 = vadd.f32 %v4417, %v4472
        %v4516 = vadd.f32 %v4418, %v4474
        %v4517 = vadd.f32 %v4419, %v4476
        %v4518 = vadd.f32 %v4420, %v4478
        %v4519 = vadd.f32 %v4421, %v4480
        %v4520 = vadd.f32 %v4422, %v4482
        %v4521 = vadd.f32 %v4423, %v4484
        %v4522 = vadd.f32 %v4424, %v4486
        %v4523 = vadd.f32 %v4425, %v4488
        %v4524 = vadd.f32 %v4426, %v4490
        %v4525 = vadd.f32 %v4427, %v4492
        %v4526 = vadd.f32 %v4428, %v4494
        %s4527 = sld [smem:[#allocation5 + $0x2d]]
        %v4528 = vstv %s4527
        %v4529 = vmul.f32 %v4528, %v549
        %v4530 = vmul.f32 %v4528, %v550
        %v4531 = vmul.f32 %v4528, %v551
        %v4532 = vmul.f32 %v4528, %v552
        %v4533 = vmul.f32 %v4528, %v553
        %v4534 = vmul.f32 %v4528, %v554
        %v4535 = vmul.f32 %v4528, %v555
        %v4536 = vmul.f32 %v4528, %v556
        %v4537 = vmul.f32 %v4528, %v557
        %v4538 = vmul.f32 %v4528, %v558
        %v4539 = vmul.f32 %v4528, %v559
        %v4540 = vmul.f32 %v4528, %v560
        %v4541 = vmul.f32 %v4528, %v561
        %v4542 = vmul.f32 %v4528, %v562
        %v4543 = vmul.f32 %v4528, %v563
        %v4544 = vmul.f32 %v4528, %v564
        %4561 = vrot.lane.b32.xlu0 %v4529, 125
        %v4562 = vpop.permute.xlu0 %4561
        %4563 = vrot.lane.b32.xlu0 %v4530, 125
        %v4564 = vpop.permute.xlu0 %4563
        %4565 = vrot.lane.b32.xlu0 %v4531, 125
        %v4566 = vpop.permute.xlu0 %4565
        %4567 = vrot.lane.b32.xlu0 %v4532, 125
        %v4568 = vpop.permute.xlu0 %4567
        %4569 = vrot.lane.b32.xlu0 %v4533, 125
        %v4570 = vpop.permute.xlu0 %4569
        %4571 = vrot.lane.b32.xlu0 %v4534, 125
        %v4572 = vpop.permute.xlu0 %4571
        %4573 = vrot.lane.b32.xlu0 %v4535, 125
        %v4574 = vpop.permute.xlu0 %4573
        %4575 = vrot.lane.b32.xlu0 %v4536, 125
        %v4576 = vpop.permute.xlu0 %4575
        %4577 = vrot.lane.b32.xlu0 %v4537, 125
        %v4578 = vpop.permute.xlu0 %4577
        %4579 = vrot.lane.b32.xlu0 %v4538, 125
        %v4580 = vpop.permute.xlu0 %4579
        %4581 = vrot.lane.b32.xlu0 %v4539, 125
        %v4582 = vpop.permute.xlu0 %4581
        %4583 = vrot.lane.b32.xlu0 %v4540, 125
        %v4584 = vpop.permute.xlu0 %4583
        %4585 = vrot.lane.b32.xlu0 %v4541, 125
        %v4586 = vpop.permute.xlu0 %4585
        %4587 = vrot.lane.b32.xlu0 %v4542, 125
        %v4588 = vpop.permute.xlu0 %4587
        %4589 = vrot.lane.b32.xlu0 %v4543, 125
        %v4590 = vpop.permute.xlu0 %4589
        %4591 = vrot.lane.b32.xlu0 %v4544, 125
        %v4592 = vpop.permute.xlu0 %4591
        %v4609 = vadd.f32 %v4511, %v4562
        %v4610 = vadd.f32 %v4512, %v4564
        %v4611 = vadd.f32 %v4513, %v4566
        %v4612 = vadd.f32 %v4514, %v4568
        %v4613 = vadd.f32 %v4515, %v4570
        %v4614 = vadd.f32 %v4516, %v4572
        %v4615 = vadd.f32 %v4517, %v4574
        %v4616 = vadd.f32 %v4518, %v4576
        %v4617 = vadd.f32 %v4519, %v4578
        %v4618 = vadd.f32 %v4520, %v4580
        %v4619 = vadd.f32 %v4521, %v4582
        %v4620 = vadd.f32 %v4522, %v4584
        %v4621 = vadd.f32 %v4523, %v4586
        %v4622 = vadd.f32 %v4524, %v4588
        %v4623 = vadd.f32 %v4525, %v4590
        %v4624 = vadd.f32 %v4526, %v4592
        %s4625 = sld [smem:[#allocation5 + $0x2e]]
        %v4626 = vstv %s4625
        %v4627 = vmul.f32 %v4626, %v549
        %v4628 = vmul.f32 %v4626, %v550
        %v4629 = vmul.f32 %v4626, %v551
        %v4630 = vmul.f32 %v4626, %v552
        %v4631 = vmul.f32 %v4626, %v553
        %v4632 = vmul.f32 %v4626, %v554
        %v4633 = vmul.f32 %v4626, %v555
        %v4634 = vmul.f32 %v4626, %v556
        %v4635 = vmul.f32 %v4626, %v557
        %v4636 = vmul.f32 %v4626, %v558
        %v4637 = vmul.f32 %v4626, %v559
        %v4638 = vmul.f32 %v4626, %v560
        %v4639 = vmul.f32 %v4626, %v561
        %v4640 = vmul.f32 %v4626, %v562
        %v4641 = vmul.f32 %v4626, %v563
        %v4642 = vmul.f32 %v4626, %v564
        %4659 = vrot.lane.b32.xlu0 %v4627, 124
        %v4660 = vpop.permute.xlu0 %4659
        %4661 = vrot.lane.b32.xlu0 %v4628, 124
        %v4662 = vpop.permute.xlu0 %4661
        %4663 = vrot.lane.b32.xlu0 %v4629, 124
        %v4664 = vpop.permute.xlu0 %4663
        %4665 = vrot.lane.b32.xlu0 %v4630, 124
        %v4666 = vpop.permute.xlu0 %4665
        %4667 = vrot.lane.b32.xlu0 %v4631, 124
        %v4668 = vpop.permute.xlu0 %4667
        %4669 = vrot.lane.b32.xlu0 %v4632, 124
        %v4670 = vpop.permute.xlu0 %4669
        %4671 = vrot.lane.b32.xlu0 %v4633, 124
        %v4672 = vpop.permute.xlu0 %4671
        %4673 = vrot.lane.b32.xlu0 %v4634, 124
        %v4674 = vpop.permute.xlu0 %4673
        %4675 = vrot.lane.b32.xlu0 %v4635, 124
        %v4676 = vpop.permute.xlu0 %4675
        %4677 = vrot.lane.b32.xlu0 %v4636, 124
        %v4678 = vpop.permute.xlu0 %4677
        %4679 = vrot.lane.b32.xlu0 %v4637, 124
        %v4680 = vpop.permute.xlu0 %4679
        %4681 = vrot.lane.b32.xlu0 %v4638, 124
        %v4682 = vpop.permute.xlu0 %4681
        %4683 = vrot.lane.b32.xlu0 %v4639, 124
        %v4684 = vpop.permute.xlu0 %4683
        %4685 = vrot.lane.b32.xlu0 %v4640, 124
        %v4686 = vpop.permute.xlu0 %4685
        %4687 = vrot.lane.b32.xlu0 %v4641, 124
        %v4688 = vpop.permute.xlu0 %4687
        %4689 = vrot.lane.b32.xlu0 %v4642, 124
        %v4690 = vpop.permute.xlu0 %4689
        %v4707 = vadd.f32 %v4609, %v4660
        %v4708 = vadd.f32 %v4610, %v4662
        %v4709 = vadd.f32 %v4611, %v4664
        %v4710 = vadd.f32 %v4612, %v4666
        %v4711 = vadd.f32 %v4613, %v4668
        %v4712 = vadd.f32 %v4614, %v4670
        %v4713 = vadd.f32 %v4615, %v4672
        %v4714 = vadd.f32 %v4616, %v4674
        %v4715 = vadd.f32 %v4617, %v4676
        %v4716 = vadd.f32 %v4618, %v4678
        %v4717 = vadd.f32 %v4619, %v4680
        %v4718 = vadd.f32 %v4620, %v4682
        %v4719 = vadd.f32 %v4621, %v4684
        %v4720 = vadd.f32 %v4622, %v4686
        %v4721 = vadd.f32 %v4623, %v4688
        %v4722 = vadd.f32 %v4624, %v4690
        %s4723 = sld [smem:[#allocation5 + $0x2f]]
        %v4724 = vstv %s4723
        %v4725 = vmul.f32 %v4724, %v549
        %v4726 = vmul.f32 %v4724, %v550
        %v4727 = vmul.f32 %v4724, %v551
        %v4728 = vmul.f32 %v4724, %v552
        %v4729 = vmul.f32 %v4724, %v553
        %v4730 = vmul.f32 %v4724, %v554
        %v4731 = vmul.f32 %v4724, %v555
        %v4732 = vmul.f32 %v4724, %v556
        %v4733 = vmul.f32 %v4724, %v557
        %v4734 = vmul.f32 %v4724, %v558
        %v4735 = vmul.f32 %v4724, %v559
        %v4736 = vmul.f32 %v4724, %v560
        %v4737 = vmul.f32 %v4724, %v561
        %v4738 = vmul.f32 %v4724, %v562
        %v4739 = vmul.f32 %v4724, %v563
        %v4740 = vmul.f32 %v4724, %v564
        %4757 = vrot.lane.b32.xlu0 %v4725, 123
        %v4758 = vpop.permute.xlu0 %4757
        %4759 = vrot.lane.b32.xlu0 %v4726, 123
        %v4760 = vpop.permute.xlu0 %4759
        %4761 = vrot.lane.b32.xlu0 %v4727, 123
        %v4762 = vpop.permute.xlu0 %4761
        %4763 = vrot.lane.b32.xlu0 %v4728, 123
        %v4764 = vpop.permute.xlu0 %4763
        %4765 = vrot.lane.b32.xlu0 %v4729, 123
        %v4766 = vpop.permute.xlu0 %4765
        %4767 = vrot.lane.b32.xlu0 %v4730, 123
        %v4768 = vpop.permute.xlu0 %4767
        %4769 = vrot.lane.b32.xlu0 %v4731, 123
        %v4770 = vpop.permute.xlu0 %4769
        %4771 = vrot.lane.b32.xlu0 %v4732, 123
        %v4772 = vpop.permute.xlu0 %4771
        %4773 = vrot.lane.b32.xlu0 %v4733, 123
        %v4774 = vpop.permute.xlu0 %4773
        %4775 = vrot.lane.b32.xlu0 %v4734, 123
        %v4776 = vpop.permute.xlu0 %4775
        %4777 = vrot.lane.b32.xlu0 %v4735, 123
        %v4778 = vpop.permute.xlu0 %4777
        %4779 = vrot.lane.b32.xlu0 %v4736, 123
        %v4780 = vpop.permute.xlu0 %4779
        %4781 = vrot.lane.b32.xlu0 %v4737, 123
        %v4782 = vpop.permute.xlu0 %4781
        %4783 = vrot.lane.b32.xlu0 %v4738, 123
        %v4784 = vpop.permute.xlu0 %4783
        %4785 = vrot.lane.b32.xlu0 %v4739, 123
        %v4786 = vpop.permute.xlu0 %4785
        %4787 = vrot.lane.b32.xlu0 %v4740, 123
        %v4788 = vpop.permute.xlu0 %4787
        %v4805 = vadd.f32 %v4707, %v4758
        %v4806 = vadd.f32 %v4708, %v4760
        %v4807 = vadd.f32 %v4709, %v4762
        %v4808 = vadd.f32 %v4710, %v4764
        %v4809 = vadd.f32 %v4711, %v4766
        %v4810 = vadd.f32 %v4712, %v4768
        %v4811 = vadd.f32 %v4713, %v4770
        %v4812 = vadd.f32 %v4714, %v4772
        %v4813 = vadd.f32 %v4715, %v4774
        %v4814 = vadd.f32 %v4716, %v4776
        %v4815 = vadd.f32 %v4717, %v4778
        %v4816 = vadd.f32 %v4718, %v4780
        %v4817 = vadd.f32 %v4719, %v4782
        %v4818 = vadd.f32 %v4720, %v4784
        %v4819 = vadd.f32 %v4721, %v4786
        %v4820 = vadd.f32 %v4722, %v4788
        %s4821 = sld [smem:[#allocation5 + $0x30]]
        %v4822 = vstv %s4821
        %v4823 = vmul.f32 %v4822, %v549
        %v4824 = vmul.f32 %v4822, %v550
        %v4825 = vmul.f32 %v4822, %v551
        %v4826 = vmul.f32 %v4822, %v552
        %v4827 = vmul.f32 %v4822, %v553
        %v4828 = vmul.f32 %v4822, %v554
        %v4829 = vmul.f32 %v4822, %v555
        %v4830 = vmul.f32 %v4822, %v556
        %v4831 = vmul.f32 %v4822, %v557
        %v4832 = vmul.f32 %v4822, %v558
        %v4833 = vmul.f32 %v4822, %v559
        %v4834 = vmul.f32 %v4822, %v560
        %v4835 = vmul.f32 %v4822, %v561
        %v4836 = vmul.f32 %v4822, %v562
        %v4837 = vmul.f32 %v4822, %v563
        %v4838 = vmul.f32 %v4822, %v564
        %4855 = vrot.lane.b32.xlu0 %v4823, 122
        %v4856 = vpop.permute.xlu0 %4855
        %4857 = vrot.lane.b32.xlu0 %v4824, 122
        %v4858 = vpop.permute.xlu0 %4857
        %4859 = vrot.lane.b32.xlu0 %v4825, 122
        %v4860 = vpop.permute.xlu0 %4859
        %4861 = vrot.lane.b32.xlu0 %v4826, 122
        %v4862 = vpop.permute.xlu0 %4861
        %4863 = vrot.lane.b32.xlu0 %v4827, 122
        %v4864 = vpop.permute.xlu0 %4863
        %4865 = vrot.lane.b32.xlu0 %v4828, 122
        %v4866 = vpop.permute.xlu0 %4865
        %4867 = vrot.lane.b32.xlu0 %v4829, 122
        %v4868 = vpop.permute.xlu0 %4867
        %4869 = vrot.lane.b32.xlu0 %v4830, 122
        %v4870 = vpop.permute.xlu0 %4869
        %4871 = vrot.lane.b32.xlu0 %v4831, 122
        %v4872 = vpop.permute.xlu0 %4871
        %4873 = vrot.lane.b32.xlu0 %v4832, 122
        %v4874 = vpop.permute.xlu0 %4873
        %4875 = vrot.lane.b32.xlu0 %v4833, 122
        %v4876 = vpop.permute.xlu0 %4875
        %4877 = vrot.lane.b32.xlu0 %v4834, 122
        %v4878 = vpop.permute.xlu0 %4877
        %4879 = vrot.lane.b32.xlu0 %v4835, 122
        %v4880 = vpop.permute.xlu0 %4879
        %4881 = vrot.lane.b32.xlu0 %v4836, 122
        %v4882 = vpop.permute.xlu0 %4881
        %4883 = vrot.lane.b32.xlu0 %v4837, 122
        %v4884 = vpop.permute.xlu0 %4883
        %4885 = vrot.lane.b32.xlu0 %v4838, 122
        %v4886 = vpop.permute.xlu0 %4885
        %v4903 = vadd.f32 %v4805, %v4856
        %v4904 = vadd.f32 %v4806, %v4858
        %v4905 = vadd.f32 %v4807, %v4860
        %v4906 = vadd.f32 %v4808, %v4862
        %v4907 = vadd.f32 %v4809, %v4864
        %v4908 = vadd.f32 %v4810, %v4866
        %v4909 = vadd.f32 %v4811, %v4868
        %v4910 = vadd.f32 %v4812, %v4870
        %v4911 = vadd.f32 %v4813, %v4872
        %v4912 = vadd.f32 %v4814, %v4874
        %v4913 = vadd.f32 %v4815, %v4876
        %v4914 = vadd.f32 %v4816, %v4878
        %v4915 = vadd.f32 %v4817, %v4880
        %v4916 = vadd.f32 %v4818, %v4882
        %v4917 = vadd.f32 %v4819, %v4884
        %v4918 = vadd.f32 %v4820, %v4886
        %s4919 = scalar_lea.vmem [#allocation2], 22
        %v4920 = vld [vmem:[%s4919] sm:$0x1]
        %v4921 = vld [vmem:[%s4919 + $0x1] sm:$0x1]
        %v4922 = vld [vmem:[%s4919 + $0x2] sm:$0x1]
        %v4923 = vld [vmem:[%s4919 + $0x3] sm:$0x1]
        %v4924 = vld [vmem:[%s4919 + $0x4] sm:$0x1]
        %v4925 = vld [vmem:[%s4919 + $0x5] sm:$0x1]
        %v4926 = vld [vmem:[%s4919 + $0x6] sm:$0x1]
        %v4927 = vld [vmem:[%s4919 + $0x7] sm:$0x1]
        %v4928 = vld [vmem:[%s4919 + $0x8] sm:$0x1]
        %v4929 = vld [vmem:[%s4919 + $0x9] sm:$0x1]
        %v4930 = vld [vmem:[%s4919 + $0xa] sm:$0x1]
        %v4931 = vld [vmem:[%s4919 + $0xb] sm:$0x1]
        %v4932 = vld [vmem:[%s4919 + $0xc] sm:$0x1]
        %v4933 = vld [vmem:[%s4919 + $0xd] sm:$0x1]
        %v4934 = vld [vmem:[%s4919 + $0xe] sm:$0x1]
        %v4935 = vld [vmem:[%s4919 + $0xf] sm:$0x1]
        %v4936 = vld [vmem:[%s4919 + $0x10] sm:$0x1]
        %v4937 = vld [vmem:[%s4919 + $0x11] sm:$0x1]
        %v4938 = vld [vmem:[%s4919 + $0x12] sm:$0x1]
        %v4939 = vld [vmem:[%s4919 + $0x13] sm:$0x1]
        %v4940 = vld [vmem:[%s4919 + $0x14] sm:$0x1]
        %v4941 = vld [vmem:[%s4919 + $0x15] sm:$0x1]
        %s4942 = sld [smem:[#allocation5 + $0x31]]
        %v4943 = vstv %s4942
        %v4944 = vmul.f32 %v4943, %v4920
        %v4945 = vmul.f32 %v4943, %v4921
        %v4946 = vmul.f32 %v4943, %v4922
        %v4947 = vmul.f32 %v4943, %v4923
        %v4948 = vmul.f32 %v4943, %v4924
        %v4949 = vmul.f32 %v4943, %v4925
        %v4950 = vmul.f32 %v4943, %v4926
        %v4951 = vmul.f32 %v4943, %v4927
        %v4952 = vmul.f32 %v4943, %v4928
        %v4953 = vmul.f32 %v4943, %v4929
        %v4954 = vmul.f32 %v4943, %v4930
        %v4955 = vmul.f32 %v4943, %v4931
        %v4956 = vmul.f32 %v4943, %v4932
        %v4957 = vmul.f32 %v4943, %v4933
        %v4958 = vmul.f32 %v4943, %v4934
        %v4959 = vmul.f32 %v4943, %v4935
        %v4960 = vadd.f32 %v4903, %v4944
        %v4961 = vadd.f32 %v4904, %v4945
        %v4962 = vadd.f32 %v4905, %v4946
        %v4963 = vadd.f32 %v4906, %v4947
        %v4964 = vadd.f32 %v4907, %v4948
        %v4965 = vadd.f32 %v4908, %v4949
        %v4966 = vadd.f32 %v4909, %v4950
        %v4967 = vadd.f32 %v4910, %v4951
        %v4968 = vadd.f32 %v4911, %v4952
        %v4969 = vadd.f32 %v4912, %v4953
        %v4970 = vadd.f32 %v4913, %v4954
        %v4971 = vadd.f32 %v4914, %v4955
        %v4972 = vadd.f32 %v4915, %v4956
        %v4973 = vadd.f32 %v4916, %v4957
        %v4974 = vadd.f32 %v4917, %v4958
        %v4975 = vadd.f32 %v4918, %v4959
        %s4976 = sld [smem:[#allocation5 + $0x32]]
        %v4977 = vstv %s4976
        %v4978 = vmul.f32 %v4977, %v4920
        %v4979 = vmul.f32 %v4977, %v4921
        %v4980 = vmul.f32 %v4977, %v4922
        %v4981 = vmul.f32 %v4977, %v4923
        %v4982 = vmul.f32 %v4977, %v4924
        %v4983 = vmul.f32 %v4977, %v4925
        %v4984 = vmul.f32 %v4977, %v4926
        %v4985 = vmul.f32 %v4977, %v4927
        %v4986 = vmul.f32 %v4977, %v4928
        %v4987 = vmul.f32 %v4977, %v4929
        %v4988 = vmul.f32 %v4977, %v4930
        %v4989 = vmul.f32 %v4977, %v4931
        %v4990 = vmul.f32 %v4977, %v4932
        %v4991 = vmul.f32 %v4977, %v4933
        %v4992 = vmul.f32 %v4977, %v4934
        %v4993 = vmul.f32 %v4977, %v4935
        %5010 = vrot.lane.b32.xlu0 %v4978, 127
        %v5011 = vpop.permute.xlu0 %5010
        %5012 = vrot.lane.b32.xlu0 %v4979, 127
        %v5013 = vpop.permute.xlu0 %5012
        %5014 = vrot.lane.b32.xlu0 %v4980, 127
        %v5015 = vpop.permute.xlu0 %5014
        %5016 = vrot.lane.b32.xlu0 %v4981, 127
        %v5017 = vpop.permute.xlu0 %5016
        %5018 = vrot.lane.b32.xlu0 %v4982, 127
        %v5019 = vpop.permute.xlu0 %5018
        %5020 = vrot.lane.b32.xlu0 %v4983, 127
        %v5021 = vpop.permute.xlu0 %5020
        %5022 = vrot.lane.b32.xlu0 %v4984, 127
        %v5023 = vpop.permute.xlu0 %5022
        %5024 = vrot.lane.b32.xlu0 %v4985, 127
        %v5025 = vpop.permute.xlu0 %5024
        %5026 = vrot.lane.b32.xlu0 %v4986, 127
        %v5027 = vpop.permute.xlu0 %5026
        %5028 = vrot.lane.b32.xlu0 %v4987, 127
        %v5029 = vpop.permute.xlu0 %5028
        %5030 = vrot.lane.b32.xlu0 %v4988, 127
        %v5031 = vpop.permute.xlu0 %5030
        %5032 = vrot.lane.b32.xlu0 %v4989, 127
        %v5033 = vpop.permute.xlu0 %5032
        %5034 = vrot.lane.b32.xlu0 %v4990, 127
        %v5035 = vpop.permute.xlu0 %5034
        %5036 = vrot.lane.b32.xlu0 %v4991, 127
        %v5037 = vpop.permute.xlu0 %5036
        %5038 = vrot.lane.b32.xlu0 %v4992, 127
        %v5039 = vpop.permute.xlu0 %5038
        %5040 = vrot.lane.b32.xlu0 %v4993, 127
        %v5041 = vpop.permute.xlu0 %5040
        %v5058 = vadd.f32 %v4960, %v5011
        %v5059 = vadd.f32 %v4961, %v5013
        %v5060 = vadd.f32 %v4962, %v5015
        %v5061 = vadd.f32 %v4963, %v5017
        %v5062 = vadd.f32 %v4964, %v5019
        %v5063 = vadd.f32 %v4965, %v5021
        %v5064 = vadd.f32 %v4966, %v5023
        %v5065 = vadd.f32 %v4967, %v5025
        %v5066 = vadd.f32 %v4968, %v5027
        %v5067 = vadd.f32 %v4969, %v5029
        %v5068 = vadd.f32 %v4970, %v5031
        %v5069 = vadd.f32 %v4971, %v5033
        %v5070 = vadd.f32 %v4972, %v5035
        %v5071 = vadd.f32 %v4973, %v5037
        %v5072 = vadd.f32 %v4974, %v5039
        %v5073 = vadd.f32 %v4975, %v5041
        %s5074 = sld [smem:[#allocation5 + $0x33]]
        %v5075 = vstv %s5074
        %v5076 = vmul.f32 %v5075, %v4920
        %v5077 = vmul.f32 %v5075, %v4921
        %v5078 = vmul.f32 %v5075, %v4922
        %v5079 = vmul.f32 %v5075, %v4923
        %v5080 = vmul.f32 %v5075, %v4924
        %v5081 = vmul.f32 %v5075, %v4925
        %v5082 = vmul.f32 %v5075, %v4926
        %v5083 = vmul.f32 %v5075, %v4927
        %v5084 = vmul.f32 %v5075, %v4928
        %v5085 = vmul.f32 %v5075, %v4929
        %v5086 = vmul.f32 %v5075, %v4930
        %v5087 = vmul.f32 %v5075, %v4931
        %v5088 = vmul.f32 %v5075, %v4932
        %v5089 = vmul.f32 %v5075, %v4933
        %v5090 = vmul.f32 %v5075, %v4934
        %v5091 = vmul.f32 %v5075, %v4935
        %5108 = vrot.lane.b32.xlu0 %v5076, 126
        %v5109 = vpop.permute.xlu0 %5108
        %5110 = vrot.lane.b32.xlu0 %v5077, 126
        %v5111 = vpop.permute.xlu0 %5110
        %5112 = vrot.lane.b32.xlu0 %v5078, 126
        %v5113 = vpop.permute.xlu0 %5112
        %5114 = vrot.lane.b32.xlu0 %v5079, 126
        %v5115 = vpop.permute.xlu0 %5114
        %5116 = vrot.lane.b32.xlu0 %v5080, 126
        %v5117 = vpop.permute.xlu0 %5116
        %5118 = vrot.lane.b32.xlu0 %v5081, 126
        %v5119 = vpop.permute.xlu0 %5118
        %5120 = vrot.lane.b32.xlu0 %v5082, 126
        %v5121 = vpop.permute.xlu0 %5120
        %5122 = vrot.lane.b32.xlu0 %v5083, 126
        %v5123 = vpop.permute.xlu0 %5122
        %5124 = vrot.lane.b32.xlu0 %v5084, 126
        %v5125 = vpop.permute.xlu0 %5124
        %5126 = vrot.lane.b32.xlu0 %v5085, 126
        %v5127 = vpop.permute.xlu0 %5126
        %5128 = vrot.lane.b32.xlu0 %v5086, 126
        %v5129 = vpop.permute.xlu0 %5128
        %5130 = vrot.lane.b32.xlu0 %v5087, 126
        %v5131 = vpop.permute.xlu0 %5130
        %5132 = vrot.lane.b32.xlu0 %v5088, 126
        %v5133 = vpop.permute.xlu0 %5132
        %5134 = vrot.lane.b32.xlu0 %v5089, 126
        %v5135 = vpop.permute.xlu0 %5134
        %5136 = vrot.lane.b32.xlu0 %v5090, 126
        %v5137 = vpop.permute.xlu0 %5136
        %5138 = vrot.lane.b32.xlu0 %v5091, 126
        %v5139 = vpop.permute.xlu0 %5138
        %v5156 = vadd.f32 %v5058, %v5109
        %v5157 = vadd.f32 %v5059, %v5111
        %v5158 = vadd.f32 %v5060, %v5113
        %v5159 = vadd.f32 %v5061, %v5115
        %v5160 = vadd.f32 %v5062, %v5117
        %v5161 = vadd.f32 %v5063, %v5119
        %v5162 = vadd.f32 %v5064, %v5121
        %v5163 = vadd.f32 %v5065, %v5123
        %v5164 = vadd.f32 %v5066, %v5125
        %v5165 = vadd.f32 %v5067, %v5127
        %v5166 = vadd.f32 %v5068, %v5129
        %v5167 = vadd.f32 %v5069, %v5131
        %v5168 = vadd.f32 %v5070, %v5133
        %v5169 = vadd.f32 %v5071, %v5135
        %v5170 = vadd.f32 %v5072, %v5137
        %v5171 = vadd.f32 %v5073, %v5139
        %s5172 = sld [smem:[#allocation5 + $0x34]]
        %v5173 = vstv %s5172
        %v5174 = vmul.f32 %v5173, %v4920
        %v5175 = vmul.f32 %v5173, %v4921
        %v5176 = vmul.f32 %v5173, %v4922
        %v5177 = vmul.f32 %v5173, %v4923
        %v5178 = vmul.f32 %v5173, %v4924
        %v5179 = vmul.f32 %v5173, %v4925
        %v5180 = vmul.f32 %v5173, %v4926
        %v5181 = vmul.f32 %v5173, %v4927
        %v5182 = vmul.f32 %v5173, %v4928
        %v5183 = vmul.f32 %v5173, %v4929
        %v5184 = vmul.f32 %v5173, %v4930
        %v5185 = vmul.f32 %v5173, %v4931
        %v5186 = vmul.f32 %v5173, %v4932
        %v5187 = vmul.f32 %v5173, %v4933
        %v5188 = vmul.f32 %v5173, %v4934
        %v5189 = vmul.f32 %v5173, %v4935
        %5206 = vrot.lane.b32.xlu0 %v5174, 125
        %v5207 = vpop.permute.xlu0 %5206
        %5208 = vrot.lane.b32.xlu0 %v5175, 125
        %v5209 = vpop.permute.xlu0 %5208
        %5210 = vrot.lane.b32.xlu0 %v5176, 125
        %v5211 = vpop.permute.xlu0 %5210
        %5212 = vrot.lane.b32.xlu0 %v5177, 125
        %v5213 = vpop.permute.xlu0 %5212
        %5214 = vrot.lane.b32.xlu0 %v5178, 125
        %v5215 = vpop.permute.xlu0 %5214
        %5216 = vrot.lane.b32.xlu0 %v5179, 125
        %v5217 = vpop.permute.xlu0 %5216
        %5218 = vrot.lane.b32.xlu0 %v5180, 125
        %v5219 = vpop.permute.xlu0 %5218
        %5220 = vrot.lane.b32.xlu0 %v5181, 125
        %v5221 = vpop.permute.xlu0 %5220
        %5222 = vrot.lane.b32.xlu0 %v5182, 125
        %v5223 = vpop.permute.xlu0 %5222
        %5224 = vrot.lane.b32.xlu0 %v5183, 125
        %v5225 = vpop.permute.xlu0 %5224
        %5226 = vrot.lane.b32.xlu0 %v5184, 125
        %v5227 = vpop.permute.xlu0 %5226
        %5228 = vrot.lane.b32.xlu0 %v5185, 125
        %v5229 = vpop.permute.xlu0 %5228
        %5230 = vrot.lane.b32.xlu0 %v5186, 125
        %v5231 = vpop.permute.xlu0 %5230
        %5232 = vrot.lane.b32.xlu0 %v5187, 125
        %v5233 = vpop.permute.xlu0 %5232
        %5234 = vrot.lane.b32.xlu0 %v5188, 125
        %v5235 = vpop.permute.xlu0 %5234
        %5236 = vrot.lane.b32.xlu0 %v5189, 125
        %v5237 = vpop.permute.xlu0 %5236
        %v5254 = vadd.f32 %v5156, %v5207
        %v5255 = vadd.f32 %v5157, %v5209
        %v5256 = vadd.f32 %v5158, %v5211
        %v5257 = vadd.f32 %v5159, %v5213
        %v5258 = vadd.f32 %v5160, %v5215
        %v5259 = vadd.f32 %v5161, %v5217
        %v5260 = vadd.f32 %v5162, %v5219
        %v5261 = vadd.f32 %v5163, %v5221
        %v5262 = vadd.f32 %v5164, %v5223
        %v5263 = vadd.f32 %v5165, %v5225
        %v5264 = vadd.f32 %v5166, %v5227
        %v5265 = vadd.f32 %v5167, %v5229
        %v5266 = vadd.f32 %v5168, %v5231
        %v5267 = vadd.f32 %v5169, %v5233
        %v5268 = vadd.f32 %v5170, %v5235
        %v5269 = vadd.f32 %v5171, %v5237
        %s5270 = sld [smem:[#allocation5 + $0x35]]
        %v5271 = vstv %s5270
        %v5272 = vmul.f32 %v5271, %v4920
        %v5273 = vmul.f32 %v5271, %v4921
        %v5274 = vmul.f32 %v5271, %v4922
        %v5275 = vmul.f32 %v5271, %v4923
        %v5276 = vmul.f32 %v5271, %v4924
        %v5277 = vmul.f32 %v5271, %v4925
        %v5278 = vmul.f32 %v5271, %v4926
        %v5279 = vmul.f32 %v5271, %v4927
        %v5280 = vmul.f32 %v5271, %v4928
        %v5281 = vmul.f32 %v5271, %v4929
        %v5282 = vmul.f32 %v5271, %v4930
        %v5283 = vmul.f32 %v5271, %v4931
        %v5284 = vmul.f32 %v5271, %v4932
        %v5285 = vmul.f32 %v5271, %v4933
        %v5286 = vmul.f32 %v5271, %v4934
        %v5287 = vmul.f32 %v5271, %v4935
        %5304 = vrot.lane.b32.xlu0 %v5272, 124
        %v5305 = vpop.permute.xlu0 %5304
        %5306 = vrot.lane.b32.xlu0 %v5273, 124
        %v5307 = vpop.permute.xlu0 %5306
        %5308 = vrot.lane.b32.xlu0 %v5274, 124
        %v5309 = vpop.permute.xlu0 %5308
        %5310 = vrot.lane.b32.xlu0 %v5275, 124
        %v5311 = vpop.permute.xlu0 %5310
        %5312 = vrot.lane.b32.xlu0 %v5276, 124
        %v5313 = vpop.permute.xlu0 %5312
        %5314 = vrot.lane.b32.xlu0 %v5277, 124
        %v5315 = vpop.permute.xlu0 %5314
        %5316 = vrot.lane.b32.xlu0 %v5278, 124
        %v5317 = vpop.permute.xlu0 %5316
        %5318 = vrot.lane.b32.xlu0 %v5279, 124
        %v5319 = vpop.permute.xlu0 %5318
        %5320 = vrot.lane.b32.xlu0 %v5280, 124
        %v5321 = vpop.permute.xlu0 %5320
        %5322 = vrot.lane.b32.xlu0 %v5281, 124
        %v5323 = vpop.permute.xlu0 %5322
        %5324 = vrot.lane.b32.xlu0 %v5282, 124
        %v5325 = vpop.permute.xlu0 %5324
        %5326 = vrot.lane.b32.xlu0 %v5283, 124
        %v5327 = vpop.permute.xlu0 %5326
        %5328 = vrot.lane.b32.xlu0 %v5284, 124
        %v5329 = vpop.permute.xlu0 %5328
        %5330 = vrot.lane.b32.xlu0 %v5285, 124
        %v5331 = vpop.permute.xlu0 %5330
        %5332 = vrot.lane.b32.xlu0 %v5286, 124
        %v5333 = vpop.permute.xlu0 %5332
        %5334 = vrot.lane.b32.xlu0 %v5287, 124
        %v5335 = vpop.permute.xlu0 %5334
        %v5352 = vadd.f32 %v5254, %v5305
        %v5353 = vadd.f32 %v5255, %v5307
        %v5354 = vadd.f32 %v5256, %v5309
        %v5355 = vadd.f32 %v5257, %v5311
        %v5356 = vadd.f32 %v5258, %v5313
        %v5357 = vadd.f32 %v5259, %v5315
        %v5358 = vadd.f32 %v5260, %v5317
        %v5359 = vadd.f32 %v5261, %v5319
        %v5360 = vadd.f32 %v5262, %v5321
        %v5361 = vadd.f32 %v5263, %v5323
        %v5362 = vadd.f32 %v5264, %v5325
        %v5363 = vadd.f32 %v5265, %v5327
        %v5364 = vadd.f32 %v5266, %v5329
        %v5365 = vadd.f32 %v5267, %v5331
        %v5366 = vadd.f32 %v5268, %v5333
        %v5367 = vadd.f32 %v5269, %v5335
        %s5368 = sld [smem:[#allocation5 + $0x36]]
        %v5369 = vstv %s5368
        %v5370 = vmul.f32 %v5369, %v4920
        %v5371 = vmul.f32 %v5369, %v4921
        %v5372 = vmul.f32 %v5369, %v4922
        %v5373 = vmul.f32 %v5369, %v4923
        %v5374 = vmul.f32 %v5369, %v4924
        %v5375 = vmul.f32 %v5369, %v4925
        %v5376 = vmul.f32 %v5369, %v4926
        %v5377 = vmul.f32 %v5369, %v4927
        %v5378 = vmul.f32 %v5369, %v4928
        %v5379 = vmul.f32 %v5369, %v4929
        %v5380 = vmul.f32 %v5369, %v4930
        %v5381 = vmul.f32 %v5369, %v4931
        %v5382 = vmul.f32 %v5369, %v4932
        %v5383 = vmul.f32 %v5369, %v4933
        %v5384 = vmul.f32 %v5369, %v4934
        %v5385 = vmul.f32 %v5369, %v4935
        %5402 = vrot.lane.b32.xlu0 %v5370, 123
        %v5403 = vpop.permute.xlu0 %5402
        %5404 = vrot.lane.b32.xlu0 %v5371, 123
        %v5405 = vpop.permute.xlu0 %5404
        %5406 = vrot.lane.b32.xlu0 %v5372, 123
        %v5407 = vpop.permute.xlu0 %5406
        %5408 = vrot.lane.b32.xlu0 %v5373, 123
        %v5409 = vpop.permute.xlu0 %5408
        %5410 = vrot.lane.b32.xlu0 %v5374, 123
        %v5411 = vpop.permute.xlu0 %5410
        %5412 = vrot.lane.b32.xlu0 %v5375, 123
        %v5413 = vpop.permute.xlu0 %5412
        %5414 = vrot.lane.b32.xlu0 %v5376, 123
        %v5415 = vpop.permute.xlu0 %5414
        %5416 = vrot.lane.b32.xlu0 %v5377, 123
        %v5417 = vpop.permute.xlu0 %5416
        %5418 = vrot.lane.b32.xlu0 %v5378, 123
        %v5419 = vpop.permute.xlu0 %5418
        %5420 = vrot.lane.b32.xlu0 %v5379, 123
        %v5421 = vpop.permute.xlu0 %5420
        %5422 = vrot.lane.b32.xlu0 %v5380, 123
        %v5423 = vpop.permute.xlu0 %5422
        %5424 = vrot.lane.b32.xlu0 %v5381, 123
        %v5425 = vpop.permute.xlu0 %5424
        %5426 = vrot.lane.b32.xlu0 %v5382, 123
        %v5427 = vpop.permute.xlu0 %5426
        %5428 = vrot.lane.b32.xlu0 %v5383, 123
        %v5429 = vpop.permute.xlu0 %5428
        %5430 = vrot.lane.b32.xlu0 %v5384, 123
        %v5431 = vpop.permute.xlu0 %5430
        %5432 = vrot.lane.b32.xlu0 %v5385, 123
        %v5433 = vpop.permute.xlu0 %5432
        %v5450 = vadd.f32 %v5352, %v5403
        %v5451 = vadd.f32 %v5353, %v5405
        %v5452 = vadd.f32 %v5354, %v5407
        %v5453 = vadd.f32 %v5355, %v5409
        %v5454 = vadd.f32 %v5356, %v5411
        %v5455 = vadd.f32 %v5357, %v5413
        %v5456 = vadd.f32 %v5358, %v5415
        %v5457 = vadd.f32 %v5359, %v5417
        %v5458 = vadd.f32 %v5360, %v5419
        %v5459 = vadd.f32 %v5361, %v5421
        %v5460 = vadd.f32 %v5362, %v5423
        %v5461 = vadd.f32 %v5363, %v5425
        %v5462 = vadd.f32 %v5364, %v5427
        %v5463 = vadd.f32 %v5365, %v5429
        %v5464 = vadd.f32 %v5366, %v5431
        %v5465 = vadd.f32 %v5367, %v5433
        %s5466 = sld [smem:[#allocation5 + $0x37]]
        %v5467 = vstv %s5466
        %v5468 = vmul.f32 %v5467, %v4920
        %v5469 = vmul.f32 %v5467, %v4921
        %v5470 = vmul.f32 %v5467, %v4922
        %v5471 = vmul.f32 %v5467, %v4923
        %v5472 = vmul.f32 %v5467, %v4924
        %v5473 = vmul.f32 %v5467, %v4925
        %v5474 = vmul.f32 %v5467, %v4926
        %v5475 = vmul.f32 %v5467, %v4927
        %v5476 = vmul.f32 %v5467, %v4928
        %v5477 = vmul.f32 %v5467, %v4929
        %v5478 = vmul.f32 %v5467, %v4930
        %v5479 = vmul.f32 %v5467, %v4931
        %v5480 = vmul.f32 %v5467, %v4932
        %v5481 = vmul.f32 %v5467, %v4933
        %v5482 = vmul.f32 %v5467, %v4934
        %v5483 = vmul.f32 %v5467, %v4935
        %5500 = vrot.lane.b32.xlu0 %v5468, 122
        %v5501 = vpop.permute.xlu0 %5500
        %5502 = vrot.lane.b32.xlu0 %v5469, 122
        %v5503 = vpop.permute.xlu0 %5502
        %5504 = vrot.lane.b32.xlu0 %v5470, 122
        %v5505 = vpop.permute.xlu0 %5504
        %5506 = vrot.lane.b32.xlu0 %v5471, 122
        %v5507 = vpop.permute.xlu0 %5506
        %5508 = vrot.lane.b32.xlu0 %v5472, 122
        %v5509 = vpop.permute.xlu0 %5508
        %5510 = vrot.lane.b32.xlu0 %v5473, 122
        %v5511 = vpop.permute.xlu0 %5510
        %5512 = vrot.lane.b32.xlu0 %v5474, 122
        %v5513 = vpop.permute.xlu0 %5512
        %5514 = vrot.lane.b32.xlu0 %v5475, 122
        %v5515 = vpop.permute.xlu0 %5514
        %5516 = vrot.lane.b32.xlu0 %v5476, 122
        %v5517 = vpop.permute.xlu0 %5516
        %5518 = vrot.lane.b32.xlu0 %v5477, 122
        %v5519 = vpop.permute.xlu0 %5518
        %5520 = vrot.lane.b32.xlu0 %v5478, 122
        %v5521 = vpop.permute.xlu0 %5520
        %5522 = vrot.lane.b32.xlu0 %v5479, 122
        %v5523 = vpop.permute.xlu0 %5522
        %5524 = vrot.lane.b32.xlu0 %v5480, 122
        %v5525 = vpop.permute.xlu0 %5524
        %5526 = vrot.lane.b32.xlu0 %v5481, 122
        %v5527 = vpop.permute.xlu0 %5526
        %5528 = vrot.lane.b32.xlu0 %v5482, 122
        %v5529 = vpop.permute.xlu0 %5528
        %5530 = vrot.lane.b32.xlu0 %v5483, 122
        %v5531 = vpop.permute.xlu0 %5530
        %v5548 = vadd.f32 %v5450, %v5501
        %v5549 = vadd.f32 %v5451, %v5503
        %v5550 = vadd.f32 %v5452, %v5505
        %v5551 = vadd.f32 %v5453, %v5507
        %v5552 = vadd.f32 %v5454, %v5509
        %v5553 = vadd.f32 %v5455, %v5511
        %v5554 = vadd.f32 %v5456, %v5513
        %v5555 = vadd.f32 %v5457, %v5515
        %v5556 = vadd.f32 %v5458, %v5517
        %v5557 = vadd.f32 %v5459, %v5519
        %v5558 = vadd.f32 %v5460, %v5521
        %v5559 = vadd.f32 %v5461, %v5523
        %v5560 = vadd.f32 %v5462, %v5525
        %v5561 = vadd.f32 %v5463, %v5527
        %v5562 = vadd.f32 %v5464, %v5529
        %v5563 = vadd.f32 %v5465, %v5531
        %s5564 = sld [smem:[#allocation5 + $0x38]]
        %v5565 = vstv %s5564
        %v5566 = vmul.f32 %v5565, %v4921
        %v5567 = vmul.f32 %v5565, %v4922
        %v5568 = vmul.f32 %v5565, %v4923
        %v5569 = vmul.f32 %v5565, %v4924
        %v5570 = vmul.f32 %v5565, %v4925
        %v5571 = vmul.f32 %v5565, %v4926
        %v5572 = vmul.f32 %v5565, %v4927
        %v5573 = vmul.f32 %v5565, %v4928
        %v5574 = vmul.f32 %v5565, %v4929
        %v5575 = vmul.f32 %v5565, %v4930
        %v5576 = vmul.f32 %v5565, %v4931
        %v5577 = vmul.f32 %v5565, %v4932
        %v5578 = vmul.f32 %v5565, %v4933
        %v5579 = vmul.f32 %v5565, %v4934
        %v5580 = vmul.f32 %v5565, %v4935
        %v5581 = vmul.f32 %v5565, %v4936
        %v5582 = vadd.f32 %v5548, %v5566
        %v5583 = vadd.f32 %v5549, %v5567
        %v5584 = vadd.f32 %v5550, %v5568
        %v5585 = vadd.f32 %v5551, %v5569
        %v5586 = vadd.f32 %v5552, %v5570
        %v5587 = vadd.f32 %v5553, %v5571
        %v5588 = vadd.f32 %v5554, %v5572
        %v5589 = vadd.f32 %v5555, %v5573
        %v5590 = vadd.f32 %v5556, %v5574
        %v5591 = vadd.f32 %v5557, %v5575
        %v5592 = vadd.f32 %v5558, %v5576
        %v5593 = vadd.f32 %v5559, %v5577
        %v5594 = vadd.f32 %v5560, %v5578
        %v5595 = vadd.f32 %v5561, %v5579
        %v5596 = vadd.f32 %v5562, %v5580
        %v5597 = vadd.f32 %v5563, %v5581
        %s5598 = sld [smem:[#allocation5 + $0x39]]
        %v5599 = vstv %s5598
        %v5600 = vmul.f32 %v5599, %v4921
        %v5601 = vmul.f32 %v5599, %v4922
        %v5602 = vmul.f32 %v5599, %v4923
        %v5603 = vmul.f32 %v5599, %v4924
        %v5604 = vmul.f32 %v5599, %v4925
        %v5605 = vmul.f32 %v5599, %v4926
        %v5606 = vmul.f32 %v5599, %v4927
        %v5607 = vmul.f32 %v5599, %v4928
        %v5608 = vmul.f32 %v5599, %v4929
        %v5609 = vmul.f32 %v5599, %v4930
        %v5610 = vmul.f32 %v5599, %v4931
        %v5611 = vmul.f32 %v5599, %v4932
        %v5612 = vmul.f32 %v5599, %v4933
        %v5613 = vmul.f32 %v5599, %v4934
        %v5614 = vmul.f32 %v5599, %v4935
        %v5615 = vmul.f32 %v5599, %v4936
        %5632 = vrot.lane.b32.xlu0 %v5600, 127
        %v5633 = vpop.permute.xlu0 %5632
        %5634 = vrot.lane.b32.xlu0 %v5601, 127
        %v5635 = vpop.permute.xlu0 %5634
        %5636 = vrot.lane.b32.xlu0 %v5602, 127
        %v5637 = vpop.permute.xlu0 %5636
        %5638 = vrot.lane.b32.xlu0 %v5603, 127
        %v5639 = vpop.permute.xlu0 %5638
        %5640 = vrot.lane.b32.xlu0 %v5604, 127
        %v5641 = vpop.permute.xlu0 %5640
        %5642 = vrot.lane.b32.xlu0 %v5605, 127
        %v5643 = vpop.permute.xlu0 %5642
        %5644 = vrot.lane.b32.xlu0 %v5606, 127
        %v5645 = vpop.permute.xlu0 %5644
        %5646 = vrot.lane.b32.xlu0 %v5607, 127
        %v5647 = vpop.permute.xlu0 %5646
        %5648 = vrot.lane.b32.xlu0 %v5608, 127
        %v5649 = vpop.permute.xlu0 %5648
        %5650 = vrot.lane.b32.xlu0 %v5609, 127
        %v5651 = vpop.permute.xlu0 %5650
        %5652 = vrot.lane.b32.xlu0 %v5610, 127
        %v5653 = vpop.permute.xlu0 %5652
        %5654 = vrot.lane.b32.xlu0 %v5611, 127
        %v5655 = vpop.permute.xlu0 %5654
        %5656 = vrot.lane.b32.xlu0 %v5612, 127
        %v5657 = vpop.permute.xlu0 %5656
        %5658 = vrot.lane.b32.xlu0 %v5613, 127
        %v5659 = vpop.permute.xlu0 %5658
        %5660 = vrot.lane.b32.xlu0 %v5614, 127
        %v5661 = vpop.permute.xlu0 %5660
        %5662 = vrot.lane.b32.xlu0 %v5615, 127
        %v5663 = vpop.permute.xlu0 %5662
        %v5680 = vadd.f32 %v5582, %v5633
        %v5681 = vadd.f32 %v5583, %v5635
        %v5682 = vadd.f32 %v5584, %v5637
        %v5683 = vadd.f32 %v5585, %v5639
        %v5684 = vadd.f32 %v5586, %v5641
        %v5685 = vadd.f32 %v5587, %v5643
        %v5686 = vadd.f32 %v5588, %v5645
        %v5687 = vadd.f32 %v5589, %v5647
        %v5688 = vadd.f32 %v5590, %v5649
        %v5689 = vadd.f32 %v5591, %v5651
        %v5690 = vadd.f32 %v5592, %v5653
        %v5691 = vadd.f32 %v5593, %v5655
        %v5692 = vadd.f32 %v5594, %v5657
        %v5693 = vadd.f32 %v5595, %v5659
        %v5694 = vadd.f32 %v5596, %v5661
        %v5695 = vadd.f32 %v5597, %v5663
        %s5696 = sld [smem:[#allocation5 + $0x3a]]
        %v5697 = vstv %s5696
        %v5698 = vmul.f32 %v5697, %v4921
        %v5699 = vmul.f32 %v5697, %v4922
        %v5700 = vmul.f32 %v5697, %v4923
        %v5701 = vmul.f32 %v5697, %v4924
        %v5702 = vmul.f32 %v5697, %v4925
        %v5703 = vmul.f32 %v5697, %v4926
        %v5704 = vmul.f32 %v5697, %v4927
        %v5705 = vmul.f32 %v5697, %v4928
        %v5706 = vmul.f32 %v5697, %v4929
        %v5707 = vmul.f32 %v5697, %v4930
        %v5708 = vmul.f32 %v5697, %v4931
        %v5709 = vmul.f32 %v5697, %v4932
        %v5710 = vmul.f32 %v5697, %v4933
        %v5711 = vmul.f32 %v5697, %v4934
        %v5712 = vmul.f32 %v5697, %v4935
        %v5713 = vmul.f32 %v5697, %v4936
        %5730 = vrot.lane.b32.xlu0 %v5698, 126
        %v5731 = vpop.permute.xlu0 %5730
        %5732 = vrot.lane.b32.xlu0 %v5699, 126
        %v5733 = vpop.permute.xlu0 %5732
        %5734 = vrot.lane.b32.xlu0 %v5700, 126
        %v5735 = vpop.permute.xlu0 %5734
        %5736 = vrot.lane.b32.xlu0 %v5701, 126
        %v5737 = vpop.permute.xlu0 %5736
        %5738 = vrot.lane.b32.xlu0 %v5702, 126
        %v5739 = vpop.permute.xlu0 %5738
        %5740 = vrot.lane.b32.xlu0 %v5703, 126
        %v5741 = vpop.permute.xlu0 %5740
        %5742 = vrot.lane.b32.xlu0 %v5704, 126
        %v5743 = vpop.permute.xlu0 %5742
        %5744 = vrot.lane.b32.xlu0 %v5705, 126
        %v5745 = vpop.permute.xlu0 %5744
        %5746 = vrot.lane.b32.xlu0 %v5706, 126
        %v5747 = vpop.permute.xlu0 %5746
        %5748 = vrot.lane.b32.xlu0 %v5707, 126
        %v5749 = vpop.permute.xlu0 %5748
        %5750 = vrot.lane.b32.xlu0 %v5708, 126
        %v5751 = vpop.permute.xlu0 %5750
        %5752 = vrot.lane.b32.xlu0 %v5709, 126
        %v5753 = vpop.permute.xlu0 %5752
        %5754 = vrot.lane.b32.xlu0 %v5710, 126
        %v5755 = vpop.permute.xlu0 %5754
        %5756 = vrot.lane.b32.xlu0 %v5711, 126
        %v5757 = vpop.permute.xlu0 %5756
        %5758 = vrot.lane.b32.xlu0 %v5712, 126
        %v5759 = vpop.permute.xlu0 %5758
        %5760 = vrot.lane.b32.xlu0 %v5713, 126
        %v5761 = vpop.permute.xlu0 %5760
        %v5778 = vadd.f32 %v5680, %v5731
        %v5779 = vadd.f32 %v5681, %v5733
        %v5780 = vadd.f32 %v5682, %v5735
        %v5781 = vadd.f32 %v5683, %v5737
        %v5782 = vadd.f32 %v5684, %v5739
        %v5783 = vadd.f32 %v5685, %v5741
        %v5784 = vadd.f32 %v5686, %v5743
        %v5785 = vadd.f32 %v5687, %v5745
        %v5786 = vadd.f32 %v5688, %v5747
        %v5787 = vadd.f32 %v5689, %v5749
        %v5788 = vadd.f32 %v5690, %v5751
        %v5789 = vadd.f32 %v5691, %v5753
        %v5790 = vadd.f32 %v5692, %v5755
        %v5791 = vadd.f32 %v5693, %v5757
        %v5792 = vadd.f32 %v5694, %v5759
        %v5793 = vadd.f32 %v5695, %v5761
        %s5794 = sld [smem:[#allocation5 + $0x3b]]
        %v5795 = vstv %s5794
        %v5796 = vmul.f32 %v5795, %v4921
        %v5797 = vmul.f32 %v5795, %v4922
        %v5798 = vmul.f32 %v5795, %v4923
        %v5799 = vmul.f32 %v5795, %v4924
        %v5800 = vmul.f32 %v5795, %v4925
        %v5801 = vmul.f32 %v5795, %v4926
        %v5802 = vmul.f32 %v5795, %v4927
        %v5803 = vmul.f32 %v5795, %v4928
        %v5804 = vmul.f32 %v5795, %v4929
        %v5805 = vmul.f32 %v5795, %v4930
        %v5806 = vmul.f32 %v5795, %v4931
        %v5807 = vmul.f32 %v5795, %v4932
        %v5808 = vmul.f32 %v5795, %v4933
        %v5809 = vmul.f32 %v5795, %v4934
        %v5810 = vmul.f32 %v5795, %v4935
        %v5811 = vmul.f32 %v5795, %v4936
        %5828 = vrot.lane.b32.xlu0 %v5796, 125
        %v5829 = vpop.permute.xlu0 %5828
        %5830 = vrot.lane.b32.xlu0 %v5797, 125
        %v5831 = vpop.permute.xlu0 %5830
        %5832 = vrot.lane.b32.xlu0 %v5798, 125
        %v5833 = vpop.permute.xlu0 %5832
        %5834 = vrot.lane.b32.xlu0 %v5799, 125
        %v5835 = vpop.permute.xlu0 %5834
        %5836 = vrot.lane.b32.xlu0 %v5800, 125
        %v5837 = vpop.permute.xlu0 %5836
        %5838 = vrot.lane.b32.xlu0 %v5801, 125
        %v5839 = vpop.permute.xlu0 %5838
        %5840 = vrot.lane.b32.xlu0 %v5802, 125
        %v5841 = vpop.permute.xlu0 %5840
        %5842 = vrot.lane.b32.xlu0 %v5803, 125
        %v5843 = vpop.permute.xlu0 %5842
        %5844 = vrot.lane.b32.xlu0 %v5804, 125
        %v5845 = vpop.permute.xlu0 %5844
        %5846 = vrot.lane.b32.xlu0 %v5805, 125
        %v5847 = vpop.permute.xlu0 %5846
        %5848 = vrot.lane.b32.xlu0 %v5806, 125
        %v5849 = vpop.permute.xlu0 %5848
        %5850 = vrot.lane.b32.xlu0 %v5807, 125
        %v5851 = vpop.permute.xlu0 %5850
        %5852 = vrot.lane.b32.xlu0 %v5808, 125
        %v5853 = vpop.permute.xlu0 %5852
        %5854 = vrot.lane.b32.xlu0 %v5809, 125
        %v5855 = vpop.permute.xlu0 %5854
        %5856 = vrot.lane.b32.xlu0 %v5810, 125
        %v5857 = vpop.permute.xlu0 %5856
        %5858 = vrot.lane.b32.xlu0 %v5811, 125
        %v5859 = vpop.permute.xlu0 %5858
        %v5876 = vadd.f32 %v5778, %v5829
        %v5877 = vadd.f32 %v5779, %v5831
        %v5878 = vadd.f32 %v5780, %v5833
        %v5879 = vadd.f32 %v5781, %v5835
        %v5880 = vadd.f32 %v5782, %v5837
        %v5881 = vadd.f32 %v5783, %v5839
        %v5882 = vadd.f32 %v5784, %v5841
        %v5883 = vadd.f32 %v5785, %v5843
        %v5884 = vadd.f32 %v5786, %v5845
        %v5885 = vadd.f32 %v5787, %v5847
        %v5886 = vadd.f32 %v5788, %v5849
        %v5887 = vadd.f32 %v5789, %v5851
        %v5888 = vadd.f32 %v5790, %v5853
        %v5889 = vadd.f32 %v5791, %v5855
        %v5890 = vadd.f32 %v5792, %v5857
        %v5891 = vadd.f32 %v5793, %v5859
        %s5892 = sld [smem:[#allocation5 + $0x3c]]
        %v5893 = vstv %s5892
        %v5894 = vmul.f32 %v5893, %v4921
        %v5895 = vmul.f32 %v5893, %v4922
        %v5896 = vmul.f32 %v5893, %v4923
        %v5897 = vmul.f32 %v5893, %v4924
        %v5898 = vmul.f32 %v5893, %v4925
        %v5899 = vmul.f32 %v5893, %v4926
        %v5900 = vmul.f32 %v5893, %v4927
        %v5901 = vmul.f32 %v5893, %v4928
        %v5902 = vmul.f32 %v5893, %v4929
        %v5903 = vmul.f32 %v5893, %v4930
        %v5904 = vmul.f32 %v5893, %v4931
        %v5905 = vmul.f32 %v5893, %v4932
        %v5906 = vmul.f32 %v5893, %v4933
        %v5907 = vmul.f32 %v5893, %v4934
        %v5908 = vmul.f32 %v5893, %v4935
        %v5909 = vmul.f32 %v5893, %v4936
        %5926 = vrot.lane.b32.xlu0 %v5894, 124
        %v5927 = vpop.permute.xlu0 %5926
        %5928 = vrot.lane.b32.xlu0 %v5895, 124
        %v5929 = vpop.permute.xlu0 %5928
        %5930 = vrot.lane.b32.xlu0 %v5896, 124
        %v5931 = vpop.permute.xlu0 %5930
        %5932 = vrot.lane.b32.xlu0 %v5897, 124
        %v5933 = vpop.permute.xlu0 %5932
        %5934 = vrot.lane.b32.xlu0 %v5898, 124
        %v5935 = vpop.permute.xlu0 %5934
        %5936 = vrot.lane.b32.xlu0 %v5899, 124
        %v5937 = vpop.permute.xlu0 %5936
        %5938 = vrot.lane.b32.xlu0 %v5900, 124
        %v5939 = vpop.permute.xlu0 %5938
        %5940 = vrot.lane.b32.xlu0 %v5901, 124
        %v5941 = vpop.permute.xlu0 %5940
        %5942 = vrot.lane.b32.xlu0 %v5902, 124
        %v5943 = vpop.permute.xlu0 %5942
        %5944 = vrot.lane.b32.xlu0 %v5903, 124
        %v5945 = vpop.permute.xlu0 %5944
        %5946 = vrot.lane.b32.xlu0 %v5904, 124
        %v5947 = vpop.permute.xlu0 %5946
        %5948 = vrot.lane.b32.xlu0 %v5905, 124
        %v5949 = vpop.permute.xlu0 %5948
        %5950 = vrot.lane.b32.xlu0 %v5906, 124
        %v5951 = vpop.permute.xlu0 %5950
        %5952 = vrot.lane.b32.xlu0 %v5907, 124
        %v5953 = vpop.permute.xlu0 %5952
        %5954 = vrot.lane.b32.xlu0 %v5908, 124
        %v5955 = vpop.permute.xlu0 %5954
        %5956 = vrot.lane.b32.xlu0 %v5909, 124
        %v5957 = vpop.permute.xlu0 %5956
        %v5974 = vadd.f32 %v5876, %v5927
        %v5975 = vadd.f32 %v5877, %v5929
        %v5976 = vadd.f32 %v5878, %v5931
        %v5977 = vadd.f32 %v5879, %v5933
        %v5978 = vadd.f32 %v5880, %v5935
        %v5979 = vadd.f32 %v5881, %v5937
        %v5980 = vadd.f32 %v5882, %v5939
        %v5981 = vadd.f32 %v5883, %v5941
        %v5982 = vadd.f32 %v5884, %v5943
        %v5983 = vadd.f32 %v5885, %v5945
        %v5984 = vadd.f32 %v5886, %v5947
        %v5985 = vadd.f32 %v5887, %v5949
        %v5986 = vadd.f32 %v5888, %v5951
        %v5987 = vadd.f32 %v5889, %v5953
        %v5988 = vadd.f32 %v5890, %v5955
        %v5989 = vadd.f32 %v5891, %v5957
        %s5990 = sld [smem:[#allocation5 + $0x3d]]
        %v5991 = vstv %s5990
        %v5992 = vmul.f32 %v5991, %v4921
        %v5993 = vmul.f32 %v5991, %v4922
        %v5994 = vmul.f32 %v5991, %v4923
        %v5995 = vmul.f32 %v5991, %v4924
        %v5996 = vmul.f32 %v5991, %v4925
        %v5997 = vmul.f32 %v5991, %v4926
        %v5998 = vmul.f32 %v5991, %v4927
        %v5999 = vmul.f32 %v5991, %v4928
        %v6000 = vmul.f32 %v5991, %v4929
        %v6001 = vmul.f32 %v5991, %v4930
        %v6002 = vmul.f32 %v5991, %v4931
        %v6003 = vmul.f32 %v5991, %v4932
        %v6004 = vmul.f32 %v5991, %v4933
        %v6005 = vmul.f32 %v5991, %v4934
        %v6006 = vmul.f32 %v5991, %v4935
        %v6007 = vmul.f32 %v5991, %v4936
        %6024 = vrot.lane.b32.xlu0 %v5992, 123
        %v6025 = vpop.permute.xlu0 %6024
        %6026 = vrot.lane.b32.xlu0 %v5993, 123
        %v6027 = vpop.permute.xlu0 %6026
        %6028 = vrot.lane.b32.xlu0 %v5994, 123
        %v6029 = vpop.permute.xlu0 %6028
        %6030 = vrot.lane.b32.xlu0 %v5995, 123
        %v6031 = vpop.permute.xlu0 %6030
        %6032 = vrot.lane.b32.xlu0 %v5996, 123
        %v6033 = vpop.permute.xlu0 %6032
        %6034 = vrot.lane.b32.xlu0 %v5997, 123
        %v6035 = vpop.permute.xlu0 %6034
        %6036 = vrot.lane.b32.xlu0 %v5998, 123
        %v6037 = vpop.permute.xlu0 %6036
        %6038 = vrot.lane.b32.xlu0 %v5999, 123
        %v6039 = vpop.permute.xlu0 %6038
        %6040 = vrot.lane.b32.xlu0 %v6000, 123
        %v6041 = vpop.permute.xlu0 %6040
        %6042 = vrot.lane.b32.xlu0 %v6001, 123
        %v6043 = vpop.permute.xlu0 %6042
        %6044 = vrot.lane.b32.xlu0 %v6002, 123
        %v6045 = vpop.permute.xlu0 %6044
        %6046 = vrot.lane.b32.xlu0 %v6003, 123
        %v6047 = vpop.permute.xlu0 %6046
        %6048 = vrot.lane.b32.xlu0 %v6004, 123
        %v6049 = vpop.permute.xlu0 %6048
        %6050 = vrot.lane.b32.xlu0 %v6005, 123
        %v6051 = vpop.permute.xlu0 %6050
        %6052 = vrot.lane.b32.xlu0 %v6006, 123
        %v6053 = vpop.permute.xlu0 %6052
        %6054 = vrot.lane.b32.xlu0 %v6007, 123
        %v6055 = vpop.permute.xlu0 %6054
        %v6072 = vadd.f32 %v5974, %v6025
        %v6073 = vadd.f32 %v5975, %v6027
        %v6074 = vadd.f32 %v5976, %v6029
        %v6075 = vadd.f32 %v5977, %v6031
        %v6076 = vadd.f32 %v5978, %v6033
        %v6077 = vadd.f32 %v5979, %v6035
        %v6078 = vadd.f32 %v5980, %v6037
        %v6079 = vadd.f32 %v5981, %v6039
        %v6080 = vadd.f32 %v5982, %v6041
        %v6081 = vadd.f32 %v5983, %v6043
        %v6082 = vadd.f32 %v5984, %v6045
        %v6083 = vadd.f32 %v5985, %v6047
        %v6084 = vadd.f32 %v5986, %v6049
        %v6085 = vadd.f32 %v5987, %v6051
        %v6086 = vadd.f32 %v5988, %v6053
        %v6087 = vadd.f32 %v5989, %v6055
        %s6088 = sld [smem:[#allocation5 + $0x3e]]
        %v6089 = vstv %s6088
        %v6090 = vmul.f32 %v6089, %v4921
        %v6091 = vmul.f32 %v6089, %v4922
        %v6092 = vmul.f32 %v6089, %v4923
        %v6093 = vmul.f32 %v6089, %v4924
        %v6094 = vmul.f32 %v6089, %v4925
        %v6095 = vmul.f32 %v6089, %v4926
        %v6096 = vmul.f32 %v6089, %v4927
        %v6097 = vmul.f32 %v6089, %v4928
        %v6098 = vmul.f32 %v6089, %v4929
        %v6099 = vmul.f32 %v6089, %v4930
        %v6100 = vmul.f32 %v6089, %v4931
        %v6101 = vmul.f32 %v6089, %v4932
        %v6102 = vmul.f32 %v6089, %v4933
        %v6103 = vmul.f32 %v6089, %v4934
        %v6104 = vmul.f32 %v6089, %v4935
        %v6105 = vmul.f32 %v6089, %v4936
        %6122 = vrot.lane.b32.xlu0 %v6090, 122
        %v6123 = vpop.permute.xlu0 %6122
        %6124 = vrot.lane.b32.xlu0 %v6091, 122
        %v6125 = vpop.permute.xlu0 %6124
        %6126 = vrot.lane.b32.xlu0 %v6092, 122
        %v6127 = vpop.permute.xlu0 %6126
        %6128 = vrot.lane.b32.xlu0 %v6093, 122
        %v6129 = vpop.permute.xlu0 %6128
        %6130 = vrot.lane.b32.xlu0 %v6094, 122
        %v6131 = vpop.permute.xlu0 %6130
        %6132 = vrot.lane.b32.xlu0 %v6095, 122
        %v6133 = vpop.permute.xlu0 %6132
        %6134 = vrot.lane.b32.xlu0 %v6096, 122
        %v6135 = vpop.permute.xlu0 %6134
        %6136 = vrot.lane.b32.xlu0 %v6097, 122
        %v6137 = vpop.permute.xlu0 %6136
        %6138 = vrot.lane.b32.xlu0 %v6098, 122
        %v6139 = vpop.permute.xlu0 %6138
        %6140 = vrot.lane.b32.xlu0 %v6099, 122
        %v6141 = vpop.permute.xlu0 %6140
        %6142 = vrot.lane.b32.xlu0 %v6100, 122
        %v6143 = vpop.permute.xlu0 %6142
        %6144 = vrot.lane.b32.xlu0 %v6101, 122
        %v6145 = vpop.permute.xlu0 %6144
        %6146 = vrot.lane.b32.xlu0 %v6102, 122
        %v6147 = vpop.permute.xlu0 %6146
        %6148 = vrot.lane.b32.xlu0 %v6103, 122
        %v6149 = vpop.permute.xlu0 %6148
        %6150 = vrot.lane.b32.xlu0 %v6104, 122
        %v6151 = vpop.permute.xlu0 %6150
        %6152 = vrot.lane.b32.xlu0 %v6105, 122
        %v6153 = vpop.permute.xlu0 %6152
        %v6170 = vadd.f32 %v6072, %v6123
        %v6171 = vadd.f32 %v6073, %v6125
        %v6172 = vadd.f32 %v6074, %v6127
        %v6173 = vadd.f32 %v6075, %v6129
        %v6174 = vadd.f32 %v6076, %v6131
        %v6175 = vadd.f32 %v6077, %v6133
        %v6176 = vadd.f32 %v6078, %v6135
        %v6177 = vadd.f32 %v6079, %v6137
        %v6178 = vadd.f32 %v6080, %v6139
        %v6179 = vadd.f32 %v6081, %v6141
        %v6180 = vadd.f32 %v6082, %v6143
        %v6181 = vadd.f32 %v6083, %v6145
        %v6182 = vadd.f32 %v6084, %v6147
        %v6183 = vadd.f32 %v6085, %v6149
        %v6184 = vadd.f32 %v6086, %v6151
        %v6185 = vadd.f32 %v6087, %v6153
        %s6186 = sld [smem:[#allocation5 + $0x3f]]
        %v6187 = vstv %s6186
        %v6188 = vmul.f32 %v6187, %v4922
        %v6189 = vmul.f32 %v6187, %v4923
        %v6190 = vmul.f32 %v6187, %v4924
        %v6191 = vmul.f32 %v6187, %v4925
        %v6192 = vmul.f32 %v6187, %v4926
        %v6193 = vmul.f32 %v6187, %v4927
        %v6194 = vmul.f32 %v6187, %v4928
        %v6195 = vmul.f32 %v6187, %v4929
        %v6196 = vmul.f32 %v6187, %v4930
        %v6197 = vmul.f32 %v6187, %v4931
        %v6198 = vmul.f32 %v6187, %v4932
        %v6199 = vmul.f32 %v6187, %v4933
        %v6200 = vmul.f32 %v6187, %v4934
        %v6201 = vmul.f32 %v6187, %v4935
        %v6202 = vmul.f32 %v6187, %v4936
        %v6203 = vmul.f32 %v6187, %v4937
        %v6204 = vadd.f32 %v6170, %v6188
        %v6205 = vadd.f32 %v6171, %v6189
        %v6206 = vadd.f32 %v6172, %v6190
        %v6207 = vadd.f32 %v6173, %v6191
        %v6208 = vadd.f32 %v6174, %v6192
        %v6209 = vadd.f32 %v6175, %v6193
        %v6210 = vadd.f32 %v6176, %v6194
        %v6211 = vadd.f32 %v6177, %v6195
        %v6212 = vadd.f32 %v6178, %v6196
        %v6213 = vadd.f32 %v6179, %v6197
        %v6214 = vadd.f32 %v6180, %v6198
        %v6215 = vadd.f32 %v6181, %v6199
        %v6216 = vadd.f32 %v6182, %v6200
        %v6217 = vadd.f32 %v6183, %v6201
        %v6218 = vadd.f32 %v6184, %v6202
        %v6219 = vadd.f32 %v6185, %v6203
        %s6220 = sld [smem:[#allocation5 + $0x40]]
        %v6221 = vstv %s6220
        %v6222 = vmul.f32 %v6221, %v4922
        %v6223 = vmul.f32 %v6221, %v4923
        %v6224 = vmul.f32 %v6221, %v4924
        %v6225 = vmul.f32 %v6221, %v4925
        %v6226 = vmul.f32 %v6221, %v4926
        %v6227 = vmul.f32 %v6221, %v4927
        %v6228 = vmul.f32 %v6221, %v4928
        %v6229 = vmul.f32 %v6221, %v4929
        %v6230 = vmul.f32 %v6221, %v4930
        %v6231 = vmul.f32 %v6221, %v4931
        %v6232 = vmul.f32 %v6221, %v4932
        %v6233 = vmul.f32 %v6221, %v4933
        %v6234 = vmul.f32 %v6221, %v4934
        %v6235 = vmul.f32 %v6221, %v4935
        %v6236 = vmul.f32 %v6221, %v4936
        %v6237 = vmul.f32 %v6221, %v4937
        %6254 = vrot.lane.b32.xlu0 %v6222, 127
        %v6255 = vpop.permute.xlu0 %6254
        %6256 = vrot.lane.b32.xlu0 %v6223, 127
        %v6257 = vpop.permute.xlu0 %6256
        %6258 = vrot.lane.b32.xlu0 %v6224, 127
        %v6259 = vpop.permute.xlu0 %6258
        %6260 = vrot.lane.b32.xlu0 %v6225, 127
        %v6261 = vpop.permute.xlu0 %6260
        %6262 = vrot.lane.b32.xlu0 %v6226, 127
        %v6263 = vpop.permute.xlu0 %6262
        %6264 = vrot.lane.b32.xlu0 %v6227, 127
        %v6265 = vpop.permute.xlu0 %6264
        %6266 = vrot.lane.b32.xlu0 %v6228, 127
        %v6267 = vpop.permute.xlu0 %6266
        %6268 = vrot.lane.b32.xlu0 %v6229, 127
        %v6269 = vpop.permute.xlu0 %6268
        %6270 = vrot.lane.b32.xlu0 %v6230, 127
        %v6271 = vpop.permute.xlu0 %6270
        %6272 = vrot.lane.b32.xlu0 %v6231, 127
        %v6273 = vpop.permute.xlu0 %6272
        %6274 = vrot.lane.b32.xlu0 %v6232, 127
        %v6275 = vpop.permute.xlu0 %6274
        %6276 = vrot.lane.b32.xlu0 %v6233, 127
        %v6277 = vpop.permute.xlu0 %6276
        %6278 = vrot.lane.b32.xlu0 %v6234, 127
        %v6279 = vpop.permute.xlu0 %6278
        %6280 = vrot.lane.b32.xlu0 %v6235, 127
        %v6281 = vpop.permute.xlu0 %6280
        %6282 = vrot.lane.b32.xlu0 %v6236, 127
        %v6283 = vpop.permute.xlu0 %6282
        %6284 = vrot.lane.b32.xlu0 %v6237, 127
        %v6285 = vpop.permute.xlu0 %6284
        %v6302 = vadd.f32 %v6204, %v6255
        %v6303 = vadd.f32 %v6205, %v6257
        %v6304 = vadd.f32 %v6206, %v6259
        %v6305 = vadd.f32 %v6207, %v6261
        %v6306 = vadd.f32 %v6208, %v6263
        %v6307 = vadd.f32 %v6209, %v6265
        %v6308 = vadd.f32 %v6210, %v6267
        %v6309 = vadd.f32 %v6211, %v6269
        %v6310 = vadd.f32 %v6212, %v6271
        %v6311 = vadd.f32 %v6213, %v6273
        %v6312 = vadd.f32 %v6214, %v6275
        %v6313 = vadd.f32 %v6215, %v6277
        %v6314 = vadd.f32 %v6216, %v6279
        %v6315 = vadd.f32 %v6217, %v6281
        %v6316 = vadd.f32 %v6218, %v6283
        %v6317 = vadd.f32 %v6219, %v6285
        %s6318 = sld [smem:[#allocation5 + $0x41]]
        %v6319 = vstv %s6318
        %v6320 = vmul.f32 %v6319, %v4922
        %v6321 = vmul.f32 %v6319, %v4923
        %v6322 = vmul.f32 %v6319, %v4924
        %v6323 = vmul.f32 %v6319, %v4925
        %v6324 = vmul.f32 %v6319, %v4926
        %v6325 = vmul.f32 %v6319, %v4927
        %v6326 = vmul.f32 %v6319, %v4928
        %v6327 = vmul.f32 %v6319, %v4929
        %v6328 = vmul.f32 %v6319, %v4930
        %v6329 = vmul.f32 %v6319, %v4931
        %v6330 = vmul.f32 %v6319, %v4932
        %v6331 = vmul.f32 %v6319, %v4933
        %v6332 = vmul.f32 %v6319, %v4934
        %v6333 = vmul.f32 %v6319, %v4935
        %v6334 = vmul.f32 %v6319, %v4936
        %v6335 = vmul.f32 %v6319, %v4937
        %6352 = vrot.lane.b32.xlu0 %v6320, 126
        %v6353 = vpop.permute.xlu0 %6352
        %6354 = vrot.lane.b32.xlu0 %v6321, 126
        %v6355 = vpop.permute.xlu0 %6354
        %6356 = vrot.lane.b32.xlu0 %v6322, 126
        %v6357 = vpop.permute.xlu0 %6356
        %6358 = vrot.lane.b32.xlu0 %v6323, 126
        %v6359 = vpop.permute.xlu0 %6358
        %6360 = vrot.lane.b32.xlu0 %v6324, 126
        %v6361 = vpop.permute.xlu0 %6360
        %6362 = vrot.lane.b32.xlu0 %v6325, 126
        %v6363 = vpop.permute.xlu0 %6362
        %6364 = vrot.lane.b32.xlu0 %v6326, 126
        %v6365 = vpop.permute.xlu0 %6364
        %6366 = vrot.lane.b32.xlu0 %v6327, 126
        %v6367 = vpop.permute.xlu0 %6366
        %6368 = vrot.lane.b32.xlu0 %v6328, 126
        %v6369 = vpop.permute.xlu0 %6368
        %6370 = vrot.lane.b32.xlu0 %v6329, 126
        %v6371 = vpop.permute.xlu0 %6370
        %6372 = vrot.lane.b32.xlu0 %v6330, 126
        %v6373 = vpop.permute.xlu0 %6372
        %6374 = vrot.lane.b32.xlu0 %v6331, 126
        %v6375 = vpop.permute.xlu0 %6374
        %6376 = vrot.lane.b32.xlu0 %v6332, 126
        %v6377 = vpop.permute.xlu0 %6376
        %6378 = vrot.lane.b32.xlu0 %v6333, 126
        %v6379 = vpop.permute.xlu0 %6378
        %6380 = vrot.lane.b32.xlu0 %v6334, 126
        %v6381 = vpop.permute.xlu0 %6380
        %6382 = vrot.lane.b32.xlu0 %v6335, 126
        %v6383 = vpop.permute.xlu0 %6382
        %v6400 = vadd.f32 %v6302, %v6353
        %v6401 = vadd.f32 %v6303, %v6355
        %v6402 = vadd.f32 %v6304, %v6357
        %v6403 = vadd.f32 %v6305, %v6359
        %v6404 = vadd.f32 %v6306, %v6361
        %v6405 = vadd.f32 %v6307, %v6363
        %v6406 = vadd.f32 %v6308, %v6365
        %v6407 = vadd.f32 %v6309, %v6367
        %v6408 = vadd.f32 %v6310, %v6369
        %v6409 = vadd.f32 %v6311, %v6371
        %v6410 = vadd.f32 %v6312, %v6373
        %v6411 = vadd.f32 %v6313, %v6375
        %v6412 = vadd.f32 %v6314, %v6377
        %v6413 = vadd.f32 %v6315, %v6379
        %v6414 = vadd.f32 %v6316, %v6381
        %v6415 = vadd.f32 %v6317, %v6383
        %s6416 = sld [smem:[#allocation5 + $0x42]]
        %v6417 = vstv %s6416
        %v6418 = vmul.f32 %v6417, %v4922
        %v6419 = vmul.f32 %v6417, %v4923
        %v6420 = vmul.f32 %v6417, %v4924
        %v6421 = vmul.f32 %v6417, %v4925
        %v6422 = vmul.f32 %v6417, %v4926
        %v6423 = vmul.f32 %v6417, %v4927
        %v6424 = vmul.f32 %v6417, %v4928
        %v6425 = vmul.f32 %v6417, %v4929
        %v6426 = vmul.f32 %v6417, %v4930
        %v6427 = vmul.f32 %v6417, %v4931
        %v6428 = vmul.f32 %v6417, %v4932
        %v6429 = vmul.f32 %v6417, %v4933
        %v6430 = vmul.f32 %v6417, %v4934
        %v6431 = vmul.f32 %v6417, %v4935
        %v6432 = vmul.f32 %v6417, %v4936
        %v6433 = vmul.f32 %v6417, %v4937
        %6450 = vrot.lane.b32.xlu0 %v6418, 125
        %v6451 = vpop.permute.xlu0 %6450
        %6452 = vrot.lane.b32.xlu0 %v6419, 125
        %v6453 = vpop.permute.xlu0 %6452
        %6454 = vrot.lane.b32.xlu0 %v6420, 125
        %v6455 = vpop.permute.xlu0 %6454
        %6456 = vrot.lane.b32.xlu0 %v6421, 125
        %v6457 = vpop.permute.xlu0 %6456
        %6458 = vrot.lane.b32.xlu0 %v6422, 125
        %v6459 = vpop.permute.xlu0 %6458
        %6460 = vrot.lane.b32.xlu0 %v6423, 125
        %v6461 = vpop.permute.xlu0 %6460
        %6462 = vrot.lane.b32.xlu0 %v6424, 125
        %v6463 = vpop.permute.xlu0 %6462
        %6464 = vrot.lane.b32.xlu0 %v6425, 125
        %v6465 = vpop.permute.xlu0 %6464
        %6466 = vrot.lane.b32.xlu0 %v6426, 125
        %v6467 = vpop.permute.xlu0 %6466
        %6468 = vrot.lane.b32.xlu0 %v6427, 125
        %v6469 = vpop.permute.xlu0 %6468
        %6470 = vrot.lane.b32.xlu0 %v6428, 125
        %v6471 = vpop.permute.xlu0 %6470
        %6472 = vrot.lane.b32.xlu0 %v6429, 125
        %v6473 = vpop.permute.xlu0 %6472
        %6474 = vrot.lane.b32.xlu0 %v6430, 125
        %v6475 = vpop.permute.xlu0 %6474
        %6476 = vrot.lane.b32.xlu0 %v6431, 125
        %v6477 = vpop.permute.xlu0 %6476
        %6478 = vrot.lane.b32.xlu0 %v6432, 125
        %v6479 = vpop.permute.xlu0 %6478
        %6480 = vrot.lane.b32.xlu0 %v6433, 125
        %v6481 = vpop.permute.xlu0 %6480
        %v6498 = vadd.f32 %v6400, %v6451
        %v6499 = vadd.f32 %v6401, %v6453
        %v6500 = vadd.f32 %v6402, %v6455
        %v6501 = vadd.f32 %v6403, %v6457
        %v6502 = vadd.f32 %v6404, %v6459
        %v6503 = vadd.f32 %v6405, %v6461
        %v6504 = vadd.f32 %v6406, %v6463
        %v6505 = vadd.f32 %v6407, %v6465
        %v6506 = vadd.f32 %v6408, %v6467
        %v6507 = vadd.f32 %v6409, %v6469
        %v6508 = vadd.f32 %v6410, %v6471
        %v6509 = vadd.f32 %v6411, %v6473
        %v6510 = vadd.f32 %v6412, %v6475
        %v6511 = vadd.f32 %v6413, %v6477
        %v6512 = vadd.f32 %v6414, %v6479
        %v6513 = vadd.f32 %v6415, %v6481
        %s6514 = sld [smem:[#allocation5 + $0x43]]
        %v6515 = vstv %s6514
        %v6516 = vmul.f32 %v6515, %v4922
        %v6517 = vmul.f32 %v6515, %v4923
        %v6518 = vmul.f32 %v6515, %v4924
        %v6519 = vmul.f32 %v6515, %v4925
        %v6520 = vmul.f32 %v6515, %v4926
        %v6521 = vmul.f32 %v6515, %v4927
        %v6522 = vmul.f32 %v6515, %v4928
        %v6523 = vmul.f32 %v6515, %v4929
        %v6524 = vmul.f32 %v6515, %v4930
        %v6525 = vmul.f32 %v6515, %v4931
        %v6526 = vmul.f32 %v6515, %v4932
        %v6527 = vmul.f32 %v6515, %v4933
        %v6528 = vmul.f32 %v6515, %v4934
        %v6529 = vmul.f32 %v6515, %v4935
        %v6530 = vmul.f32 %v6515, %v4936
        %v6531 = vmul.f32 %v6515, %v4937
        %6548 = vrot.lane.b32.xlu0 %v6516, 124
        %v6549 = vpop.permute.xlu0 %6548
        %6550 = vrot.lane.b32.xlu0 %v6517, 124
        %v6551 = vpop.permute.xlu0 %6550
        %6552 = vrot.lane.b32.xlu0 %v6518, 124
        %v6553 = vpop.permute.xlu0 %6552
        %6554 = vrot.lane.b32.xlu0 %v6519, 124
        %v6555 = vpop.permute.xlu0 %6554
        %6556 = vrot.lane.b32.xlu0 %v6520, 124
        %v6557 = vpop.permute.xlu0 %6556
        %6558 = vrot.lane.b32.xlu0 %v6521, 124
        %v6559 = vpop.permute.xlu0 %6558
        %6560 = vrot.lane.b32.xlu0 %v6522, 124
        %v6561 = vpop.permute.xlu0 %6560
        %6562 = vrot.lane.b32.xlu0 %v6523, 124
        %v6563 = vpop.permute.xlu0 %6562
        %6564 = vrot.lane.b32.xlu0 %v6524, 124
        %v6565 = vpop.permute.xlu0 %6564
        %6566 = vrot.lane.b32.xlu0 %v6525, 124
        %v6567 = vpop.permute.xlu0 %6566
        %6568 = vrot.lane.b32.xlu0 %v6526, 124
        %v6569 = vpop.permute.xlu0 %6568
        %6570 = vrot.lane.b32.xlu0 %v6527, 124
        %v6571 = vpop.permute.xlu0 %6570
        %6572 = vrot.lane.b32.xlu0 %v6528, 124
        %v6573 = vpop.permute.xlu0 %6572
        %6574 = vrot.lane.b32.xlu0 %v6529, 124
        %v6575 = vpop.permute.xlu0 %6574
        %6576 = vrot.lane.b32.xlu0 %v6530, 124
        %v6577 = vpop.permute.xlu0 %6576
        %6578 = vrot.lane.b32.xlu0 %v6531, 124
        %v6579 = vpop.permute.xlu0 %6578
        %v6596 = vadd.f32 %v6498, %v6549
        %v6597 = vadd.f32 %v6499, %v6551
        %v6598 = vadd.f32 %v6500, %v6553
        %v6599 = vadd.f32 %v6501, %v6555
        %v6600 = vadd.f32 %v6502, %v6557
        %v6601 = vadd.f32 %v6503, %v6559
        %v6602 = vadd.f32 %v6504, %v6561
        %v6603 = vadd.f32 %v6505, %v6563
        %v6604 = vadd.f32 %v6506, %v6565
        %v6605 = vadd.f32 %v6507, %v6567
        %v6606 = vadd.f32 %v6508, %v6569
        %v6607 = vadd.f32 %v6509, %v6571
        %v6608 = vadd.f32 %v6510, %v6573
        %v6609 = vadd.f32 %v6511, %v6575
        %v6610 = vadd.f32 %v6512, %v6577
        %v6611 = vadd.f32 %v6513, %v6579
        %s6612 = sld [smem:[#allocation5 + $0x44]]
        %v6613 = vstv %s6612
        %v6614 = vmul.f32 %v6613, %v4922
        %v6615 = vmul.f32 %v6613, %v4923
        %v6616 = vmul.f32 %v6613, %v4924
        %v6617 = vmul.f32 %v6613, %v4925
        %v6618 = vmul.f32 %v6613, %v4926
        %v6619 = vmul.f32 %v6613, %v4927
        %v6620 = vmul.f32 %v6613, %v4928
        %v6621 = vmul.f32 %v6613, %v4929
        %v6622 = vmul.f32 %v6613, %v4930
        %v6623 = vmul.f32 %v6613, %v4931
        %v6624 = vmul.f32 %v6613, %v4932
        %v6625 = vmul.f32 %v6613, %v4933
        %v6626 = vmul.f32 %v6613, %v4934
        %v6627 = vmul.f32 %v6613, %v4935
        %v6628 = vmul.f32 %v6613, %v4936
        %v6629 = vmul.f32 %v6613, %v4937
        %6646 = vrot.lane.b32.xlu0 %v6614, 123
        %v6647 = vpop.permute.xlu0 %6646
        %6648 = vrot.lane.b32.xlu0 %v6615, 123
        %v6649 = vpop.permute.xlu0 %6648
        %6650 = vrot.lane.b32.xlu0 %v6616, 123
        %v6651 = vpop.permute.xlu0 %6650
        %6652 = vrot.lane.b32.xlu0 %v6617, 123
        %v6653 = vpop.permute.xlu0 %6652
        %6654 = vrot.lane.b32.xlu0 %v6618, 123
        %v6655 = vpop.permute.xlu0 %6654
        %6656 = vrot.lane.b32.xlu0 %v6619, 123
        %v6657 = vpop.permute.xlu0 %6656
        %6658 = vrot.lane.b32.xlu0 %v6620, 123
        %v6659 = vpop.permute.xlu0 %6658
        %6660 = vrot.lane.b32.xlu0 %v6621, 123
        %v6661 = vpop.permute.xlu0 %6660
        %6662 = vrot.lane.b32.xlu0 %v6622, 123
        %v6663 = vpop.permute.xlu0 %6662
        %6664 = vrot.lane.b32.xlu0 %v6623, 123
        %v6665 = vpop.permute.xlu0 %6664
        %6666 = vrot.lane.b32.xlu0 %v6624, 123
        %v6667 = vpop.permute.xlu0 %6666
        %6668 = vrot.lane.b32.xlu0 %v6625, 123
        %v6669 = vpop.permute.xlu0 %6668
        %6670 = vrot.lane.b32.xlu0 %v6626, 123
        %v6671 = vpop.permute.xlu0 %6670
        %6672 = vrot.lane.b32.xlu0 %v6627, 123
        %v6673 = vpop.permute.xlu0 %6672
        %6674 = vrot.lane.b32.xlu0 %v6628, 123
        %v6675 = vpop.permute.xlu0 %6674
        %6676 = vrot.lane.b32.xlu0 %v6629, 123
        %v6677 = vpop.permute.xlu0 %6676
        %v6694 = vadd.f32 %v6596, %v6647
        %v6695 = vadd.f32 %v6597, %v6649
        %v6696 = vadd.f32 %v6598, %v6651
        %v6697 = vadd.f32 %v6599, %v6653
        %v6698 = vadd.f32 %v6600, %v6655
        %v6699 = vadd.f32 %v6601, %v6657
        %v6700 = vadd.f32 %v6602, %v6659
        %v6701 = vadd.f32 %v6603, %v6661
        %v6702 = vadd.f32 %v6604, %v6663
        %v6703 = vadd.f32 %v6605, %v6665
        %v6704 = vadd.f32 %v6606, %v6667
        %v6705 = vadd.f32 %v6607, %v6669
        %v6706 = vadd.f32 %v6608, %v6671
        %v6707 = vadd.f32 %v6609, %v6673
        %v6708 = vadd.f32 %v6610, %v6675
        %v6709 = vadd.f32 %v6611, %v6677
        %s6710 = sld [smem:[#allocation5 + $0x45]]
        %v6711 = vstv %s6710
        %v6712 = vmul.f32 %v6711, %v4922
        %v6713 = vmul.f32 %v6711, %v4923
        %v6714 = vmul.f32 %v6711, %v4924
        %v6715 = vmul.f32 %v6711, %v4925
        %v6716 = vmul.f32 %v6711, %v4926
        %v6717 = vmul.f32 %v6711, %v4927
        %v6718 = vmul.f32 %v6711, %v4928
        %v6719 = vmul.f32 %v6711, %v4929
        %v6720 = vmul.f32 %v6711, %v4930
        %v6721 = vmul.f32 %v6711, %v4931
        %v6722 = vmul.f32 %v6711, %v4932
        %v6723 = vmul.f32 %v6711, %v4933
        %v6724 = vmul.f32 %v6711, %v4934
        %v6725 = vmul.f32 %v6711, %v4935
        %v6726 = vmul.f32 %v6711, %v4936
        %v6727 = vmul.f32 %v6711, %v4937
        %6744 = vrot.lane.b32.xlu0 %v6712, 122
        %v6745 = vpop.permute.xlu0 %6744
        %6746 = vrot.lane.b32.xlu0 %v6713, 122
        %v6747 = vpop.permute.xlu0 %6746
        %6748 = vrot.lane.b32.xlu0 %v6714, 122
        %v6749 = vpop.permute.xlu0 %6748
        %6750 = vrot.lane.b32.xlu0 %v6715, 122
        %v6751 = vpop.permute.xlu0 %6750
        %6752 = vrot.lane.b32.xlu0 %v6716, 122
        %v6753 = vpop.permute.xlu0 %6752
        %6754 = vrot.lane.b32.xlu0 %v6717, 122
        %v6755 = vpop.permute.xlu0 %6754
        %6756 = vrot.lane.b32.xlu0 %v6718, 122
        %v6757 = vpop.permute.xlu0 %6756
        %6758 = vrot.lane.b32.xlu0 %v6719, 122
        %v6759 = vpop.permute.xlu0 %6758
        %6760 = vrot.lane.b32.xlu0 %v6720, 122
        %v6761 = vpop.permute.xlu0 %6760
        %6762 = vrot.lane.b32.xlu0 %v6721, 122
        %v6763 = vpop.permute.xlu0 %6762
        %6764 = vrot.lane.b32.xlu0 %v6722, 122
        %v6765 = vpop.permute.xlu0 %6764
        %6766 = vrot.lane.b32.xlu0 %v6723, 122
        %v6767 = vpop.permute.xlu0 %6766
        %6768 = vrot.lane.b32.xlu0 %v6724, 122
        %v6769 = vpop.permute.xlu0 %6768
        %6770 = vrot.lane.b32.xlu0 %v6725, 122
        %v6771 = vpop.permute.xlu0 %6770
        %6772 = vrot.lane.b32.xlu0 %v6726, 122
        %v6773 = vpop.permute.xlu0 %6772
        %6774 = vrot.lane.b32.xlu0 %v6727, 122
        %v6775 = vpop.permute.xlu0 %6774
        %v6792 = vadd.f32 %v6694, %v6745
        %v6793 = vadd.f32 %v6695, %v6747
        %v6794 = vadd.f32 %v6696, %v6749
        %v6795 = vadd.f32 %v6697, %v6751
        %v6796 = vadd.f32 %v6698, %v6753
        %v6797 = vadd.f32 %v6699, %v6755
        %v6798 = vadd.f32 %v6700, %v6757
        %v6799 = vadd.f32 %v6701, %v6759
        %v6800 = vadd.f32 %v6702, %v6761
        %v6801 = vadd.f32 %v6703, %v6763
        %v6802 = vadd.f32 %v6704, %v6765
        %v6803 = vadd.f32 %v6705, %v6767
        %v6804 = vadd.f32 %v6706, %v6769
        %v6805 = vadd.f32 %v6707, %v6771
        %v6806 = vadd.f32 %v6708, %v6773
        %v6807 = vadd.f32 %v6709, %v6775
        %s6808 = sld [smem:[#allocation5 + $0x46]]
        %v6809 = vstv %s6808
        %v6810 = vmul.f32 %v6809, %v4923
        %v6811 = vmul.f32 %v6809, %v4924
        %v6812 = vmul.f32 %v6809, %v4925
        %v6813 = vmul.f32 %v6809, %v4926
        %v6814 = vmul.f32 %v6809, %v4927
        %v6815 = vmul.f32 %v6809, %v4928
        %v6816 = vmul.f32 %v6809, %v4929
        %v6817 = vmul.f32 %v6809, %v4930
        %v6818 = vmul.f32 %v6809, %v4931
        %v6819 = vmul.f32 %v6809, %v4932
        %v6820 = vmul.f32 %v6809, %v4933
        %v6821 = vmul.f32 %v6809, %v4934
        %v6822 = vmul.f32 %v6809, %v4935
        %v6823 = vmul.f32 %v6809, %v4936
        %v6824 = vmul.f32 %v6809, %v4937
        %v6825 = vmul.f32 %v6809, %v4938
        %v6826 = vadd.f32 %v6792, %v6810
        %v6827 = vadd.f32 %v6793, %v6811
        %v6828 = vadd.f32 %v6794, %v6812
        %v6829 = vadd.f32 %v6795, %v6813
        %v6830 = vadd.f32 %v6796, %v6814
        %v6831 = vadd.f32 %v6797, %v6815
        %v6832 = vadd.f32 %v6798, %v6816
        %v6833 = vadd.f32 %v6799, %v6817
        %v6834 = vadd.f32 %v6800, %v6818
        %v6835 = vadd.f32 %v6801, %v6819
        %v6836 = vadd.f32 %v6802, %v6820
        %v6837 = vadd.f32 %v6803, %v6821
        %v6838 = vadd.f32 %v6804, %v6822
        %v6839 = vadd.f32 %v6805, %v6823
        %v6840 = vadd.f32 %v6806, %v6824
        %v6841 = vadd.f32 %v6807, %v6825
        %s6842 = sld [smem:[#allocation5 + $0x47]]
        %v6843 = vstv %s6842
        %v6844 = vmul.f32 %v6843, %v4923
        %v6845 = vmul.f32 %v6843, %v4924
        %v6846 = vmul.f32 %v6843, %v4925
        %v6847 = vmul.f32 %v6843, %v4926
        %v6848 = vmul.f32 %v6843, %v4927
        %v6849 = vmul.f32 %v6843, %v4928
        %v6850 = vmul.f32 %v6843, %v4929
        %v6851 = vmul.f32 %v6843, %v4930
        %v6852 = vmul.f32 %v6843, %v4931
        %v6853 = vmul.f32 %v6843, %v4932
        %v6854 = vmul.f32 %v6843, %v4933
        %v6855 = vmul.f32 %v6843, %v4934
        %v6856 = vmul.f32 %v6843, %v4935
        %v6857 = vmul.f32 %v6843, %v4936
        %v6858 = vmul.f32 %v6843, %v4937
        %v6859 = vmul.f32 %v6843, %v4938
        %6876 = vrot.lane.b32.xlu0 %v6844, 127
        %v6877 = vpop.permute.xlu0 %6876
        %6878 = vrot.lane.b32.xlu0 %v6845, 127
        %v6879 = vpop.permute.xlu0 %6878
        %6880 = vrot.lane.b32.xlu0 %v6846, 127
        %v6881 = vpop.permute.xlu0 %6880
        %6882 = vrot.lane.b32.xlu0 %v6847, 127
        %v6883 = vpop.permute.xlu0 %6882
        %6884 = vrot.lane.b32.xlu0 %v6848, 127
        %v6885 = vpop.permute.xlu0 %6884
        %6886 = vrot.lane.b32.xlu0 %v6849, 127
        %v6887 = vpop.permute.xlu0 %6886
        %6888 = vrot.lane.b32.xlu0 %v6850, 127
        %v6889 = vpop.permute.xlu0 %6888
        %6890 = vrot.lane.b32.xlu0 %v6851, 127
        %v6891 = vpop.permute.xlu0 %6890
        %6892 = vrot.lane.b32.xlu0 %v6852, 127
        %v6893 = vpop.permute.xlu0 %6892
        %6894 = vrot.lane.b32.xlu0 %v6853, 127
        %v6895 = vpop.permute.xlu0 %6894
        %6896 = vrot.lane.b32.xlu0 %v6854, 127
        %v6897 = vpop.permute.xlu0 %6896
        %6898 = vrot.lane.b32.xlu0 %v6855, 127
        %v6899 = vpop.permute.xlu0 %6898
        %6900 = vrot.lane.b32.xlu0 %v6856, 127
        %v6901 = vpop.permute.xlu0 %6900
        %6902 = vrot.lane.b32.xlu0 %v6857, 127
        %v6903 = vpop.permute.xlu0 %6902
        %6904 = vrot.lane.b32.xlu0 %v6858, 127
        %v6905 = vpop.permute.xlu0 %6904
        %6906 = vrot.lane.b32.xlu0 %v6859, 127
        %v6907 = vpop.permute.xlu0 %6906
        %v6924 = vadd.f32 %v6826, %v6877
        %v6925 = vadd.f32 %v6827, %v6879
        %v6926 = vadd.f32 %v6828, %v6881
        %v6927 = vadd.f32 %v6829, %v6883
        %v6928 = vadd.f32 %v6830, %v6885
        %v6929 = vadd.f32 %v6831, %v6887
        %v6930 = vadd.f32 %v6832, %v6889
        %v6931 = vadd.f32 %v6833, %v6891
        %v6932 = vadd.f32 %v6834, %v6893
        %v6933 = vadd.f32 %v6835, %v6895
        %v6934 = vadd.f32 %v6836, %v6897
        %v6935 = vadd.f32 %v6837, %v6899
        %v6936 = vadd.f32 %v6838, %v6901
        %v6937 = vadd.f32 %v6839, %v6903
        %v6938 = vadd.f32 %v6840, %v6905
        %v6939 = vadd.f32 %v6841, %v6907
        %s6940 = sld [smem:[#allocation5 + $0x48]]
        %v6941 = vstv %s6940
        %v6942 = vmul.f32 %v6941, %v4923
        %v6943 = vmul.f32 %v6941, %v4924
        %v6944 = vmul.f32 %v6941, %v4925
        %v6945 = vmul.f32 %v6941, %v4926
        %v6946 = vmul.f32 %v6941, %v4927
        %v6947 = vmul.f32 %v6941, %v4928
        %v6948 = vmul.f32 %v6941, %v4929
        %v6949 = vmul.f32 %v6941, %v4930
        %v6950 = vmul.f32 %v6941, %v4931
        %v6951 = vmul.f32 %v6941, %v4932
        %v6952 = vmul.f32 %v6941, %v4933
        %v6953 = vmul.f32 %v6941, %v4934
        %v6954 = vmul.f32 %v6941, %v4935
        %v6955 = vmul.f32 %v6941, %v4936
        %v6956 = vmul.f32 %v6941, %v4937
        %v6957 = vmul.f32 %v6941, %v4938
        %6974 = vrot.lane.b32.xlu0 %v6942, 126
        %v6975 = vpop.permute.xlu0 %6974
        %6976 = vrot.lane.b32.xlu0 %v6943, 126
        %v6977 = vpop.permute.xlu0 %6976
        %6978 = vrot.lane.b32.xlu0 %v6944, 126
        %v6979 = vpop.permute.xlu0 %6978
        %6980 = vrot.lane.b32.xlu0 %v6945, 126
        %v6981 = vpop.permute.xlu0 %6980
        %6982 = vrot.lane.b32.xlu0 %v6946, 126
        %v6983 = vpop.permute.xlu0 %6982
        %6984 = vrot.lane.b32.xlu0 %v6947, 126
        %v6985 = vpop.permute.xlu0 %6984
        %6986 = vrot.lane.b32.xlu0 %v6948, 126
        %v6987 = vpop.permute.xlu0 %6986
        %6988 = vrot.lane.b32.xlu0 %v6949, 126
        %v6989 = vpop.permute.xlu0 %6988
        %6990 = vrot.lane.b32.xlu0 %v6950, 126
        %v6991 = vpop.permute.xlu0 %6990
        %6992 = vrot.lane.b32.xlu0 %v6951, 126
        %v6993 = vpop.permute.xlu0 %6992
        %6994 = vrot.lane.b32.xlu0 %v6952, 126
        %v6995 = vpop.permute.xlu0 %6994
        %6996 = vrot.lane.b32.xlu0 %v6953, 126
        %v6997 = vpop.permute.xlu0 %6996
        %6998 = vrot.lane.b32.xlu0 %v6954, 126
        %v6999 = vpop.permute.xlu0 %6998
        %7000 = vrot.lane.b32.xlu0 %v6955, 126
        %v7001 = vpop.permute.xlu0 %7000
        %7002 = vrot.lane.b32.xlu0 %v6956, 126
        %v7003 = vpop.permute.xlu0 %7002
        %7004 = vrot.lane.b32.xlu0 %v6957, 126
        %v7005 = vpop.permute.xlu0 %7004
        %v7022 = vadd.f32 %v6924, %v6975
        %v7023 = vadd.f32 %v6925, %v6977
        %v7024 = vadd.f32 %v6926, %v6979
        %v7025 = vadd.f32 %v6927, %v6981
        %v7026 = vadd.f32 %v6928, %v6983
        %v7027 = vadd.f32 %v6929, %v6985
        %v7028 = vadd.f32 %v6930, %v6987
        %v7029 = vadd.f32 %v6931, %v6989
        %v7030 = vadd.f32 %v6932, %v6991
        %v7031 = vadd.f32 %v6933, %v6993
        %v7032 = vadd.f32 %v6934, %v6995
        %v7033 = vadd.f32 %v6935, %v6997
        %v7034 = vadd.f32 %v6936, %v6999
        %v7035 = vadd.f32 %v6937, %v7001
        %v7036 = vadd.f32 %v6938, %v7003
        %v7037 = vadd.f32 %v6939, %v7005
        %s7038 = sld [smem:[#allocation5 + $0x49]]
        %v7039 = vstv %s7038
        %v7040 = vmul.f32 %v7039, %v4923
        %v7041 = vmul.f32 %v7039, %v4924
        %v7042 = vmul.f32 %v7039, %v4925
        %v7043 = vmul.f32 %v7039, %v4926
        %v7044 = vmul.f32 %v7039, %v4927
        %v7045 = vmul.f32 %v7039, %v4928
        %v7046 = vmul.f32 %v7039, %v4929
        %v7047 = vmul.f32 %v7039, %v4930
        %v7048 = vmul.f32 %v7039, %v4931
        %v7049 = vmul.f32 %v7039, %v4932
        %v7050 = vmul.f32 %v7039, %v4933
        %v7051 = vmul.f32 %v7039, %v4934
        %v7052 = vmul.f32 %v7039, %v4935
        %v7053 = vmul.f32 %v7039, %v4936
        %v7054 = vmul.f32 %v7039, %v4937
        %v7055 = vmul.f32 %v7039, %v4938
        %7072 = vrot.lane.b32.xlu0 %v7040, 125
        %v7073 = vpop.permute.xlu0 %7072
        %7074 = vrot.lane.b32.xlu0 %v7041, 125
        %v7075 = vpop.permute.xlu0 %7074
        %7076 = vrot.lane.b32.xlu0 %v7042, 125
        %v7077 = vpop.permute.xlu0 %7076
        %7078 = vrot.lane.b32.xlu0 %v7043, 125
        %v7079 = vpop.permute.xlu0 %7078
        %7080 = vrot.lane.b32.xlu0 %v7044, 125
        %v7081 = vpop.permute.xlu0 %7080
        %7082 = vrot.lane.b32.xlu0 %v7045, 125
        %v7083 = vpop.permute.xlu0 %7082
        %7084 = vrot.lane.b32.xlu0 %v7046, 125
        %v7085 = vpop.permute.xlu0 %7084
        %7086 = vrot.lane.b32.xlu0 %v7047, 125
        %v7087 = vpop.permute.xlu0 %7086
        %7088 = vrot.lane.b32.xlu0 %v7048, 125
        %v7089 = vpop.permute.xlu0 %7088
        %7090 = vrot.lane.b32.xlu0 %v7049, 125
        %v7091 = vpop.permute.xlu0 %7090
        %7092 = vrot.lane.b32.xlu0 %v7050, 125
        %v7093 = vpop.permute.xlu0 %7092
        %7094 = vrot.lane.b32.xlu0 %v7051, 125
        %v7095 = vpop.permute.xlu0 %7094
        %7096 = vrot.lane.b32.xlu0 %v7052, 125
        %v7097 = vpop.permute.xlu0 %7096
        %7098 = vrot.lane.b32.xlu0 %v7053, 125
        %v7099 = vpop.permute.xlu0 %7098
        %7100 = vrot.lane.b32.xlu0 %v7054, 125
        %v7101 = vpop.permute.xlu0 %7100
        %7102 = vrot.lane.b32.xlu0 %v7055, 125
        %v7103 = vpop.permute.xlu0 %7102
        %v7120 = vadd.f32 %v7022, %v7073
        %v7121 = vadd.f32 %v7023, %v7075
        %v7122 = vadd.f32 %v7024, %v7077
        %v7123 = vadd.f32 %v7025, %v7079
        %v7124 = vadd.f32 %v7026, %v7081
        %v7125 = vadd.f32 %v7027, %v7083
        %v7126 = vadd.f32 %v7028, %v7085
        %v7127 = vadd.f32 %v7029, %v7087
        %v7128 = vadd.f32 %v7030, %v7089
        %v7129 = vadd.f32 %v7031, %v7091
        %v7130 = vadd.f32 %v7032, %v7093
        %v7131 = vadd.f32 %v7033, %v7095
        %v7132 = vadd.f32 %v7034, %v7097
        %v7133 = vadd.f32 %v7035, %v7099
        %v7134 = vadd.f32 %v7036, %v7101
        %v7135 = vadd.f32 %v7037, %v7103
        %s7136 = sld [smem:[#allocation5 + $0x4a]]
        %v7137 = vstv %s7136
        %v7138 = vmul.f32 %v7137, %v4923
        %v7139 = vmul.f32 %v7137, %v4924
        %v7140 = vmul.f32 %v7137, %v4925
        %v7141 = vmul.f32 %v7137, %v4926
        %v7142 = vmul.f32 %v7137, %v4927
        %v7143 = vmul.f32 %v7137, %v4928
        %v7144 = vmul.f32 %v7137, %v4929
        %v7145 = vmul.f32 %v7137, %v4930
        %v7146 = vmul.f32 %v7137, %v4931
        %v7147 = vmul.f32 %v7137, %v4932
        %v7148 = vmul.f32 %v7137, %v4933
        %v7149 = vmul.f32 %v7137, %v4934
        %v7150 = vmul.f32 %v7137, %v4935
        %v7151 = vmul.f32 %v7137, %v4936
        %v7152 = vmul.f32 %v7137, %v4937
        %v7153 = vmul.f32 %v7137, %v4938
        %7170 = vrot.lane.b32.xlu0 %v7138, 124
        %v7171 = vpop.permute.xlu0 %7170
        %7172 = vrot.lane.b32.xlu0 %v7139, 124
        %v7173 = vpop.permute.xlu0 %7172
        %7174 = vrot.lane.b32.xlu0 %v7140, 124
        %v7175 = vpop.permute.xlu0 %7174
        %7176 = vrot.lane.b32.xlu0 %v7141, 124
        %v7177 = vpop.permute.xlu0 %7176
        %7178 = vrot.lane.b32.xlu0 %v7142, 124
        %v7179 = vpop.permute.xlu0 %7178
        %7180 = vrot.lane.b32.xlu0 %v7143, 124
        %v7181 = vpop.permute.xlu0 %7180
        %7182 = vrot.lane.b32.xlu0 %v7144, 124
        %v7183 = vpop.permute.xlu0 %7182
        %7184 = vrot.lane.b32.xlu0 %v7145, 124
        %v7185 = vpop.permute.xlu0 %7184
        %7186 = vrot.lane.b32.xlu0 %v7146, 124
        %v7187 = vpop.permute.xlu0 %7186
        %7188 = vrot.lane.b32.xlu0 %v7147, 124
        %v7189 = vpop.permute.xlu0 %7188
        %7190 = vrot.lane.b32.xlu0 %v7148, 124
        %v7191 = vpop.permute.xlu0 %7190
        %7192 = vrot.lane.b32.xlu0 %v7149, 124
        %v7193 = vpop.permute.xlu0 %7192
        %7194 = vrot.lane.b32.xlu0 %v7150, 124
        %v7195 = vpop.permute.xlu0 %7194
        %7196 = vrot.lane.b32.xlu0 %v7151, 124
        %v7197 = vpop.permute.xlu0 %7196
        %7198 = vrot.lane.b32.xlu0 %v7152, 124
        %v7199 = vpop.permute.xlu0 %7198
        %7200 = vrot.lane.b32.xlu0 %v7153, 124
        %v7201 = vpop.permute.xlu0 %7200
        %v7218 = vadd.f32 %v7120, %v7171
        %v7219 = vadd.f32 %v7121, %v7173
        %v7220 = vadd.f32 %v7122, %v7175
        %v7221 = vadd.f32 %v7123, %v7177
        %v7222 = vadd.f32 %v7124, %v7179
        %v7223 = vadd.f32 %v7125, %v7181
        %v7224 = vadd.f32 %v7126, %v7183
        %v7225 = vadd.f32 %v7127, %v7185
        %v7226 = vadd.f32 %v7128, %v7187
        %v7227 = vadd.f32 %v7129, %v7189
        %v7228 = vadd.f32 %v7130, %v7191
        %v7229 = vadd.f32 %v7131, %v7193
        %v7230 = vadd.f32 %v7132, %v7195
        %v7231 = vadd.f32 %v7133, %v7197
        %v7232 = vadd.f32 %v7134, %v7199
        %v7233 = vadd.f32 %v7135, %v7201
        %s7234 = sld [smem:[#allocation5 + $0x4b]]
        %v7235 = vstv %s7234
        %v7236 = vmul.f32 %v7235, %v4923
        %v7237 = vmul.f32 %v7235, %v4924
        %v7238 = vmul.f32 %v7235, %v4925
        %v7239 = vmul.f32 %v7235, %v4926
        %v7240 = vmul.f32 %v7235, %v4927
        %v7241 = vmul.f32 %v7235, %v4928
        %v7242 = vmul.f32 %v7235, %v4929
        %v7243 = vmul.f32 %v7235, %v4930
        %v7244 = vmul.f32 %v7235, %v4931
        %v7245 = vmul.f32 %v7235, %v4932
        %v7246 = vmul.f32 %v7235, %v4933
        %v7247 = vmul.f32 %v7235, %v4934
        %v7248 = vmul.f32 %v7235, %v4935
        %v7249 = vmul.f32 %v7235, %v4936
        %v7250 = vmul.f32 %v7235, %v4937
        %v7251 = vmul.f32 %v7235, %v4938
        %7268 = vrot.lane.b32.xlu0 %v7236, 123
        %v7269 = vpop.permute.xlu0 %7268
        %7270 = vrot.lane.b32.xlu0 %v7237, 123
        %v7271 = vpop.permute.xlu0 %7270
        %7272 = vrot.lane.b32.xlu0 %v7238, 123
        %v7273 = vpop.permute.xlu0 %7272
        %7274 = vrot.lane.b32.xlu0 %v7239, 123
        %v7275 = vpop.permute.xlu0 %7274
        %7276 = vrot.lane.b32.xlu0 %v7240, 123
        %v7277 = vpop.permute.xlu0 %7276
        %7278 = vrot.lane.b32.xlu0 %v7241, 123
        %v7279 = vpop.permute.xlu0 %7278
        %7280 = vrot.lane.b32.xlu0 %v7242, 123
        %v7281 = vpop.permute.xlu0 %7280
        %7282 = vrot.lane.b32.xlu0 %v7243, 123
        %v7283 = vpop.permute.xlu0 %7282
        %7284 = vrot.lane.b32.xlu0 %v7244, 123
        %v7285 = vpop.permute.xlu0 %7284
        %7286 = vrot.lane.b32.xlu0 %v7245, 123
        %v7287 = vpop.permute.xlu0 %7286
        %7288 = vrot.lane.b32.xlu0 %v7246, 123
        %v7289 = vpop.permute.xlu0 %7288
        %7290 = vrot.lane.b32.xlu0 %v7247, 123
        %v7291 = vpop.permute.xlu0 %7290
        %7292 = vrot.lane.b32.xlu0 %v7248, 123
        %v7293 = vpop.permute.xlu0 %7292
        %7294 = vrot.lane.b32.xlu0 %v7249, 123
        %v7295 = vpop.permute.xlu0 %7294
        %7296 = vrot.lane.b32.xlu0 %v7250, 123
        %v7297 = vpop.permute.xlu0 %7296
        %7298 = vrot.lane.b32.xlu0 %v7251, 123
        %v7299 = vpop.permute.xlu0 %7298
        %v7316 = vadd.f32 %v7218, %v7269
        %v7317 = vadd.f32 %v7219, %v7271
        %v7318 = vadd.f32 %v7220, %v7273
        %v7319 = vadd.f32 %v7221, %v7275
        %v7320 = vadd.f32 %v7222, %v7277
        %v7321 = vadd.f32 %v7223, %v7279
        %v7322 = vadd.f32 %v7224, %v7281
        %v7323 = vadd.f32 %v7225, %v7283
        %v7324 = vadd.f32 %v7226, %v7285
        %v7325 = vadd.f32 %v7227, %v7287
        %v7326 = vadd.f32 %v7228, %v7289
        %v7327 = vadd.f32 %v7229, %v7291
        %v7328 = vadd.f32 %v7230, %v7293
        %v7329 = vadd.f32 %v7231, %v7295
        %v7330 = vadd.f32 %v7232, %v7297
        %v7331 = vadd.f32 %v7233, %v7299
        %s7332 = sld [smem:[#allocation5 + $0x4c]]
        %v7333 = vstv %s7332
        %v7334 = vmul.f32 %v7333, %v4923
        %v7335 = vmul.f32 %v7333, %v4924
        %v7336 = vmul.f32 %v7333, %v4925
        %v7337 = vmul.f32 %v7333, %v4926
        %v7338 = vmul.f32 %v7333, %v4927
        %v7339 = vmul.f32 %v7333, %v4928
        %v7340 = vmul.f32 %v7333, %v4929
        %v7341 = vmul.f32 %v7333, %v4930
        %v7342 = vmul.f32 %v7333, %v4931
        %v7343 = vmul.f32 %v7333, %v4932
        %v7344 = vmul.f32 %v7333, %v4933
        %v7345 = vmul.f32 %v7333, %v4934
        %v7346 = vmul.f32 %v7333, %v4935
        %v7347 = vmul.f32 %v7333, %v4936
        %v7348 = vmul.f32 %v7333, %v4937
        %v7349 = vmul.f32 %v7333, %v4938
        %7366 = vrot.lane.b32.xlu0 %v7334, 122
        %v7367 = vpop.permute.xlu0 %7366
        %7368 = vrot.lane.b32.xlu0 %v7335, 122
        %v7369 = vpop.permute.xlu0 %7368
        %7370 = vrot.lane.b32.xlu0 %v7336, 122
        %v7371 = vpop.permute.xlu0 %7370
        %7372 = vrot.lane.b32.xlu0 %v7337, 122
        %v7373 = vpop.permute.xlu0 %7372
        %7374 = vrot.lane.b32.xlu0 %v7338, 122
        %v7375 = vpop.permute.xlu0 %7374
        %7376 = vrot.lane.b32.xlu0 %v7339, 122
        %v7377 = vpop.permute.xlu0 %7376
        %7378 = vrot.lane.b32.xlu0 %v7340, 122
        %v7379 = vpop.permute.xlu0 %7378
        %7380 = vrot.lane.b32.xlu0 %v7341, 122
        %v7381 = vpop.permute.xlu0 %7380
        %7382 = vrot.lane.b32.xlu0 %v7342, 122
        %v7383 = vpop.permute.xlu0 %7382
        %7384 = vrot.lane.b32.xlu0 %v7343, 122
        %v7385 = vpop.permute.xlu0 %7384
        %7386 = vrot.lane.b32.xlu0 %v7344, 122
        %v7387 = vpop.permute.xlu0 %7386
        %7388 = vrot.lane.b32.xlu0 %v7345, 122
        %v7389 = vpop.permute.xlu0 %7388
        %7390 = vrot.lane.b32.xlu0 %v7346, 122
        %v7391 = vpop.permute.xlu0 %7390
        %7392 = vrot.lane.b32.xlu0 %v7347, 122
        %v7393 = vpop.permute.xlu0 %7392
        %7394 = vrot.lane.b32.xlu0 %v7348, 122
        %v7395 = vpop.permute.xlu0 %7394
        %7396 = vrot.lane.b32.xlu0 %v7349, 122
        %v7397 = vpop.permute.xlu0 %7396
        %v7414 = vadd.f32 %v7316, %v7367
        %v7415 = vadd.f32 %v7317, %v7369
        %v7416 = vadd.f32 %v7318, %v7371
        %v7417 = vadd.f32 %v7319, %v7373
        %v7418 = vadd.f32 %v7320, %v7375
        %v7419 = vadd.f32 %v7321, %v7377
        %v7420 = vadd.f32 %v7322, %v7379
        %v7421 = vadd.f32 %v7323, %v7381
        %v7422 = vadd.f32 %v7324, %v7383
        %v7423 = vadd.f32 %v7325, %v7385
        %v7424 = vadd.f32 %v7326, %v7387
        %v7425 = vadd.f32 %v7327, %v7389
        %v7426 = vadd.f32 %v7328, %v7391
        %v7427 = vadd.f32 %v7329, %v7393
        %v7428 = vadd.f32 %v7330, %v7395
        %v7429 = vadd.f32 %v7331, %v7397
        %s7430 = sld [smem:[#allocation5 + $0x4d]]
        %v7431 = vstv %s7430
        %v7432 = vmul.f32 %v7431, %v4924
        %v7433 = vmul.f32 %v7431, %v4925
        %v7434 = vmul.f32 %v7431, %v4926
        %v7435 = vmul.f32 %v7431, %v4927
        %v7436 = vmul.f32 %v7431, %v4928
        %v7437 = vmul.f32 %v7431, %v4929
        %v7438 = vmul.f32 %v7431, %v4930
        %v7439 = vmul.f32 %v7431, %v4931
        %v7440 = vmul.f32 %v7431, %v4932
        %v7441 = vmul.f32 %v7431, %v4933
        %v7442 = vmul.f32 %v7431, %v4934
        %v7443 = vmul.f32 %v7431, %v4935
        %v7444 = vmul.f32 %v7431, %v4936
        %v7445 = vmul.f32 %v7431, %v4937
        %v7446 = vmul.f32 %v7431, %v4938
        %v7447 = vmul.f32 %v7431, %v4939
        %v7448 = vadd.f32 %v7414, %v7432
        %v7449 = vadd.f32 %v7415, %v7433
        %v7450 = vadd.f32 %v7416, %v7434
        %v7451 = vadd.f32 %v7417, %v7435
        %v7452 = vadd.f32 %v7418, %v7436
        %v7453 = vadd.f32 %v7419, %v7437
        %v7454 = vadd.f32 %v7420, %v7438
        %v7455 = vadd.f32 %v7421, %v7439
        %v7456 = vadd.f32 %v7422, %v7440
        %v7457 = vadd.f32 %v7423, %v7441
        %v7458 = vadd.f32 %v7424, %v7442
        %v7459 = vadd.f32 %v7425, %v7443
        %v7460 = vadd.f32 %v7426, %v7444
        %v7461 = vadd.f32 %v7427, %v7445
        %v7462 = vadd.f32 %v7428, %v7446
        %v7463 = vadd.f32 %v7429, %v7447
        %s7464 = sld [smem:[#allocation5 + $0x4e]]
        %v7465 = vstv %s7464
        %v7466 = vmul.f32 %v7465, %v4924
        %v7467 = vmul.f32 %v7465, %v4925
        %v7468 = vmul.f32 %v7465, %v4926
        %v7469 = vmul.f32 %v7465, %v4927
        %v7470 = vmul.f32 %v7465, %v4928
        %v7471 = vmul.f32 %v7465, %v4929
        %v7472 = vmul.f32 %v7465, %v4930
        %v7473 = vmul.f32 %v7465, %v4931
        %v7474 = vmul.f32 %v7465, %v4932
        %v7475 = vmul.f32 %v7465, %v4933
        %v7476 = vmul.f32 %v7465, %v4934
        %v7477 = vmul.f32 %v7465, %v4935
        %v7478 = vmul.f32 %v7465, %v4936
        %v7479 = vmul.f32 %v7465, %v4937
        %v7480 = vmul.f32 %v7465, %v4938
        %v7481 = vmul.f32 %v7465, %v4939
        %7498 = vrot.lane.b32.xlu0 %v7466, 127
        %v7499 = vpop.permute.xlu0 %7498
        %7500 = vrot.lane.b32.xlu0 %v7467, 127
        %v7501 = vpop.permute.xlu0 %7500
        %7502 = vrot.lane.b32.xlu0 %v7468, 127
        %v7503 = vpop.permute.xlu0 %7502
        %7504 = vrot.lane.b32.xlu0 %v7469, 127
        %v7505 = vpop.permute.xlu0 %7504
        %7506 = vrot.lane.b32.xlu0 %v7470, 127
        %v7507 = vpop.permute.xlu0 %7506
        %7508 = vrot.lane.b32.xlu0 %v7471, 127
        %v7509 = vpop.permute.xlu0 %7508
        %7510 = vrot.lane.b32.xlu0 %v7472, 127
        %v7511 = vpop.permute.xlu0 %7510
        %7512 = vrot.lane.b32.xlu0 %v7473, 127
        %v7513 = vpop.permute.xlu0 %7512
        %7514 = vrot.lane.b32.xlu0 %v7474, 127
        %v7515 = vpop.permute.xlu0 %7514
        %7516 = vrot.lane.b32.xlu0 %v7475, 127
        %v7517 = vpop.permute.xlu0 %7516
        %7518 = vrot.lane.b32.xlu0 %v7476, 127
        %v7519 = vpop.permute.xlu0 %7518
        %7520 = vrot.lane.b32.xlu0 %v7477, 127
        %v7521 = vpop.permute.xlu0 %7520
        %7522 = vrot.lane.b32.xlu0 %v7478, 127
        %v7523 = vpop.permute.xlu0 %7522
        %7524 = vrot.lane.b32.xlu0 %v7479, 127
        %v7525 = vpop.permute.xlu0 %7524
        %7526 = vrot.lane.b32.xlu0 %v7480, 127
        %v7527 = vpop.permute.xlu0 %7526
        %7528 = vrot.lane.b32.xlu0 %v7481, 127
        %v7529 = vpop.permute.xlu0 %7528
        %v7546 = vadd.f32 %v7448, %v7499
        %v7547 = vadd.f32 %v7449, %v7501
        %v7548 = vadd.f32 %v7450, %v7503
        %v7549 = vadd.f32 %v7451, %v7505
        %v7550 = vadd.f32 %v7452, %v7507
        %v7551 = vadd.f32 %v7453, %v7509
        %v7552 = vadd.f32 %v7454, %v7511
        %v7553 = vadd.f32 %v7455, %v7513
        %v7554 = vadd.f32 %v7456, %v7515
        %v7555 = vadd.f32 %v7457, %v7517
        %v7556 = vadd.f32 %v7458, %v7519
        %v7557 = vadd.f32 %v7459, %v7521
        %v7558 = vadd.f32 %v7460, %v7523
        %v7559 = vadd.f32 %v7461, %v7525
        %v7560 = vadd.f32 %v7462, %v7527
        %v7561 = vadd.f32 %v7463, %v7529
        %s7562 = sld [smem:[#allocation5 + $0x4f]]
        %v7563 = vstv %s7562
        %v7564 = vmul.f32 %v7563, %v4924
        %v7565 = vmul.f32 %v7563, %v4925
        %v7566 = vmul.f32 %v7563, %v4926
        %v7567 = vmul.f32 %v7563, %v4927
        %v7568 = vmul.f32 %v7563, %v4928
        %v7569 = vmul.f32 %v7563, %v4929
        %v7570 = vmul.f32 %v7563, %v4930
        %v7571 = vmul.f32 %v7563, %v4931
        %v7572 = vmul.f32 %v7563, %v4932
        %v7573 = vmul.f32 %v7563, %v4933
        %v7574 = vmul.f32 %v7563, %v4934
        %v7575 = vmul.f32 %v7563, %v4935
        %v7576 = vmul.f32 %v7563, %v4936
        %v7577 = vmul.f32 %v7563, %v4937
        %v7578 = vmul.f32 %v7563, %v4938
        %v7579 = vmul.f32 %v7563, %v4939
        %7596 = vrot.lane.b32.xlu0 %v7564, 126
        %v7597 = vpop.permute.xlu0 %7596
        %7598 = vrot.lane.b32.xlu0 %v7565, 126
        %v7599 = vpop.permute.xlu0 %7598
        %7600 = vrot.lane.b32.xlu0 %v7566, 126
        %v7601 = vpop.permute.xlu0 %7600
        %7602 = vrot.lane.b32.xlu0 %v7567, 126
        %v7603 = vpop.permute.xlu0 %7602
        %7604 = vrot.lane.b32.xlu0 %v7568, 126
        %v7605 = vpop.permute.xlu0 %7604
        %7606 = vrot.lane.b32.xlu0 %v7569, 126
        %v7607 = vpop.permute.xlu0 %7606
        %7608 = vrot.lane.b32.xlu0 %v7570, 126
        %v7609 = vpop.permute.xlu0 %7608
        %7610 = vrot.lane.b32.xlu0 %v7571, 126
        %v7611 = vpop.permute.xlu0 %7610
        %7612 = vrot.lane.b32.xlu0 %v7572, 126
        %v7613 = vpop.permute.xlu0 %7612
        %7614 = vrot.lane.b32.xlu0 %v7573, 126
        %v7615 = vpop.permute.xlu0 %7614
        %7616 = vrot.lane.b32.xlu0 %v7574, 126
        %v7617 = vpop.permute.xlu0 %7616
        %7618 = vrot.lane.b32.xlu0 %v7575, 126
        %v7619 = vpop.permute.xlu0 %7618
        %7620 = vrot.lane.b32.xlu0 %v7576, 126
        %v7621 = vpop.permute.xlu0 %7620
        %7622 = vrot.lane.b32.xlu0 %v7577, 126
        %v7623 = vpop.permute.xlu0 %7622
        %7624 = vrot.lane.b32.xlu0 %v7578, 126
        %v7625 = vpop.permute.xlu0 %7624
        %7626 = vrot.lane.b32.xlu0 %v7579, 126
        %v7627 = vpop.permute.xlu0 %7626
        %v7644 = vadd.f32 %v7546, %v7597
        %v7645 = vadd.f32 %v7547, %v7599
        %v7646 = vadd.f32 %v7548, %v7601
        %v7647 = vadd.f32 %v7549, %v7603
        %v7648 = vadd.f32 %v7550, %v7605
        %v7649 = vadd.f32 %v7551, %v7607
        %v7650 = vadd.f32 %v7552, %v7609
        %v7651 = vadd.f32 %v7553, %v7611
        %v7652 = vadd.f32 %v7554, %v7613
        %v7653 = vadd.f32 %v7555, %v7615
        %v7654 = vadd.f32 %v7556, %v7617
        %v7655 = vadd.f32 %v7557, %v7619
        %v7656 = vadd.f32 %v7558, %v7621
        %v7657 = vadd.f32 %v7559, %v7623
        %v7658 = vadd.f32 %v7560, %v7625
        %v7659 = vadd.f32 %v7561, %v7627
        %s7660 = sld [smem:[#allocation5 + $0x50]]
        %v7661 = vstv %s7660
        %v7662 = vmul.f32 %v7661, %v4924
        %v7663 = vmul.f32 %v7661, %v4925
        %v7664 = vmul.f32 %v7661, %v4926
        %v7665 = vmul.f32 %v7661, %v4927
        %v7666 = vmul.f32 %v7661, %v4928
        %v7667 = vmul.f32 %v7661, %v4929
        %v7668 = vmul.f32 %v7661, %v4930
        %v7669 = vmul.f32 %v7661, %v4931
        %v7670 = vmul.f32 %v7661, %v4932
        %v7671 = vmul.f32 %v7661, %v4933
        %v7672 = vmul.f32 %v7661, %v4934
        %v7673 = vmul.f32 %v7661, %v4935
        %v7674 = vmul.f32 %v7661, %v4936
        %v7675 = vmul.f32 %v7661, %v4937
        %v7676 = vmul.f32 %v7661, %v4938
        %v7677 = vmul.f32 %v7661, %v4939
        %7694 = vrot.lane.b32.xlu0 %v7662, 125
        %v7695 = vpop.permute.xlu0 %7694
        %7696 = vrot.lane.b32.xlu0 %v7663, 125
        %v7697 = vpop.permute.xlu0 %7696
        %7698 = vrot.lane.b32.xlu0 %v7664, 125
        %v7699 = vpop.permute.xlu0 %7698
        %7700 = vrot.lane.b32.xlu0 %v7665, 125
        %v7701 = vpop.permute.xlu0 %7700
        %7702 = vrot.lane.b32.xlu0 %v7666, 125
        %v7703 = vpop.permute.xlu0 %7702
        %7704 = vrot.lane.b32.xlu0 %v7667, 125
        %v7705 = vpop.permute.xlu0 %7704
        %7706 = vrot.lane.b32.xlu0 %v7668, 125
        %v7707 = vpop.permute.xlu0 %7706
        %7708 = vrot.lane.b32.xlu0 %v7669, 125
        %v7709 = vpop.permute.xlu0 %7708
        %7710 = vrot.lane.b32.xlu0 %v7670, 125
        %v7711 = vpop.permute.xlu0 %7710
        %7712 = vrot.lane.b32.xlu0 %v7671, 125
        %v7713 = vpop.permute.xlu0 %7712
        %7714 = vrot.lane.b32.xlu0 %v7672, 125
        %v7715 = vpop.permute.xlu0 %7714
        %7716 = vrot.lane.b32.xlu0 %v7673, 125
        %v7717 = vpop.permute.xlu0 %7716
        %7718 = vrot.lane.b32.xlu0 %v7674, 125
        %v7719 = vpop.permute.xlu0 %7718
        %7720 = vrot.lane.b32.xlu0 %v7675, 125
        %v7721 = vpop.permute.xlu0 %7720
        %7722 = vrot.lane.b32.xlu0 %v7676, 125
        %v7723 = vpop.permute.xlu0 %7722
        %7724 = vrot.lane.b32.xlu0 %v7677, 125
        %v7725 = vpop.permute.xlu0 %7724
        %v7742 = vadd.f32 %v7644, %v7695
        %v7743 = vadd.f32 %v7645, %v7697
        %v7744 = vadd.f32 %v7646, %v7699
        %v7745 = vadd.f32 %v7647, %v7701
        %v7746 = vadd.f32 %v7648, %v7703
        %v7747 = vadd.f32 %v7649, %v7705
        %v7748 = vadd.f32 %v7650, %v7707
        %v7749 = vadd.f32 %v7651, %v7709
        %v7750 = vadd.f32 %v7652, %v7711
        %v7751 = vadd.f32 %v7653, %v7713
        %v7752 = vadd.f32 %v7654, %v7715
        %v7753 = vadd.f32 %v7655, %v7717
        %v7754 = vadd.f32 %v7656, %v7719
        %v7755 = vadd.f32 %v7657, %v7721
        %v7756 = vadd.f32 %v7658, %v7723
        %v7757 = vadd.f32 %v7659, %v7725
        %s7758 = sld [smem:[#allocation5 + $0x51]]
        %v7759 = vstv %s7758
        %v7760 = vmul.f32 %v7759, %v4924
        %v7761 = vmul.f32 %v7759, %v4925
        %v7762 = vmul.f32 %v7759, %v4926
        %v7763 = vmul.f32 %v7759, %v4927
        %v7764 = vmul.f32 %v7759, %v4928
        %v7765 = vmul.f32 %v7759, %v4929
        %v7766 = vmul.f32 %v7759, %v4930
        %v7767 = vmul.f32 %v7759, %v4931
        %v7768 = vmul.f32 %v7759, %v4932
        %v7769 = vmul.f32 %v7759, %v4933
        %v7770 = vmul.f32 %v7759, %v4934
        %v7771 = vmul.f32 %v7759, %v4935
        %v7772 = vmul.f32 %v7759, %v4936
        %v7773 = vmul.f32 %v7759, %v4937
        %v7774 = vmul.f32 %v7759, %v4938
        %v7775 = vmul.f32 %v7759, %v4939
        %7792 = vrot.lane.b32.xlu0 %v7760, 124
        %v7793 = vpop.permute.xlu0 %7792
        %7794 = vrot.lane.b32.xlu0 %v7761, 124
        %v7795 = vpop.permute.xlu0 %7794
        %7796 = vrot.lane.b32.xlu0 %v7762, 124
        %v7797 = vpop.permute.xlu0 %7796
        %7798 = vrot.lane.b32.xlu0 %v7763, 124
        %v7799 = vpop.permute.xlu0 %7798
        %7800 = vrot.lane.b32.xlu0 %v7764, 124
        %v7801 = vpop.permute.xlu0 %7800
        %7802 = vrot.lane.b32.xlu0 %v7765, 124
        %v7803 = vpop.permute.xlu0 %7802
        %7804 = vrot.lane.b32.xlu0 %v7766, 124
        %v7805 = vpop.permute.xlu0 %7804
        %7806 = vrot.lane.b32.xlu0 %v7767, 124
        %v7807 = vpop.permute.xlu0 %7806
        %7808 = vrot.lane.b32.xlu0 %v7768, 124
        %v7809 = vpop.permute.xlu0 %7808
        %7810 = vrot.lane.b32.xlu0 %v7769, 124
        %v7811 = vpop.permute.xlu0 %7810
        %7812 = vrot.lane.b32.xlu0 %v7770, 124
        %v7813 = vpop.permute.xlu0 %7812
        %7814 = vrot.lane.b32.xlu0 %v7771, 124
        %v7815 = vpop.permute.xlu0 %7814
        %7816 = vrot.lane.b32.xlu0 %v7772, 124
        %v7817 = vpop.permute.xlu0 %7816
        %7818 = vrot.lane.b32.xlu0 %v7773, 124
        %v7819 = vpop.permute.xlu0 %7818
        %7820 = vrot.lane.b32.xlu0 %v7774, 124
        %v7821 = vpop.permute.xlu0 %7820
        %7822 = vrot.lane.b32.xlu0 %v7775, 124
        %v7823 = vpop.permute.xlu0 %7822
        %v7840 = vadd.f32 %v7742, %v7793
        %v7841 = vadd.f32 %v7743, %v7795
        %v7842 = vadd.f32 %v7744, %v7797
        %v7843 = vadd.f32 %v7745, %v7799
        %v7844 = vadd.f32 %v7746, %v7801
        %v7845 = vadd.f32 %v7747, %v7803
        %v7846 = vadd.f32 %v7748, %v7805
        %v7847 = vadd.f32 %v7749, %v7807
        %v7848 = vadd.f32 %v7750, %v7809
        %v7849 = vadd.f32 %v7751, %v7811
        %v7850 = vadd.f32 %v7752, %v7813
        %v7851 = vadd.f32 %v7753, %v7815
        %v7852 = vadd.f32 %v7754, %v7817
        %v7853 = vadd.f32 %v7755, %v7819
        %v7854 = vadd.f32 %v7756, %v7821
        %v7855 = vadd.f32 %v7757, %v7823
        %s7856 = sld [smem:[#allocation5 + $0x52]]
        %v7857 = vstv %s7856
        %v7858 = vmul.f32 %v7857, %v4924
        %v7859 = vmul.f32 %v7857, %v4925
        %v7860 = vmul.f32 %v7857, %v4926
        %v7861 = vmul.f32 %v7857, %v4927
        %v7862 = vmul.f32 %v7857, %v4928
        %v7863 = vmul.f32 %v7857, %v4929
        %v7864 = vmul.f32 %v7857, %v4930
        %v7865 = vmul.f32 %v7857, %v4931
        %v7866 = vmul.f32 %v7857, %v4932
        %v7867 = vmul.f32 %v7857, %v4933
        %v7868 = vmul.f32 %v7857, %v4934
        %v7869 = vmul.f32 %v7857, %v4935
        %v7870 = vmul.f32 %v7857, %v4936
        %v7871 = vmul.f32 %v7857, %v4937
        %v7872 = vmul.f32 %v7857, %v4938
        %v7873 = vmul.f32 %v7857, %v4939
        %7890 = vrot.lane.b32.xlu0 %v7858, 123
        %v7891 = vpop.permute.xlu0 %7890
        %7892 = vrot.lane.b32.xlu0 %v7859, 123
        %v7893 = vpop.permute.xlu0 %7892
        %7894 = vrot.lane.b32.xlu0 %v7860, 123
        %v7895 = vpop.permute.xlu0 %7894
        %7896 = vrot.lane.b32.xlu0 %v7861, 123
        %v7897 = vpop.permute.xlu0 %7896
        %7898 = vrot.lane.b32.xlu0 %v7862, 123
        %v7899 = vpop.permute.xlu0 %7898
        %7900 = vrot.lane.b32.xlu0 %v7863, 123
        %v7901 = vpop.permute.xlu0 %7900
        %7902 = vrot.lane.b32.xlu0 %v7864, 123
        %v7903 = vpop.permute.xlu0 %7902
        %7904 = vrot.lane.b32.xlu0 %v7865, 123
        %v7905 = vpop.permute.xlu0 %7904
        %7906 = vrot.lane.b32.xlu0 %v7866, 123
        %v7907 = vpop.permute.xlu0 %7906
        %7908 = vrot.lane.b32.xlu0 %v7867, 123
        %v7909 = vpop.permute.xlu0 %7908
        %7910 = vrot.lane.b32.xlu0 %v7868, 123
        %v7911 = vpop.permute.xlu0 %7910
        %7912 = vrot.lane.b32.xlu0 %v7869, 123
        %v7913 = vpop.permute.xlu0 %7912
        %7914 = vrot.lane.b32.xlu0 %v7870, 123
        %v7915 = vpop.permute.xlu0 %7914
        %7916 = vrot.lane.b32.xlu0 %v7871, 123
        %v7917 = vpop.permute.xlu0 %7916
        %7918 = vrot.lane.b32.xlu0 %v7872, 123
        %v7919 = vpop.permute.xlu0 %7918
        %7920 = vrot.lane.b32.xlu0 %v7873, 123
        %v7921 = vpop.permute.xlu0 %7920
        %v7938 = vadd.f32 %v7840, %v7891
        %v7939 = vadd.f32 %v7841, %v7893
        %v7940 = vadd.f32 %v7842, %v7895
        %v7941 = vadd.f32 %v7843, %v7897
        %v7942 = vadd.f32 %v7844, %v7899
        %v7943 = vadd.f32 %v7845, %v7901
        %v7944 = vadd.f32 %v7846, %v7903
        %v7945 = vadd.f32 %v7847, %v7905
        %v7946 = vadd.f32 %v7848, %v7907
        %v7947 = vadd.f32 %v7849, %v7909
        %v7948 = vadd.f32 %v7850, %v7911
        %v7949 = vadd.f32 %v7851, %v7913
        %v7950 = vadd.f32 %v7852, %v7915
        %v7951 = vadd.f32 %v7853, %v7917
        %v7952 = vadd.f32 %v7854, %v7919
        %v7953 = vadd.f32 %v7855, %v7921
        %s7954 = sld [smem:[#allocation5 + $0x53]]
        %v7955 = vstv %s7954
        %v7956 = vmul.f32 %v7955, %v4924
        %v7957 = vmul.f32 %v7955, %v4925
        %v7958 = vmul.f32 %v7955, %v4926
        %v7959 = vmul.f32 %v7955, %v4927
        %v7960 = vmul.f32 %v7955, %v4928
        %v7961 = vmul.f32 %v7955, %v4929
        %v7962 = vmul.f32 %v7955, %v4930
        %v7963 = vmul.f32 %v7955, %v4931
        %v7964 = vmul.f32 %v7955, %v4932
        %v7965 = vmul.f32 %v7955, %v4933
        %v7966 = vmul.f32 %v7955, %v4934
        %v7967 = vmul.f32 %v7955, %v4935
        %v7968 = vmul.f32 %v7955, %v4936
        %v7969 = vmul.f32 %v7955, %v4937
        %v7970 = vmul.f32 %v7955, %v4938
        %v7971 = vmul.f32 %v7955, %v4939
        %7988 = vrot.lane.b32.xlu0 %v7956, 122
        %v7989 = vpop.permute.xlu0 %7988
        %7990 = vrot.lane.b32.xlu0 %v7957, 122
        %v7991 = vpop.permute.xlu0 %7990
        %7992 = vrot.lane.b32.xlu0 %v7958, 122
        %v7993 = vpop.permute.xlu0 %7992
        %7994 = vrot.lane.b32.xlu0 %v7959, 122
        %v7995 = vpop.permute.xlu0 %7994
        %7996 = vrot.lane.b32.xlu0 %v7960, 122
        %v7997 = vpop.permute.xlu0 %7996
        %7998 = vrot.lane.b32.xlu0 %v7961, 122
        %v7999 = vpop.permute.xlu0 %7998
        %8000 = vrot.lane.b32.xlu0 %v7962, 122
        %v8001 = vpop.permute.xlu0 %8000
        %8002 = vrot.lane.b32.xlu0 %v7963, 122
        %v8003 = vpop.permute.xlu0 %8002
        %8004 = vrot.lane.b32.xlu0 %v7964, 122
        %v8005 = vpop.permute.xlu0 %8004
        %8006 = vrot.lane.b32.xlu0 %v7965, 122
        %v8007 = vpop.permute.xlu0 %8006
        %8008 = vrot.lane.b32.xlu0 %v7966, 122
        %v8009 = vpop.permute.xlu0 %8008
        %8010 = vrot.lane.b32.xlu0 %v7967, 122
        %v8011 = vpop.permute.xlu0 %8010
        %8012 = vrot.lane.b32.xlu0 %v7968, 122
        %v8013 = vpop.permute.xlu0 %8012
        %8014 = vrot.lane.b32.xlu0 %v7969, 122
        %v8015 = vpop.permute.xlu0 %8014
        %8016 = vrot.lane.b32.xlu0 %v7970, 122
        %v8017 = vpop.permute.xlu0 %8016
        %8018 = vrot.lane.b32.xlu0 %v7971, 122
        %v8019 = vpop.permute.xlu0 %8018
        %v8036 = vadd.f32 %v7938, %v7989
        %v8037 = vadd.f32 %v7939, %v7991
        %v8038 = vadd.f32 %v7940, %v7993
        %v8039 = vadd.f32 %v7941, %v7995
        %v8040 = vadd.f32 %v7942, %v7997
        %v8041 = vadd.f32 %v7943, %v7999
        %v8042 = vadd.f32 %v7944, %v8001
        %v8043 = vadd.f32 %v7945, %v8003
        %v8044 = vadd.f32 %v7946, %v8005
        %v8045 = vadd.f32 %v7947, %v8007
        %v8046 = vadd.f32 %v7948, %v8009
        %v8047 = vadd.f32 %v7949, %v8011
        %v8048 = vadd.f32 %v7950, %v8013
        %v8049 = vadd.f32 %v7951, %v8015
        %v8050 = vadd.f32 %v7952, %v8017
        %v8051 = vadd.f32 %v7953, %v8019
        %s8052 = sld [smem:[#allocation5 + $0x54]]
        %v8053 = vstv %s8052
        %v8054 = vmul.f32 %v8053, %v4925
        %v8055 = vmul.f32 %v8053, %v4926
        %v8056 = vmul.f32 %v8053, %v4927
        %v8057 = vmul.f32 %v8053, %v4928
        %v8058 = vmul.f32 %v8053, %v4929
        %v8059 = vmul.f32 %v8053, %v4930
        %v8060 = vmul.f32 %v8053, %v4931
        %v8061 = vmul.f32 %v8053, %v4932
        %v8062 = vmul.f32 %v8053, %v4933
        %v8063 = vmul.f32 %v8053, %v4934
        %v8064 = vmul.f32 %v8053, %v4935
        %v8065 = vmul.f32 %v8053, %v4936
        %v8066 = vmul.f32 %v8053, %v4937
        %v8067 = vmul.f32 %v8053, %v4938
        %v8068 = vmul.f32 %v8053, %v4939
        %v8069 = vmul.f32 %v8053, %v4940
        %v8070 = vadd.f32 %v8036, %v8054
        %v8071 = vadd.f32 %v8037, %v8055
        %v8072 = vadd.f32 %v8038, %v8056
        %v8073 = vadd.f32 %v8039, %v8057
        %v8074 = vadd.f32 %v8040, %v8058
        %v8075 = vadd.f32 %v8041, %v8059
        %v8076 = vadd.f32 %v8042, %v8060
        %v8077 = vadd.f32 %v8043, %v8061
        %v8078 = vadd.f32 %v8044, %v8062
        %v8079 = vadd.f32 %v8045, %v8063
        %v8080 = vadd.f32 %v8046, %v8064
        %v8081 = vadd.f32 %v8047, %v8065
        %v8082 = vadd.f32 %v8048, %v8066
        %v8083 = vadd.f32 %v8049, %v8067
        %v8084 = vadd.f32 %v8050, %v8068
        %v8085 = vadd.f32 %v8051, %v8069
        %s8086 = sld [smem:[#allocation5 + $0x55]]
        %v8087 = vstv %s8086
        %v8088 = vmul.f32 %v8087, %v4925
        %v8089 = vmul.f32 %v8087, %v4926
        %v8090 = vmul.f32 %v8087, %v4927
        %v8091 = vmul.f32 %v8087, %v4928
        %v8092 = vmul.f32 %v8087, %v4929
        %v8093 = vmul.f32 %v8087, %v4930
        %v8094 = vmul.f32 %v8087, %v4931
        %v8095 = vmul.f32 %v8087, %v4932
        %v8096 = vmul.f32 %v8087, %v4933
        %v8097 = vmul.f32 %v8087, %v4934
        %v8098 = vmul.f32 %v8087, %v4935
        %v8099 = vmul.f32 %v8087, %v4936
        %v8100 = vmul.f32 %v8087, %v4937
        %v8101 = vmul.f32 %v8087, %v4938
        %v8102 = vmul.f32 %v8087, %v4939
        %v8103 = vmul.f32 %v8087, %v4940
        %8120 = vrot.lane.b32.xlu0 %v8088, 127
        %v8121 = vpop.permute.xlu0 %8120
        %8122 = vrot.lane.b32.xlu0 %v8089, 127
        %v8123 = vpop.permute.xlu0 %8122
        %8124 = vrot.lane.b32.xlu0 %v8090, 127
        %v8125 = vpop.permute.xlu0 %8124
        %8126 = vrot.lane.b32.xlu0 %v8091, 127
        %v8127 = vpop.permute.xlu0 %8126
        %8128 = vrot.lane.b32.xlu0 %v8092, 127
        %v8129 = vpop.permute.xlu0 %8128
        %8130 = vrot.lane.b32.xlu0 %v8093, 127
        %v8131 = vpop.permute.xlu0 %8130
        %8132 = vrot.lane.b32.xlu0 %v8094, 127
        %v8133 = vpop.permute.xlu0 %8132
        %8134 = vrot.lane.b32.xlu0 %v8095, 127
        %v8135 = vpop.permute.xlu0 %8134
        %8136 = vrot.lane.b32.xlu0 %v8096, 127
        %v8137 = vpop.permute.xlu0 %8136
        %8138 = vrot.lane.b32.xlu0 %v8097, 127
        %v8139 = vpop.permute.xlu0 %8138
        %8140 = vrot.lane.b32.xlu0 %v8098, 127
        %v8141 = vpop.permute.xlu0 %8140
        %8142 = vrot.lane.b32.xlu0 %v8099, 127
        %v8143 = vpop.permute.xlu0 %8142
        %8144 = vrot.lane.b32.xlu0 %v8100, 127
        %v8145 = vpop.permute.xlu0 %8144
        %8146 = vrot.lane.b32.xlu0 %v8101, 127
        %v8147 = vpop.permute.xlu0 %8146
        %8148 = vrot.lane.b32.xlu0 %v8102, 127
        %v8149 = vpop.permute.xlu0 %8148
        %8150 = vrot.lane.b32.xlu0 %v8103, 127
        %v8151 = vpop.permute.xlu0 %8150
        %v8168 = vadd.f32 %v8070, %v8121
        %v8169 = vadd.f32 %v8071, %v8123
        %v8170 = vadd.f32 %v8072, %v8125
        %v8171 = vadd.f32 %v8073, %v8127
        %v8172 = vadd.f32 %v8074, %v8129
        %v8173 = vadd.f32 %v8075, %v8131
        %v8174 = vadd.f32 %v8076, %v8133
        %v8175 = vadd.f32 %v8077, %v8135
        %v8176 = vadd.f32 %v8078, %v8137
        %v8177 = vadd.f32 %v8079, %v8139
        %v8178 = vadd.f32 %v8080, %v8141
        %v8179 = vadd.f32 %v8081, %v8143
        %v8180 = vadd.f32 %v8082, %v8145
        %v8181 = vadd.f32 %v8083, %v8147
        %v8182 = vadd.f32 %v8084, %v8149
        %v8183 = vadd.f32 %v8085, %v8151
        %s8184 = sld [smem:[#allocation5 + $0x56]]
        %v8185 = vstv %s8184
        %v8186 = vmul.f32 %v8185, %v4925
        %v8187 = vmul.f32 %v8185, %v4926
        %v8188 = vmul.f32 %v8185, %v4927
        %v8189 = vmul.f32 %v8185, %v4928
        %v8190 = vmul.f32 %v8185, %v4929
        %v8191 = vmul.f32 %v8185, %v4930
        %v8192 = vmul.f32 %v8185, %v4931
        %v8193 = vmul.f32 %v8185, %v4932
        %v8194 = vmul.f32 %v8185, %v4933
        %v8195 = vmul.f32 %v8185, %v4934
        %v8196 = vmul.f32 %v8185, %v4935
        %v8197 = vmul.f32 %v8185, %v4936
        %v8198 = vmul.f32 %v8185, %v4937
        %v8199 = vmul.f32 %v8185, %v4938
        %v8200 = vmul.f32 %v8185, %v4939
        %v8201 = vmul.f32 %v8185, %v4940
        %8218 = vrot.lane.b32.xlu0 %v8186, 126
        %v8219 = vpop.permute.xlu0 %8218
        %8220 = vrot.lane.b32.xlu0 %v8187, 126
        %v8221 = vpop.permute.xlu0 %8220
        %8222 = vrot.lane.b32.xlu0 %v8188, 126
        %v8223 = vpop.permute.xlu0 %8222
        %8224 = vrot.lane.b32.xlu0 %v8189, 126
        %v8225 = vpop.permute.xlu0 %8224
        %8226 = vrot.lane.b32.xlu0 %v8190, 126
        %v8227 = vpop.permute.xlu0 %8226
        %8228 = vrot.lane.b32.xlu0 %v8191, 126
        %v8229 = vpop.permute.xlu0 %8228
        %8230 = vrot.lane.b32.xlu0 %v8192, 126
        %v8231 = vpop.permute.xlu0 %8230
        %8232 = vrot.lane.b32.xlu0 %v8193, 126
        %v8233 = vpop.permute.xlu0 %8232
        %8234 = vrot.lane.b32.xlu0 %v8194, 126
        %v8235 = vpop.permute.xlu0 %8234
        %8236 = vrot.lane.b32.xlu0 %v8195, 126
        %v8237 = vpop.permute.xlu0 %8236
        %8238 = vrot.lane.b32.xlu0 %v8196, 126
        %v8239 = vpop.permute.xlu0 %8238
        %8240 = vrot.lane.b32.xlu0 %v8197, 126
        %v8241 = vpop.permute.xlu0 %8240
        %8242 = vrot.lane.b32.xlu0 %v8198, 126
        %v8243 = vpop.permute.xlu0 %8242
        %8244 = vrot.lane.b32.xlu0 %v8199, 126
        %v8245 = vpop.permute.xlu0 %8244
        %8246 = vrot.lane.b32.xlu0 %v8200, 126
        %v8247 = vpop.permute.xlu0 %8246
        %8248 = vrot.lane.b32.xlu0 %v8201, 126
        %v8249 = vpop.permute.xlu0 %8248
        %v8266 = vadd.f32 %v8168, %v8219
        %v8267 = vadd.f32 %v8169, %v8221
        %v8268 = vadd.f32 %v8170, %v8223
        %v8269 = vadd.f32 %v8171, %v8225
        %v8270 = vadd.f32 %v8172, %v8227
        %v8271 = vadd.f32 %v8173, %v8229
        %v8272 = vadd.f32 %v8174, %v8231
        %v8273 = vadd.f32 %v8175, %v8233
        %v8274 = vadd.f32 %v8176, %v8235
        %v8275 = vadd.f32 %v8177, %v8237
        %v8276 = vadd.f32 %v8178, %v8239
        %v8277 = vadd.f32 %v8179, %v8241
        %v8278 = vadd.f32 %v8180, %v8243
        %v8279 = vadd.f32 %v8181, %v8245
        %v8280 = vadd.f32 %v8182, %v8247
        %v8281 = vadd.f32 %v8183, %v8249
        %s8282 = sld [smem:[#allocation5 + $0x57]]
        %v8283 = vstv %s8282
        %v8284 = vmul.f32 %v8283, %v4925
        %v8285 = vmul.f32 %v8283, %v4926
        %v8286 = vmul.f32 %v8283, %v4927
        %v8287 = vmul.f32 %v8283, %v4928
        %v8288 = vmul.f32 %v8283, %v4929
        %v8289 = vmul.f32 %v8283, %v4930
        %v8290 = vmul.f32 %v8283, %v4931
        %v8291 = vmul.f32 %v8283, %v4932
        %v8292 = vmul.f32 %v8283, %v4933
        %v8293 = vmul.f32 %v8283, %v4934
        %v8294 = vmul.f32 %v8283, %v4935
        %v8295 = vmul.f32 %v8283, %v4936
        %v8296 = vmul.f32 %v8283, %v4937
        %v8297 = vmul.f32 %v8283, %v4938
        %v8298 = vmul.f32 %v8283, %v4939
        %v8299 = vmul.f32 %v8283, %v4940
        %8316 = vrot.lane.b32.xlu0 %v8284, 125
        %v8317 = vpop.permute.xlu0 %8316
        %8318 = vrot.lane.b32.xlu0 %v8285, 125
        %v8319 = vpop.permute.xlu0 %8318
        %8320 = vrot.lane.b32.xlu0 %v8286, 125
        %v8321 = vpop.permute.xlu0 %8320
        %8322 = vrot.lane.b32.xlu0 %v8287, 125
        %v8323 = vpop.permute.xlu0 %8322
        %8324 = vrot.lane.b32.xlu0 %v8288, 125
        %v8325 = vpop.permute.xlu0 %8324
        %8326 = vrot.lane.b32.xlu0 %v8289, 125
        %v8327 = vpop.permute.xlu0 %8326
        %8328 = vrot.lane.b32.xlu0 %v8290, 125
        %v8329 = vpop.permute.xlu0 %8328
        %8330 = vrot.lane.b32.xlu0 %v8291, 125
        %v8331 = vpop.permute.xlu0 %8330
        %8332 = vrot.lane.b32.xlu0 %v8292, 125
        %v8333 = vpop.permute.xlu0 %8332
        %8334 = vrot.lane.b32.xlu0 %v8293, 125
        %v8335 = vpop.permute.xlu0 %8334
        %8336 = vrot.lane.b32.xlu0 %v8294, 125
        %v8337 = vpop.permute.xlu0 %8336
        %8338 = vrot.lane.b32.xlu0 %v8295, 125
        %v8339 = vpop.permute.xlu0 %8338
        %8340 = vrot.lane.b32.xlu0 %v8296, 125
        %v8341 = vpop.permute.xlu0 %8340
        %8342 = vrot.lane.b32.xlu0 %v8297, 125
        %v8343 = vpop.permute.xlu0 %8342
        %8344 = vrot.lane.b32.xlu0 %v8298, 125
        %v8345 = vpop.permute.xlu0 %8344
        %8346 = vrot.lane.b32.xlu0 %v8299, 125
        %v8347 = vpop.permute.xlu0 %8346
        %v8364 = vadd.f32 %v8266, %v8317
        %v8365 = vadd.f32 %v8267, %v8319
        %v8366 = vadd.f32 %v8268, %v8321
        %v8367 = vadd.f32 %v8269, %v8323
        %v8368 = vadd.f32 %v8270, %v8325
        %v8369 = vadd.f32 %v8271, %v8327
        %v8370 = vadd.f32 %v8272, %v8329
        %v8371 = vadd.f32 %v8273, %v8331
        %v8372 = vadd.f32 %v8274, %v8333
        %v8373 = vadd.f32 %v8275, %v8335
        %v8374 = vadd.f32 %v8276, %v8337
        %v8375 = vadd.f32 %v8277, %v8339
        %v8376 = vadd.f32 %v8278, %v8341
        %v8377 = vadd.f32 %v8279, %v8343
        %v8378 = vadd.f32 %v8280, %v8345
        %v8379 = vadd.f32 %v8281, %v8347
        %s8380 = sld [smem:[#allocation5 + $0x58]]
        %v8381 = vstv %s8380
        %v8382 = vmul.f32 %v8381, %v4925
        %v8383 = vmul.f32 %v8381, %v4926
        %v8384 = vmul.f32 %v8381, %v4927
        %v8385 = vmul.f32 %v8381, %v4928
        %v8386 = vmul.f32 %v8381, %v4929
        %v8387 = vmul.f32 %v8381, %v4930
        %v8388 = vmul.f32 %v8381, %v4931
        %v8389 = vmul.f32 %v8381, %v4932
        %v8390 = vmul.f32 %v8381, %v4933
        %v8391 = vmul.f32 %v8381, %v4934
        %v8392 = vmul.f32 %v8381, %v4935
        %v8393 = vmul.f32 %v8381, %v4936
        %v8394 = vmul.f32 %v8381, %v4937
        %v8395 = vmul.f32 %v8381, %v4938
        %v8396 = vmul.f32 %v8381, %v4939
        %v8397 = vmul.f32 %v8381, %v4940
        %8414 = vrot.lane.b32.xlu0 %v8382, 124
        %v8415 = vpop.permute.xlu0 %8414
        %8416 = vrot.lane.b32.xlu0 %v8383, 124
        %v8417 = vpop.permute.xlu0 %8416
        %8418 = vrot.lane.b32.xlu0 %v8384, 124
        %v8419 = vpop.permute.xlu0 %8418
        %8420 = vrot.lane.b32.xlu0 %v8385, 124
        %v8421 = vpop.permute.xlu0 %8420
        %8422 = vrot.lane.b32.xlu0 %v8386, 124
        %v8423 = vpop.permute.xlu0 %8422
        %8424 = vrot.lane.b32.xlu0 %v8387, 124
        %v8425 = vpop.permute.xlu0 %8424
        %8426 = vrot.lane.b32.xlu0 %v8388, 124
        %v8427 = vpop.permute.xlu0 %8426
        %8428 = vrot.lane.b32.xlu0 %v8389, 124
        %v8429 = vpop.permute.xlu0 %8428
        %8430 = vrot.lane.b32.xlu0 %v8390, 124
        %v8431 = vpop.permute.xlu0 %8430
        %8432 = vrot.lane.b32.xlu0 %v8391, 124
        %v8433 = vpop.permute.xlu0 %8432
        %8434 = vrot.lane.b32.xlu0 %v8392, 124
        %v8435 = vpop.permute.xlu0 %8434
        %8436 = vrot.lane.b32.xlu0 %v8393, 124
        %v8437 = vpop.permute.xlu0 %8436
        %8438 = vrot.lane.b32.xlu0 %v8394, 124
        %v8439 = vpop.permute.xlu0 %8438
        %8440 = vrot.lane.b32.xlu0 %v8395, 124
        %v8441 = vpop.permute.xlu0 %8440
        %8442 = vrot.lane.b32.xlu0 %v8396, 124
        %v8443 = vpop.permute.xlu0 %8442
        %8444 = vrot.lane.b32.xlu0 %v8397, 124
        %v8445 = vpop.permute.xlu0 %8444
        %v8462 = vadd.f32 %v8364, %v8415
        %v8463 = vadd.f32 %v8365, %v8417
        %v8464 = vadd.f32 %v8366, %v8419
        %v8465 = vadd.f32 %v8367, %v8421
        %v8466 = vadd.f32 %v8368, %v8423
        %v8467 = vadd.f32 %v8369, %v8425
        %v8468 = vadd.f32 %v8370, %v8427
        %v8469 = vadd.f32 %v8371, %v8429
        %v8470 = vadd.f32 %v8372, %v8431
        %v8471 = vadd.f32 %v8373, %v8433
        %v8472 = vadd.f32 %v8374, %v8435
        %v8473 = vadd.f32 %v8375, %v8437
        %v8474 = vadd.f32 %v8376, %v8439
        %v8475 = vadd.f32 %v8377, %v8441
        %v8476 = vadd.f32 %v8378, %v8443
        %v8477 = vadd.f32 %v8379, %v8445
        %s8478 = sld [smem:[#allocation5 + $0x59]]
        %v8479 = vstv %s8478
        %v8480 = vmul.f32 %v8479, %v4925
        %v8481 = vmul.f32 %v8479, %v4926
        %v8482 = vmul.f32 %v8479, %v4927
        %v8483 = vmul.f32 %v8479, %v4928
        %v8484 = vmul.f32 %v8479, %v4929
        %v8485 = vmul.f32 %v8479, %v4930
        %v8486 = vmul.f32 %v8479, %v4931
        %v8487 = vmul.f32 %v8479, %v4932
        %v8488 = vmul.f32 %v8479, %v4933
        %v8489 = vmul.f32 %v8479, %v4934
        %v8490 = vmul.f32 %v8479, %v4935
        %v8491 = vmul.f32 %v8479, %v4936
        %v8492 = vmul.f32 %v8479, %v4937
        %v8493 = vmul.f32 %v8479, %v4938
        %v8494 = vmul.f32 %v8479, %v4939
        %v8495 = vmul.f32 %v8479, %v4940
        %8512 = vrot.lane.b32.xlu0 %v8480, 123
        %v8513 = vpop.permute.xlu0 %8512
        %8514 = vrot.lane.b32.xlu0 %v8481, 123
        %v8515 = vpop.permute.xlu0 %8514
        %8516 = vrot.lane.b32.xlu0 %v8482, 123
        %v8517 = vpop.permute.xlu0 %8516
        %8518 = vrot.lane.b32.xlu0 %v8483, 123
        %v8519 = vpop.permute.xlu0 %8518
        %8520 = vrot.lane.b32.xlu0 %v8484, 123
        %v8521 = vpop.permute.xlu0 %8520
        %8522 = vrot.lane.b32.xlu0 %v8485, 123
        %v8523 = vpop.permute.xlu0 %8522
        %8524 = vrot.lane.b32.xlu0 %v8486, 123
        %v8525 = vpop.permute.xlu0 %8524
        %8526 = vrot.lane.b32.xlu0 %v8487, 123
        %v8527 = vpop.permute.xlu0 %8526
        %8528 = vrot.lane.b32.xlu0 %v8488, 123
        %v8529 = vpop.permute.xlu0 %8528
        %8530 = vrot.lane.b32.xlu0 %v8489, 123
        %v8531 = vpop.permute.xlu0 %8530
        %8532 = vrot.lane.b32.xlu0 %v8490, 123
        %v8533 = vpop.permute.xlu0 %8532
        %8534 = vrot.lane.b32.xlu0 %v8491, 123
        %v8535 = vpop.permute.xlu0 %8534
        %8536 = vrot.lane.b32.xlu0 %v8492, 123
        %v8537 = vpop.permute.xlu0 %8536
        %8538 = vrot.lane.b32.xlu0 %v8493, 123
        %v8539 = vpop.permute.xlu0 %8538
        %8540 = vrot.lane.b32.xlu0 %v8494, 123
        %v8541 = vpop.permute.xlu0 %8540
        %8542 = vrot.lane.b32.xlu0 %v8495, 123
        %v8543 = vpop.permute.xlu0 %8542
        %v8560 = vadd.f32 %v8462, %v8513
        %v8561 = vadd.f32 %v8463, %v8515
        %v8562 = vadd.f32 %v8464, %v8517
        %v8563 = vadd.f32 %v8465, %v8519
        %v8564 = vadd.f32 %v8466, %v8521
        %v8565 = vadd.f32 %v8467, %v8523
        %v8566 = vadd.f32 %v8468, %v8525
        %v8567 = vadd.f32 %v8469, %v8527
        %v8568 = vadd.f32 %v8470, %v8529
        %v8569 = vadd.f32 %v8471, %v8531
        %v8570 = vadd.f32 %v8472, %v8533
        %v8571 = vadd.f32 %v8473, %v8535
        %v8572 = vadd.f32 %v8474, %v8537
        %v8573 = vadd.f32 %v8475, %v8539
        %v8574 = vadd.f32 %v8476, %v8541
        %v8575 = vadd.f32 %v8477, %v8543
        %s8576 = sld [smem:[#allocation5 + $0x5a]]
        %v8577 = vstv %s8576
        %v8578 = vmul.f32 %v8577, %v4925
        %v8579 = vmul.f32 %v8577, %v4926
        %v8580 = vmul.f32 %v8577, %v4927
        %v8581 = vmul.f32 %v8577, %v4928
        %v8582 = vmul.f32 %v8577, %v4929
        %v8583 = vmul.f32 %v8577, %v4930
        %v8584 = vmul.f32 %v8577, %v4931
        %v8585 = vmul.f32 %v8577, %v4932
        %v8586 = vmul.f32 %v8577, %v4933
        %v8587 = vmul.f32 %v8577, %v4934
        %v8588 = vmul.f32 %v8577, %v4935
        %v8589 = vmul.f32 %v8577, %v4936
        %v8590 = vmul.f32 %v8577, %v4937
        %v8591 = vmul.f32 %v8577, %v4938
        %v8592 = vmul.f32 %v8577, %v4939
        %v8593 = vmul.f32 %v8577, %v4940
        %8610 = vrot.lane.b32.xlu0 %v8578, 122
        %v8611 = vpop.permute.xlu0 %8610
        %8612 = vrot.lane.b32.xlu0 %v8579, 122
        %v8613 = vpop.permute.xlu0 %8612
        %8614 = vrot.lane.b32.xlu0 %v8580, 122
        %v8615 = vpop.permute.xlu0 %8614
        %8616 = vrot.lane.b32.xlu0 %v8581, 122
        %v8617 = vpop.permute.xlu0 %8616
        %8618 = vrot.lane.b32.xlu0 %v8582, 122
        %v8619 = vpop.permute.xlu0 %8618
        %8620 = vrot.lane.b32.xlu0 %v8583, 122
        %v8621 = vpop.permute.xlu0 %8620
        %8622 = vrot.lane.b32.xlu0 %v8584, 122
        %v8623 = vpop.permute.xlu0 %8622
        %8624 = vrot.lane.b32.xlu0 %v8585, 122
        %v8625 = vpop.permute.xlu0 %8624
        %8626 = vrot.lane.b32.xlu0 %v8586, 122
        %v8627 = vpop.permute.xlu0 %8626
        %8628 = vrot.lane.b32.xlu0 %v8587, 122
        %v8629 = vpop.permute.xlu0 %8628
        %8630 = vrot.lane.b32.xlu0 %v8588, 122
        %v8631 = vpop.permute.xlu0 %8630
        %8632 = vrot.lane.b32.xlu0 %v8589, 122
        %v8633 = vpop.permute.xlu0 %8632
        %8634 = vrot.lane.b32.xlu0 %v8590, 122
        %v8635 = vpop.permute.xlu0 %8634
        %8636 = vrot.lane.b32.xlu0 %v8591, 122
        %v8637 = vpop.permute.xlu0 %8636
        %8638 = vrot.lane.b32.xlu0 %v8592, 122
        %v8639 = vpop.permute.xlu0 %8638
        %8640 = vrot.lane.b32.xlu0 %v8593, 122
        %v8641 = vpop.permute.xlu0 %8640
        %v8658 = vadd.f32 %v8560, %v8611
        %v8659 = vadd.f32 %v8561, %v8613
        %v8660 = vadd.f32 %v8562, %v8615
        %v8661 = vadd.f32 %v8563, %v8617
        %v8662 = vadd.f32 %v8564, %v8619
        %v8663 = vadd.f32 %v8565, %v8621
        %v8664 = vadd.f32 %v8566, %v8623
        %v8665 = vadd.f32 %v8567, %v8625
        %v8666 = vadd.f32 %v8568, %v8627
        %v8667 = vadd.f32 %v8569, %v8629
        %v8668 = vadd.f32 %v8570, %v8631
        %v8669 = vadd.f32 %v8571, %v8633
        %v8670 = vadd.f32 %v8572, %v8635
        %v8671 = vadd.f32 %v8573, %v8637
        %v8672 = vadd.f32 %v8574, %v8639
        %v8673 = vadd.f32 %v8575, %v8641
        %s8674 = sld [smem:[#allocation5 + $0x5b]]
        %v8675 = vstv %s8674
        %v8676 = vmul.f32 %v8675, %v4926
        %v8677 = vmul.f32 %v8675, %v4927
        %v8678 = vmul.f32 %v8675, %v4928
        %v8679 = vmul.f32 %v8675, %v4929
        %v8680 = vmul.f32 %v8675, %v4930
        %v8681 = vmul.f32 %v8675, %v4931
        %v8682 = vmul.f32 %v8675, %v4932
        %v8683 = vmul.f32 %v8675, %v4933
        %v8684 = vmul.f32 %v8675, %v4934
        %v8685 = vmul.f32 %v8675, %v4935
        %v8686 = vmul.f32 %v8675, %v4936
        %v8687 = vmul.f32 %v8675, %v4937
        %v8688 = vmul.f32 %v8675, %v4938
        %v8689 = vmul.f32 %v8675, %v4939
        %v8690 = vmul.f32 %v8675, %v4940
        %v8691 = vmul.f32 %v8675, %v4941
        %v8692 = vadd.f32 %v8658, %v8676
        %v8693 = vadd.f32 %v8659, %v8677
        %v8694 = vadd.f32 %v8660, %v8678
        %v8695 = vadd.f32 %v8661, %v8679
        %v8696 = vadd.f32 %v8662, %v8680
        %v8697 = vadd.f32 %v8663, %v8681
        %v8698 = vadd.f32 %v8664, %v8682
        %v8699 = vadd.f32 %v8665, %v8683
        %v8700 = vadd.f32 %v8666, %v8684
        %v8701 = vadd.f32 %v8667, %v8685
        %v8702 = vadd.f32 %v8668, %v8686
        %v8703 = vadd.f32 %v8669, %v8687
        %v8704 = vadd.f32 %v8670, %v8688
        %v8705 = vadd.f32 %v8671, %v8689
        %v8706 = vadd.f32 %v8672, %v8690
        %v8707 = vadd.f32 %v8673, %v8691
        %s8708 = sld [smem:[#allocation5 + $0x5c]]
        %v8709 = vstv %s8708
        %v8710 = vmul.f32 %v8709, %v4926
        %v8711 = vmul.f32 %v8709, %v4927
        %v8712 = vmul.f32 %v8709, %v4928
        %v8713 = vmul.f32 %v8709, %v4929
        %v8714 = vmul.f32 %v8709, %v4930
        %v8715 = vmul.f32 %v8709, %v4931
        %v8716 = vmul.f32 %v8709, %v4932
        %v8717 = vmul.f32 %v8709, %v4933
        %v8718 = vmul.f32 %v8709, %v4934
        %v8719 = vmul.f32 %v8709, %v4935
        %v8720 = vmul.f32 %v8709, %v4936
        %v8721 = vmul.f32 %v8709, %v4937
        %v8722 = vmul.f32 %v8709, %v4938
        %v8723 = vmul.f32 %v8709, %v4939
        %v8724 = vmul.f32 %v8709, %v4940
        %v8725 = vmul.f32 %v8709, %v4941
        %8742 = vrot.lane.b32.xlu0 %v8710, 127
        %v8743 = vpop.permute.xlu0 %8742
        %8744 = vrot.lane.b32.xlu0 %v8711, 127
        %v8745 = vpop.permute.xlu0 %8744
        %8746 = vrot.lane.b32.xlu0 %v8712, 127
        %v8747 = vpop.permute.xlu0 %8746
        %8748 = vrot.lane.b32.xlu0 %v8713, 127
        %v8749 = vpop.permute.xlu0 %8748
        %8750 = vrot.lane.b32.xlu0 %v8714, 127
        %v8751 = vpop.permute.xlu0 %8750
        %8752 = vrot.lane.b32.xlu0 %v8715, 127
        %v8753 = vpop.permute.xlu0 %8752
        %8754 = vrot.lane.b32.xlu0 %v8716, 127
        %v8755 = vpop.permute.xlu0 %8754
        %8756 = vrot.lane.b32.xlu0 %v8717, 127
        %v8757 = vpop.permute.xlu0 %8756
        %8758 = vrot.lane.b32.xlu0 %v8718, 127
        %v8759 = vpop.permute.xlu0 %8758
        %8760 = vrot.lane.b32.xlu0 %v8719, 127
        %v8761 = vpop.permute.xlu0 %8760
        %8762 = vrot.lane.b32.xlu0 %v8720, 127
        %v8763 = vpop.permute.xlu0 %8762
        %8764 = vrot.lane.b32.xlu0 %v8721, 127
        %v8765 = vpop.permute.xlu0 %8764
        %8766 = vrot.lane.b32.xlu0 %v8722, 127
        %v8767 = vpop.permute.xlu0 %8766
        %8768 = vrot.lane.b32.xlu0 %v8723, 127
        %v8769 = vpop.permute.xlu0 %8768
        %8770 = vrot.lane.b32.xlu0 %v8724, 127
        %v8771 = vpop.permute.xlu0 %8770
        %8772 = vrot.lane.b32.xlu0 %v8725, 127
        %v8773 = vpop.permute.xlu0 %8772
        %v8790 = vadd.f32 %v8692, %v8743
        %v8791 = vadd.f32 %v8693, %v8745
        %v8792 = vadd.f32 %v8694, %v8747
        %v8793 = vadd.f32 %v8695, %v8749
        %v8794 = vadd.f32 %v8696, %v8751
        %v8795 = vadd.f32 %v8697, %v8753
        %v8796 = vadd.f32 %v8698, %v8755
        %v8797 = vadd.f32 %v8699, %v8757
        %v8798 = vadd.f32 %v8700, %v8759
        %v8799 = vadd.f32 %v8701, %v8761
        %v8800 = vadd.f32 %v8702, %v8763
        %v8801 = vadd.f32 %v8703, %v8765
        %v8802 = vadd.f32 %v8704, %v8767
        %v8803 = vadd.f32 %v8705, %v8769
        %v8804 = vadd.f32 %v8706, %v8771
        %v8805 = vadd.f32 %v8707, %v8773
        %s8806 = sld [smem:[#allocation5 + $0x5d]]
        %v8807 = vstv %s8806
        %v8808 = vmul.f32 %v8807, %v4926
        %v8809 = vmul.f32 %v8807, %v4927
        %v8810 = vmul.f32 %v8807, %v4928
        %v8811 = vmul.f32 %v8807, %v4929
        %v8812 = vmul.f32 %v8807, %v4930
        %v8813 = vmul.f32 %v8807, %v4931
        %v8814 = vmul.f32 %v8807, %v4932
        %v8815 = vmul.f32 %v8807, %v4933
        %v8816 = vmul.f32 %v8807, %v4934
        %v8817 = vmul.f32 %v8807, %v4935
        %v8818 = vmul.f32 %v8807, %v4936
        %v8819 = vmul.f32 %v8807, %v4937
        %v8820 = vmul.f32 %v8807, %v4938
        %v8821 = vmul.f32 %v8807, %v4939
        %v8822 = vmul.f32 %v8807, %v4940
        %v8823 = vmul.f32 %v8807, %v4941
        %8840 = vrot.lane.b32.xlu0 %v8808, 126
        %v8841 = vpop.permute.xlu0 %8840
        %8842 = vrot.lane.b32.xlu0 %v8809, 126
        %v8843 = vpop.permute.xlu0 %8842
        %8844 = vrot.lane.b32.xlu0 %v8810, 126
        %v8845 = vpop.permute.xlu0 %8844
        %8846 = vrot.lane.b32.xlu0 %v8811, 126
        %v8847 = vpop.permute.xlu0 %8846
        %8848 = vrot.lane.b32.xlu0 %v8812, 126
        %v8849 = vpop.permute.xlu0 %8848
        %8850 = vrot.lane.b32.xlu0 %v8813, 126
        %v8851 = vpop.permute.xlu0 %8850
        %8852 = vrot.lane.b32.xlu0 %v8814, 126
        %v8853 = vpop.permute.xlu0 %8852
        %8854 = vrot.lane.b32.xlu0 %v8815, 126
        %v8855 = vpop.permute.xlu0 %8854
        %8856 = vrot.lane.b32.xlu0 %v8816, 126
        %v8857 = vpop.permute.xlu0 %8856
        %8858 = vrot.lane.b32.xlu0 %v8817, 126
        %v8859 = vpop.permute.xlu0 %8858
        %8860 = vrot.lane.b32.xlu0 %v8818, 126
        %v8861 = vpop.permute.xlu0 %8860
        %8862 = vrot.lane.b32.xlu0 %v8819, 126
        %v8863 = vpop.permute.xlu0 %8862
        %8864 = vrot.lane.b32.xlu0 %v8820, 126
        %v8865 = vpop.permute.xlu0 %8864
        %8866 = vrot.lane.b32.xlu0 %v8821, 126
        %v8867 = vpop.permute.xlu0 %8866
        %8868 = vrot.lane.b32.xlu0 %v8822, 126
        %v8869 = vpop.permute.xlu0 %8868
        %8870 = vrot.lane.b32.xlu0 %v8823, 126
        %v8871 = vpop.permute.xlu0 %8870
        %v8888 = vadd.f32 %v8790, %v8841
        %v8889 = vadd.f32 %v8791, %v8843
        %v8890 = vadd.f32 %v8792, %v8845
        %v8891 = vadd.f32 %v8793, %v8847
        %v8892 = vadd.f32 %v8794, %v8849
        %v8893 = vadd.f32 %v8795, %v8851
        %v8894 = vadd.f32 %v8796, %v8853
        %v8895 = vadd.f32 %v8797, %v8855
        %v8896 = vadd.f32 %v8798, %v8857
        %v8897 = vadd.f32 %v8799, %v8859
        %v8898 = vadd.f32 %v8800, %v8861
        %v8899 = vadd.f32 %v8801, %v8863
        %v8900 = vadd.f32 %v8802, %v8865
        %v8901 = vadd.f32 %v8803, %v8867
        %v8902 = vadd.f32 %v8804, %v8869
        %v8903 = vadd.f32 %v8805, %v8871
        %s8904 = sld [smem:[#allocation5 + $0x5e]]
        %v8905 = vstv %s8904
        %v8906 = vmul.f32 %v8905, %v4926
        %v8907 = vmul.f32 %v8905, %v4927
        %v8908 = vmul.f32 %v8905, %v4928
        %v8909 = vmul.f32 %v8905, %v4929
        %v8910 = vmul.f32 %v8905, %v4930
        %v8911 = vmul.f32 %v8905, %v4931
        %v8912 = vmul.f32 %v8905, %v4932
        %v8913 = vmul.f32 %v8905, %v4933
        %v8914 = vmul.f32 %v8905, %v4934
        %v8915 = vmul.f32 %v8905, %v4935
        %v8916 = vmul.f32 %v8905, %v4936
        %v8917 = vmul.f32 %v8905, %v4937
        %v8918 = vmul.f32 %v8905, %v4938
        %v8919 = vmul.f32 %v8905, %v4939
        %v8920 = vmul.f32 %v8905, %v4940
        %v8921 = vmul.f32 %v8905, %v4941
        %8938 = vrot.lane.b32.xlu0 %v8906, 125
        %v8939 = vpop.permute.xlu0 %8938
        %8940 = vrot.lane.b32.xlu0 %v8907, 125
        %v8941 = vpop.permute.xlu0 %8940
        %8942 = vrot.lane.b32.xlu0 %v8908, 125
        %v8943 = vpop.permute.xlu0 %8942
        %8944 = vrot.lane.b32.xlu0 %v8909, 125
        %v8945 = vpop.permute.xlu0 %8944
        %8946 = vrot.lane.b32.xlu0 %v8910, 125
        %v8947 = vpop.permute.xlu0 %8946
        %8948 = vrot.lane.b32.xlu0 %v8911, 125
        %v8949 = vpop.permute.xlu0 %8948
        %8950 = vrot.lane.b32.xlu0 %v8912, 125
        %v8951 = vpop.permute.xlu0 %8950
        %8952 = vrot.lane.b32.xlu0 %v8913, 125
        %v8953 = vpop.permute.xlu0 %8952
        %8954 = vrot.lane.b32.xlu0 %v8914, 125
        %v8955 = vpop.permute.xlu0 %8954
        %8956 = vrot.lane.b32.xlu0 %v8915, 125
        %v8957 = vpop.permute.xlu0 %8956
        %8958 = vrot.lane.b32.xlu0 %v8916, 125
        %v8959 = vpop.permute.xlu0 %8958
        %8960 = vrot.lane.b32.xlu0 %v8917, 125
        %v8961 = vpop.permute.xlu0 %8960
        %8962 = vrot.lane.b32.xlu0 %v8918, 125
        %v8963 = vpop.permute.xlu0 %8962
        %8964 = vrot.lane.b32.xlu0 %v8919, 125
        %v8965 = vpop.permute.xlu0 %8964
        %8966 = vrot.lane.b32.xlu0 %v8920, 125
        %v8967 = vpop.permute.xlu0 %8966
        %8968 = vrot.lane.b32.xlu0 %v8921, 125
        %v8969 = vpop.permute.xlu0 %8968
        %v8986 = vadd.f32 %v8888, %v8939
        %v8987 = vadd.f32 %v8889, %v8941
        %v8988 = vadd.f32 %v8890, %v8943
        %v8989 = vadd.f32 %v8891, %v8945
        %v8990 = vadd.f32 %v8892, %v8947
        %v8991 = vadd.f32 %v8893, %v8949
        %v8992 = vadd.f32 %v8894, %v8951
        %v8993 = vadd.f32 %v8895, %v8953
        %v8994 = vadd.f32 %v8896, %v8955
        %v8995 = vadd.f32 %v8897, %v8957
        %v8996 = vadd.f32 %v8898, %v8959
        %v8997 = vadd.f32 %v8899, %v8961
        %v8998 = vadd.f32 %v8900, %v8963
        %v8999 = vadd.f32 %v8901, %v8965
        %v9000 = vadd.f32 %v8902, %v8967
        %v9001 = vadd.f32 %v8903, %v8969
        %s9002 = sld [smem:[#allocation5 + $0x5f]]
        %v9003 = vstv %s9002
        %v9004 = vmul.f32 %v9003, %v4926
        %v9005 = vmul.f32 %v9003, %v4927
        %v9006 = vmul.f32 %v9003, %v4928
        %v9007 = vmul.f32 %v9003, %v4929
        %v9008 = vmul.f32 %v9003, %v4930
        %v9009 = vmul.f32 %v9003, %v4931
        %v9010 = vmul.f32 %v9003, %v4932
        %v9011 = vmul.f32 %v9003, %v4933
        %v9012 = vmul.f32 %v9003, %v4934
        %v9013 = vmul.f32 %v9003, %v4935
        %v9014 = vmul.f32 %v9003, %v4936
        %v9015 = vmul.f32 %v9003, %v4937
        %v9016 = vmul.f32 %v9003, %v4938
        %v9017 = vmul.f32 %v9003, %v4939
        %v9018 = vmul.f32 %v9003, %v4940
        %v9019 = vmul.f32 %v9003, %v4941
        %9036 = vrot.lane.b32.xlu0 %v9004, 124
        %v9037 = vpop.permute.xlu0 %9036
        %9038 = vrot.lane.b32.xlu0 %v9005, 124
        %v9039 = vpop.permute.xlu0 %9038
        %9040 = vrot.lane.b32.xlu0 %v9006, 124
        %v9041 = vpop.permute.xlu0 %9040
        %9042 = vrot.lane.b32.xlu0 %v9007, 124
        %v9043 = vpop.permute.xlu0 %9042
        %9044 = vrot.lane.b32.xlu0 %v9008, 124
        %v9045 = vpop.permute.xlu0 %9044
        %9046 = vrot.lane.b32.xlu0 %v9009, 124
        %v9047 = vpop.permute.xlu0 %9046
        %9048 = vrot.lane.b32.xlu0 %v9010, 124
        %v9049 = vpop.permute.xlu0 %9048
        %9050 = vrot.lane.b32.xlu0 %v9011, 124
        %v9051 = vpop.permute.xlu0 %9050
        %9052 = vrot.lane.b32.xlu0 %v9012, 124
        %v9053 = vpop.permute.xlu0 %9052
        %9054 = vrot.lane.b32.xlu0 %v9013, 124
        %v9055 = vpop.permute.xlu0 %9054
        %9056 = vrot.lane.b32.xlu0 %v9014, 124
        %v9057 = vpop.permute.xlu0 %9056
        %9058 = vrot.lane.b32.xlu0 %v9015, 124
        %v9059 = vpop.permute.xlu0 %9058
        %9060 = vrot.lane.b32.xlu0 %v9016, 124
        %v9061 = vpop.permute.xlu0 %9060
        %9062 = vrot.lane.b32.xlu0 %v9017, 124
        %v9063 = vpop.permute.xlu0 %9062
        %9064 = vrot.lane.b32.xlu0 %v9018, 124
        %v9065 = vpop.permute.xlu0 %9064
        %9066 = vrot.lane.b32.xlu0 %v9019, 124
        %v9067 = vpop.permute.xlu0 %9066
        %v9084 = vadd.f32 %v8986, %v9037
        %v9085 = vadd.f32 %v8987, %v9039
        %v9086 = vadd.f32 %v8988, %v9041
        %v9087 = vadd.f32 %v8989, %v9043
        %v9088 = vadd.f32 %v8990, %v9045
        %v9089 = vadd.f32 %v8991, %v9047
        %v9090 = vadd.f32 %v8992, %v9049
        %v9091 = vadd.f32 %v8993, %v9051
        %v9092 = vadd.f32 %v8994, %v9053
        %v9093 = vadd.f32 %v8995, %v9055
        %v9094 = vadd.f32 %v8996, %v9057
        %v9095 = vadd.f32 %v8997, %v9059
        %v9096 = vadd.f32 %v8998, %v9061
        %v9097 = vadd.f32 %v8999, %v9063
        %v9098 = vadd.f32 %v9000, %v9065
        %v9099 = vadd.f32 %v9001, %v9067
        %s9100 = sld [smem:[#allocation5 + $0x60]]
        %v9101 = vstv %s9100
        %v9102 = vmul.f32 %v9101, %v4926
        %v9103 = vmul.f32 %v9101, %v4927
        %v9104 = vmul.f32 %v9101, %v4928
        %v9105 = vmul.f32 %v9101, %v4929
        %v9106 = vmul.f32 %v9101, %v4930
        %v9107 = vmul.f32 %v9101, %v4931
        %v9108 = vmul.f32 %v9101, %v4932
        %v9109 = vmul.f32 %v9101, %v4933
        %v9110 = vmul.f32 %v9101, %v4934
        %v9111 = vmul.f32 %v9101, %v4935
        %v9112 = vmul.f32 %v9101, %v4936
        %v9113 = vmul.f32 %v9101, %v4937
        %v9114 = vmul.f32 %v9101, %v4938
        %v9115 = vmul.f32 %v9101, %v4939
        %v9116 = vmul.f32 %v9101, %v4940
        %v9117 = vmul.f32 %v9101, %v4941
        %9134 = vrot.lane.b32.xlu0 %v9102, 123
        %v9135 = vpop.permute.xlu0 %9134
        %9136 = vrot.lane.b32.xlu0 %v9103, 123
        %v9137 = vpop.permute.xlu0 %9136
        %9138 = vrot.lane.b32.xlu0 %v9104, 123
        %v9139 = vpop.permute.xlu0 %9138
        %9140 = vrot.lane.b32.xlu0 %v9105, 123
        %v9141 = vpop.permute.xlu0 %9140
        %9142 = vrot.lane.b32.xlu0 %v9106, 123
        %v9143 = vpop.permute.xlu0 %9142
        %9144 = vrot.lane.b32.xlu0 %v9107, 123
        %v9145 = vpop.permute.xlu0 %9144
        %9146 = vrot.lane.b32.xlu0 %v9108, 123
        %v9147 = vpop.permute.xlu0 %9146
        %9148 = vrot.lane.b32.xlu0 %v9109, 123
        %v9149 = vpop.permute.xlu0 %9148
        %9150 = vrot.lane.b32.xlu0 %v9110, 123
        %v9151 = vpop.permute.xlu0 %9150
        %9152 = vrot.lane.b32.xlu0 %v9111, 123
        %v9153 = vpop.permute.xlu0 %9152
        %9154 = vrot.lane.b32.xlu0 %v9112, 123
        %v9155 = vpop.permute.xlu0 %9154
        %9156 = vrot.lane.b32.xlu0 %v9113, 123
        %v9157 = vpop.permute.xlu0 %9156
        %9158 = vrot.lane.b32.xlu0 %v9114, 123
        %v9159 = vpop.permute.xlu0 %9158
        %9160 = vrot.lane.b32.xlu0 %v9115, 123
        %v9161 = vpop.permute.xlu0 %9160
        %9162 = vrot.lane.b32.xlu0 %v9116, 123
        %v9163 = vpop.permute.xlu0 %9162
        %9164 = vrot.lane.b32.xlu0 %v9117, 123
        %v9165 = vpop.permute.xlu0 %9164
        %v9182 = vadd.f32 %v9084, %v9135
        %v9183 = vadd.f32 %v9085, %v9137
        %v9184 = vadd.f32 %v9086, %v9139
        %v9185 = vadd.f32 %v9087, %v9141
        %v9186 = vadd.f32 %v9088, %v9143
        %v9187 = vadd.f32 %v9089, %v9145
        %v9188 = vadd.f32 %v9090, %v9147
        %v9189 = vadd.f32 %v9091, %v9149
        %v9190 = vadd.f32 %v9092, %v9151
        %v9191 = vadd.f32 %v9093, %v9153
        %v9192 = vadd.f32 %v9094, %v9155
        %v9193 = vadd.f32 %v9095, %v9157
        %v9194 = vadd.f32 %v9096, %v9159
        %v9195 = vadd.f32 %v9097, %v9161
        %v9196 = vadd.f32 %v9098, %v9163
        %v9197 = vadd.f32 %v9099, %v9165
        %s9198 = sld [smem:[#allocation5 + $0x61]]
        %v9199 = vstv %s9198
        %v9200 = vmul.f32 %v9199, %v4926
        %v9201 = vmul.f32 %v9199, %v4927
        %v9202 = vmul.f32 %v9199, %v4928
        %v9203 = vmul.f32 %v9199, %v4929
        %v9204 = vmul.f32 %v9199, %v4930
        %v9205 = vmul.f32 %v9199, %v4931
        %v9206 = vmul.f32 %v9199, %v4932
        %v9207 = vmul.f32 %v9199, %v4933
        %v9208 = vmul.f32 %v9199, %v4934
        %v9209 = vmul.f32 %v9199, %v4935
        %v9210 = vmul.f32 %v9199, %v4936
        %v9211 = vmul.f32 %v9199, %v4937
        %v9212 = vmul.f32 %v9199, %v4938
        %v9213 = vmul.f32 %v9199, %v4939
        %v9214 = vmul.f32 %v9199, %v4940
        %v9215 = vmul.f32 %v9199, %v4941
        %9232 = vrot.lane.b32.xlu0 %v9200, 122
        %v9233 = vpop.permute.xlu0 %9232
        %9234 = vrot.lane.b32.xlu0 %v9201, 122
        %v9235 = vpop.permute.xlu0 %9234
        %9236 = vrot.lane.b32.xlu0 %v9202, 122
        %v9237 = vpop.permute.xlu0 %9236
        %9238 = vrot.lane.b32.xlu0 %v9203, 122
        %v9239 = vpop.permute.xlu0 %9238
        %9240 = vrot.lane.b32.xlu0 %v9204, 122
        %v9241 = vpop.permute.xlu0 %9240
        %9242 = vrot.lane.b32.xlu0 %v9205, 122
        %v9243 = vpop.permute.xlu0 %9242
        %9244 = vrot.lane.b32.xlu0 %v9206, 122
        %v9245 = vpop.permute.xlu0 %9244
        %9246 = vrot.lane.b32.xlu0 %v9207, 122
        %v9247 = vpop.permute.xlu0 %9246
        %9248 = vrot.lane.b32.xlu0 %v9208, 122
        %v9249 = vpop.permute.xlu0 %9248
        %9250 = vrot.lane.b32.xlu0 %v9209, 122
        %v9251 = vpop.permute.xlu0 %9250
        %9252 = vrot.lane.b32.xlu0 %v9210, 122
        %v9253 = vpop.permute.xlu0 %9252
        %9254 = vrot.lane.b32.xlu0 %v9211, 122
        %v9255 = vpop.permute.xlu0 %9254
        %9256 = vrot.lane.b32.xlu0 %v9212, 122
        %v9257 = vpop.permute.xlu0 %9256
        %9258 = vrot.lane.b32.xlu0 %v9213, 122
        %v9259 = vpop.permute.xlu0 %9258
        %9260 = vrot.lane.b32.xlu0 %v9214, 122
        %v9261 = vpop.permute.xlu0 %9260
        %9262 = vrot.lane.b32.xlu0 %v9215, 122
        %v9263 = vpop.permute.xlu0 %9262
        %v9280 = vadd.f32 %v9182, %v9233
        %v9281 = vadd.f32 %v9183, %v9235
        %v9282 = vadd.f32 %v9184, %v9237
        %v9283 = vadd.f32 %v9185, %v9239
        %v9284 = vadd.f32 %v9186, %v9241
        %v9285 = vadd.f32 %v9187, %v9243
        %v9286 = vadd.f32 %v9188, %v9245
        %v9287 = vadd.f32 %v9189, %v9247
        %v9288 = vadd.f32 %v9190, %v9249
        %v9289 = vadd.f32 %v9191, %v9251
        %v9290 = vadd.f32 %v9192, %v9253
        %v9291 = vadd.f32 %v9193, %v9255
        %v9292 = vadd.f32 %v9194, %v9257
        %v9293 = vadd.f32 %v9195, %v9259
        %v9294 = vadd.f32 %v9196, %v9261
        %v9295 = vadd.f32 %v9197, %v9263
        %v9296 = vmax.f32 %v9280, 0.0
        %v9297 = vmax.f32 %v9281, 0.0
        %v9298 = vmax.f32 %v9282, 0.0
        %v9299 = vmax.f32 %v9283, 0.0
        %v9300 = vmax.f32 %v9284, 0.0
        %v9301 = vmax.f32 %v9285, 0.0
        %v9302 = vmax.f32 %v9286, 0.0
        %v9303 = vmax.f32 %v9287, 0.0
        %v9304 = vmax.f32 %v9288, 0.0
        %v9305 = vmax.f32 %v9289, 0.0
        %v9306 = vmax.f32 %v9290, 0.0
        %v9307 = vmax.f32 %v9291, 0.0
        %v9308 = vmax.f32 %v9292, 0.0
        %v9309 = vmax.f32 %v9293, 0.0
        %v9310 = vmax.f32 %v9294, 0.0
        %v9311 = vmax.f32 %v9295, 0.0
        %v9328 = vperm.slane %v9296, 0
        %v9329 = vperm.slane %v9297, 0
        %v9330 = vperm.slane %v9298, 0
        %v9331 = vperm.slane %v9299, 0
        %v9332 = vperm.slane %v9300, 0
        %v9333 = vperm.slane %v9301, 0
        %v9334 = vperm.slane %v9302, 0
        %v9335 = vperm.slane %v9303, 0
        %v9336 = vperm.slane %v9304, 0
        %v9337 = vperm.slane %v9305, 0
        %v9338 = vperm.slane %v9306, 0
        %v9339 = vperm.slane %v9307, 0
        %v9340 = vperm.slane %v9308, 0
        %v9341 = vperm.slane %v9309, 0
        %v9342 = vperm.slane %v9310, 0
        %v9343 = vperm.slane %v9311, 0
        %9344 = vrot.lane.b32.xlu0 %v9328, 2
        %v9345 = vpop.permute.xlu0 %9344
        %9346 = vrot.lane.b32.xlu0 %v9329, 2
        %v9347 = vpop.permute.xlu0 %9346
        %9348 = vrot.lane.b32.xlu0 %v9330, 2
        %v9349 = vpop.permute.xlu0 %9348
        %9350 = vrot.lane.b32.xlu0 %v9331, 2
        %v9351 = vpop.permute.xlu0 %9350
        %9352 = vrot.lane.b32.xlu0 %v9332, 2
        %v9353 = vpop.permute.xlu0 %9352
        %9354 = vrot.lane.b32.xlu0 %v9333, 2
        %v9355 = vpop.permute.xlu0 %9354
        %9356 = vrot.lane.b32.xlu0 %v9334, 2
        %v9357 = vpop.permute.xlu0 %9356
        %9358 = vrot.lane.b32.xlu0 %v9335, 2
        %v9359 = vpop.permute.xlu0 %9358
        %9360 = vrot.lane.b32.xlu0 %v9336, 2
        %v9361 = vpop.permute.xlu0 %9360
        %9362 = vrot.lane.b32.xlu0 %v9337, 2
        %v9363 = vpop.permute.xlu0 %9362
        %9364 = vrot.lane.b32.xlu0 %v9338, 2
        %v9365 = vpop.permute.xlu0 %9364
        %9366 = vrot.lane.b32.xlu0 %v9339, 2
        %v9367 = vpop.permute.xlu0 %9366
        %9368 = vrot.lane.b32.xlu0 %v9340, 2
        %v9369 = vpop.permute.xlu0 %9368
        %9370 = vrot.lane.b32.xlu0 %v9341, 2
        %v9371 = vpop.permute.xlu0 %9370
        %9372 = vrot.lane.b32.xlu0 %v9342, 2
        %v9373 = vpop.permute.xlu0 %9372
        %9374 = vrot.lane.b32.xlu0 %v9343, 2
        %v9375 = vpop.permute.xlu0 %9374
        %s9392 = scalar_lea.vmem [#allocation3], 2
        %vm9393 = vcmask 139280
        %9394 = vst.msk [vmem:[%s9392] sm:$0x1] %vm9393, %v9345
        %9395 = vst.msk [vmem:[%s9392 + $0x1] sm:$0x1] %vm9393, %v9347
        %9396 = vst.msk [vmem:[%s9392 + $0x2] sm:$0x1] %vm9393, %v9349
        %9397 = vst.msk [vmem:[%s9392 + $0x3] sm:$0x1] %vm9393, %v9351
        %9398 = vst.msk [vmem:[%s9392 + $0x4] sm:$0x1] %vm9393, %v9353
        %9399 = vst.msk [vmem:[%s9392 + $0x5] sm:$0x1] %vm9393, %v9355
        %9400 = vst.msk [vmem:[%s9392 + $0x6] sm:$0x1] %vm9393, %v9357
        %9401 = vst.msk [vmem:[%s9392 + $0x7] sm:$0x1] %vm9393, %v9359
        %9402 = vst.msk [vmem:[%s9392 + $0x8] sm:$0x1] %vm9393, %v9361
        %9403 = vst.msk [vmem:[%s9392 + $0x9] sm:$0x1] %vm9393, %v9363
        %9404 = vst.msk [vmem:[%s9392 + $0xa] sm:$0x1] %vm9393, %v9365
        %9405 = vst.msk [vmem:[%s9392 + $0xb] sm:$0x1] %vm9393, %v9367
        %9406 = vst.msk [vmem:[%s9392 + $0xc] sm:$0x1] %vm9393, %v9369
        %9407 = vst.msk [vmem:[%s9392 + $0xd] sm:$0x1] %vm9393, %v9371
        %9408 = vst.msk [vmem:[%s9392 + $0xe] sm:$0x1] %vm9393, %v9373
        %9409 = vst.msk [vmem:[%s9392 + $0xf] sm:$0x1] %vm9393, %v9375
        %v9410 = vld [vmem:[#allocation3] sm:$0x1]
        %v9411 = vld [vmem:[#allocation3 + $0x1] sm:$0x1]
        %v9412 = vld [vmem:[#allocation3 + $0x2] sm:$0x1]
        %v9413 = vld [vmem:[#allocation3 + $0x3] sm:$0x1]
        %v9414 = vld [vmem:[#allocation3 + $0x4] sm:$0x1]
        %v9415 = vld [vmem:[#allocation3 + $0x5] sm:$0x1]
        %v9416 = vld [vmem:[#allocation3 + $0x6] sm:$0x1]
        %v9417 = vld [vmem:[#allocation3 + $0x7] sm:$0x1]
        %v9418 = vld [vmem:[#allocation3 + $0x8] sm:$0x1]
        %v9419 = vld [vmem:[#allocation3 + $0x9] sm:$0x1]
        %v9420 = vld [vmem:[#allocation3 + $0xa] sm:$0x1]
        %v9421 = vld [vmem:[#allocation3 + $0xb] sm:$0x1]
        %v9422 = vld [vmem:[#allocation3 + $0xc] sm:$0x1]
        %v9423 = vld [vmem:[#allocation3 + $0xd] sm:$0x1]
        %v9424 = vld [vmem:[#allocation3 + $0xe] sm:$0x1]
        %v9425 = vld [vmem:[#allocation3 + $0xf] sm:$0x1]
        %v9426 = vld [vmem:[#allocation3 + $0x10] sm:$0x1]
        %v9427 = vld [vmem:[#allocation3 + $0x11] sm:$0x1]
        %v9428 = vld [vmem:[#allocation3 + $0x12] sm:$0x1]
        %v9429 = vld [vmem:[#allocation3 + $0x13] sm:$0x1]
        %s9430 = sld [smem:[#allocation12 + $0x1]]
        %v9431 = vstv %s9430
        %s9432 = sld [smem:[#allocation10]]
        %v9433 = vstv %s9432
        %v9434 = vmul.f32 %v9433, %v9410
        %v9435 = vmul.f32 %v9433, %v9411
        %v9436 = vmul.f32 %v9433, %v9412
        %v9437 = vmul.f32 %v9433, %v9413
        %v9438 = vmul.f32 %v9433, %v9414
        %v9439 = vmul.f32 %v9433, %v9415
        %v9440 = vmul.f32 %v9433, %v9416
        %v9441 = vmul.f32 %v9433, %v9417
        %v9442 = vmul.f32 %v9433, %v9418
        %v9443 = vmul.f32 %v9433, %v9419
        %v9444 = vmul.f32 %v9433, %v9420
        %v9445 = vmul.f32 %v9433, %v9421
        %v9446 = vmul.f32 %v9433, %v9422
        %v9447 = vmul.f32 %v9433, %v9423
        %v9448 = vmul.f32 %v9433, %v9424
        %v9449 = vmul.f32 %v9433, %v9425
        %v9450 = vadd.f32 %v9431, %v9434
        %v9451 = vadd.f32 %v9431, %v9435
        %v9452 = vadd.f32 %v9431, %v9436
        %v9453 = vadd.f32 %v9431, %v9437
        %v9454 = vadd.f32 %v9431, %v9438
        %v9455 = vadd.f32 %v9431, %v9439
        %v9456 = vadd.f32 %v9431, %v9440
        %v9457 = vadd.f32 %v9431, %v9441
        %v9458 = vadd.f32 %v9431, %v9442
        %v9459 = vadd.f32 %v9431, %v9443
        %v9460 = vadd.f32 %v9431, %v9444
        %v9461 = vadd.f32 %v9431, %v9445
        %v9462 = vadd.f32 %v9431, %v9446
        %v9463 = vadd.f32 %v9431, %v9447
        %v9464 = vadd.f32 %v9431, %v9448
        %v9465 = vadd.f32 %v9431, %v9449
        %s9466 = sld [smem:[#allocation10 + $0x1]]
        %v9467 = vstv %s9466
        %v9468 = vmul.f32 %v9467, %v9410
        %v9469 = vmul.f32 %v9467, %v9411
        %v9470 = vmul.f32 %v9467, %v9412
        %v9471 = vmul.f32 %v9467, %v9413
        %v9472 = vmul.f32 %v9467, %v9414
        %v9473 = vmul.f32 %v9467, %v9415
        %v9474 = vmul.f32 %v9467, %v9416
        %v9475 = vmul.f32 %v9467, %v9417
        %v9476 = vmul.f32 %v9467, %v9418
        %v9477 = vmul.f32 %v9467, %v9419
        %v9478 = vmul.f32 %v9467, %v9420
        %v9479 = vmul.f32 %v9467, %v9421
        %v9480 = vmul.f32 %v9467, %v9422
        %v9481 = vmul.f32 %v9467, %v9423
        %v9482 = vmul.f32 %v9467, %v9424
        %v9483 = vmul.f32 %v9467, %v9425
        %9500 = vrot.lane.b32.xlu0 %v9468, 126
        %v9501 = vpop.permute.xlu0 %9500
        %9502 = vrot.lane.b32.xlu0 %v9469, 126
        %v9503 = vpop.permute.xlu0 %9502
        %9504 = vrot.lane.b32.xlu0 %v9470, 126
        %v9505 = vpop.permute.xlu0 %9504
        %9506 = vrot.lane.b32.xlu0 %v9471, 126
        %v9507 = vpop.permute.xlu0 %9506
        %9508 = vrot.lane.b32.xlu0 %v9472, 126
        %v9509 = vpop.permute.xlu0 %9508
        %9510 = vrot.lane.b32.xlu0 %v9473, 126
        %v9511 = vpop.permute.xlu0 %9510
        %9512 = vrot.lane.b32.xlu0 %v9474, 126
        %v9513 = vpop.permute.xlu0 %9512
        %9514 = vrot.lane.b32.xlu0 %v9475, 126
        %v9515 = vpop.permute.xlu0 %9514
        %9516 = vrot.lane.b32.xlu0 %v9476, 126
        %v9517 = vpop.permute.xlu0 %9516
        %9518 = vrot.lane.b32.xlu0 %v9477, 126
        %v9519 = vpop.permute.xlu0 %9518
        %9520 = vrot.lane.b32.xlu0 %v9478, 126
        %v9521 = vpop.permute.xlu0 %9520
        %9522 = vrot.lane.b32.xlu0 %v9479, 126
        %v9523 = vpop.permute.xlu0 %9522
        %9524 = vrot.lane.b32.xlu0 %v9480, 126
        %v9525 = vpop.permute.xlu0 %9524
        %9526 = vrot.lane.b32.xlu0 %v9481, 126
        %v9527 = vpop.permute.xlu0 %9526
        %9528 = vrot.lane.b32.xlu0 %v9482, 126
        %v9529 = vpop.permute.xlu0 %9528
        %9530 = vrot.lane.b32.xlu0 %v9483, 126
        %v9531 = vpop.permute.xlu0 %9530
        %v9548 = vadd.f32 %v9450, %v9501
        %v9549 = vadd.f32 %v9451, %v9503
        %v9550 = vadd.f32 %v9452, %v9505
        %v9551 = vadd.f32 %v9453, %v9507
        %v9552 = vadd.f32 %v9454, %v9509
        %v9553 = vadd.f32 %v9455, %v9511
        %v9554 = vadd.f32 %v9456, %v9513
        %v9555 = vadd.f32 %v9457, %v9515
        %v9556 = vadd.f32 %v9458, %v9517
        %v9557 = vadd.f32 %v9459, %v9519
        %v9558 = vadd.f32 %v9460, %v9521
        %v9559 = vadd.f32 %v9461, %v9523
        %v9560 = vadd.f32 %v9462, %v9525
        %v9561 = vadd.f32 %v9463, %v9527
        %v9562 = vadd.f32 %v9464, %v9529
        %v9563 = vadd.f32 %v9465, %v9531
        %s9564 = sld [smem:[#allocation10 + $0x2]]
        %v9565 = vstv %s9564
        %v9566 = vmul.f32 %v9565, %v9410
        %v9567 = vmul.f32 %v9565, %v9411
        %v9568 = vmul.f32 %v9565, %v9412
        %v9569 = vmul.f32 %v9565, %v9413
        %v9570 = vmul.f32 %v9565, %v9414
        %v9571 = vmul.f32 %v9565, %v9415
        %v9572 = vmul.f32 %v9565, %v9416
        %v9573 = vmul.f32 %v9565, %v9417
        %v9574 = vmul.f32 %v9565, %v9418
        %v9575 = vmul.f32 %v9565, %v9419
        %v9576 = vmul.f32 %v9565, %v9420
        %v9577 = vmul.f32 %v9565, %v9421
        %v9578 = vmul.f32 %v9565, %v9422
        %v9579 = vmul.f32 %v9565, %v9423
        %v9580 = vmul.f32 %v9565, %v9424
        %v9581 = vmul.f32 %v9565, %v9425
        %9598 = vrot.lane.b32.xlu0 %v9566, 124
        %v9599 = vpop.permute.xlu0 %9598
        %9600 = vrot.lane.b32.xlu0 %v9567, 124
        %v9601 = vpop.permute.xlu0 %9600
        %9602 = vrot.lane.b32.xlu0 %v9568, 124
        %v9603 = vpop.permute.xlu0 %9602
        %9604 = vrot.lane.b32.xlu0 %v9569, 124
        %v9605 = vpop.permute.xlu0 %9604
        %9606 = vrot.lane.b32.xlu0 %v9570, 124
        %v9607 = vpop.permute.xlu0 %9606
        %9608 = vrot.lane.b32.xlu0 %v9571, 124
        %v9609 = vpop.permute.xlu0 %9608
        %9610 = vrot.lane.b32.xlu0 %v9572, 124
        %v9611 = vpop.permute.xlu0 %9610
        %9612 = vrot.lane.b32.xlu0 %v9573, 124
        %v9613 = vpop.permute.xlu0 %9612
        %9614 = vrot.lane.b32.xlu0 %v9574, 124
        %v9615 = vpop.permute.xlu0 %9614
        %9616 = vrot.lane.b32.xlu0 %v9575, 124
        %v9617 = vpop.permute.xlu0 %9616
        %9618 = vrot.lane.b32.xlu0 %v9576, 124
        %v9619 = vpop.permute.xlu0 %9618
        %9620 = vrot.lane.b32.xlu0 %v9577, 124
        %v9621 = vpop.permute.xlu0 %9620
        %9622 = vrot.lane.b32.xlu0 %v9578, 124
        %v9623 = vpop.permute.xlu0 %9622
        %9624 = vrot.lane.b32.xlu0 %v9579, 124
        %v9625 = vpop.permute.xlu0 %9624
        %9626 = vrot.lane.b32.xlu0 %v9580, 124
        %v9627 = vpop.permute.xlu0 %9626
        %9628 = vrot.lane.b32.xlu0 %v9581, 124
        %v9629 = vpop.permute.xlu0 %9628
        %v9646 = vadd.f32 %v9548, %v9599
        %v9647 = vadd.f32 %v9549, %v9601
        %v9648 = vadd.f32 %v9550, %v9603
        %v9649 = vadd.f32 %v9551, %v9605
        %v9650 = vadd.f32 %v9552, %v9607
        %v9651 = vadd.f32 %v9553, %v9609
        %v9652 = vadd.f32 %v9554, %v9611
        %v9653 = vadd.f32 %v9555, %v9613
        %v9654 = vadd.f32 %v9556, %v9615
        %v9655 = vadd.f32 %v9557, %v9617
        %v9656 = vadd.f32 %v9558, %v9619
        %v9657 = vadd.f32 %v9559, %v9621
        %v9658 = vadd.f32 %v9560, %v9623
        %v9659 = vadd.f32 %v9561, %v9625
        %v9660 = vadd.f32 %v9562, %v9627
        %v9661 = vadd.f32 %v9563, %v9629
        %s9662 = sld [smem:[#allocation10 + $0x3]]
        %v9663 = vstv %s9662
        %v9664 = vmul.f32 %v9663, %v9412
        %v9665 = vmul.f32 %v9663, %v9413
        %v9666 = vmul.f32 %v9663, %v9414
        %v9667 = vmul.f32 %v9663, %v9415
        %v9668 = vmul.f32 %v9663, %v9416
        %v9669 = vmul.f32 %v9663, %v9417
        %v9670 = vmul.f32 %v9663, %v9418
        %v9671 = vmul.f32 %v9663, %v9419
        %v9672 = vmul.f32 %v9663, %v9420
        %v9673 = vmul.f32 %v9663, %v9421
        %v9674 = vmul.f32 %v9663, %v9422
        %v9675 = vmul.f32 %v9663, %v9423
        %v9676 = vmul.f32 %v9663, %v9424
        %v9677 = vmul.f32 %v9663, %v9425
        %v9678 = vmul.f32 %v9663, %v9426
        %v9679 = vmul.f32 %v9663, %v9427
        %v9680 = vadd.f32 %v9646, %v9664
        %v9681 = vadd.f32 %v9647, %v9665
        %v9682 = vadd.f32 %v9648, %v9666
        %v9683 = vadd.f32 %v9649, %v9667
        %v9684 = vadd.f32 %v9650, %v9668
        %v9685 = vadd.f32 %v9651, %v9669
        %v9686 = vadd.f32 %v9652, %v9670
        %v9687 = vadd.f32 %v9653, %v9671
        %v9688 = vadd.f32 %v9654, %v9672
        %v9689 = vadd.f32 %v9655, %v9673
        %v9690 = vadd.f32 %v9656, %v9674
        %v9691 = vadd.f32 %v9657, %v9675
        %v9692 = vadd.f32 %v9658, %v9676
        %v9693 = vadd.f32 %v9659, %v9677
        %v9694 = vadd.f32 %v9660, %v9678
        %v9695 = vadd.f32 %v9661, %v9679
        %s9696 = sld [smem:[#allocation10 + $0x4]]
        %v9697 = vstv %s9696
        %v9698 = vmul.f32 %v9697, %v9412
        %v9699 = vmul.f32 %v9697, %v9413
        %v9700 = vmul.f32 %v9697, %v9414
        %v9701 = vmul.f32 %v9697, %v9415
        %v9702 = vmul.f32 %v9697, %v9416
        %v9703 = vmul.f32 %v9697, %v9417
        %v9704 = vmul.f32 %v9697, %v9418
        %v9705 = vmul.f32 %v9697, %v9419
        %v9706 = vmul.f32 %v9697, %v9420
        %v9707 = vmul.f32 %v9697, %v9421
        %v9708 = vmul.f32 %v9697, %v9422
        %v9709 = vmul.f32 %v9697, %v9423
        %v9710 = vmul.f32 %v9697, %v9424
        %v9711 = vmul.f32 %v9697, %v9425
        %v9712 = vmul.f32 %v9697, %v9426
        %v9713 = vmul.f32 %v9697, %v9427
        %9730 = vrot.lane.b32.xlu0 %v9698, 126
        %v9731 = vpop.permute.xlu0 %9730
        %9732 = vrot.lane.b32.xlu0 %v9699, 126
        %v9733 = vpop.permute.xlu0 %9732
        %9734 = vrot.lane.b32.xlu0 %v9700, 126
        %v9735 = vpop.permute.xlu0 %9734
        %9736 = vrot.lane.b32.xlu0 %v9701, 126
        %v9737 = vpop.permute.xlu0 %9736
        %9738 = vrot.lane.b32.xlu0 %v9702, 126
        %v9739 = vpop.permute.xlu0 %9738
        %9740 = vrot.lane.b32.xlu0 %v9703, 126
        %v9741 = vpop.permute.xlu0 %9740
        %9742 = vrot.lane.b32.xlu0 %v9704, 126
        %v9743 = vpop.permute.xlu0 %9742
        %9744 = vrot.lane.b32.xlu0 %v9705, 126
        %v9745 = vpop.permute.xlu0 %9744
        %9746 = vrot.lane.b32.xlu0 %v9706, 126
        %v9747 = vpop.permute.xlu0 %9746
        %9748 = vrot.lane.b32.xlu0 %v9707, 126
        %v9749 = vpop.permute.xlu0 %9748
        %9750 = vrot.lane.b32.xlu0 %v9708, 126
        %v9751 = vpop.permute.xlu0 %9750
        %9752 = vrot.lane.b32.xlu0 %v9709, 126
        %v9753 = vpop.permute.xlu0 %9752
        %9754 = vrot.lane.b32.xlu0 %v9710, 126
        %v9755 = vpop.permute.xlu0 %9754
        %9756 = vrot.lane.b32.xlu0 %v9711, 126
        %v9757 = vpop.permute.xlu0 %9756
        %9758 = vrot.lane.b32.xlu0 %v9712, 126
        %v9759 = vpop.permute.xlu0 %9758
        %9760 = vrot.lane.b32.xlu0 %v9713, 126
        %v9761 = vpop.permute.xlu0 %9760
        %v9778 = vadd.f32 %v9680, %v9731
        %v9779 = vadd.f32 %v9681, %v9733
        %v9780 = vadd.f32 %v9682, %v9735
        %v9781 = vadd.f32 %v9683, %v9737
        %v9782 = vadd.f32 %v9684, %v9739
        %v9783 = vadd.f32 %v9685, %v9741
        %v9784 = vadd.f32 %v9686, %v9743
        %v9785 = vadd.f32 %v9687, %v9745
        %v9786 = vadd.f32 %v9688, %v9747
        %v9787 = vadd.f32 %v9689, %v9749
        %v9788 = vadd.f32 %v9690, %v9751
        %v9789 = vadd.f32 %v9691, %v9753
        %v9790 = vadd.f32 %v9692, %v9755
        %v9791 = vadd.f32 %v9693, %v9757
        %v9792 = vadd.f32 %v9694, %v9759
        %v9793 = vadd.f32 %v9695, %v9761
        %s9794 = sld [smem:[#allocation10 + $0x5]]
        %v9795 = vstv %s9794
        %v9796 = vmul.f32 %v9795, %v9412
        %v9797 = vmul.f32 %v9795, %v9413
        %v9798 = vmul.f32 %v9795, %v9414
        %v9799 = vmul.f32 %v9795, %v9415
        %v9800 = vmul.f32 %v9795, %v9416
        %v9801 = vmul.f32 %v9795, %v9417
        %v9802 = vmul.f32 %v9795, %v9418
        %v9803 = vmul.f32 %v9795, %v9419
        %v9804 = vmul.f32 %v9795, %v9420
        %v9805 = vmul.f32 %v9795, %v9421
        %v9806 = vmul.f32 %v9795, %v9422
        %v9807 = vmul.f32 %v9795, %v9423
        %v9808 = vmul.f32 %v9795, %v9424
        %v9809 = vmul.f32 %v9795, %v9425
        %v9810 = vmul.f32 %v9795, %v9426
        %v9811 = vmul.f32 %v9795, %v9427
        %9828 = vrot.lane.b32.xlu0 %v9796, 124
        %v9829 = vpop.permute.xlu0 %9828
        %9830 = vrot.lane.b32.xlu0 %v9797, 124
        %v9831 = vpop.permute.xlu0 %9830
        %9832 = vrot.lane.b32.xlu0 %v9798, 124
        %v9833 = vpop.permute.xlu0 %9832
        %9834 = vrot.lane.b32.xlu0 %v9799, 124
        %v9835 = vpop.permute.xlu0 %9834
        %9836 = vrot.lane.b32.xlu0 %v9800, 124
        %v9837 = vpop.permute.xlu0 %9836
        %9838 = vrot.lane.b32.xlu0 %v9801, 124
        %v9839 = vpop.permute.xlu0 %9838
        %9840 = vrot.lane.b32.xlu0 %v9802, 124
        %v9841 = vpop.permute.xlu0 %9840
        %9842 = vrot.lane.b32.xlu0 %v9803, 124
        %v9843 = vpop.permute.xlu0 %9842
        %9844 = vrot.lane.b32.xlu0 %v9804, 124
        %v9845 = vpop.permute.xlu0 %9844
        %9846 = vrot.lane.b32.xlu0 %v9805, 124
        %v9847 = vpop.permute.xlu0 %9846
        %9848 = vrot.lane.b32.xlu0 %v9806, 124
        %v9849 = vpop.permute.xlu0 %9848
        %9850 = vrot.lane.b32.xlu0 %v9807, 124
        %v9851 = vpop.permute.xlu0 %9850
        %9852 = vrot.lane.b32.xlu0 %v9808, 124
        %v9853 = vpop.permute.xlu0 %9852
        %9854 = vrot.lane.b32.xlu0 %v9809, 124
        %v9855 = vpop.permute.xlu0 %9854
        %9856 = vrot.lane.b32.xlu0 %v9810, 124
        %v9857 = vpop.permute.xlu0 %9856
        %9858 = vrot.lane.b32.xlu0 %v9811, 124
        %v9859 = vpop.permute.xlu0 %9858
        %v9876 = vadd.f32 %v9778, %v9829
        %v9877 = vadd.f32 %v9779, %v9831
        %v9878 = vadd.f32 %v9780, %v9833
        %v9879 = vadd.f32 %v9781, %v9835
        %v9880 = vadd.f32 %v9782, %v9837
        %v9881 = vadd.f32 %v9783, %v9839
        %v9882 = vadd.f32 %v9784, %v9841
        %v9883 = vadd.f32 %v9785, %v9843
        %v9884 = vadd.f32 %v9786, %v9845
        %v9885 = vadd.f32 %v9787, %v9847
        %v9886 = vadd.f32 %v9788, %v9849
        %v9887 = vadd.f32 %v9789, %v9851
        %v9888 = vadd.f32 %v9790, %v9853
        %v9889 = vadd.f32 %v9791, %v9855
        %v9890 = vadd.f32 %v9792, %v9857
        %v9891 = vadd.f32 %v9793, %v9859
        %s9892 = sld [smem:[#allocation10 + $0x6]]
        %v9893 = vstv %s9892
        %v9894 = vmul.f32 %v9893, %v9414
        %v9895 = vmul.f32 %v9893, %v9415
        %v9896 = vmul.f32 %v9893, %v9416
        %v9897 = vmul.f32 %v9893, %v9417
        %v9898 = vmul.f32 %v9893, %v9418
        %v9899 = vmul.f32 %v9893, %v9419
        %v9900 = vmul.f32 %v9893, %v9420
        %v9901 = vmul.f32 %v9893, %v9421
        %v9902 = vmul.f32 %v9893, %v9422
        %v9903 = vmul.f32 %v9893, %v9423
        %v9904 = vmul.f32 %v9893, %v9424
        %v9905 = vmul.f32 %v9893, %v9425
        %v9906 = vmul.f32 %v9893, %v9426
        %v9907 = vmul.f32 %v9893, %v9427
        %v9908 = vmul.f32 %v9893, %v9428
        %v9909 = vmul.f32 %v9893, %v9429
        %v9910 = vadd.f32 %v9876, %v9894
        %v9911 = vadd.f32 %v9877, %v9895
        %v9912 = vadd.f32 %v9878, %v9896
        %v9913 = vadd.f32 %v9879, %v9897
        %v9914 = vadd.f32 %v9880, %v9898
        %v9915 = vadd.f32 %v9881, %v9899
        %v9916 = vadd.f32 %v9882, %v9900
        %v9917 = vadd.f32 %v9883, %v9901
        %v9918 = vadd.f32 %v9884, %v9902
        %v9919 = vadd.f32 %v9885, %v9903
        %v9920 = vadd.f32 %v9886, %v9904
        %v9921 = vadd.f32 %v9887, %v9905
        %v9922 = vadd.f32 %v9888, %v9906
        %v9923 = vadd.f32 %v9889, %v9907
        %v9924 = vadd.f32 %v9890, %v9908
        %v9925 = vadd.f32 %v9891, %v9909
        %s9926 = sld [smem:[#allocation10 + $0x7]]
        %v9927 = vstv %s9926
        %v9928 = vmul.f32 %v9927, %v9414
        %v9929 = vmul.f32 %v9927, %v9415
        %v9930 = vmul.f32 %v9927, %v9416
        %v9931 = vmul.f32 %v9927, %v9417
        %v9932 = vmul.f32 %v9927, %v9418
        %v9933 = vmul.f32 %v9927, %v9419
        %v9934 = vmul.f32 %v9927, %v9420
        %v9935 = vmul.f32 %v9927, %v9421
        %v9936 = vmul.f32 %v9927, %v9422
        %v9937 = vmul.f32 %v9927, %v9423
        %v9938 = vmul.f32 %v9927, %v9424
        %v9939 = vmul.f32 %v9927, %v9425
        %v9940 = vmul.f32 %v9927, %v9426
        %v9941 = vmul.f32 %v9927, %v9427
        %v9942 = vmul.f32 %v9927, %v9428
        %v9943 = vmul.f32 %v9927, %v9429
        %9960 = vrot.lane.b32.xlu0 %v9928, 126
        %v9961 = vpop.permute.xlu0 %9960
        %9962 = vrot.lane.b32.xlu0 %v9929, 126
        %v9963 = vpop.permute.xlu0 %9962
        %9964 = vrot.lane.b32.xlu0 %v9930, 126
        %v9965 = vpop.permute.xlu0 %9964
        %9966 = vrot.lane.b32.xlu0 %v9931, 126
        %v9967 = vpop.permute.xlu0 %9966
        %9968 = vrot.lane.b32.xlu0 %v9932, 126
        %v9969 = vpop.permute.xlu0 %9968
        %9970 = vrot.lane.b32.xlu0 %v9933, 126
        %v9971 = vpop.permute.xlu0 %9970
        %9972 = vrot.lane.b32.xlu0 %v9934, 126
        %v9973 = vpop.permute.xlu0 %9972
        %9974 = vrot.lane.b32.xlu0 %v9935, 126
        %v9975 = vpop.permute.xlu0 %9974
        %9976 = vrot.lane.b32.xlu0 %v9936, 126
        %v9977 = vpop.permute.xlu0 %9976
        %9978 = vrot.lane.b32.xlu0 %v9937, 126
        %v9979 = vpop.permute.xlu0 %9978
        %9980 = vrot.lane.b32.xlu0 %v9938, 126
        %v9981 = vpop.permute.xlu0 %9980
        %9982 = vrot.lane.b32.xlu0 %v9939, 126
        %v9983 = vpop.permute.xlu0 %9982
        %9984 = vrot.lane.b32.xlu0 %v9940, 126
        %v9985 = vpop.permute.xlu0 %9984
        %9986 = vrot.lane.b32.xlu0 %v9941, 126
        %v9987 = vpop.permute.xlu0 %9986
        %9988 = vrot.lane.b32.xlu0 %v9942, 126
        %v9989 = vpop.permute.xlu0 %9988
        %9990 = vrot.lane.b32.xlu0 %v9943, 126
        %v9991 = vpop.permute.xlu0 %9990
        %v10008 = vadd.f32 %v9910, %v9961
        %v10009 = vadd.f32 %v9911, %v9963
        %v10010 = vadd.f32 %v9912, %v9965
        %v10011 = vadd.f32 %v9913, %v9967
        %v10012 = vadd.f32 %v9914, %v9969
        %v10013 = vadd.f32 %v9915, %v9971
        %v10014 = vadd.f32 %v9916, %v9973
        %v10015 = vadd.f32 %v9917, %v9975
        %v10016 = vadd.f32 %v9918, %v9977
        %v10017 = vadd.f32 %v9919, %v9979
        %v10018 = vadd.f32 %v9920, %v9981
        %v10019 = vadd.f32 %v9921, %v9983
        %v10020 = vadd.f32 %v9922, %v9985
        %v10021 = vadd.f32 %v9923, %v9987
        %v10022 = vadd.f32 %v9924, %v9989
        %v10023 = vadd.f32 %v9925, %v9991
        %s10024 = sld [smem:[#allocation10 + $0x8]]
        %v10025 = vstv %s10024
        %v10026 = vmul.f32 %v10025, %v9414
        %v10027 = vmul.f32 %v10025, %v9415
        %v10028 = vmul.f32 %v10025, %v9416
        %v10029 = vmul.f32 %v10025, %v9417
        %v10030 = vmul.f32 %v10025, %v9418
        %v10031 = vmul.f32 %v10025, %v9419
        %v10032 = vmul.f32 %v10025, %v9420
        %v10033 = vmul.f32 %v10025, %v9421
        %v10034 = vmul.f32 %v10025, %v9422
        %v10035 = vmul.f32 %v10025, %v9423
        %v10036 = vmul.f32 %v10025, %v9424
        %v10037 = vmul.f32 %v10025, %v9425
        %v10038 = vmul.f32 %v10025, %v9426
        %v10039 = vmul.f32 %v10025, %v9427
        %v10040 = vmul.f32 %v10025, %v9428
        %v10041 = vmul.f32 %v10025, %v9429
        %10058 = vrot.lane.b32.xlu0 %v10026, 124
        %v10059 = vpop.permute.xlu0 %10058
        %10060 = vrot.lane.b32.xlu0 %v10027, 124
        %v10061 = vpop.permute.xlu0 %10060
        %10062 = vrot.lane.b32.xlu0 %v10028, 124
        %v10063 = vpop.permute.xlu0 %10062
        %10064 = vrot.lane.b32.xlu0 %v10029, 124
        %v10065 = vpop.permute.xlu0 %10064
        %10066 = vrot.lane.b32.xlu0 %v10030, 124
        %v10067 = vpop.permute.xlu0 %10066
        %10068 = vrot.lane.b32.xlu0 %v10031, 124
        %v10069 = vpop.permute.xlu0 %10068
        %10070 = vrot.lane.b32.xlu0 %v10032, 124
        %v10071 = vpop.permute.xlu0 %10070
        %10072 = vrot.lane.b32.xlu0 %v10033, 124
        %v10073 = vpop.permute.xlu0 %10072
        %10074 = vrot.lane.b32.xlu0 %v10034, 124
        %v10075 = vpop.permute.xlu0 %10074
        %10076 = vrot.lane.b32.xlu0 %v10035, 124
        %v10077 = vpop.permute.xlu0 %10076
        %10078 = vrot.lane.b32.xlu0 %v10036, 124
        %v10079 = vpop.permute.xlu0 %10078
        %10080 = vrot.lane.b32.xlu0 %v10037, 124
        %v10081 = vpop.permute.xlu0 %10080
        %10082 = vrot.lane.b32.xlu0 %v10038, 124
        %v10083 = vpop.permute.xlu0 %10082
        %10084 = vrot.lane.b32.xlu0 %v10039, 124
        %v10085 = vpop.permute.xlu0 %10084
        %10086 = vrot.lane.b32.xlu0 %v10040, 124
        %v10087 = vpop.permute.xlu0 %10086
        %10088 = vrot.lane.b32.xlu0 %v10041, 124
        %v10089 = vpop.permute.xlu0 %10088
        %v10106 = vadd.f32 %v10008, %v10059
        %v10107 = vadd.f32 %v10009, %v10061
        %v10108 = vadd.f32 %v10010, %v10063
        %v10109 = vadd.f32 %v10011, %v10065
        %v10110 = vadd.f32 %v10012, %v10067
        %v10111 = vadd.f32 %v10013, %v10069
        %v10112 = vadd.f32 %v10014, %v10071
        %v10113 = vadd.f32 %v10015, %v10073
        %v10114 = vadd.f32 %v10016, %v10075
        %v10115 = vadd.f32 %v10017, %v10077
        %v10116 = vadd.f32 %v10018, %v10079
        %v10117 = vadd.f32 %v10019, %v10081
        %v10118 = vadd.f32 %v10020, %v10083
        %v10119 = vadd.f32 %v10021, %v10085
        %v10120 = vadd.f32 %v10022, %v10087
        %v10121 = vadd.f32 %v10023, %v10089
        %v10122 = vxor.u32 %v10106, 2147483648
        %v10123 = vxor.u32 %v10107, 2147483648
        %v10124 = vxor.u32 %v10108, 2147483648
        %v10125 = vxor.u32 %v10109, 2147483648
        %v10126 = vxor.u32 %v10110, 2147483648
        %v10127 = vxor.u32 %v10111, 2147483648
        %v10128 = vxor.u32 %v10112, 2147483648
        %v10129 = vxor.u32 %v10113, 2147483648
        %v10130 = vxor.u32 %v10114, 2147483648
        %v10131 = vxor.u32 %v10115, 2147483648
        %v10132 = vxor.u32 %v10116, 2147483648
        %v10133 = vxor.u32 %v10117, 2147483648
        %v10134 = vxor.u32 %v10118, 2147483648
        %v10135 = vxor.u32 %v10119, 2147483648
        %v10136 = vxor.u32 %v10120, 2147483648
        %v10137 = vxor.u32 %v10121, 2147483648
        %v10138 = vmul.f32 %v10122, 1.442695
        %v10139 = vpow.pop %v10138
        %v10140 = vmul.f32 %v10123, 1.442695
        %v10141 = vpow.pop %v10140
        %v10142 = vmul.f32 %v10124, 1.442695
        %v10143 = vpow.pop %v10142
        %v10144 = vmul.f32 %v10125, 1.442695
        %v10145 = vpow.pop %v10144
        %v10146 = vmul.f32 %v10126, 1.442695
        %v10147 = vpow.pop %v10146
        %v10148 = vmul.f32 %v10127, 1.442695
        %v10149 = vpow.pop %v10148
        %v10150 = vmul.f32 %v10128, 1.442695
        %v10151 = vpow.pop %v10150
        %v10152 = vmul.f32 %v10129, 1.442695
        %v10153 = vpow.pop %v10152
        %v10154 = vmul.f32 %v10130, 1.442695
        %v10155 = vpow.pop %v10154
        %v10156 = vmul.f32 %v10131, 1.442695
        %v10157 = vpow.pop %v10156
        %v10158 = vmul.f32 %v10132, 1.442695
        %v10159 = vpow.pop %v10158
        %v10160 = vmul.f32 %v10133, 1.442695
        %v10161 = vpow.pop %v10160
        %v10162 = vmul.f32 %v10134, 1.442695
        %v10163 = vpow.pop %v10162
        %v10164 = vmul.f32 %v10135, 1.442695
        %v10165 = vpow.pop %v10164
        %v10166 = vmul.f32 %v10136, 1.442695
        %v10167 = vpow.pop %v10166
        %v10168 = vmul.f32 %v10137, 1.442695
        %v10169 = vpow.pop %v10168
        %v10170 = vadd.f32 %v10139, 1.0
        %v10171 = vadd.f32 %v10141, 1.0
        %v10172 = vadd.f32 %v10143, 1.0
        %v10173 = vadd.f32 %v10145, 1.0
        %v10174 = vadd.f32 %v10147, 1.0
        %v10175 = vadd.f32 %v10149, 1.0
        %v10176 = vadd.f32 %v10151, 1.0
        %v10177 = vadd.f32 %v10153, 1.0
        %v10178 = vadd.f32 %v10155, 1.0
        %v10179 = vadd.f32 %v10157, 1.0
        %v10180 = vadd.f32 %v10159, 1.0
        %v10181 = vadd.f32 %v10161, 1.0
        %v10182 = vadd.f32 %v10163, 1.0
        %v10183 = vadd.f32 %v10165, 1.0
        %v10184 = vadd.f32 %v10167, 1.0
        %v10185 = vadd.f32 %v10169, 1.0
        %v10186 = vrcp.pop %v10170
        %v10187 = vmul.f32 %v10170, %v10186
        %v10188 = vsub.f32 1.0, %v10187
        %v10189 = vmul.f32 %v10186, %v10188
        %v10190 = vadd.f32 %v10186, %v10189
        %vm10191 = vweird.f32 %v10170
        %vm10192 = vweird.f32 %v10186
        %vm10193 = vmor %vm10191, %vm10192
        %v10194 = vsel %vm10193, %v10186, %v10190
        %v10195 = vand.u32 2147483647, %v10170
        %vm10196 = vcmp.eq.f32.partialorder %v10195, 8.507059e+37
        %v10197 = vand.u32 %v10170, 2147483648
        %v10198 = vor.u32 1.1754944e-38, %v10197
        %v10199 = vsel %vm10196, %v10198, %v10194
        %v10200 = vmul.f32 1.0, %v10199
        %v10201 = vrcp.pop %v10171
        %v10202 = vmul.f32 %v10171, %v10201
        %v10203 = vsub.f32 1.0, %v10202
        %v10204 = vmul.f32 %v10201, %v10203
        %v10205 = vadd.f32 %v10201, %v10204
        %vm10206 = vweird.f32 %v10171
        %vm10207 = vweird.f32 %v10201
        %vm10208 = vmor %vm10206, %vm10207
        %v10209 = vsel %vm10208, %v10201, %v10205
        %v10210 = vand.u32 2147483647, %v10171
        %vm10211 = vcmp.eq.f32.partialorder %v10210, 8.507059e+37
        %v10212 = vand.u32 %v10171, 2147483648
        %v10213 = vor.u32 1.1754944e-38, %v10212
        %v10214 = vsel %vm10211, %v10213, %v10209
        %v10215 = vmul.f32 1.0, %v10214
        %v10216 = vrcp.pop %v10172
        %v10217 = vmul.f32 %v10172, %v10216
        %v10218 = vsub.f32 1.0, %v10217
        %v10219 = vmul.f32 %v10216, %v10218
        %v10220 = vadd.f32 %v10216, %v10219
        %vm10221 = vweird.f32 %v10172
        %vm10222 = vweird.f32 %v10216
        %vm10223 = vmor %vm10221, %vm10222
        %v10224 = vsel %vm10223, %v10216, %v10220
        %v10225 = vand.u32 2147483647, %v10172
        %vm10226 = vcmp.eq.f32.partialorder %v10225, 8.507059e+37
        %v10227 = vand.u32 %v10172, 2147483648
        %v10228 = vor.u32 1.1754944e-38, %v10227
        %v10229 = vsel %vm10226, %v10228, %v10224
        %v10230 = vmul.f32 1.0, %v10229
        %v10231 = vrcp.pop %v10173
        %v10232 = vmul.f32 %v10173, %v10231
        %v10233 = vsub.f32 1.0, %v10232
        %v10234 = vmul.f32 %v10231, %v10233
        %v10235 = vadd.f32 %v10231, %v10234
        %vm10236 = vweird.f32 %v10173
        %vm10237 = vweird.f32 %v10231
        %vm10238 = vmor %vm10236, %vm10237
        %v10239 = vsel %vm10238, %v10231, %v10235
        %v10240 = vand.u32 2147483647, %v10173
        %vm10241 = vcmp.eq.f32.partialorder %v10240, 8.507059e+37
        %v10242 = vand.u32 %v10173, 2147483648
        %v10243 = vor.u32 1.1754944e-38, %v10242
        %v10244 = vsel %vm10241, %v10243, %v10239
        %v10245 = vmul.f32 1.0, %v10244
        %v10246 = vrcp.pop %v10174
        %v10247 = vmul.f32 %v10174, %v10246
        %v10248 = vsub.f32 1.0, %v10247
        %v10249 = vmul.f32 %v10246, %v10248
        %v10250 = vadd.f32 %v10246, %v10249
        %vm10251 = vweird.f32 %v10174
        %vm10252 = vweird.f32 %v10246
        %vm10253 = vmor %vm10251, %vm10252
        %v10254 = vsel %vm10253, %v10246, %v10250
        %v10255 = vand.u32 2147483647, %v10174
        %vm10256 = vcmp.eq.f32.partialorder %v10255, 8.507059e+37
        %v10257 = vand.u32 %v10174, 2147483648
        %v10258 = vor.u32 1.1754944e-38, %v10257
        %v10259 = vsel %vm10256, %v10258, %v10254
        %v10260 = vmul.f32 1.0, %v10259
        %v10261 = vrcp.pop %v10175
        %v10262 = vmul.f32 %v10175, %v10261
        %v10263 = vsub.f32 1.0, %v10262
        %v10264 = vmul.f32 %v10261, %v10263
        %v10265 = vadd.f32 %v10261, %v10264
        %vm10266 = vweird.f32 %v10175
        %vm10267 = vweird.f32 %v10261
        %vm10268 = vmor %vm10266, %vm10267
        %v10269 = vsel %vm10268, %v10261, %v10265
        %v10270 = vand.u32 2147483647, %v10175
        %vm10271 = vcmp.eq.f32.partialorder %v10270, 8.507059e+37
        %v10272 = vand.u32 %v10175, 2147483648
        %v10273 = vor.u32 1.1754944e-38, %v10272
        %v10274 = vsel %vm10271, %v10273, %v10269
        %v10275 = vmul.f32 1.0, %v10274
        %v10276 = vrcp.pop %v10176
        %v10277 = vmul.f32 %v10176, %v10276
        %v10278 = vsub.f32 1.0, %v10277
        %v10279 = vmul.f32 %v10276, %v10278
        %v10280 = vadd.f32 %v10276, %v10279
        %vm10281 = vweird.f32 %v10176
        %vm10282 = vweird.f32 %v10276
        %vm10283 = vmor %vm10281, %vm10282
        %v10284 = vsel %vm10283, %v10276, %v10280
        %v10285 = vand.u32 2147483647, %v10176
        %vm10286 = vcmp.eq.f32.partialorder %v10285, 8.507059e+37
        %v10287 = vand.u32 %v10176, 2147483648
        %v10288 = vor.u32 1.1754944e-38, %v10287
        %v10289 = vsel %vm10286, %v10288, %v10284
        %v10290 = vmul.f32 1.0, %v10289
        %v10291 = vrcp.pop %v10177
        %v10292 = vmul.f32 %v10177, %v10291
        %v10293 = vsub.f32 1.0, %v10292
        %v10294 = vmul.f32 %v10291, %v10293
        %v10295 = vadd.f32 %v10291, %v10294
        %vm10296 = vweird.f32 %v10177
        %vm10297 = vweird.f32 %v10291
        %vm10298 = vmor %vm10296, %vm10297
        %v10299 = vsel %vm10298, %v10291, %v10295
        %v10300 = vand.u32 2147483647, %v10177
        %vm10301 = vcmp.eq.f32.partialorder %v10300, 8.507059e+37
        %v10302 = vand.u32 %v10177, 2147483648
        %v10303 = vor.u32 1.1754944e-38, %v10302
        %v10304 = vsel %vm10301, %v10303, %v10299
        %v10305 = vmul.f32 1.0, %v10304
        %v10306 = vrcp.pop %v10178
        %v10307 = vmul.f32 %v10178, %v10306
        %v10308 = vsub.f32 1.0, %v10307
        %v10309 = vmul.f32 %v10306, %v10308
        %v10310 = vadd.f32 %v10306, %v10309
        %vm10311 = vweird.f32 %v10178
        %vm10312 = vweird.f32 %v10306
        %vm10313 = vmor %vm10311, %vm10312
        %v10314 = vsel %vm10313, %v10306, %v10310
        %v10315 = vand.u32 2147483647, %v10178
        %vm10316 = vcmp.eq.f32.partialorder %v10315, 8.507059e+37
        %v10317 = vand.u32 %v10178, 2147483648
        %v10318 = vor.u32 1.1754944e-38, %v10317
        %v10319 = vsel %vm10316, %v10318, %v10314
        %v10320 = vmul.f32 1.0, %v10319
        %v10321 = vrcp.pop %v10179
        %v10322 = vmul.f32 %v10179, %v10321
        %v10323 = vsub.f32 1.0, %v10322
        %v10324 = vmul.f32 %v10321, %v10323
        %v10325 = vadd.f32 %v10321, %v10324
        %vm10326 = vweird.f32 %v10179
        %vm10327 = vweird.f32 %v10321
        %vm10328 = vmor %vm10326, %vm10327
        %v10329 = vsel %vm10328, %v10321, %v10325
        %v10330 = vand.u32 2147483647, %v10179
        %vm10331 = vcmp.eq.f32.partialorder %v10330, 8.507059e+37
        %v10332 = vand.u32 %v10179, 2147483648
        %v10333 = vor.u32 1.1754944e-38, %v10332
        %v10334 = vsel %vm10331, %v10333, %v10329
        %v10335 = vmul.f32 1.0, %v10334
        %v10336 = vrcp.pop %v10180
        %v10337 = vmul.f32 %v10180, %v10336
        %v10338 = vsub.f32 1.0, %v10337
        %v10339 = vmul.f32 %v10336, %v10338
        %v10340 = vadd.f32 %v10336, %v10339
        %vm10341 = vweird.f32 %v10180
        %vm10342 = vweird.f32 %v10336
        %vm10343 = vmor %vm10341, %vm10342
        %v10344 = vsel %vm10343, %v10336, %v10340
        %v10345 = vand.u32 2147483647, %v10180
        %vm10346 = vcmp.eq.f32.partialorder %v10345, 8.507059e+37
        %v10347 = vand.u32 %v10180, 2147483648
        %v10348 = vor.u32 1.1754944e-38, %v10347
        %v10349 = vsel %vm10346, %v10348, %v10344
        %v10350 = vmul.f32 1.0, %v10349
        %v10351 = vrcp.pop %v10181
        %v10352 = vmul.f32 %v10181, %v10351
        %v10353 = vsub.f32 1.0, %v10352
        %v10354 = vmul.f32 %v10351, %v10353
        %v10355 = vadd.f32 %v10351, %v10354
        %vm10356 = vweird.f32 %v10181
        %vm10357 = vweird.f32 %v10351
        %vm10358 = vmor %vm10356, %vm10357
        %v10359 = vsel %vm10358, %v10351, %v10355
        %v10360 = vand.u32 2147483647, %v10181
        %vm10361 = vcmp.eq.f32.partialorder %v10360, 8.507059e+37
        %v10362 = vand.u32 %v10181, 2147483648
        %v10363 = vor.u32 1.1754944e-38, %v10362
        %v10364 = vsel %vm10361, %v10363, %v10359
        %v10365 = vmul.f32 1.0, %v10364
        %v10366 = vrcp.pop %v10182
        %v10367 = vmul.f32 %v10182, %v10366
        %v10368 = vsub.f32 1.0, %v10367
        %v10369 = vmul.f32 %v10366, %v10368
        %v10370 = vadd.f32 %v10366, %v10369
        %vm10371 = vweird.f32 %v10182
        %vm10372 = vweird.f32 %v10366
        %vm10373 = vmor %vm10371, %vm10372
        %v10374 = vsel %vm10373, %v10366, %v10370
        %v10375 = vand.u32 2147483647, %v10182
        %vm10376 = vcmp.eq.f32.partialorder %v10375, 8.507059e+37
        %v10377 = vand.u32 %v10182, 2147483648
        %v10378 = vor.u32 1.1754944e-38, %v10377
        %v10379 = vsel %vm10376, %v10378, %v10374
        %v10380 = vmul.f32 1.0, %v10379
        %v10381 = vrcp.pop %v10183
        %v10382 = vmul.f32 %v10183, %v10381
        %v10383 = vsub.f32 1.0, %v10382
        %v10384 = vmul.f32 %v10381, %v10383
        %v10385 = vadd.f32 %v10381, %v10384
        %vm10386 = vweird.f32 %v10183
        %vm10387 = vweird.f32 %v10381
        %vm10388 = vmor %vm10386, %vm10387
        %v10389 = vsel %vm10388, %v10381, %v10385
        %v10390 = vand.u32 2147483647, %v10183
        %vm10391 = vcmp.eq.f32.partialorder %v10390, 8.507059e+37
        %v10392 = vand.u32 %v10183, 2147483648
        %v10393 = vor.u32 1.1754944e-38, %v10392
        %v10394 = vsel %vm10391, %v10393, %v10389
        %v10395 = vmul.f32 1.0, %v10394
        %v10396 = vrcp.pop %v10184
        %v10397 = vmul.f32 %v10184, %v10396
        %v10398 = vsub.f32 1.0, %v10397
        %v10399 = vmul.f32 %v10396, %v10398
        %v10400 = vadd.f32 %v10396, %v10399
        %vm10401 = vweird.f32 %v10184
        %vm10402 = vweird.f32 %v10396
        %vm10403 = vmor %vm10401, %vm10402
        %v10404 = vsel %vm10403, %v10396, %v10400
        %v10405 = vand.u32 2147483647, %v10184
        %vm10406 = vcmp.eq.f32.partialorder %v10405, 8.507059e+37
        %v10407 = vand.u32 %v10184, 2147483648
        %v10408 = vor.u32 1.1754944e-38, %v10407
        %v10409 = vsel %vm10406, %v10408, %v10404
        %v10410 = vmul.f32 1.0, %v10409
        %v10411 = vrcp.pop %v10185
        %v10412 = vmul.f32 %v10185, %v10411
        %v10413 = vsub.f32 1.0, %v10412
        %v10414 = vmul.f32 %v10411, %v10413
        %v10415 = vadd.f32 %v10411, %v10414
        %vm10416 = vweird.f32 %v10185
        %vm10417 = vweird.f32 %v10411
        %vm10418 = vmor %vm10416, %vm10417
        %v10419 = vsel %vm10418, %v10411, %v10415
        %v10420 = vand.u32 2147483647, %v10185
        %vm10421 = vcmp.eq.f32.partialorder %v10420, 8.507059e+37
        %v10422 = vand.u32 %v10185, 2147483648
        %v10423 = vor.u32 1.1754944e-38, %v10422
        %v10424 = vsel %vm10421, %v10423, %v10419
        %v10425 = vmul.f32 1.0, %v10424
        %v10426 = vlaneseq
        %vm10427 = vcmp.ge.s32.totalorder %v10426, 0
        %vm10428 = vcmp.lt.s32.totalorder %v10426, 16
        %vm10429 = vmand %vm10427, %vm10428
        %10430 = vst.msk [vmem:[#allocation4] sm:$0x1] %vm10429, %v10200
        %10432 = vrot.lane.b32.xlu0 %v10215, 16
        %v10433 = vpop.permute.xlu0 %10432
        %vm10435 = vcmp.ge.s32.totalorder %v10426, 16
        %vm10436 = vcmp.lt.s32.totalorder %v10426, 32
        %vm10437 = vmand %vm10435, %vm10436
        %10438 = vst.msk [vmem:[#allocation4] sm:$0x1] %vm10437, %v10433
        %10440 = vrot.lane.b32.xlu0 %v10230, 32
        %v10441 = vpop.permute.xlu0 %10440
        %vm10443 = vcmp.ge.s32.totalorder %v10426, 32
        %vm10444 = vcmp.lt.s32.totalorder %v10426, 48
        %vm10445 = vmand %vm10443, %vm10444
        %10446 = vst.msk [vmem:[#allocation4] sm:$0x1] %vm10445, %v10441
        %10448 = vrot.lane.b32.xlu0 %v10245, 48
        %v10449 = vpop.permute.xlu0 %10448
        %vm10451 = vcmp.ge.s32.totalorder %v10426, 48
        %vm10452 = vcmp.lt.s32.totalorder %v10426, 64
        %vm10453 = vmand %vm10451, %vm10452
        %10454 = vst.msk [vmem:[#allocation4] sm:$0x1] %vm10453, %v10449
        %10456 = vrot.lane.b32.xlu0 %v10260, 64
        %v10457 = vpop.permute.xlu0 %10456
        %vm10459 = vcmp.ge.s32.totalorder %v10426, 64
        %vm10460 = vcmp.lt.s32.totalorder %v10426, 80
        %vm10461 = vmand %vm10459, %vm10460
        %10462 = vst.msk [vmem:[#allocation4] sm:$0x1] %vm10461, %v10457
        %10464 = vrot.lane.b32.xlu0 %v10275, 80
        %v10465 = vpop.permute.xlu0 %10464
        %vm10467 = vcmp.ge.s32.totalorder %v10426, 80
        %vm10468 = vcmp.lt.s32.totalorder %v10426, 96
        %vm10469 = vmand %vm10467, %vm10468
        %10470 = vst.msk [vmem:[#allocation4] sm:$0x1] %vm10469, %v10465
        %10472 = vrot.lane.b32.xlu0 %v10290, 96
        %v10473 = vpop.permute.xlu0 %10472
        %vm10475 = vcmp.ge.s32.totalorder %v10426, 96
        %vm10476 = vcmp.lt.s32.totalorder %v10426, 112
        %vm10477 = vmand %vm10475, %vm10476
        %10478 = vst.msk [vmem:[#allocation4] sm:$0x1] %vm10477, %v10473
        %10480 = vrot.lane.b32.xlu0 %v10305, 112
        %v10481 = vpop.permute.xlu0 %10480
        %vm10483 = vcmp.ge.s32.totalorder %v10426, 112
        %vm10484 = vcmp.lt.s32.totalorder %v10426, 128
        %vm10485 = vmand %vm10483, %vm10484
        %10486 = vst.msk [vmem:[#allocation4] sm:$0x1] %vm10485, %v10481
        %10487 = vst.msk [vmem:[#allocation4 + $0x1] sm:$0x1] %vm10429, %v10320
        %10489 = vrot.lane.b32.xlu0 %v10335, 16
        %v10490 = vpop.permute.xlu0 %10489
        %10492 = vst.msk [vmem:[#allocation4 + $0x1] sm:$0x1] %vm10437, %v10490
        %10494 = vrot.lane.b32.xlu0 %v10350, 32
        %v10495 = vpop.permute.xlu0 %10494
        %10497 = vst.msk [vmem:[#allocation4 + $0x1] sm:$0x1] %vm10445, %v10495
        %10499 = vrot.lane.b32.xlu0 %v10365, 48
        %v10500 = vpop.permute.xlu0 %10499
        %10502 = vst.msk [vmem:[#allocation4 + $0x1] sm:$0x1] %vm10453, %v10500
        %10504 = vrot.lane.b32.xlu0 %v10380, 64
        %v10505 = vpop.permute.xlu0 %10504
        %10507 = vst.msk [vmem:[#allocation4 + $0x1] sm:$0x1] %vm10461, %v10505
        %10509 = vrot.lane.b32.xlu0 %v10395, 80
        %v10510 = vpop.permute.xlu0 %10509
        %10512 = vst.msk [vmem:[#allocation4 + $0x1] sm:$0x1] %vm10469, %v10510
        %10514 = vrot.lane.b32.xlu0 %v10410, 96
        %v10515 = vpop.permute.xlu0 %10514
        %10517 = vst.msk [vmem:[#allocation4 + $0x1] sm:$0x1] %vm10477, %v10515
        %10519 = vrot.lane.b32.xlu0 %v10425, 112
        %v10520 = vpop.permute.xlu0 %10519
        %10522 = vst.msk [vmem:[#allocation4 + $0x1] sm:$0x1] %vm10485, %v10520
        %v10523 = vld [vmem:[#allocation4] sm:$0x3]
        %v10525 = vperm.slane %v10523, 0
        %v10526 = vperm.slane %v10523, 1
        %v10527 = vrot.slane %v10526, 4
        %v10528 = vsel %vm333, %v10525, %v10527
        %v10530 = vmul.f32 %v326, %v10528
        %10531 = vst [vmem:[%s255] sm:$0xff] %v10530
        %s10532 = sand.u32 %s121, 1
        %s10533 = scalar_lea.sflag [#allocation7], %s10532
        %s10534 = sand.u32 %s121, 1
        %s10535 = smul.addr %s10534, 8
        %s10536 = scalar_lea.vmem [#allocation14], %s10535
        // Predicated region
        $region57: #{tpu_custom_call.1} parent=35 // pred_check
          %p10537 = pneg %p131
        $region58: #{tpu_custom_call.1} parent=35 // pred_check_branch
          %10539 = sbr.rel (%p10537) target = $region60
        $region59: #{tpu_custom_call.1} parent=35 // pred_region
          %10541 = vsyncadd %s10533, 0
          %s10542 = smul.addr %s24, 2
          %s10543 = smul.addr %s10542, 4
          %s10544 = scalar_lea.hbm %s4, %s10543
          %s10546 = sshll.u32 %s10536, 4
          %s10547 = int_to_ptr.vmem [resolvable:$true] %s10546
          %s10548 = sshll.u32 %s10544, 4
          %s10549 = int_to_ptr.hbm [resolvable:$true] %s10548
          %10551 = dma.vmem_to_hbm [thread:$0]  %s10547, 128, %s10549, %s10533
        $region60: #{tpu_custom_call.1} parent=35 // pred_fallthru
          _
      $region36: #{tpu_custom_call.1} parent=5 // pred_fallthru
        _
      %p10552 = scmp.le.s32.totalorder 2, %s19
      // Predicated region
      $region61: #{tpu_custom_call.1} parent=5 // pred_check
        %p10553 = pneg %p10552
      $region62: #{tpu_custom_call.1} parent=5 // pred_check_branch
        %10555 = sbr.rel (%p10553) target = $region64
      $region63: #{tpu_custom_call.1} parent=5 // pred_region
        %s10556 = ssub.s32 %s19, 2
        // Predicated region
        $region65: #{tpu_custom_call.1} parent=63 // pred_check
          %p10557 = pneg %p137
        $region66: #{tpu_custom_call.1} parent=63 // pred_check_branch
          %10559 = sbr.rel (%p10557) target = $region68
        $region67: #{tpu_custom_call.1} parent=63 // pred_region
          %s10560 = sand.u32 %s122, 1
          %s10561 = scalar_lea.sflag [#allocation7], %s10560
          %s10562 = sand.u32 %s122, 1
          %s10563 = smul.addr %s10562, 8
          %s10564 = scalar_lea.vmem [#allocation14], %s10563
          %10566 = dma.done %s10561, 128
        $region68: #{tpu_custom_call.1} parent=63 // pred_fallthru
          _
      $region64: #{tpu_custom_call.1} parent=5 // pred_fallthru
        _
    $region6: #{tpu_custom_call.1} parent=1 // loop_footer
      %s23 = sadd.s32 1, %s19
    $region7: #{tpu_custom_call.1} parent=1 // loop_footer_branch
      %18 = sbr.rel target = $region3
    $region8: #{tpu_custom_call.1} parent=1 // loop_exit
      _
    %10567 = vsyncpa [#allocation6], 1
    %s10568 = scalar_lea.sflag [#allocation6], 1
    %10569 = vsyncpa %s10568, 1
    %10570 = vsyncpa [#allocation7], 1
    %s10571 = scalar_lea.sflag [#allocation7], 1
    %10572 = vsyncpa %s10571, 1
    %10573 = vsyncpa [#allocation8], 1
    %s10574 = scalar_lea.sflag [#allocation8], 1
    %10575 = vsyncpa %s10574, 1
    %10576 = vsyncpa [#allocation11], 1
    %10577 = vsyncpa [#allocation9], 1
    %s10578 = scalar_lea.sflag [#allocation9], 1
    %10579 = vsyncpa %s10578, 1

</llo_original>
